<compile_context>
chip_gen: v7x
topology: tpu7x:2x2x1
jax: 0.10.0
libtpu: 0.0.40
codegen_flags: <defaults>
</compile_context>

<pallas_src>
import math
import numpy as np
import jax
import jax.numpy as jnp
from jax import lax
from jax.experimental import pallas as pl
from jax.experimental.pallas import tpu as pltpu

# ---- small, module-consistent config ----
B, S = 2, 8            # batch, source sequence length
E, H, FFN = 32, 4, 64  # emb_dim, num_attention_heads, ffn_dim
DH = E // H            # head_dim
N_LAYERS = 2           # stacked EncoderLayers fused into one kernel
EPS = 1e-5             # nn.LayerNorm default
CLAMP = float(np.finfo(np.float32).max) - 1000.0   # rounds back to FLT_MAX in f32 (torch semantics)
MASK_BIAS = -1e9       # finite stand-in for masked_fill(-inf); identical softmax for any
                       # row with >=1 unmasked key, no NaN if a row were fully masked.

# ---- weight-slab row map (per layer); every block starts at lane 0 ----
# rows 0..127 : 16 blocks of DH rows, block index (h*4 + t), t in {Wq_h^T, Wk_h^T, Wv_h^T, Wo_h},
#               each block is (DH, E)
ROW_W1 = 16 * DH            # 128 : w1  (E, FFN)
ROW_W2 = ROW_W1 + E         # 160 : w2  (FFN, E)
ROW_LNG = ROW_W2 + FFN      # 224 : layer-norm gamma (1, E)
ROW_LNB = ROW_LNG + 8       # 232 : layer-norm beta  (1, E)
ROW_B1 = ROW_LNB + 8        # 240 : ffn bias 1 (1, FFN)
ROW_B2 = ROW_B1 + 8         # 248 : ffn bias 2 (1, E)
W_ROWS = ROW_B2 + 8         # 256
W_LANES = 128


def _layer_norm(t, g, b):
    mu = jnp.mean(t, axis=-1, keepdims=True)
    var = jnp.mean((t - mu) ** 2, axis=-1, keepdims=True)
    return (t - mu) * lax.rsqrt(var + EPS) * g + b


# ------------- Pallas kernel: whole batch, both layers fused, grid-less -------------
def encoder_stack_kernel(xm_ref, w_ref, out_ref, attnw_ref):
    x = xm_ref[0:B * S, :]                                   # (B*S, E), resident all layers
    # raw (B, S) additive key-padding bias packed as 2 extra rows; broadcast once, reused.
    bias = xm_ref[B * S:B * S + B, 0:S].reshape(B, 1, S)     # (B, 1, S)
    scale = 1.0 / math.sqrt(DH)

    for l in range(N_LAYERS):                                # unrolled layer loop
        gamma = w_ref[l, ROW_LNG:ROW_LNG + 1, 0:E]           # (1, E)
        beta = w_ref[l, ROW_LNB:ROW_LNB + 1, 0:E]
        b1 = w_ref[l, ROW_B1:ROW_B1 + 1, 0:FFN]              # (1, FFN)
        b2 = w_ref[l, ROW_B2:ROW_B2 + 1, 0:E]                # (1, E)

        # ---- multi-head self attention (per-head weights: no activation lane slicing) ----
        acc = x                                              # residual + sum_h ctx_h @ Wo_h
        p_heads = []
        for h in range(H):                                   # unrolled head loop
            r = (h * 4) * DH
            wq_t = w_ref[l, r:r + DH, 0:E]                   # (DH, E) = Wq[:, head h].T
            wk_t = w_ref[l, r + DH:r + 2 * DH, 0:E]
            wv_t = w_ref[l, r + 2 * DH:r + 3 * DH, 0:E]
            wo_h = w_ref[l, r + 3 * DH:r + 4 * DH, 0:E]      # (DH, E) = Wo[head-h rows, :]

            q = jnp.einsum("ne,de->nd", x, wq_t, preferred_element_type=jnp.float32)
            k = jnp.einsum("ne,de->nd", x, wk_t, preferred_element_type=jnp.float32)
            v = jnp.einsum("ne,de->nd", x, wv_t, preferred_element_type=jnp.float32)
            q3 = q.reshape(B, S, DH)                         # leading-dim split: layout no-op
            k3 = k.reshape(B, S, DH)
            v3 = v.reshape(B, S, DH)

            s = jnp.einsum("bqd,bkd->bqk", q3, k3,
                           preferred_element_type=jnp.float32) * scale       # (B, S, S)
            s = s + bias
            m = jnp.max(s, axis=-1, keepdims=True)
            e = jnp.exp(s - m)
            p = e * pl.reciprocal(jnp.sum(e, axis=-1, keepdims=True), approx=False)
            p_heads.append(p)

            ctx = jnp.einsum("bqk,bkd->bqd", p, v3,
                             preferred_element_type=jnp.float32)             # (B, S, DH)
            # head merge folded into the output projection (mathematically == concat @ Wo)
            acc = acc + jnp.dot(ctx.reshape(B * S, DH), wo_h,
                                preferred_element_type=jnp.float32)

        attnw_ref[l] = jnp.stack(p_heads, axis=0)            # (H, B, S, S): one store per layer
        x = _layer_norm(acc, gamma, beta)                    # dropout == identity (eval)

        # ---- position-wise feed forward ----
        w1 = w_ref[l, ROW_W1:ROW_W1 + E, 0:FFN]              # (E, FFN)
        w2 = w_ref[l, ROW_W2:ROW_W2 + FFN, 0:E]              # (FFN, E)
        h1 = jnp.maximum(jnp.dot(x, w1, preferred_element_type=jnp.float32) + b1, 0.0)
        ff = jnp.dot(h1, w2, preferred_element_type=jnp.float32) + b2
        # the reference module re-applies attn_layer_norm here (feed_forward_layer_norm is
        # defined but never used) — reproduced exactly.
        x = _layer_norm(ff + x, gamma, beta)

        # ---- nan/inf clamp: whole-tensor condition, torch.clamp lets NaN pass through ----
        nonfinite = jnp.where(jnp.abs(x) < jnp.inf, 0.0, 1.0)
        bad = jnp.max(jnp.max(nonfinite, axis=-1, keepdims=True), axis=0, keepdims=True)
        x = jnp.where(bad > 0.0, jnp.clip(x, -CLAMP, CLAMP), x)

    out_ref[...] = x


_VMEM = pl.BlockSpec(memory_space=pltpu.MemorySpace.VMEM)


@jax.jit
def encoder_forward(x, padding_mask, w_slab):
    """Apply N_LAYERS stacked EncoderLayers. Returns (x, [attn_weights per layer])."""
    x2 = x.reshape(B * S, E).astype(jnp.float32)
    bias = jnp.where(padding_mask, jnp.float32(MASK_BIAS), jnp.float32(0.0))   # (B, S)
    # pack activations + mask bias into ONE input buffer: rows B*S.. hold the bias (lanes 0:S)
    xm = jnp.concatenate([x2, jnp.pad(bias, ((0, 0), (0, E - S)))], axis=0)    # (B*S + B, E)

    out2, attnw = pl.pallas_call(
        encoder_stack_kernel,
        out_shape=[jax.ShapeDtypeStruct((B * S, E), jnp.float32),
                   jax.ShapeDtypeStruct((N_LAYERS, H, B, S, S), jnp.float32)],
        in_specs=[_VMEM, _VMEM],
        out_specs=[_VMEM, _VMEM],
    )(xm, w_slab)

    attn_weights = [attnw[l].transpose(1, 0, 2, 3) for l in range(N_LAYERS)]   # (B, H, S, S)
    return out2.reshape(B, S, E), attn_weights


# ------------------------- pure-JAX reference (verification) -------------------------
_PREC = jax.lax.Precision.HIGHEST


def reference_forward(x, padding_mask, params):
    xr = x.astype(jnp.float32)
    bias = jnp.where(padding_mask, jnp.float32(MASK_BIAS), jnp.float32(0.0))   # (B, S)
    scale = 1.0 / math.sqrt(DH)
    attn_all = []
    for l in range(N_LAYERS):
        wq, wk, wv, wo = (params[n][l] for n in ("wq", "wk", "wv", "wo"))
        g, b_ = params["ln_g"][l], params["ln_b"][l]
        w1, b1 = params["w1"][l], params["b1"][l]
        w2, b2 = params["w2"][l], params["b2"][l]

        residual = xr
        split = lambda t: t.reshape(B, S, H, DH).transpose(0, 2, 1, 3)
        qh = split(jnp.einsum("bse,ef->bsf", xr, wq, precision=_PREC))
        kh = split(jnp.einsum("bse,ef->bsf", xr, wk, precision=_PREC))
        vh = split(jnp.einsum("bse,ef->bsf", xr, wv, precision=_PREC))
        scores = jnp.einsum("bhqd,bhkd->bhqk", qh, kh, precision=_PREC) * scale
        scores = scores + bias[:, None, None, :]
        w = jax.nn.softmax(scores, axis=-1)
        attn_all.append(w)
        ctx = jnp.einsum("bhqk,bhkd->bhqd", w, vh, precision=_PREC)
        ctx = ctx.transpose(0, 2, 1, 3).reshape(B, S, E)
        xr = _layer_norm(jnp.einsum("bse,ef->bsf", ctx, wo, precision=_PREC) + residual, g, b_)

        residual = xr
        h1 = jnp.maximum(jnp.einsum("bse,ef->bsf", xr, w1, precision=_PREC) + b1, 0.0)
        ff = jnp.einsum("bsf,fe->bse", h1, w2, precision=_PREC) + b2
        xr = _layer_norm(ff + residual, g, b_)        # module reuses attn_layer_norm

        anybad = jnp.logical_not(jnp.all(jnp.abs(xr) < jnp.inf))
        xr = jnp.where(anybad, jnp.clip(xr, -CLAMP, CLAMP), xr)
    return xr, attn_all


# ------------------------- deterministic parameter init & packing -------------------------
def init_params(key):
    ks = jax.random.split(key, N_LAYERS)

    def lin(k, fan_in, fan_out):   # nn.Linear weight, pre-transposed to (in, out)
        return jax.random.normal(k, (fan_in, fan_out), jnp.float32) / np.sqrt(fan_in)

    p = {n: [] for n in ("wq", "wk", "wv", "wo", "ln_g", "ln_b", "w1", "b1", "w2", "b2")}
    for i in range(N_LAYERS):
        lk = jax.random.split(ks[i], 8)
        p["wq"].append(lin(lk[0], E, E))
        p["wk"].append(lin(lk[1], E, E))
        p["wv"].append(lin(lk[2], E, E))
        p["wo"].append(lin(lk[3], E, E))
        p["ln_g"].append(1.0 + 0.05 * jax.random.normal(lk[4], (E,), jnp.float32))
        p["ln_b"].append(0.05 * jax.random.normal(lk[5], (E,), jnp.float32))
        p["w1"].append(lin(lk[6], E, FFN))
        p["b1"].append(jnp.full((FFN,), 0.01, jnp.float32))
        p["w2"].append(lin(lk[7], FFN, E))
        p["b2"].append(jnp.full((E,), 0.01, jnp.float32))
    return {k: jnp.stack(v, axis=0) for k, v in p.items()}


def pack_weights(params):
    """Pack all per-layer weights into one (N_LAYERS, 256, 128) slab (single HBM->VMEM DMA).
    Every block starts at lane 0 with an 8-row-aligned static row offset."""
    slab = np.zeros((N_LAYERS, W_ROWS, W_LANES), np.float32)
    for l in range(N_LAYERS):
        wq, wk, wv, wo = (np.asarray(params[n][l]) for n in ("wq", "wk", "wv", "wo"))
        for h in range(H):
            cs = slice(h * DH, (h + 1) * DH)
            r = (h * 4) * DH
            slab[l, r:r + DH, :E] = wq[:, cs].T           # Wq_h^T  (DH, E)
            slab[l, r + DH:r + 2 * DH, :E] = wk[:, cs].T
            slab[l, r + 2 * DH:r + 3 * DH, :E] = wv[:, cs].T
            slab[l, r + 3 * DH:r + 4 * DH, :E] = wo[cs, :]  # Wo_h   (DH, E)
        slab[l, ROW_W1:ROW_W1 + E, :FFN] = np.asarray(params["w1"][l])
        slab[l, ROW_W2:ROW_W2 + FFN, :E] = np.asarray(params["w2"][l])
        slab[l, ROW_LNG, :E] = np.asarray(params["ln_g"][l])
        slab[l, ROW_LNB, :E] = np.asarray(params["ln_b"][l])
        slab[l, ROW_B1, :FFN] = np.asarray(params["b1"][l])
        slab[l, ROW_B2, :E] = np.asarray(params["b2"][l])
    return jnp.asarray(slab)


if __name__ == "__main__":
    key = jax.random.PRNGKey(0)
    pkey, xkey = jax.random.split(key)
    params = init_params(pkey)
    w_slab = pack_weights(params)                      # one-time host-side packing

    x_in = 0.5 * jax.random.normal(xkey, (B, S, E), jnp.float32)
    padding_mask = jnp.zeros((B, S), jnp.bool_).at[1, S - 2:].set(True)  # pad last 2 toks, batch 1

    x_out, attn_ws = encoder_forward(x_in, padding_mask, w_slab)
    x_out = jax.block_until_ready(x_out)

    # verify against the pure-JAX reference (clamp included for parity with the module)
    x_ref, attn_ref = reference_forward(x_in, padding_mask, params)
    np.testing.assert_allclose(np.asarray(x_out), np.asarray(x_ref), rtol=1e-3, atol=1e-3)
    for a, r in zip(attn_ws, attn_ref):
        np.testing.assert_allclose(np.asarray(a), np.asarray(r), rtol=1e-3, atol=1e-3)

    print("KERNEL_OK")
</pallas_src>

<mosaic_0001>
module attributes {stable_mosaic.version = 11 : i64} {
  func.func @encoder_stack_kernel(%arg0: memref<18x32xf32, #tpu.memory_space<vmem>>, %arg1: memref<2x256x128xf32, #tpu.memory_space<vmem>>, %arg2: memref<16x32xf32, #tpu.memory_space<vmem>>, %arg3: memref<2x4x2x8x8xf32, #tpu.memory_space<vmem>>) attributes {dimension_semantics = [], scalar_prefetch = 0 : i64, scratch_operands = 0 : i64, tpu.core_type = #tpu.core_type<tc>} {
    %c0 = arith.constant 0 : index
    %c0_0 = arith.constant 0 : index
    %0 = vector.load %arg0[%c0, %c0_0] : memref<18x32xf32, #tpu.memory_space<vmem>>, vector<16x32xf32>
    %c16 = arith.constant 16 : index
    %c0_1 = arith.constant 0 : index
    %1 = vector.load %arg0[%c16, %c0_1] : memref<18x32xf32, #tpu.memory_space<vmem>>, vector<2x8xf32>
    %2 = vector.shape_cast %1 : vector<2x8xf32> to vector<2x1x8xf32>
    %c0_2 = arith.constant 0 : index
    %c224 = arith.constant 224 : index
    %c0_3 = arith.constant 0 : index
    %3 = vector.load %arg1[%c0_2, %c224, %c0_3] : memref<2x256x128xf32, #tpu.memory_space<vmem>>, vector<1x1x32xf32>
    %4 = vector.shape_cast %3 : vector<1x1x32xf32> to vector<1x32xf32>
    %c0_4 = arith.constant 0 : index
    %c232 = arith.constant 232 : index
    %c0_5 = arith.constant 0 : index
    %5 = vector.load %arg1[%c0_4, %c232, %c0_5] : memref<2x256x128xf32, #tpu.memory_space<vmem>>, vector<1x1x32xf32>
    %6 = vector.shape_cast %5 : vector<1x1x32xf32> to vector<1x32xf32>
    %c0_6 = arith.constant 0 : index
    %c240 = arith.constant 240 : index
    %c0_7 = arith.constant 0 : index
    %7 = vector.load %arg1[%c0_6, %c240, %c0_7] : memref<2x256x128xf32, #tpu.memory_space<vmem>>, vector<1x1x64xf32>
    %8 = vector.shape_cast %7 : vector<1x1x64xf32> to vector<1x64xf32>
    %c0_8 = arith.constant 0 : index
    %c248 = arith.constant 248 : index
    %c0_9 = arith.constant 0 : index
    %9 = vector.load %arg1[%c0_8, %c248, %c0_9] : memref<2x256x128xf32, #tpu.memory_space<vmem>>, vector<1x1x32xf32>
    %10 = vector.shape_cast %9 : vector<1x1x32xf32> to vector<1x32xf32>
    %c0_10 = arith.constant 0 : index
    %c0_11 = arith.constant 0 : index
    %c0_12 = arith.constant 0 : index
    %11 = vector.load %arg1[%c0_10, %c0_11, %c0_12] : memref<2x256x128xf32, #tpu.memory_space<vmem>>, vector<1x8x32xf32>
    %12 = vector.shape_cast %11 : vector<1x8x32xf32> to vector<8x32xf32>
    %c0_13 = arith.constant 0 : index
    %c8 = arith.constant 8 : index
    %c0_14 = arith.constant 0 : index
    %13 = vector.load %arg1[%c0_13, %c8, %c0_14] : memref<2x256x128xf32, #tpu.memory_space<vmem>>, vector<1x8x32xf32>
    %14 = vector.shape_cast %13 : vector<1x8x32xf32> to vector<8x32xf32>
    %c0_15 = arith.constant 0 : index
    %c16_16 = arith.constant 16 : index
    %c0_17 = arith.constant 0 : index
    %15 = vector.load %arg1[%c0_15, %c16_16, %c0_17] : memref<2x256x128xf32, #tpu.memory_space<vmem>>, vector<1x8x32xf32>
    %16 = vector.shape_cast %15 : vector<1x8x32xf32> to vector<8x32xf32>
    %c0_18 = arith.constant 0 : index
    %c24 = arith.constant 24 : index
    %c0_19 = arith.constant 0 : index
    %17 = vector.load %arg1[%c0_18, %c24, %c0_19] : memref<2x256x128xf32, #tpu.memory_space<vmem>>, vector<1x8x32xf32>
    %18 = vector.shape_cast %17 : vector<1x8x32xf32> to vector<8x32xf32>
    "tpu.trace_start"() <{level = 10 : i32, message = "ne,de->nd"}> : () -> ()
    %cst = arith.constant dense<0.000000e+00> : vector<16x8xf32>
    %19 = tpu.matmul %0, %12, %cst {dimension_numbers = #tpu.dot_dimension_numbers<[1], [1], [0], [0], [0, 0, 1, 0], [], []>} : vector<16x32xf32>, vector<8x32xf32>, vector<16x8xf32> -> vector<16x8xf32>
    %cst_20 = arith.constant dense<0.000000e+00> : vector<16x8xf32>
    %20 = tpu.matmul %0, %14, %cst_20 {dimension_numbers = #tpu.dot_dimension_numbers<[1], [1], [0], [0], [0, 0, 1, 0], [], []>} : vector<16x32xf32>, vector<8x32xf32>, vector<16x8xf32> -> vector<16x8xf32>
    %cst_21 = arith.constant dense<0.000000e+00> : vector<16x8xf32>
    %21 = tpu.matmul %0, %16, %cst_21 {dimension_numbers = #tpu.dot_dimension_numbers<[1], [1], [0], [0], [0, 0, 1, 0], [], []>} : vector<16x32xf32>, vector<8x32xf32>, vector<16x8xf32> -> vector<16x8xf32>
    "tpu.trace_stop"() : () -> ()
    %22 = vector.shape_cast %19 : vector<16x8xf32> to vector<2x8x8xf32>
    %23 = vector.shape_cast %20 : vector<16x8xf32> to vector<2x8x8xf32>
    %24 = vector.shape_cast %21 : vector<16x8xf32> to vector<2x8x8xf32>
    "tpu.trace_start"() <{level = 10 : i32, message = "bqd,bkd->bqk"}> : () -> ()
    %cst_22 = arith.constant dense<0.000000e+00> : vector<2x8x8xf32>
    %25 = tpu.matmul %22, %23, %cst_22 {dimension_numbers = #tpu.dot_dimension_numbers<[2], [2], [1], [1], [0, 0, 0, 1, 1, 1], [0], [0]>} : vector<2x8x8xf32>, vector<2x8x8xf32>, vector<2x8x8xf32> -> vector<2x8x8xf32>
    "tpu.trace_stop"() : () -> ()
    %cst_23 = arith.constant 0.353553385 : f32
    %26 = vector.broadcast %cst_23 : f32 to vector<2x8x8xf32>
    %27 = arith.mulf %25, %26 : vector<2x8x8xf32>
    %28 = vector.broadcast %2 : vector<2x1x8xf32> to vector<2x8x8xf32>
    %29 = arith.addf %27, %28 : vector<2x8x8xf32>
    %cst_24 = arith.constant dense<0xFF800000> : vector<2x8xf32>
    %30 = vector.multi_reduction <maximumf>, %29, %cst_24 [2] : vector<2x8x8xf32> to vector<2x8xf32>
    %31 = vector.shape_cast %30 : vector<2x8xf32> to vector<2x8x1xf32>
    %32 = vector.broadcast %31 : vector<2x8x1xf32> to vector<2x8x8xf32>
    %33 = arith.subf %29, %32 : vector<2x8x8xf32>
    %34 = math.exp %33 : vector<2x8x8xf32>
    %cst_25 = arith.constant dense<0.000000e+00> : vector<2x8xf32>
    %35 = vector.multi_reduction <add>, %34, %cst_25 [2] : vector<2x8x8xf32> to vector<2x8xf32>
    %36 = vector.shape_cast %35 : vector<2x8xf32> to vector<2x8x1xf32>
    %37 = tpu.reciprocal %36 : vector<2x8x1xf32> -> vector<2x8x1xf32>
    %38 = vector.broadcast %37 : vector<2x8x1xf32> to vector<2x8x8xf32>
    %39 = arith.mulf %34, %38 : vector<2x8x8xf32>
    "tpu.trace_start"() <{level = 10 : i32, message = "bqk,bkd->bqd"}> : () -> ()
    %cst_26 = arith.constant dense<0.000000e+00> : vector<2x8x8xf32>
    %40 = tpu.matmul %39, %24, %cst_26 {dimension_numbers = #tpu.dot_dimension_numbers<[2], [1], [1], [2], [0, 0, 0, 1, 1, 2], [0], [0]>} : vector<2x8x8xf32>, vector<2x8x8xf32>, vector<2x8x8xf32> -> vector<2x8x8xf32>
    "tpu.trace_stop"() : () -> ()
    %41 = vector.shape_cast %40 : vector<2x8x8xf32> to vector<16x8xf32>
    %cst_27 = arith.constant dense<0.000000e+00> : vector<16x32xf32>
    %42 = tpu.matmul %41, %18, %cst_27 {dimension_numbers = #tpu.dot_dimension_numbers<[1], [0], [0], [1], [0, 0, 1, 1], [], []>} : vector<16x8xf32>, vector<8x32xf32>, vector<16x32xf32> -> vector<16x32xf32>
    %43 = arith.addf %0, %42 : vector<16x32xf32>
    %c0_28 = arith.constant 0 : index
    %c32 = arith.constant 32 : index
    %c0_29 = arith.constant 0 : index
    %44 = vector.load %arg1[%c0_28, %c32, %c0_29] : memref<2x256x128xf32, #tpu.memory_space<vmem>>, vector<1x8x32xf32>
    %45 = vector.shape_cast %44 : vector<1x8x32xf32> to vector<8x32xf32>
    %c0_30 = arith.constant 0 : index
    %c40 = arith.constant 40 : index
    %c0_31 = arith.constant 0 : index
    %46 = vector.load %arg1[%c0_30, %c40, %c0_31] : memref<2x256x128xf32, #tpu.memory_space<vmem>>, vector<1x8x32xf32>
    %47 = vector.shape_cast %46 : vector<1x8x32xf32> to vector<8x32xf32>
    %c0_32 = arith.constant 0 : index
    %c48 = arith.constant 48 : index
    %c0_33 = arith.constant 0 : index
    %48 = vector.load %arg1[%c0_32, %c48, %c0_33] : memref<2x256x128xf32, #tpu.memory_space<vmem>>, vector<1x8x32xf32>
    %49 = vector.shape_cast %48 : vector<1x8x32xf32> to vector<8x32xf32>
    %c0_34 = arith.constant 0 : index
    %c56 = arith.constant 56 : index
    %c0_35 = arith.constant 0 : index
    %50 = vector.load %arg1[%c0_34, %c56, %c0_35] : memref<2x256x128xf32, #tpu.memory_space<vmem>>, vector<1x8x32xf32>
    %51 = vector.shape_cast %50 : vector<1x8x32xf32> to vector<8x32xf32>
    "tpu.trace_start"() <{level = 10 : i32, message = "ne,de->nd"}> : () -> ()
    %cst_36 = arith.constant dense<0.000000e+00> : vector<16x8xf32>
    %52 = tpu.matmul %0, %45, %cst_36 {dimension_numbers = #tpu.dot_dimension_numbers<[1], [1], [0], [0], [0, 0, 1, 0], [], []>} : vector<16x32xf32>, vector<8x32xf32>, vector<16x8xf32> -> vector<16x8xf32>
    %cst_37 = arith.constant dense<0.000000e+00> : vector<16x8xf32>
    %53 = tpu.matmul %0, %47, %cst_37 {dimension_numbers = #tpu.dot_dimension_numbers<[1], [1], [0], [0], [0, 0, 1, 0], [], []>} : vector<16x32xf32>, vector<8x32xf32>, vector<16x8xf32> -> vector<16x8xf32>
    %cst_38 = arith.constant dense<0.000000e+00> : vector<16x8xf32>
    %54 = tpu.matmul %0, %49, %cst_38 {dimension_numbers = #tpu.dot_dimension_numbers<[1], [1], [0], [0], [0, 0, 1, 0], [], []>} : vector<16x32xf32>, vector<8x32xf32>, vector<16x8xf32> -> vector<16x8xf32>
    "tpu.trace_stop"() : () -> ()
    %55 = vector.shape_cast %52 : vector<16x8xf32> to vector<2x8x8xf32>
    %56 = vector.shape_cast %53 : vector<16x8xf32> to vector<2x8x8xf32>
    %57 = vector.shape_cast %54 : vector<16x8xf32> to vector<2x8x8xf32>
    "tpu.trace_start"() <{level = 10 : i32, message = "bqd,bkd->bqk"}> : () -> ()
    %cst_39 = arith.constant dense<0.000000e+00> : vector<2x8x8xf32>
    %58 = tpu.matmul %55, %56, %cst_39 {dimension_numbers = #tpu.dot_dimension_numbers<[2], [2], [1], [1], [0, 0, 0, 1, 1, 1], [0], [0]>} : vector<2x8x8xf32>, vector<2x8x8xf32>, vector<2x8x8xf32> -> vector<2x8x8xf32>
    "tpu.trace_stop"() : () -> ()
    %cst_40 = arith.constant 0.353553385 : f32
    %59 = vector.broadcast %cst_40 : f32 to vector<2x8x8xf32>
    %60 = arith.mulf %58, %59 : vector<2x8x8xf32>
    %61 = vector.broadcast %2 : vector<2x1x8xf32> to vector<2x8x8xf32>
    %62 = arith.addf %60, %61 : vector<2x8x8xf32>
    %cst_41 = arith.constant dense<0xFF800000> : vector<2x8xf32>
    %63 = vector.multi_reduction <maximumf>, %62, %cst_41 [2] : vector<2x8x8xf32> to vector<2x8xf32>
    %64 = vector.shape_cast %63 : vector<2x8xf32> to vector<2x8x1xf32>
    %65 = vector.broadcast %64 : vector<2x8x1xf32> to vector<2x8x8xf32>
    %66 = arith.subf %62, %65 : vector<2x8x8xf32>
    %67 = math.exp %66 : vector<2x8x8xf32>
    %cst_42 = arith.constant dense<0.000000e+00> : vector<2x8xf32>
    %68 = vector.multi_reduction <add>, %67, %cst_42 [2] : vector<2x8x8xf32> to vector<2x8xf32>
    %69 = vector.shape_cast %68 : vector<2x8xf32> to vector<2x8x1xf32>
    %70 = tpu.reciprocal %69 : vector<2x8x1xf32> -> vector<2x8x1xf32>
    %71 = vector.broadcast %70 : vector<2x8x1xf32> to vector<2x8x8xf32>
    %72 = arith.mulf %67, %71 : vector<2x8x8xf32>
    "tpu.trace_start"() <{level = 10 : i32, message = "bqk,bkd->bqd"}> : () -> ()
    %cst_43 = arith.constant dense<0.000000e+00> : vector<2x8x8xf32>
    %73 = tpu.matmul %72, %57, %cst_43 {dimension_numbers = #tpu.dot_dimension_numbers<[2], [1], [1], [2], [0, 0, 0, 1, 1, 2], [0], [0]>} : vector<2x8x8xf32>, vector<2x8x8xf32>, vector<2x8x8xf32> -> vector<2x8x8xf32>
    "tpu.trace_stop"() : () -> ()
    %74 = vector.shape_cast %73 : vector<2x8x8xf32> to vector<16x8xf32>
    %cst_44 = arith.constant dense<0.000000e+00> : vector<16x32xf32>
    %75 = tpu.matmul %74, %51, %cst_44 {dimension_numbers = #tpu.dot_dimension_numbers<[1], [0], [0], [1], [0, 0, 1, 1], [], []>} : vector<16x8xf32>, vector<8x32xf32>, vector<16x32xf32> -> vector<16x32xf32>
    %76 = arith.addf %43, %75 : vector<16x32xf32>
    %c0_45 = arith.constant 0 : index
    %c64 = arith.constant 64 : index
    %c0_46 = arith.constant 0 : index
    %77 = vector.load %arg1[%c0_45, %c64, %c0_46] : memref<2x256x128xf32, #tpu.memory_space<vmem>>, vector<1x8x32xf32>
    %78 = vector.shape_cast %77 : vector<1x8x32xf32> to vector<8x32xf32>
    %c0_47 = arith.constant 0 : index
    %c72 = arith.constant 72 : index
    %c0_48 = arith.constant 0 : index
    %79 = vector.load %arg1[%c0_47, %c72, %c0_48] : memref<2x256x128xf32, #tpu.memory_space<vmem>>, vector<1x8x32xf32>
    %80 = vector.shape_cast %79 : vector<1x8x32xf32> to vector<8x32xf32>
    %c0_49 = arith.constant 0 : index
    %c80 = arith.constant 80 : index
    %c0_50 = arith.constant 0 : index
    %81 = vector.load %arg1[%c0_49, %c80, %c0_50] : memref<2x256x128xf32, #tpu.memory_space<vmem>>, vector<1x8x32xf32>
    %82 = vector.shape_cast %81 : vector<1x8x32xf32> to vector<8x32xf32>
    %c0_51 = arith.constant 0 : index
    %c88 = arith.constant 88 : index
    %c0_52 = arith.constant 0 : index
    %83 = vector.load %arg1[%c0_51, %c88, %c0_52] : memref<2x256x128xf32, #tpu.memory_space<vmem>>, vector<1x8x32xf32>
    %84 = vector.shape_cast %83 : vector<1x8x32xf32> to vector<8x32xf32>
    "tpu.trace_start"() <{level = 10 : i32, message = "ne,de->nd"}> : () -> ()
    %cst_53 = arith.constant dense<0.000000e+00> : vector<16x8xf32>
    %85 = tpu.matmul %0, %78, %cst_53 {dimension_numbers = #tpu.dot_dimension_numbers<[1], [1], [0], [0], [0, 0, 1, 0], [], []>} : vector<16x32xf32>, vector<8x32xf32>, vector<16x8xf32> -> vector<16x8xf32>
    %cst_54 = arith.constant dense<0.000000e+00> : vector<16x8xf32>
    %86 = tpu.matmul %0, %80, %cst_54 {dimension_numbers = #tpu.dot_dimension_numbers<[1], [1], [0], [0], [0, 0, 1, 0], [], []>} : vector<16x32xf32>, vector<8x32xf32>, vector<16x8xf32> -> vector<16x8xf32>
    %cst_55 = arith.constant dense<0.000000e+00> : vector<16x8xf32>
    %87 = tpu.matmul %0, %82, %cst_55 {dimension_numbers = #tpu.dot_dimension_numbers<[1], [1], [0], [0], [0, 0, 1, 0], [], []>} : vector<16x32xf32>, vector<8x32xf32>, vector<16x8xf32> -> vector<16x8xf32>
    "tpu.trace_stop"() : () -> ()
    %88 = vector.shape_cast %85 : vector<16x8xf32> to vector<2x8x8xf32>
    %89 = vector.shape_cast %86 : vector<16x8xf32> to vector<2x8x8xf32>
    %90 = vector.shape_cast %87 : vector<16x8xf32> to vector<2x8x8xf32>
    "tpu.trace_start"() <{level = 10 : i32, message = "bqd,bkd->bqk"}> : () -> ()
    %cst_56 = arith.constant dense<0.000000e+00> : vector<2x8x8xf32>
    %91 = tpu.matmul %88, %89, %cst_56 {dimension_numbers = #tpu.dot_dimension_numbers<[2], [2], [1], [1], [0, 0, 0, 1, 1, 1], [0], [0]>} : vector<2x8x8xf32>, vector<2x8x8xf32>, vector<2x8x8xf32> -> vector<2x8x8xf32>
    "tpu.trace_stop"() : () -> ()
    %cst_57 = arith.constant 0.353553385 : f32
    %92 = vector.broadcast %cst_57 : f32 to vector<2x8x8xf32>
    %93 = arith.mulf %91, %92 : vector<2x8x8xf32>
    %94 = vector.broadcast %2 : vector<2x1x8xf32> to vector<2x8x8xf32>
    %95 = arith.addf %93, %94 : vector<2x8x8xf32>
    %cst_58 = arith.constant dense<0xFF800000> : vector<2x8xf32>
    %96 = vector.multi_reduction <maximumf>, %95, %cst_58 [2] : vector<2x8x8xf32> to vector<2x8xf32>
    %97 = vector.shape_cast %96 : vector<2x8xf32> to vector<2x8x1xf32>
    %98 = vector.broadcast %97 : vector<2x8x1xf32> to vector<2x8x8xf32>
    %99 = arith.subf %95, %98 : vector<2x8x8xf32>
    %100 = math.exp %99 : vector<2x8x8xf32>
    %cst_59 = arith.constant dense<0.000000e+00> : vector<2x8xf32>
    %101 = vector.multi_reduction <add>, %100, %cst_59 [2] : vector<2x8x8xf32> to vector<2x8xf32>
    %102 = vector.shape_cast %101 : vector<2x8xf32> to vector<2x8x1xf32>
    %103 = tpu.reciprocal %102 : vector<2x8x1xf32> -> vector<2x8x1xf32>
    %104 = vector.broadcast %103 : vector<2x8x1xf32> to vector<2x8x8xf32>
    %105 = arith.mulf %100, %104 : vector<2x8x8xf32>
    "tpu.trace_start"() <{level = 10 : i32, message = "bqk,bkd->bqd"}> : () -> ()
    %cst_60 = arith.constant dense<0.000000e+00> : vector<2x8x8xf32>
    %106 = tpu.matmul %105, %90, %cst_60 {dimension_numbers = #tpu.dot_dimension_numbers<[2], [1], [1], [2], [0, 0, 0, 1, 1, 2], [0], [0]>} : vector<2x8x8xf32>, vector<2x8x8xf32>, vector<2x8x8xf32> -> vector<2x8x8xf32>
    "tpu.trace_stop"() : () -> ()
    %107 = vector.shape_cast %106 : vector<2x8x8xf32> to vector<16x8xf32>
    %cst_61 = arith.constant dense<0.000000e+00> : vector<16x32xf32>
    %108 = tpu.matmul %107, %84, %cst_61 {dimension_numbers = #tpu.dot_dimension_numbers<[1], [0], [0], [1], [0, 0, 1, 1], [], []>} : vector<16x8xf32>, vector<8x32xf32>, vector<16x32xf32> -> vector<16x32xf32>
    %109 = arith.addf %76, %108 : vector<16x32xf32>
    %c0_62 = arith.constant 0 : index
    %c96 = arith.constant 96 : index
    %c0_63 = arith.constant 0 : index
    %110 = vector.load %arg1[%c0_62, %c96, %c0_63] : memref<2x256x128xf32, #tpu.memory_space<vmem>>, vector<1x8x32xf32>
    %111 = vector.shape_cast %110 : vector<1x8x32xf32> to vector<8x32xf32>
    %c0_64 = arith.constant 0 : index
    %c104 = arith.constant 104 : index
    %c0_65 = arith.constant 0 : index
    %112 = vector.load %arg1[%c0_64, %c104, %c0_65] : memref<2x256x128xf32, #tpu.memory_space<vmem>>, vector<1x8x32xf32>
    %113 = vector.shape_cast %112 : vector<1x8x32xf32> to vector<8x32xf32>
    %c0_66 = arith.constant 0 : index
    %c112 = arith.constant 112 : index
    %c0_67 = arith.constant 0 : index
    %114 = vector.load %arg1[%c0_66, %c112, %c0_67] : memref<2x256x128xf32, #tpu.memory_space<vmem>>, vector<1x8x32xf32>
    %115 = vector.shape_cast %114 : vector<1x8x32xf32> to vector<8x32xf32>
    %c0_68 = arith.constant 0 : index
    %c120 = arith.constant 120 : index
    %c0_69 = arith.constant 0 : index
    %116 = vector.load %arg1[%c0_68, %c120, %c0_69] : memref<2x256x128xf32, #tpu.memory_space<vmem>>, vector<1x8x32xf32>
    %117 = vector.shape_cast %116 : vector<1x8x32xf32> to vector<8x32xf32>
    "tpu.trace_start"() <{level = 10 : i32, message = "ne,de->nd"}> : () -> ()
    %cst_70 = arith.constant dense<0.000000e+00> : vector<16x8xf32>
    %118 = tpu.matmul %0, %111, %cst_70 {dimension_numbers = #tpu.dot_dimension_numbers<[1], [1], [0], [0], [0, 0, 1, 0], [], []>} : vector<16x32xf32>, vector<8x32xf32>, vector<16x8xf32> -> vector<16x8xf32>
    %cst_71 = arith.constant dense<0.000000e+00> : vector<16x8xf32>
    %119 = tpu.matmul %0, %113, %cst_71 {dimension_numbers = #tpu.dot_dimension_numbers<[1], [1], [0], [0], [0, 0, 1, 0], [], []>} : vector<16x32xf32>, vector<8x32xf32>, vector<16x8xf32> -> vector<16x8xf32>
    %cst_72 = arith.constant dense<0.000000e+00> : vector<16x8xf32>
    %120 = tpu.matmul %0, %115, %cst_72 {dimension_numbers = #tpu.dot_dimension_numbers<[1], [1], [0], [0], [0, 0, 1, 0], [], []>} : vector<16x32xf32>, vector<8x32xf32>, vector<16x8xf32> -> vector<16x8xf32>
    "tpu.trace_stop"() : () -> ()
    %121 = vector.shape_cast %118 : vector<16x8xf32> to vector<2x8x8xf32>
    %122 = vector.shape_cast %119 : vector<16x8xf32> to vector<2x8x8xf32>
    %123 = vector.shape_cast %120 : vector<16x8xf32> to vector<2x8x8xf32>
    "tpu.trace_start"() <{level = 10 : i32, message = "bqd,bkd->bqk"}> : () -> ()
    %cst_73 = arith.constant dense<0.000000e+00> : vector<2x8x8xf32>
    %124 = tpu.matmul %121, %122, %cst_73 {dimension_numbers = #tpu.dot_dimension_numbers<[2], [2], [1], [1], [0, 0, 0, 1, 1, 1], [0], [0]>} : vector<2x8x8xf32>, vector<2x8x8xf32>, vector<2x8x8xf32> -> vector<2x8x8xf32>
    "tpu.trace_stop"() : () -> ()
    %cst_74 = arith.constant 0.353553385 : f32
    %125 = vector.broadcast %cst_74 : f32 to vector<2x8x8xf32>
    %126 = arith.mulf %124, %125 : vector<2x8x8xf32>
    %127 = vector.broadcast %2 : vector<2x1x8xf32> to vector<2x8x8xf32>
    %128 = arith.addf %126, %127 : vector<2x8x8xf32>
    %cst_75 = arith.constant dense<0xFF800000> : vector<2x8xf32>
    %129 = vector.multi_reduction <maximumf>, %128, %cst_75 [2] : vector<2x8x8xf32> to vector<2x8xf32>
    %130 = vector.shape_cast %129 : vector<2x8xf32> to vector<2x8x1xf32>
    %131 = vector.broadcast %130 : vector<2x8x1xf32> to vector<2x8x8xf32>
    %132 = arith.subf %128, %131 : vector<2x8x8xf32>
    %133 = math.exp %132 : vector<2x8x8xf32>
    %cst_76 = arith.constant dense<0.000000e+00> : vector<2x8xf32>
    %134 = vector.multi_reduction <add>, %133, %cst_76 [2] : vector<2x8x8xf32> to vector<2x8xf32>
    %135 = vector.shape_cast %134 : vector<2x8xf32> to vector<2x8x1xf32>
    %136 = tpu.reciprocal %135 : vector<2x8x1xf32> -> vector<2x8x1xf32>
    %137 = vector.broadcast %136 : vector<2x8x1xf32> to vector<2x8x8xf32>
    %138 = arith.mulf %133, %137 : vector<2x8x8xf32>
    "tpu.trace_start"() <{level = 10 : i32, message = "bqk,bkd->bqd"}> : () -> ()
    %cst_77 = arith.constant dense<0.000000e+00> : vector<2x8x8xf32>
    %139 = tpu.matmul %138, %123, %cst_77 {dimension_numbers = #tpu.dot_dimension_numbers<[2], [1], [1], [2], [0, 0, 0, 1, 1, 2], [0], [0]>} : vector<2x8x8xf32>, vector<2x8x8xf32>, vector<2x8x8xf32> -> vector<2x8x8xf32>
    "tpu.trace_stop"() : () -> ()
    %140 = vector.shape_cast %139 : vector<2x8x8xf32> to vector<16x8xf32>
    %cst_78 = arith.constant dense<0.000000e+00> : vector<16x32xf32>
    %141 = tpu.matmul %140, %117, %cst_78 {dimension_numbers = #tpu.dot_dimension_numbers<[1], [0], [0], [1], [0, 0, 1, 1], [], []>} : vector<16x8xf32>, vector<8x32xf32>, vector<16x32xf32> -> vector<16x32xf32>
    %142 = arith.addf %109, %141 : vector<16x32xf32>
    %143 = vector.shape_cast %39 : vector<2x8x8xf32> to vector<1x2x8x8xf32>
    %144 = vector.shape_cast %72 : vector<2x8x8xf32> to vector<1x2x8x8xf32>
    %145 = vector.shape_cast %105 : vector<2x8x8xf32> to vector<1x2x8x8xf32>
    %146 = vector.shape_cast %138 : vector<2x8x8xf32> to vector<1x2x8x8xf32>
    %147 = tpu.concatenate %143, %144, %145, %146 in 0 : vector<1x2x8x8xf32>, vector<1x2x8x8xf32>, vector<1x2x8x8xf32>, vector<1x2x8x8xf32> -> vector<4x2x8x8xf32>
    %c0_79 = arith.constant 0 : index
    %c0_80 = arith.constant 0 : index
    %c0_81 = arith.constant 0 : index
    %c0_82 = arith.constant 0 : index
    %c0_83 = arith.constant 0 : index
    %148 = vector.load %arg3[%c0_79, %c0_80, %c0_81, %c0_82, %c0_83] : memref<2x4x2x8x8xf32, #tpu.memory_space<vmem>>, vector<1x4x2x8x8xf32>
    %149 = vector.shape_cast %148 : vector<1x4x2x8x8xf32> to vector<4x2x8x8xf32>
    %150 = vector.shape_cast %147 : vector<4x2x8x8xf32> to vector<1x4x2x8x8xf32>
    tpu.vector_store %arg3[%c0_79, %c0_80, %c0_81, %c0_82, %c0_83], %150 {strides = array<i32>} : memref<2x4x2x8x8xf32, #tpu.memory_space<vmem>>, vector<1x4x2x8x8xf32>,
    %cst_84 = arith.constant dense<0.000000e+00> : vector<16xf32>
    %151 = vector.multi_reduction <add>, %142, %cst_84 [1] : vector<16x32xf32> to vector<16xf32>
    %152 = vector.shape_cast %151 : vector<16xf32> to vector<16x1xf32>
    %cst_85 = arith.constant 3.200000e+01 : f32
    %153 = vector.broadcast %cst_85 : f32 to vector<16x1xf32>
    %154 = arith.divf %152, %153 : vector<16x1xf32>
    %155 = vector.broadcast %154 : vector<16x1xf32> to vector<16x32xf32>
    %156 = arith.subf %142, %155 : vector<16x32xf32>
    %157 = arith.mulf %156, %156 : vector<16x32xf32>
    %cst_86 = arith.constant dense<0.000000e+00> : vector<16xf32>
    %158 = vector.multi_reduction <add>, %157, %cst_86 [1] : vector<16x32xf32> to vector<16xf32>
    %159 = vector.shape_cast %158 : vector<16xf32> to vector<16x1xf32>
    %cst_87 = arith.constant 3.200000e+01 : f32
    %160 = vector.broadcast %cst_87 : f32 to vector<16x1xf32>
    %161 = arith.divf %159, %160 : vector<16x1xf32>
    %162 = vector.broadcast %154 : vector<16x1xf32> to vector<16x32xf32>
    %163 = arith.subf %142, %162 : vector<16x32xf32>
    %cst_88 = arith.constant 9.99999974E-6 : f32
    %164 = vector.broadcast %cst_88 : f32 to vector<16x1xf32>
    %165 = arith.addf %161, %164 : vector<16x1xf32>
    %166 = math.rsqrt %165 : vector<16x1xf32>
    %167 = vector.broadcast %166 : vector<16x1xf32> to vector<16x32xf32>
    %168 = arith.mulf %163, %167 : vector<16x32xf32>
    %169 = vector.broadcast %4 : vector<1x32xf32> to vector<16x32xf32>
    %170 = arith.mulf %168, %169 : vector<16x32xf32>
    %171 = vector.broadcast %6 : vector<1x32xf32> to vector<16x32xf32>
    %172 = arith.addf %170, %171 : vector<16x32xf32>
    %c0_89 = arith.constant 0 : index
    %c128 = arith.constant 128 : index
    %c0_90 = arith.constant 0 : index
    %173 = vector.load %arg1[%c0_89, %c128, %c0_90] : memref<2x256x128xf32, #tpu.memory_space<vmem>>, vector<1x32x64xf32>
    %174 = vector.shape_cast %173 : vector<1x32x64xf32> to vector<32x64xf32>
    %c0_91 = arith.constant 0 : index
    %c160 = arith.constant 160 : index
    %c0_92 = arith.constant 0 : index
    %175 = vector.load %arg1[%c0_91, %c160, %c0_92] : memref<2x256x128xf32, #tpu.memory_space<vmem>>, vector<1x64x32xf32>
    %176 = vector.shape_cast %175 : vector<1x64x32xf32> to vector<64x32xf32>
    %cst_93 = arith.constant dense<0.000000e+00> : vector<16x64xf32>
    %177 = tpu.matmul %172, %174, %cst_93 {dimension_numbers = #tpu.dot_dimension_numbers<[1], [0], [0], [1], [0, 0, 1, 1], [], []>} : vector<16x32xf32>, vector<32x64xf32>, vector<16x64xf32> -> vector<16x64xf32>
    %178 = vector.broadcast %8 : vector<1x64xf32> to vector<16x64xf32>
    %179 = arith.addf %177, %178 : vector<16x64xf32>
    %cst_94 = arith.constant 0.000000e+00 : f32
    %180 = vector.broadcast %cst_94 : f32 to vector<16x64xf32>
    %181 = arith.maximumf %179, %180 : vector<16x64xf32>
    %cst_95 = arith.constant dense<0.000000e+00> : vector<16x32xf32>
    %182 = tpu.matmul %181, %176, %cst_95 {dimension_numbers = #tpu.dot_dimension_numbers<[1], [0], [0], [1], [0, 0, 1, 1], [], []>} : vector<16x64xf32>, vector<64x32xf32>, vector<16x32xf32> -> vector<16x32xf32>
    %183 = vector.broadcast %10 : vector<1x32xf32> to vector<16x32xf32>
    %184 = arith.addf %182, %183 : vector<16x32xf32>
    %185 = arith.addf %184, %172 : vector<16x32xf32>
    %cst_96 = arith.constant dense<0.000000e+00> : vector<16xf32>
    %186 = vector.multi_reduction <add>, %185, %cst_96 [1] : vector<16x32xf32> to vector<16xf32>
    %187 = vector.shape_cast %186 : vector<16xf32> to vector<16x1xf32>
    %cst_97 = arith.constant 3.200000e+01 : f32
    %188 = vector.broadcast %cst_97 : f32 to vector<16x1xf32>
    %189 = arith.divf %187, %188 : vector<16x1xf32>
    %190 = vector.broadcast %189 : vector<16x1xf32> to vector<16x32xf32>
    %191 = arith.subf %185, %190 : vector<16x32xf32>
    %192 = arith.mulf %191, %191 : vector<16x32xf32>
    %cst_98 = arith.constant dense<0.000000e+00> : vector<16xf32>
    %193 = vector.multi_reduction <add>, %192, %cst_98 [1] : vector<16x32xf32> to vector<16xf32>
    %194 = vector.shape_cast %193 : vector<16xf32> to vector<16x1xf32>
    %cst_99 = arith.constant 3.200000e+01 : f32
    %195 = vector.broadcast %cst_99 : f32 to vector<16x1xf32>
    %196 = arith.divf %194, %195 : vector<16x1xf32>
    %197 = vector.broadcast %189 : vector<16x1xf32> to vector<16x32xf32>
    %198 = arith.subf %185, %197 : vector<16x32xf32>
    %cst_100 = arith.constant 9.99999974E-6 : f32
    %199 = vector.broadcast %cst_100 : f32 to vector<16x1xf32>
    %200 = arith.addf %196, %199 : vector<16x1xf32>
    %201 = math.rsqrt %200 : vector<16x1xf32>
    %202 = vector.broadcast %201 : vector<16x1xf32> to vector<16x32xf32>
    %203 = arith.mulf %198, %202 : vector<16x32xf32>
    %204 = vector.broadcast %4 : vector<1x32xf32> to vector<16x32xf32>
    %205 = arith.mulf %203, %204 : vector<16x32xf32>
    %206 = vector.broadcast %6 : vector<1x32xf32> to vector<16x32xf32>
    %207 = arith.addf %205, %206 : vector<16x32xf32>
    %208 = math.absf %207 : vector<16x32xf32>
    %cst_101 = arith.constant 0x7F800000 : f32
    %209 = vector.broadcast %cst_101 : f32 to vector<16x32xf32>
    %210 = arith.cmpf olt, %208, %209 : vector<16x32xf32>
    %cst_102 = arith.constant 0.000000e+00 : f32
    %cst_103 = arith.constant 1.000000e+00 : f32
    %211 = vector.broadcast %cst_102 : f32 to vector<16x32xf32>
    %212 = vector.broadcast %cst_103 : f32 to vector<16x32xf32>
    %213 = arith.select %210, %211, %212 : vector<16x32xi1>, vector<16x32xf32>
    %cst_104 = arith.constant dense<0xFF800000> : vector<16xf32>
    %214 = vector.multi_reduction <maximumf>, %213, %cst_104 [1] : vector<16x32xf32> to vector<16xf32>
    %215 = vector.shape_cast %214 : vector<16xf32> to vector<16x1xf32>
    %cst_105 = arith.constant dense<0xFF800000> : vector<1xf32>
    %216 = vector.multi_reduction <maximumf>, %215, %cst_105 [0] : vector<16x1xf32> to vector<1xf32>
    %217 = vector.shape_cast %216 : vector<1xf32> to vector<1x1xf32>
    %cst_106 = arith.constant 0.000000e+00 : f32
    %218 = vector.broadcast %cst_106 : f32 to vector<1x1xf32>
    %219 = arith.cmpf ogt, %217, %218 : vector<1x1xf32>
    %cst_107 = arith.constant -3.40282347E+38 : f32
    %cst_108 = arith.constant 3.40282347E+38 : f32
    %220 = vector.broadcast %cst_107 : f32 to vector<16x32xf32>
    %221 = arith.maximumf %220, %207 : vector<16x32xf32>
    %222 = vector.broadcast %cst_108 : f32 to vector<16x32xf32>
    %223 = arith.minimumf %222, %221 : vector<16x32xf32>
    %224 = vector.shape_cast %219 : vector<1x1xi1> to vector<1x1xi1>
    %225 = vector.broadcast %224 : vector<1x1xi1> to vector<16x32xi1>
    %226 = arith.select %225, %223, %207 : vector<16x32xi1>, vector<16x32xf32>
    %c1 = arith.constant 1 : index
    %c224_109 = arith.constant 224 : index
    %c0_110 = arith.constant 0 : index
    %227 = vector.load %arg1[%c1, %c224_109, %c0_110] : memref<2x256x128xf32, #tpu.memory_space<vmem>>, vector<1x1x32xf32>
    %228 = vector.shape_cast %227 : vector<1x1x32xf32> to vector<1x32xf32>
    %c1_111 = arith.constant 1 : index
    %c232_112 = arith.constant 232 : index
    %c0_113 = arith.constant 0 : index
    %229 = vector.load %arg1[%c1_111, %c232_112, %c0_113] : memref<2x256x128xf32, #tpu.memory_space<vmem>>, vector<1x1x32xf32>
    %230 = vector.shape_cast %229 : vector<1x1x32xf32> to vector<1x32xf32>
    %c1_114 = arith.constant 1 : index
    %c240_115 = arith.constant 240 : index
    %c0_116 = arith.constant 0 : index
    %231 = vector.load %arg1[%c1_114, %c240_115, %c0_116] : memref<2x256x128xf32, #tpu.memory_space<vmem>>, vector<1x1x64xf32>
    %232 = vector.shape_cast %231 : vector<1x1x64xf32> to vector<1x64xf32>
    %c1_117 = arith.constant 1 : index
    %c248_118 = arith.constant 248 : index
    %c0_119 = arith.constant 0 : index
    %233 = vector.load %arg1[%c1_117, %c248_118, %c0_119] : memref<2x256x128xf32, #tpu.memory_space<vmem>>, vector<1x1x32xf32>
    %234 = vector.shape_cast %233 : vector<1x1x32xf32> to vector<1x32xf32>
    %c1_120 = arith.constant 1 : index
    %c0_121 = arith.constant 0 : index
    %c0_122 = arith.constant 0 : index
    %235 = vector.load %arg1[%c1_120, %c0_121, %c0_122] : memref<2x256x128xf32, #tpu.memory_space<vmem>>, vector<1x8x32xf32>
    %236 = vector.shape_cast %235 : vector<1x8x32xf32> to vector<8x32xf32>
    %c1_123 = arith.constant 1 : index
    %c8_124 = arith.constant 8 : index
    %c0_125 = arith.constant 0 : index
    %237 = vector.load %arg1[%c1_123, %c8_124, %c0_125] : memref<2x256x128xf32, #tpu.memory_space<vmem>>, vector<1x8x32xf32>
    %238 = vector.shape_cast %237 : vector<1x8x32xf32> to vector<8x32xf32>
    %c1_126 = arith.constant 1 : index
    %c16_127 = arith.constant 16 : index
    %c0_128 = arith.constant 0 : index
    %239 = vector.load %arg1[%c1_126, %c16_127, %c0_128] : memref<2x256x128xf32, #tpu.memory_space<vmem>>, vector<1x8x32xf32>
    %240 = vector.shape_cast %239 : vector<1x8x32xf32> to vector<8x32xf32>
    %c1_129 = arith.constant 1 : index
    %c24_130 = arith.constant 24 : index
    %c0_131 = arith.constant 0 : index
    %241 = vector.load %arg1[%c1_129, %c24_130, %c0_131] : memref<2x256x128xf32, #tpu.memory_space<vmem>>, vector<1x8x32xf32>
    %242 = vector.shape_cast %241 : vector<1x8x32xf32> to vector<8x32xf32>
    "tpu.trace_start"() <{level = 10 : i32, message = "ne,de->nd"}> : () -> ()
    %cst_132 = arith.constant dense<0.000000e+00> : vector<16x8xf32>
    %243 = tpu.matmul %226, %236, %cst_132 {dimension_numbers = #tpu.dot_dimension_numbers<[1], [1], [0], [0], [0, 0, 1, 0], [], []>} : vector<16x32xf32>, vector<8x32xf32>, vector<16x8xf32> -> vector<16x8xf32>
    %cst_133 = arith.constant dense<0.000000e+00> : vector<16x8xf32>
    %244 = tpu.matmul %226, %238, %cst_133 {dimension_numbers = #tpu.dot_dimension_numbers<[1], [1], [0], [0], [0, 0, 1, 0], [], []>} : vector<16x32xf32>, vector<8x32xf32>, vector<16x8xf32> -> vector<16x8xf32>
    %cst_134 = arith.constant dense<0.000000e+00> : vector<16x8xf32>
    %245 = tpu.matmul %226, %240, %cst_134 {dimension_numbers = #tpu.dot_dimension_numbers<[1], [1], [0], [0], [0, 0, 1, 0], [], []>} : vector<16x32xf32>, vector<8x32xf32>, vector<16x8xf32> -> vector<16x8xf32>
    "tpu.trace_stop"() : () -> ()
    %246 = vector.shape_cast %243 : vector<16x8xf32> to vector<2x8x8xf32>
    %247 = vector.shape_cast %244 : vector<16x8xf32> to vector<2x8x8xf32>
    %248 = vector.shape_cast %245 : vector<16x8xf32> to vector<2x8x8xf32>
    "tpu.trace_start"() <{level = 10 : i32, message = "bqd,bkd->bqk"}> : () -> ()
    %cst_135 = arith.constant dense<0.000000e+00> : vector<2x8x8xf32>
    %249 = tpu.matmul %246, %247, %cst_135 {dimension_numbers = #tpu.dot_dimension_numbers<[2], [2], [1], [1], [0, 0, 0, 1, 1, 1], [0], [0]>} : vector<2x8x8xf32>, vector<2x8x8xf32>, vector<2x8x8xf32> -> vector<2x8x8xf32>
    "tpu.trace_stop"() : () -> ()
    %cst_136 = arith.constant 0.353553385 : f32
    %250 = vector.broadcast %cst_136 : f32 to vector<2x8x8xf32>
    %251 = arith.mulf %249, %250 : vector<2x8x8xf32>
    %252 = vector.broadcast %2 : vector<2x1x8xf32> to vector<2x8x8xf32>
    %253 = arith.addf %251, %252 : vector<2x8x8xf32>
    %cst_137 = arith.constant dense<0xFF800000> : vector<2x8xf32>
    %254 = vector.multi_reduction <maximumf>, %253, %cst_137 [2] : vector<2x8x8xf32> to vector<2x8xf32>
    %255 = vector.shape_cast %254 : vector<2x8xf32> to vector<2x8x1xf32>
    %256 = vector.broadcast %255 : vector<2x8x1xf32> to vector<2x8x8xf32>
    %257 = arith.subf %253, %256 : vector<2x8x8xf32>
    %258 = math.exp %257 : vector<2x8x8xf32>
    %cst_138 = arith.constant dense<0.000000e+00> : vector<2x8xf32>
    %259 = vector.multi_reduction <add>, %258, %cst_138 [2] : vector<2x8x8xf32> to vector<2x8xf32>
    %260 = vector.shape_cast %259 : vector<2x8xf32> to vector<2x8x1xf32>
    %261 = tpu.reciprocal %260 : vector<2x8x1xf32> -> vector<2x8x1xf32>
    %262 = vector.broadcast %261 : vector<2x8x1xf32> to vector<2x8x8xf32>
    %263 = arith.mulf %258, %262 : vector<2x8x8xf32>
    "tpu.trace_start"() <{level = 10 : i32, message = "bqk,bkd->bqd"}> : () -> ()
    %cst_139 = arith.constant dense<0.000000e+00> : vector<2x8x8xf32>
    %264 = tpu.matmul %263, %248, %cst_139 {dimension_numbers = #tpu.dot_dimension_numbers<[2], [1], [1], [2], [0, 0, 0, 1, 1, 2], [0], [0]>} : vector<2x8x8xf32>, vector<2x8x8xf32>, vector<2x8x8xf32> -> vector<2x8x8xf32>
    "tpu.trace_stop"() : () -> ()
    %265 = vector.shape_cast %264 : vector<2x8x8xf32> to vector<16x8xf32>
    %cst_140 = arith.constant dense<0.000000e+00> : vector<16x32xf32>
    %266 = tpu.matmul %265, %242, %cst_140 {dimension_numbers = #tpu.dot_dimension_numbers<[1], [0], [0], [1], [0, 0, 1, 1], [], []>} : vector<16x8xf32>, vector<8x32xf32>, vector<16x32xf32> -> vector<16x32xf32>
    %267 = arith.addf %226, %266 : vector<16x32xf32>
    %c1_141 = arith.constant 1 : index
    %c32_142 = arith.constant 32 : index
    %c0_143 = arith.constant 0 : index
    %268 = vector.load %arg1[%c1_141, %c32_142, %c0_143] : memref<2x256x128xf32, #tpu.memory_space<vmem>>, vector<1x8x32xf32>
    %269 = vector.shape_cast %268 : vector<1x8x32xf32> to vector<8x32xf32>
    %c1_144 = arith.constant 1 : index
    %c40_145 = arith.constant 40 : index
    %c0_146 = arith.constant 0 : index
    %270 = vector.load %arg1[%c1_144, %c40_145, %c0_146] : memref<2x256x128xf32, #tpu.memory_space<vmem>>, vector<1x8x32xf32>
    %271 = vector.shape_cast %270 : vector<1x8x32xf32> to vector<8x32xf32>
    %c1_147 = arith.constant 1 : index
    %c48_148 = arith.constant 48 : index
    %c0_149 = arith.constant 0 : index
    %272 = vector.load %arg1[%c1_147, %c48_148, %c0_149] : memref<2x256x128xf32, #tpu.memory_space<vmem>>, vector<1x8x32xf32>
    %273 = vector.shape_cast %272 : vector<1x8x32xf32> to vector<8x32xf32>
    %c1_150 = arith.constant 1 : index
    %c56_151 = arith.constant 56 : index
    %c0_152 = arith.constant 0 : index
    %274 = vector.load %arg1[%c1_150, %c56_151, %c0_152] : memref<2x256x128xf32, #tpu.memory_space<vmem>>, vector<1x8x32xf32>
    %275 = vector.shape_cast %274 : vector<1x8x32xf32> to vector<8x32xf32>
    "tpu.trace_start"() <{level = 10 : i32, message = "ne,de->nd"}> : () -> ()
    %cst_153 = arith.constant dense<0.000000e+00> : vector<16x8xf32>
    %276 = tpu.matmul %226, %269, %cst_153 {dimension_numbers = #tpu.dot_dimension_numbers<[1], [1], [0], [0], [0, 0, 1, 0], [], []>} : vector<16x32xf32>, vector<8x32xf32>, vector<16x8xf32> -> vector<16x8xf32>
    %cst_154 = arith.constant dense<0.000000e+00> : vector<16x8xf32>
    %277 = tpu.matmul %226, %271, %cst_154 {dimension_numbers = #tpu.dot_dimension_numbers<[1], [1], [0], [0], [0, 0, 1, 0], [], []>} : vector<16x32xf32>, vector<8x32xf32>, vector<16x8xf32> -> vector<16x8xf32>
    %cst_155 = arith.constant dense<0.000000e+00> : vector<16x8xf32>
    %278 = tpu.matmul %226, %273, %cst_155 {dimension_numbers = #tpu.dot_dimension_numbers<[1], [1], [0], [0], [0, 0, 1, 0], [], []>} : vector<16x32xf32>, vector<8x32xf32>, vector<16x8xf32> -> vector<16x8xf32>
    "tpu.trace_stop"() : () -> ()
    %279 = vector.shape_cast %276 : vector<16x8xf32> to vector<2x8x8xf32>
    %280 = vector.shape_cast %277 : vector<16x8xf32> to vector<2x8x8xf32>
    %281 = vector.shape_cast %278 : vector<16x8xf32> to vector<2x8x8xf32>
    "tpu.trace_start"() <{level = 10 : i32, message = "bqd,bkd->bqk"}> : () -> ()
    %cst_156 = arith.constant dense<0.000000e+00> : vector<2x8x8xf32>
    %282 = tpu.matmul %279, %280, %cst_156 {dimension_numbers = #tpu.dot_dimension_numbers<[2], [2], [1], [1], [0, 0, 0, 1, 1, 1], [0], [0]>} : vector<2x8x8xf32>, vector<2x8x8xf32>, vector<2x8x8xf32> -> vector<2x8x8xf32>
    "tpu.trace_stop"() : () -> ()
    %cst_157 = arith.constant 0.353553385 : f32
    %283 = vector.broadcast %cst_157 : f32 to vector<2x8x8xf32>
    %284 = arith.mulf %282, %283 : vector<2x8x8xf32>
    %285 = vector.broadcast %2 : vector<2x1x8xf32> to vector<2x8x8xf32>
    %286 = arith.addf %284, %285 : vector<2x8x8xf32>
    %cst_158 = arith.constant dense<0xFF800000> : vector<2x8xf32>
    %287 = vector.multi_reduction <maximumf>, %286, %cst_158 [2] : vector<2x8x8xf32> to vector<2x8xf32>
    %288 = vector.shape_cast %287 : vector<2x8xf32> to vector<2x8x1xf32>
    %289 = vector.broadcast %288 : vector<2x8x1xf32> to vector<2x8x8xf32>
    %290 = arith.subf %286, %289 : vector<2x8x8xf32>
    %291 = math.exp %290 : vector<2x8x8xf32>
    %cst_159 = arith.constant dense<0.000000e+00> : vector<2x8xf32>
    %292 = vector.multi_reduction <add>, %291, %cst_159 [2] : vector<2x8x8xf32> to vector<2x8xf32>
    %293 = vector.shape_cast %292 : vector<2x8xf32> to vector<2x8x1xf32>
    %294 = tpu.reciprocal %293 : vector<2x8x1xf32> -> vector<2x8x1xf32>
    %295 = vector.broadcast %294 : vector<2x8x1xf32> to vector<2x8x8xf32>
    %296 = arith.mulf %291, %295 : vector<2x8x8xf32>
    "tpu.trace_start"() <{level = 10 : i32, message = "bqk,bkd->bqd"}> : () -> ()
    %cst_160 = arith.constant dense<0.000000e+00> : vector<2x8x8xf32>
    %297 = tpu.matmul %296, %281, %cst_160 {dimension_numbers = #tpu.dot_dimension_numbers<[2], [1], [1], [2], [0, 0, 0, 1, 1, 2], [0], [0]>} : vector<2x8x8xf32>, vector<2x8x8xf32>, vector<2x8x8xf32> -> vector<2x8x8xf32>
    "tpu.trace_stop"() : () -> ()
    %298 = vector.shape_cast %297 : vector<2x8x8xf32> to vector<16x8xf32>
    %cst_161 = arith.constant dense<0.000000e+00> : vector<16x32xf32>
    %299 = tpu.matmul %298, %275, %cst_161 {dimension_numbers = #tpu.dot_dimension_numbers<[1], [0], [0], [1], [0, 0, 1, 1], [], []>} : vector<16x8xf32>, vector<8x32xf32>, vector<16x32xf32> -> vector<16x32xf32>
    %300 = arith.addf %267, %299 : vector<16x32xf32>
    %c1_162 = arith.constant 1 : index
    %c64_163 = arith.constant 64 : index
    %c0_164 = arith.constant 0 : index
    %301 = vector.load %arg1[%c1_162, %c64_163, %c0_164] : memref<2x256x128xf32, #tpu.memory_space<vmem>>, vector<1x8x32xf32>
    %302 = vector.shape_cast %301 : vector<1x8x32xf32> to vector<8x32xf32>
    %c1_165 = arith.constant 1 : index
    %c72_166 = arith.constant 72 : index
    %c0_167 = arith.constant 0 : index
    %303 = vector.load %arg1[%c1_165, %c72_166, %c0_167] : memref<2x256x128xf32, #tpu.memory_space<vmem>>, vector<1x8x32xf32>
    %304 = vector.shape_cast %303 : vector<1x8x32xf32> to vector<8x32xf32>
    %c1_168 = arith.constant 1 : index
    %c80_169 = arith.constant 80 : index
    %c0_170 = arith.constant 0 : index
    %305 = vector.load %arg1[%c1_168, %c80_169, %c0_170] : memref<2x256x128xf32, #tpu.memory_space<vmem>>, vector<1x8x32xf32>
    %306 = vector.shape_cast %305 : vector<1x8x32xf32> to vector<8x32xf32>
    %c1_171 = arith.constant 1 : index
    %c88_172 = arith.constant 88 : index
    %c0_173 = arith.constant 0 : index
    %307 = vector.load %arg1[%c1_171, %c88_172, %c0_173] : memref<2x256x128xf32, #tpu.memory_space<vmem>>, vector<1x8x32xf32>
    %308 = vector.shape_cast %307 : vector<1x8x32xf32> to vector<8x32xf32>
    "tpu.trace_start"() <{level = 10 : i32, message = "ne,de->nd"}> : () -> ()
    %cst_174 = arith.constant dense<0.000000e+00> : vector<16x8xf32>
    %309 = tpu.matmul %226, %302, %cst_174 {dimension_numbers = #tpu.dot_dimension_numbers<[1], [1], [0], [0], [0, 0, 1, 0], [], []>} : vector<16x32xf32>, vector<8x32xf32>, vector<16x8xf32> -> vector<16x8xf32>
    %cst_175 = arith.constant dense<0.000000e+00> : vector<16x8xf32>
    %310 = tpu.matmul %226, %304, %cst_175 {dimension_numbers = #tpu.dot_dimension_numbers<[1], [1], [0], [0], [0, 0, 1, 0], [], []>} : vector<16x32xf32>, vector<8x32xf32>, vector<16x8xf32> -> vector<16x8xf32>
    %cst_176 = arith.constant dense<0.000000e+00> : vector<16x8xf32>
    %311 = tpu.matmul %226, %306, %cst_176 {dimension_numbers = #tpu.dot_dimension_numbers<[1], [1], [0], [0], [0, 0, 1, 0], [], []>} : vector<16x32xf32>, vector<8x32xf32>, vector<16x8xf32> -> vector<16x8xf32>
    "tpu.trace_stop"() : () -> ()
    %312 = vector.shape_cast %309 : vector<16x8xf32> to vector<2x8x8xf32>
    %313 = vector.shape_cast %310 : vector<16x8xf32> to vector<2x8x8xf32>
    %314 = vector.shape_cast %311 : vector<16x8xf32> to vector<2x8x8xf32>
    "tpu.trace_start"() <{level = 10 : i32, message = "bqd,bkd->bqk"}> : () -> ()
    %cst_177 = arith.constant dense<0.000000e+00> : vector<2x8x8xf32>
    %315 = tpu.matmul %312, %313, %cst_177 {dimension_numbers = #tpu.dot_dimension_numbers<[2], [2], [1], [1], [0, 0, 0, 1, 1, 1], [0], [0]>} : vector<2x8x8xf32>, vector<2x8x8xf32>, vector<2x8x8xf32> -> vector<2x8x8xf32>
    "tpu.trace_stop"() : () -> ()
    %cst_178 = arith.constant 0.353553385 : f32
    %316 = vector.broadcast %cst_178 : f32 to vector<2x8x8xf32>
    %317 = arith.mulf %315, %316 : vector<2x8x8xf32>
    %318 = vector.broadcast %2 : vector<2x1x8xf32> to vector<2x8x8xf32>
    %319 = arith.addf %317, %318 : vector<2x8x8xf32>
    %cst_179 = arith.constant dense<0xFF800000> : vector<2x8xf32>
    %320 = vector.multi_reduction <maximumf>, %319, %cst_179 [2] : vector<2x8x8xf32> to vector<2x8xf32>
    %321 = vector.shape_cast %320 : vector<2x8xf32> to vector<2x8x1xf32>
    %322 = vector.broadcast %321 : vector<2x8x1xf32> to vector<2x8x8xf32>
    %323 = arith.subf %319, %322 : vector<2x8x8xf32>
    %324 = math.exp %323 : vector<2x8x8xf32>
    %cst_180 = arith.constant dense<0.000000e+00> : vector<2x8xf32>
    %325 = vector.multi_reduction <add>, %324, %cst_180 [2] : vector<2x8x8xf32> to vector<2x8xf32>
    %326 = vector.shape_cast %325 : vector<2x8xf32> to vector<2x8x1xf32>
    %327 = tpu.reciprocal %326 : vector<2x8x1xf32> -> vector<2x8x1xf32>
    %328 = vector.broadcast %327 : vector<2x8x1xf32> to vector<2x8x8xf32>
    %329 = arith.mulf %324, %328 : vector<2x8x8xf32>
    "tpu.trace_start"() <{level = 10 : i32, message = "bqk,bkd->bqd"}> : () -> ()
    %cst_181 = arith.constant dense<0.000000e+00> : vector<2x8x8xf32>
    %330 = tpu.matmul %329, %314, %cst_181 {dimension_numbers = #tpu.dot_dimension_numbers<[2], [1], [1], [2], [0, 0, 0, 1, 1, 2], [0], [0]>} : vector<2x8x8xf32>, vector<2x8x8xf32>, vector<2x8x8xf32> -> vector<2x8x8xf32>
    "tpu.trace_stop"() : () -> ()
    %331 = vector.shape_cast %330 : vector<2x8x8xf32> to vector<16x8xf32>
    %cst_182 = arith.constant dense<0.000000e+00> : vector<16x32xf32>
    %332 = tpu.matmul %331, %308, %cst_182 {dimension_numbers = #tpu.dot_dimension_numbers<[1], [0], [0], [1], [0, 0, 1, 1], [], []>} : vector<16x8xf32>, vector<8x32xf32>, vector<16x32xf32> -> vector<16x32xf32>
    %333 = arith.addf %300, %332 : vector<16x32xf32>
    %c1_183 = arith.constant 1 : index
    %c96_184 = arith.constant 96 : index
    %c0_185 = arith.constant 0 : index
    %334 = vector.load %arg1[%c1_183, %c96_184, %c0_185] : memref<2x256x128xf32, #tpu.memory_space<vmem>>, vector<1x8x32xf32>
    %335 = vector.shape_cast %334 : vector<1x8x32xf32> to vector<8x32xf32>
    %c1_186 = arith.constant 1 : index
    %c104_187 = arith.constant 104 : index
    %c0_188 = arith.constant 0 : index
    %336 = vector.load %arg1[%c1_186, %c104_187, %c0_188] : memref<2x256x128xf32, #tpu.memory_space<vmem>>, vector<1x8x32xf32>
    %337 = vector.shape_cast %336 : vector<1x8x32xf32> to vector<8x32xf32>
    %c1_189 = arith.constant 1 : index
    %c112_190 = arith.constant 112 : index
    %c0_191 = arith.constant 0 : index
    %338 = vector.load %arg1[%c1_189, %c112_190, %c0_191] : memref<2x256x128xf32, #tpu.memory_space<vmem>>, vector<1x8x32xf32>
    %339 = vector.shape_cast %338 : vector<1x8x32xf32> to vector<8x32xf32>
    %c1_192 = arith.constant 1 : index
    %c120_193 = arith.constant 120 : index
    %c0_194 = arith.constant 0 : index
    %340 = vector.load %arg1[%c1_192, %c120_193, %c0_194] : memref<2x256x128xf32, #tpu.memory_space<vmem>>, vector<1x8x32xf32>
    %341 = vector.shape_cast %340 : vector<1x8x32xf32> to vector<8x32xf32>
    "tpu.trace_start"() <{level = 10 : i32, message = "ne,de->nd"}> : () -> ()
    %cst_195 = arith.constant dense<0.000000e+00> : vector<16x8xf32>
    %342 = tpu.matmul %226, %335, %cst_195 {dimension_numbers = #tpu.dot_dimension_numbers<[1], [1], [0], [0], [0, 0, 1, 0], [], []>} : vector<16x32xf32>, vector<8x32xf32>, vector<16x8xf32> -> vector<16x8xf32>
    %cst_196 = arith.constant dense<0.000000e+00> : vector<16x8xf32>
    %343 = tpu.matmul %226, %337, %cst_196 {dimension_numbers = #tpu.dot_dimension_numbers<[1], [1], [0], [0], [0, 0, 1, 0], [], []>} : vector<16x32xf32>, vector<8x32xf32>, vector<16x8xf32> -> vector<16x8xf32>
    %cst_197 = arith.constant dense<0.000000e+00> : vector<16x8xf32>
    %344 = tpu.matmul %226, %339, %cst_197 {dimension_numbers = #tpu.dot_dimension_numbers<[1], [1], [0], [0], [0, 0, 1, 0], [], []>} : vector<16x32xf32>, vector<8x32xf32>, vector<16x8xf32> -> vector<16x8xf32>
    "tpu.trace_stop"() : () -> ()
    %345 = vector.shape_cast %342 : vector<16x8xf32> to vector<2x8x8xf32>
    %346 = vector.shape_cast %343 : vector<16x8xf32> to vector<2x8x8xf32>
    %347 = vector.shape_cast %344 : vector<16x8xf32> to vector<2x8x8xf32>
    "tpu.trace_start"() <{level = 10 : i32, message = "bqd,bkd->bqk"}> : () -> ()
    %cst_198 = arith.constant dense<0.000000e+00> : vector<2x8x8xf32>
    %348 = tpu.matmul %345, %346, %cst_198 {dimension_numbers = #tpu.dot_dimension_numbers<[2], [2], [1], [1], [0, 0, 0, 1, 1, 1], [0], [0]>} : vector<2x8x8xf32>, vector<2x8x8xf32>, vector<2x8x8xf32> -> vector<2x8x8xf32>
    "tpu.trace_stop"() : () -> ()
    %cst_199 = arith.constant 0.353553385 : f32
    %349 = vector.broadcast %cst_199 : f32 to vector<2x8x8xf32>
    %350 = arith.mulf %348, %349 : vector<2x8x8xf32>
    %351 = vector.broadcast %2 : vector<2x1x8xf32> to vector<2x8x8xf32>
    %352 = arith.addf %350, %351 : vector<2x8x8xf32>
    %cst_200 = arith.constant dense<0xFF800000> : vector<2x8xf32>
    %353 = vector.multi_reduction <maximumf>, %352, %cst_200 [2] : vector<2x8x8xf32> to vector<2x8xf32>
    %354 = vector.shape_cast %353 : vector<2x8xf32> to vector<2x8x1xf32>
    %355 = vector.broadcast %354 : vector<2x8x1xf32> to vector<2x8x8xf32>
    %356 = arith.subf %352, %355 : vector<2x8x8xf32>
    %357 = math.exp %356 : vector<2x8x8xf32>
    %cst_201 = arith.constant dense<0.000000e+00> : vector<2x8xf32>
    %358 = vector.multi_reduction <add>, %357, %cst_201 [2] : vector<2x8x8xf32> to vector<2x8xf32>
    %359 = vector.shape_cast %358 : vector<2x8xf32> to vector<2x8x1xf32>
    %360 = tpu.reciprocal %359 : vector<2x8x1xf32> -> vector<2x8x1xf32>
    %361 = vector.broadcast %360 : vector<2x8x1xf32> to vector<2x8x8xf32>
    %362 = arith.mulf %357, %361 : vector<2x8x8xf32>
    "tpu.trace_start"() <{level = 10 : i32, message = "bqk,bkd->bqd"}> : () -> ()
    %cst_202 = arith.constant dense<0.000000e+00> : vector<2x8x8xf32>
    %363 = tpu.matmul %362, %347, %cst_202 {dimension_numbers = #tpu.dot_dimension_numbers<[2], [1], [1], [2], [0, 0, 0, 1, 1, 2], [0], [0]>} : vector<2x8x8xf32>, vector<2x8x8xf32>, vector<2x8x8xf32> -> vector<2x8x8xf32>
    "tpu.trace_stop"() : () -> ()
    %364 = vector.shape_cast %363 : vector<2x8x8xf32> to vector<16x8xf32>
    %cst_203 = arith.constant dense<0.000000e+00> : vector<16x32xf32>
    %365 = tpu.matmul %364, %341, %cst_203 {dimension_numbers = #tpu.dot_dimension_numbers<[1], [0], [0], [1], [0, 0, 1, 1], [], []>} : vector<16x8xf32>, vector<8x32xf32>, vector<16x32xf32> -> vector<16x32xf32>
    %366 = arith.addf %333, %365 : vector<16x32xf32>
    %367 = vector.shape_cast %263 : vector<2x8x8xf32> to vector<1x2x8x8xf32>
    %368 = vector.shape_cast %296 : vector<2x8x8xf32> to vector<1x2x8x8xf32>
    %369 = vector.shape_cast %329 : vector<2x8x8xf32> to vector<1x2x8x8xf32>
    %370 = vector.shape_cast %362 : vector<2x8x8xf32> to vector<1x2x8x8xf32>
    %371 = tpu.concatenate %367, %368, %369, %370 in 0 : vector<1x2x8x8xf32>, vector<1x2x8x8xf32>, vector<1x2x8x8xf32>, vector<1x2x8x8xf32> -> vector<4x2x8x8xf32>
    %c1_204 = arith.constant 1 : index
    %c0_205 = arith.constant 0 : index
    %c0_206 = arith.constant 0 : index
    %c0_207 = arith.constant 0 : index
    %c0_208 = arith.constant 0 : index
    %372 = vector.load %arg3[%c1_204, %c0_205, %c0_206, %c0_207, %c0_208] : memref<2x4x2x8x8xf32, #tpu.memory_space<vmem>>, vector<1x4x2x8x8xf32>
    %373 = vector.shape_cast %372 : vector<1x4x2x8x8xf32> to vector<4x2x8x8xf32>
    %374 = vector.shape_cast %371 : vector<4x2x8x8xf32> to vector<1x4x2x8x8xf32>
    tpu.vector_store %arg3[%c1_204, %c0_205, %c0_206, %c0_207, %c0_208], %374 {strides = array<i32>} : memref<2x4x2x8x8xf32, #tpu.memory_space<vmem>>, vector<1x4x2x8x8xf32>,
    %cst_209 = arith.constant dense<0.000000e+00> : vector<16xf32>
    %375 = vector.multi_reduction <add>, %366, %cst_209 [1] : vector<16x32xf32> to vector<16xf32>
    %376 = vector.shape_cast %375 : vector<16xf32> to vector<16x1xf32>
    %cst_210 = arith.constant 3.200000e+01 : f32
    %377 = vector.broadcast %cst_210 : f32 to vector<16x1xf32>
    %378 = arith.divf %376, %377 : vector<16x1xf32>
    %379 = vector.broadcast %378 : vector<16x1xf32> to vector<16x32xf32>
    %380 = arith.subf %366, %379 : vector<16x32xf32>
    %381 = arith.mulf %380, %380 : vector<16x32xf32>
    %cst_211 = arith.constant dense<0.000000e+00> : vector<16xf32>
    %382 = vector.multi_reduction <add>, %381, %cst_211 [1] : vector<16x32xf32> to vector<16xf32>
    %383 = vector.shape_cast %382 : vector<16xf32> to vector<16x1xf32>
    %cst_212 = arith.constant 3.200000e+01 : f32
    %384 = vector.broadcast %cst_212 : f32 to vector<16x1xf32>
    %385 = arith.divf %383, %384 : vector<16x1xf32>
    %386 = vector.broadcast %378 : vector<16x1xf32> to vector<16x32xf32>
    %387 = arith.subf %366, %386 : vector<16x32xf32>
    %cst_213 = arith.constant 9.99999974E-6 : f32
    %388 = vector.broadcast %cst_213 : f32 to vector<16x1xf32>
    %389 = arith.addf %385, %388 : vector<16x1xf32>
    %390 = math.rsqrt %389 : vector<16x1xf32>
    %391 = vector.broadcast %390 : vector<16x1xf32> to vector<16x32xf32>
    %392 = arith.mulf %387, %391 : vector<16x32xf32>
    %393 = vector.broadcast %228 : vector<1x32xf32> to vector<16x32xf32>
    %394 = arith.mulf %392, %393 : vector<16x32xf32>
    %395 = vector.broadcast %230 : vector<1x32xf32> to vector<16x32xf32>
    %396 = arith.addf %394, %395 : vector<16x32xf32>
    %c1_214 = arith.constant 1 : index
    %c128_215 = arith.constant 128 : index
    %c0_216 = arith.constant 0 : index
    %397 = vector.load %arg1[%c1_214, %c128_215, %c0_216] : memref<2x256x128xf32, #tpu.memory_space<vmem>>, vector<1x32x64xf32>
    %398 = vector.shape_cast %397 : vector<1x32x64xf32> to vector<32x64xf32>
    %c1_217 = arith.constant 1 : index
    %c160_218 = arith.constant 160 : index
    %c0_219 = arith.constant 0 : index
    %399 = vector.load %arg1[%c1_217, %c160_218, %c0_219] : memref<2x256x128xf32, #tpu.memory_space<vmem>>, vector<1x64x32xf32>
    %400 = vector.shape_cast %399 : vector<1x64x32xf32> to vector<64x32xf32>
    %cst_220 = arith.constant dense<0.000000e+00> : vector<16x64xf32>
    %401 = tpu.matmul %396, %398, %cst_220 {dimension_numbers = #tpu.dot_dimension_numbers<[1], [0], [0], [1], [0, 0, 1, 1], [], []>} : vector<16x32xf32>, vector<32x64xf32>, vector<16x64xf32> -> vector<16x64xf32>
    %402 = vector.broadcast %232 : vector<1x64xf32> to vector<16x64xf32>
    %403 = arith.addf %401, %402 : vector<16x64xf32>
    %cst_221 = arith.constant 0.000000e+00 : f32
    %404 = vector.broadcast %cst_221 : f32 to vector<16x64xf32>
    %405 = arith.maximumf %403, %404 : vector<16x64xf32>
    %cst_222 = arith.constant dense<0.000000e+00> : vector<16x32xf32>
    %406 = tpu.matmul %405, %400, %cst_222 {dimension_numbers = #tpu.dot_dimension_numbers<[1], [0], [0], [1], [0, 0, 1, 1], [], []>} : vector<16x64xf32>, vector<64x32xf32>, vector<16x32xf32> -> vector<16x32xf32>
    %407 = vector.broadcast %234 : vector<1x32xf32> to vector<16x32xf32>
    %408 = arith.addf %406, %407 : vector<16x32xf32>
    %409 = arith.addf %408, %396 : vector<16x32xf32>
    %cst_223 = arith.constant dense<0.000000e+00> : vector<16xf32>
    %410 = vector.multi_reduction <add>, %409, %cst_223 [1] : vector<16x32xf32> to vector<16xf32>
    %411 = vector.shape_cast %410 : vector<16xf32> to vector<16x1xf32>
    %cst_224 = arith.constant 3.200000e+01 : f32
    %412 = vector.broadcast %cst_224 : f32 to vector<16x1xf32>
    %413 = arith.divf %411, %412 : vector<16x1xf32>
    %414 = vector.broadcast %413 : vector<16x1xf32> to vector<16x32xf32>
    %415 = arith.subf %409, %414 : vector<16x32xf32>
    %416 = arith.mulf %415, %415 : vector<16x32xf32>
    %cst_225 = arith.constant dense<0.000000e+00> : vector<16xf32>
    %417 = vector.multi_reduction <add>, %416, %cst_225 [1] : vector<16x32xf32> to vector<16xf32>
    %418 = vector.shape_cast %417 : vector<16xf32> to vector<16x1xf32>
    %cst_226 = arith.constant 3.200000e+01 : f32
    %419 = vector.broadcast %cst_226 : f32 to vector<16x1xf32>
    %420 = arith.divf %418, %419 : vector<16x1xf32>
    %421 = vector.broadcast %413 : vector<16x1xf32> to vector<16x32xf32>
    %422 = arith.subf %409, %421 : vector<16x32xf32>
    %cst_227 = arith.constant 9.99999974E-6 : f32
    %423 = vector.broadcast %cst_227 : f32 to vector<16x1xf32>
    %424 = arith.addf %420, %423 : vector<16x1xf32>
    %425 = math.rsqrt %424 : vector<16x1xf32>
    %426 = vector.broadcast %425 : vector<16x1xf32> to vector<16x32xf32>
    %427 = arith.mulf %422, %426 : vector<16x32xf32>
    %428 = vector.broadcast %228 : vector<1x32xf32> to vector<16x32xf32>
    %429 = arith.mulf %427, %428 : vector<16x32xf32>
    %430 = vector.broadcast %230 : vector<1x32xf32> to vector<16x32xf32>
    %431 = arith.addf %429, %430 : vector<16x32xf32>
    %432 = math.absf %431 : vector<16x32xf32>
    %cst_228 = arith.constant 0x7F800000 : f32
    %433 = vector.broadcast %cst_228 : f32 to vector<16x32xf32>
    %434 = arith.cmpf olt, %432, %433 : vector<16x32xf32>
    %cst_229 = arith.constant 0.000000e+00 : f32
    %cst_230 = arith.constant 1.000000e+00 : f32
    %435 = vector.broadcast %cst_229 : f32 to vector<16x32xf32>
    %436 = vector.broadcast %cst_230 : f32 to vector<16x32xf32>
    %437 = arith.select %434, %435, %436 : vector<16x32xi1>, vector<16x32xf32>
    %cst_231 = arith.constant dense<0xFF800000> : vector<16xf32>
    %438 = vector.multi_reduction <maximumf>, %437, %cst_231 [1] : vector<16x32xf32> to vector<16xf32>
    %439 = vector.shape_cast %438 : vector<16xf32> to vector<16x1xf32>
    %cst_232 = arith.constant dense<0xFF800000> : vector<1xf32>
    %440 = vector.multi_reduction <maximumf>, %439, %cst_232 [0] : vector<16x1xf32> to vector<1xf32>
    %441 = vector.shape_cast %440 : vector<1xf32> to vector<1x1xf32>
    %cst_233 = arith.constant 0.000000e+00 : f32
    %442 = vector.broadcast %cst_233 : f32 to vector<1x1xf32>
    %443 = arith.cmpf ogt, %441, %442 : vector<1x1xf32>
    %cst_234 = arith.constant -3.40282347E+38 : f32
    %cst_235 = arith.constant 3.40282347E+38 : f32
    %444 = vector.broadcast %cst_234 : f32 to vector<16x32xf32>
    %445 = arith.maximumf %444, %431 : vector<16x32xf32>
    %446 = vector.broadcast %cst_235 : f32 to vector<16x32xf32>
    %447 = arith.minimumf %446, %445 : vector<16x32xf32>
    %448 = vector.shape_cast %443 : vector<1x1xi1> to vector<1x1xi1>
    %449 = vector.broadcast %448 : vector<1x1xi1> to vector<16x32xi1>
    %450 = arith.select %449, %447, %431 : vector<16x32xi1>, vector<16x32xf32>
    %c0_236 = arith.constant 0 : index
    %c0_237 = arith.constant 0 : index
    %451 = vector.load %arg2[%c0_236, %c0_237] : memref<16x32xf32, #tpu.memory_space<vmem>>, vector<16x32xf32>
    tpu.vector_store %arg2[%c0_236, %c0_237], %450 {strides = array<i32>} : memref<16x32xf32, #tpu.memory_space<vmem>>, vector<16x32xf32>,
    return
  }
}

</mosaic_0001>

<llo_original>
// kernel: encoder_forward.1
$region0: #{encoder_forward.1}
  #allocation0 [shape = 'u32[]', space=smem, size = 0x4, offset = 0x4, fixed_abs, tag = 'smem constant byte address 0x4 - core index']
  #allocation1 [shape = 'u32[144,128]{1,0:T(1,128)}', space=vmem, size = 0x12000, scoped, tag = 'internal scratch']
  %s0 = inlined_call_operand.vmem [shape: f32[18,32], index: 0, kind: input, shape index: {}]
  %s1 = inlined_call_operand.hbm [shape: f32[2,256,128], index: 1, kind: input, shape index: {}]
  %s2 = inlined_call_operand.hbm [shape: f32[16,32], index: 2, kind: output, shape index: {0}]
  %s3 = inlined_call_operand.vmem [shape: f32[2,4,2,8,8], index: 3, kind: output, shape index: {1}]
  %4 = xla_tuple %s2, %s3
  %s5 = sld [smem:[#allocation0]]
  $region30: #{encoder_forward.1} parent=0
    _
  %s7 = ssub.s32 1, %s5
  %s8 = scalar_select 0, %s7, %s5
  $region1: #{encoder_forward.1} parent=0
    #allocation2 [shape = 'u8[262144]{0}', space=vmem, size = 0x40000, scoped, tag = 'input window, operand 1, single buffered']
    #allocation3 [shape = 's32[1]{0}', space=sflag, size = 0x4, scoped, tag = 'scoped memory for encoder_forward.1']
    #allocation4 [shape = 's32[1]{0}', space=sflag, size = 0x4, scoped, tag = 'scoped memory for encoder_forward.1']
    #allocation5 [shape = 'u8[8192]{0}', space=vmem, size = 0x2000, scoped, tag = 'output window, operand 0, single buffered']
    %9 = vsyncpa [#allocation3], 0
    %10 = vsyncpa [#allocation4], 0
    // Predicated region
    $region2: #{encoder_forward.1} parent=1 // pred_check
      _
    $region3: #{encoder_forward.1} parent=1 // pred_check_branch
      %12 = sbr.rel (0) target = $region5
    $region4: #{encoder_forward.1} parent=1 // pred_region
      _
    $region5: #{encoder_forward.1} parent=1 // pred_fallthru
      _
    // Predicated region
    $region6: #{encoder_forward.1} parent=1 // pred_check
      _
    $region7: #{encoder_forward.1} parent=1 // pred_check_branch
      %14 = sbr.rel (0) target = $region9
    $region8: #{encoder_forward.1} parent=1 // pred_region
      %s16 = ssub.s32 8192, 8192
      %17 = vsyncadd [#allocation3], %s16
      %s18 = sshll.u32 [#allocation2], 4
      %s19 = int_to_ptr.vmem [resolvable:$true] %s18
      %24 = dma.hbm_to_vmem [thread:$0]  %s1, 8192, %s19, [#allocation3], 128, 128, 8
    $region9: #{encoder_forward.1} parent=1 // pred_fallthru
      _
    // Predicated region
    $region10: #{encoder_forward.1} parent=1 // pred_check
      _
    $region11: #{encoder_forward.1} parent=1 // pred_check_branch
      %26 = sbr.rel (0) target = $region13
    $region12: #{encoder_forward.1} parent=1 // pred_region
      %27 = dma.done [#allocation3], 8192
    $region13: #{encoder_forward.1} parent=1 // pred_fallthru
      _
    %v28 = vld [vmem:[%s0] sm:$0xff]
    %v29 = vld [vmem:[%s0 + $0x8] sm:$0xff]
    %v30 = vld [vmem:[%s0 + $0x10] sm:$0x3]
    %v33 = vunpack.c.l.s4 1966171168
    %v34 = vunpack.c.0.s8 %v33
    %v35 = vlaneseq
    %v36 = vshrl.u32 %v35, 7
    %v37 = vsub.s32 %v34, %v36
    %v38 = vrot.slane %v30, %v37
    %v39 = vcombine.high %v38, %v38
    %v41 = vunpack.c.l.s4 1966171168
    %v42 = vunpack.c.0.s8 %v41
    %v43 = vlaneseq
    %v44 = vshrl.u32 %v43, 7
    %v45 = vsub.s32 %v42, %v44
    %v46 = vrot.slane %v38, %v45
    %v48 = vunpack.c.l.s4 1966171168
    %v49 = vunpack.c.0.s8 %v48
    %v50 = vlaneseq
    %v51 = vshrl.u32 %v50, 7
    %v52 = vsub.s32 %v49, %v51
    %v53 = vrot.slane %v39, %v52
    %v54 = vld [vmem:[#allocation2 + $0xe0] sm:$0x1]
    %v55 = vld [vmem:[#allocation2 + $0xe8] sm:$0x1]
    %v56 = vld [vmem:[#allocation2 + $0xf0] sm:$0x1]
    %v57 = vld [vmem:[#allocation2 + $0xf8] sm:$0x1]
    %v58 = vld [vmem:[#allocation2] sm:$0xff]
    %v59 = vld [vmem:[#allocation2 + $0x8] sm:$0xff]
    %v60 = vld [vmem:[#allocation2 + $0x10] sm:$0xff]
    %v61 = vld [vmem:[#allocation2 + $0x18] sm:$0xff]
    %vm62 = vcmask 261120
    %v64 = vsel %vm62, %v28, 0
    %v67 = vsel %vm62, %v29, 0
    %v70 = vsel %vm62, %v58, 0
    %72 = vmatprep.subr.mxu0 0.0
    %73 = vmatpush1.xpose.msra.mxu0 %v70
    %74 = vmatprep.subr.mxu0 0.0
    %75 = vmatpush1.xpose.msra.mxu0 0.0
    %76 = vmatprep.subr.mxu0 0.0
    %77 = vmatpush1.xpose.msra.mxu0 0.0
    %78 = vmatprep.subr.mxu0 0.0
    %79 = vmatpush1.xpose.msra.mxu0 0.0
    %80 = vmatprep.subr.mxu0 0.0
    %81 = vmatpush1.xpose.msra.mxu0 0.0
    %82 = vmatprep.subr.mxu0 0.0
    %83 = vmatpush1.xpose.msra.mxu0 0.0
    %84 = vmatprep.subr.mxu0 0.0
    %85 = vmatpush1.xpose.msra.mxu0 0.0
    %86 = vmatprep.subr.mxu0 0.0
    %87 = vmatpush1.xpose.msra.mxu0 0.0
    %88 = vmatprep.subr.mxu0 0.0
    %89 = vmatpush1.xpose.msra.mxu0 0.0
    %90 = vmatprep.subr.mxu0 0.0
    %91 = vmatpush1.xpose.msra.mxu0 0.0
    %92 = vmatprep.subr.mxu0 0.0
    %93 = vmatpush1.xpose.msra.mxu0 0.0
    %94 = vmatprep.subr.mxu0 0.0
    %95 = vmatpush1.xpose.msra.mxu0 0.0
    %96 = vmatprep.subr.mxu0 0.0
    %97 = vmatpush1.xpose.msra.mxu0 0.0
    %98 = vmatprep.subr.mxu0 0.0
    %99 = vmatpush1.xpose.msra.mxu0 0.0
    %100 = vmatprep.subr.mxu0 0.0
    %101 = vmatpush1.xpose.msra.mxu0 0.0
    %102 = vmatprep.subr.mxu0 0.0
    %103 = vmatpush1.xpose.msra.mxu0 0.0
    %104 = vmatprep.subr.mxu0 0.0
    %105 = vmatpush1.xpose.msra.mxu0 0.0
    %106 = vmatprep.subr.mxu0 0.0
    %107 = vmatpush1.xpose.msra.mxu0 0.0
    %108 = vmatprep.subr.mxu0 0.0
    %109 = vmatpush1.xpose.msra.mxu0 0.0
    %110 = vmatprep.subr.mxu0 0.0
    %111 = vmatpush1.xpose.msra.mxu0 0.0
    %112 = vmatprep.subr.mxu0 0.0
    %113 = vmatpush1.xpose.msra.mxu0 0.0
    %114 = vmatprep.subr.mxu0 0.0
    %115 = vmatpush1.xpose.msra.mxu0 0.0
    %116 = vmatprep.subr.mxu0 0.0
    %117 = vmatpush1.xpose.msra.mxu0 0.0
    %118 = vmatprep.subr.mxu0 0.0
    %119 = vmatpush1.xpose.msra.mxu0 0.0
    %120 = vmatprep.subr.mxu0 0.0
    %121 = vmatpush1.xpose.msra.mxu0 0.0
    %122 = vmatprep.subr.mxu0 0.0
    %123 = vmatpush1.xpose.msra.mxu0 0.0
    %124 = vmatprep.subr.mxu0 0.0
    %125 = vmatpush1.xpose.msra.mxu0 0.0
    %126 = vmatprep.subr.mxu0 0.0
    %127 = vmatpush1.xpose.msra.mxu0 0.0
    %128 = vmatprep.subr.mxu0 0.0
    %129 = vmatpush1.xpose.msra.mxu0 0.0
    %130 = vmatprep.subr.mxu0 0.0
    %131 = vmatpush1.xpose.msra.mxu0 0.0
    %132 = vmatprep.subr.mxu0 0.0
    %133 = vmatpush1.xpose.msra.mxu0 0.0
    %134 = vmatprep.subr.mxu0 0.0
    %135 = vmatpush1.xpose.msra.mxu0 0.0
    %136 = vmatprep.mubr.f32.mxu0 0.0
    %137 = vmatmul.mubr.f32.gmra.mrb[0].mxu0 %v64
    %v138 = vpop.f32.mrb[0].mxu0
    %v139 = vadd.f32 0.0, %v138
    %v140 = vpop.f32.mrb[0].mxu0
    %141 = vmatprep.mubr.f32.mxu0 0.0
    %142 = vmatmul.mubr.f32.gmra.mrb[0].mxu0 %v67
    %v143 = vpop.f32.mrb[0].mxu0
    %v144 = vadd.f32 0.0, %v143
    %v145 = vpop.f32.mrb[0].mxu0
    %146 = vdwg.mxu0
    %v148 = vsel %vm62, %v59, 0
    %150 = vmatprep.subr.mxu0 0.0
    %151 = vmatpush1.xpose.msra.mxu0 %v148
    %152 = vmatprep.subr.mxu0 0.0
    %153 = vmatpush1.xpose.msra.mxu0 0.0
    %154 = vmatprep.subr.mxu0 0.0
    %155 = vmatpush1.xpose.msra.mxu0 0.0
    %156 = vmatprep.subr.mxu0 0.0
    %157 = vmatpush1.xpose.msra.mxu0 0.0
    %158 = vmatprep.subr.mxu0 0.0
    %159 = vmatpush1.xpose.msra.mxu0 0.0
    %160 = vmatprep.subr.mxu0 0.0
    %161 = vmatpush1.xpose.msra.mxu0 0.0
    %162 = vmatprep.subr.mxu0 0.0
    %163 = vmatpush1.xpose.msra.mxu0 0.0
    %164 = vmatprep.subr.mxu0 0.0
    %165 = vmatpush1.xpose.msra.mxu0 0.0
    %166 = vmatprep.subr.mxu0 0.0
    %167 = vmatpush1.xpose.msra.mxu0 0.0
    %168 = vmatprep.subr.mxu0 0.0
    %169 = vmatpush1.xpose.msra.mxu0 0.0
    %170 = vmatprep.subr.mxu0 0.0
    %171 = vmatpush1.xpose.msra.mxu0 0.0
    %172 = vmatprep.subr.mxu0 0.0
    %173 = vmatpush1.xpose.msra.mxu0 0.0
    %174 = vmatprep.subr.mxu0 0.0
    %175 = vmatpush1.xpose.msra.mxu0 0.0
    %176 = vmatprep.subr.mxu0 0.0
    %177 = vmatpush1.xpose.msra.mxu0 0.0
    %178 = vmatprep.subr.mxu0 0.0
    %179 = vmatpush1.xpose.msra.mxu0 0.0
    %180 = vmatprep.subr.mxu0 0.0
    %181 = vmatpush1.xpose.msra.mxu0 0.0
    %182 = vmatprep.subr.mxu0 0.0
    %183 = vmatpush1.xpose.msra.mxu0 0.0
    %184 = vmatprep.subr.mxu0 0.0
    %185 = vmatpush1.xpose.msra.mxu0 0.0
    %186 = vmatprep.subr.mxu0 0.0
    %187 = vmatpush1.xpose.msra.mxu0 0.0
    %188 = vmatprep.subr.mxu0 0.0
    %189 = vmatpush1.xpose.msra.mxu0 0.0
    %190 = vmatprep.subr.mxu0 0.0
    %191 = vmatpush1.xpose.msra.mxu0 0.0
    %192 = vmatprep.subr.mxu0 0.0
    %193 = vmatpush1.xpose.msra.mxu0 0.0
    %194 = vmatprep.subr.mxu0 0.0
    %195 = vmatpush1.xpose.msra.mxu0 0.0
    %196 = vmatprep.subr.mxu0 0.0
    %197 = vmatpush1.xpose.msra.mxu0 0.0
    %198 = vmatprep.subr.mxu0 0.0
    %199 = vmatpush1.xpose.msra.mxu0 0.0
    %200 = vmatprep.subr.mxu0 0.0
    %201 = vmatpush1.xpose.msra.mxu0 0.0
    %202 = vmatprep.subr.mxu0 0.0
    %203 = vmatpush1.xpose.msra.mxu0 0.0
    %204 = vmatprep.subr.mxu0 0.0
    %205 = vmatpush1.xpose.msra.mxu0 0.0
    %206 = vmatprep.subr.mxu0 0.0
    %207 = vmatpush1.xpose.msra.mxu0 0.0
    %208 = vmatprep.subr.mxu0 0.0
    %209 = vmatpush1.xpose.msra.mxu0 0.0
    %210 = vmatprep.subr.mxu0 0.0
    %211 = vmatpush1.xpose.msra.mxu0 0.0
    %212 = vmatprep.subr.mxu0 0.0
    %213 = vmatpush1.xpose.msra.mxu0 0.0
    %214 = vmatprep.mubr.f32.mxu0 0.0
    %215 = vmatmul.mubr.f32.gmra.mrb[0].mxu0 %v64
    %v216 = vpop.f32.mrb[0].mxu0
    %v217 = vadd.f32 0.0, %v216
    %v218 = vpop.f32.mrb[0].mxu0
    %219 = vmatprep.mubr.f32.mxu0 0.0
    %220 = vmatmul.mubr.f32.gmra.mrb[0].mxu0 %v67
    %v221 = vpop.f32.mrb[0].mxu0
    %v222 = vadd.f32 0.0, %v221
    %v223 = vpop.f32.mrb[0].mxu0
    %224 = vdwg.mxu0
    %v226 = vsel %vm62, %v60, 0
    %228 = vmatprep.subr.mxu0 0.0
    %229 = vmatpush1.xpose.msra.mxu0 %v226
    %230 = vmatprep.subr.mxu0 0.0
    %231 = vmatpush1.xpose.msra.mxu0 0.0
    %232 = vmatprep.subr.mxu0 0.0
    %233 = vmatpush1.xpose.msra.mxu0 0.0
    %234 = vmatprep.subr.mxu0 0.0
    %235 = vmatpush1.xpose.msra.mxu0 0.0
    %236 = vmatprep.subr.mxu0 0.0
    %237 = vmatpush1.xpose.msra.mxu0 0.0
    %238 = vmatprep.subr.mxu0 0.0
    %239 = vmatpush1.xpose.msra.mxu0 0.0
    %240 = vmatprep.subr.mxu0 0.0
    %241 = vmatpush1.xpose.msra.mxu0 0.0
    %242 = vmatprep.subr.mxu0 0.0
    %243 = vmatpush1.xpose.msra.mxu0 0.0
    %244 = vmatprep.subr.mxu0 0.0
    %245 = vmatpush1.xpose.msra.mxu0 0.0
    %246 = vmatprep.subr.mxu0 0.0
    %247 = vmatpush1.xpose.msra.mxu0 0.0
    %248 = vmatprep.subr.mxu0 0.0
    %249 = vmatpush1.xpose.msra.mxu0 0.0
    %250 = vmatprep.subr.mxu0 0.0
    %251 = vmatpush1.xpose.msra.mxu0 0.0
    %252 = vmatprep.subr.mxu0 0.0
    %253 = vmatpush1.xpose.msra.mxu0 0.0
    %254 = vmatprep.subr.mxu0 0.0
    %255 = vmatpush1.xpose.msra.mxu0 0.0
    %256 = vmatprep.subr.mxu0 0.0
    %257 = vmatpush1.xpose.msra.mxu0 0.0
    %258 = vmatprep.subr.mxu0 0.0
    %259 = vmatpush1.xpose.msra.mxu0 0.0
    %260 = vmatprep.subr.mxu0 0.0
    %261 = vmatpush1.xpose.msra.mxu0 0.0
    %262 = vmatprep.subr.mxu0 0.0
    %263 = vmatpush1.xpose.msra.mxu0 0.0
    %264 = vmatprep.subr.mxu0 0.0
    %265 = vmatpush1.xpose.msra.mxu0 0.0
    %266 = vmatprep.subr.mxu0 0.0
    %267 = vmatpush1.xpose.msra.mxu0 0.0
    %268 = vmatprep.subr.mxu0 0.0
    %269 = vmatpush1.xpose.msra.mxu0 0.0
    %270 = vmatprep.subr.mxu0 0.0
    %271 = vmatpush1.xpose.msra.mxu0 0.0
    %272 = vmatprep.subr.mxu0 0.0
    %273 = vmatpush1.xpose.msra.mxu0 0.0
    %274 = vmatprep.subr.mxu0 0.0
    %275 = vmatpush1.xpose.msra.mxu0 0.0
    %276 = vmatprep.subr.mxu0 0.0
    %277 = vmatpush1.xpose.msra.mxu0 0.0
    %278 = vmatprep.subr.mxu0 0.0
    %279 = vmatpush1.xpose.msra.mxu0 0.0
    %280 = vmatprep.subr.mxu0 0.0
    %281 = vmatpush1.xpose.msra.mxu0 0.0
    %282 = vmatprep.subr.mxu0 0.0
    %283 = vmatpush1.xpose.msra.mxu0 0.0
    %284 = vmatprep.subr.mxu0 0.0
    %285 = vmatpush1.xpose.msra.mxu0 0.0
    %286 = vmatprep.subr.mxu0 0.0
    %287 = vmatpush1.xpose.msra.mxu0 0.0
    %288 = vmatprep.subr.mxu0 0.0
    %289 = vmatpush1.xpose.msra.mxu0 0.0
    %290 = vmatprep.subr.mxu0 0.0
    %291 = vmatpush1.xpose.msra.mxu0 0.0
    %292 = vmatprep.mubr.f32.mxu0 0.0
    %293 = vmatmul.mubr.f32.gmra.mrb[0].mxu0 %v64
    %v294 = vpop.f32.mrb[0].mxu0
    %v295 = vadd.f32 0.0, %v294
    %v296 = vpop.f32.mrb[0].mxu0
    %297 = vmatprep.mubr.f32.mxu0 0.0
    %298 = vmatmul.mubr.f32.gmra.mrb[0].mxu0 %v67
    %v299 = vpop.f32.mrb[0].mxu0
    %v300 = vadd.f32 0.0, %v299
    %v301 = vpop.f32.mrb[0].mxu0
    %302 = vdwg.mxu0
    %vm303 = vcmask 64512
    %v305 = vsel %vm303, %v139, 0
    %v308 = vsel %vm303, %v217, 0
    %310 = vmatprep.subr.mxu0 0.0
    %311 = vmatpush1.xpose.msra.mxu0 %v308
    %312 = vmatprep.subr.mxu0 0.0
    %313 = vmatpush1.xpose.msra.mxu0 0.0
    %314 = vmatprep.subr.mxu0 0.0
    %315 = vmatpush1.xpose.msra.mxu0 0.0
    %316 = vmatprep.subr.mxu0 0.0
    %317 = vmatpush1.xpose.msra.mxu0 0.0
    %318 = vmatprep.subr.mxu0 0.0
    %319 = vmatpush1.xpose.msra.mxu0 0.0
    %320 = vmatprep.subr.mxu0 0.0
    %321 = vmatpush1.xpose.msra.mxu0 0.0
    %322 = vmatprep.subr.mxu0 0.0
    %323 = vmatpush1.xpose.msra.mxu0 0.0
    %324 = vmatprep.subr.mxu0 0.0
    %325 = vmatpush1.xpose.msra.mxu0 0.0
    %326 = vmatprep.subr.mxu0 0.0
    %327 = vmatpush1.xpose.msra.mxu0 0.0
    %328 = vmatprep.subr.mxu0 0.0
    %329 = vmatpush1.xpose.msra.mxu0 0.0
    %330 = vmatprep.subr.mxu0 0.0
    %331 = vmatpush1.xpose.msra.mxu0 0.0
    %332 = vmatprep.subr.mxu0 0.0
    %333 = vmatpush1.xpose.msra.mxu0 0.0
    %334 = vmatprep.subr.mxu0 0.0
    %335 = vmatpush1.xpose.msra.mxu0 0.0
    %336 = vmatprep.subr.mxu0 0.0
    %337 = vmatpush1.xpose.msra.mxu0 0.0
    %338 = vmatprep.subr.mxu0 0.0
    %339 = vmatpush1.xpose.msra.mxu0 0.0
    %340 = vmatprep.subr.mxu0 0.0
    %341 = vmatpush1.xpose.msra.mxu0 0.0
    %342 = vmatprep.subr.mxu0 0.0
    %343 = vmatpush1.xpose.msra.mxu0 0.0
    %344 = vmatprep.subr.mxu0 0.0
    %345 = vmatpush1.xpose.msra.mxu0 0.0
    %346 = vmatprep.subr.mxu0 0.0
    %347 = vmatpush1.xpose.msra.mxu0 0.0
    %348 = vmatprep.subr.mxu0 0.0
    %349 = vmatpush1.xpose.msra.mxu0 0.0
    %350 = vmatprep.subr.mxu0 0.0
    %351 = vmatpush1.xpose.msra.mxu0 0.0
    %352 = vmatprep.subr.mxu0 0.0
    %353 = vmatpush1.xpose.msra.mxu0 0.0
    %354 = vmatprep.subr.mxu0 0.0
    %355 = vmatpush1.xpose.msra.mxu0 0.0
    %356 = vmatprep.subr.mxu0 0.0
    %357 = vmatpush1.xpose.msra.mxu0 0.0
    %358 = vmatprep.subr.mxu0 0.0
    %359 = vmatpush1.xpose.msra.mxu0 0.0
    %360 = vmatprep.subr.mxu0 0.0
    %361 = vmatpush1.xpose.msra.mxu0 0.0
    %362 = vmatprep.subr.mxu0 0.0
    %363 = vmatpush1.xpose.msra.mxu0 0.0
    %364 = vmatprep.subr.mxu0 0.0
    %365 = vmatpush1.xpose.msra.mxu0 0.0
    %366 = vmatprep.subr.mxu0 0.0
    %367 = vmatpush1.xpose.msra.mxu0 0.0
    %368 = vmatprep.subr.mxu0 0.0
    %369 = vmatpush1.xpose.msra.mxu0 0.0
    %370 = vmatprep.subr.mxu0 0.0
    %371 = vmatpush1.xpose.msra.mxu0 0.0
    %372 = vmatprep.subr.mxu0 0.0
    %373 = vmatpush1.xpose.msra.mxu0 0.0
    %374 = vmatprep.mubr.f32.mxu0 0.0
    %375 = vmatmul.mubr.f32.gmra.mrb[0].mxu0 %v305
    %v376 = vpop.f32.mrb[0].mxu0
    %v377 = vadd.f32 0.0, %v376
    %v378 = vpop.f32.mrb[0].mxu0
    %379 = vdwg.mxu0
    %v381 = vsel %vm303, %v144, 0
    %v384 = vsel %vm303, %v222, 0
    %386 = vmatprep.subr.mxu0 0.0
    %387 = vmatpush1.xpose.msra.mxu0 %v384
    %388 = vmatprep.subr.mxu0 0.0
    %389 = vmatpush1.xpose.msra.mxu0 0.0
    %390 = vmatprep.subr.mxu0 0.0
    %391 = vmatpush1.xpose.msra.mxu0 0.0
    %392 = vmatprep.subr.mxu0 0.0
    %393 = vmatpush1.xpose.msra.mxu0 0.0
    %394 = vmatprep.subr.mxu0 0.0
    %395 = vmatpush1.xpose.msra.mxu0 0.0
    %396 = vmatprep.subr.mxu0 0.0
    %397 = vmatpush1.xpose.msra.mxu0 0.0
    %398 = vmatprep.subr.mxu0 0.0
    %399 = vmatpush1.xpose.msra.mxu0 0.0
    %400 = vmatprep.subr.mxu0 0.0
    %401 = vmatpush1.xpose.msra.mxu0 0.0
    %402 = vmatprep.subr.mxu0 0.0
    %403 = vmatpush1.xpose.msra.mxu0 0.0
    %404 = vmatprep.subr.mxu0 0.0
    %405 = vmatpush1.xpose.msra.mxu0 0.0
    %406 = vmatprep.subr.mxu0 0.0
    %407 = vmatpush1.xpose.msra.mxu0 0.0
    %408 = vmatprep.subr.mxu0 0.0
    %409 = vmatpush1.xpose.msra.mxu0 0.0
    %410 = vmatprep.subr.mxu0 0.0
    %411 = vmatpush1.xpose.msra.mxu0 0.0
    %412 = vmatprep.subr.mxu0 0.0
    %413 = vmatpush1.xpose.msra.mxu0 0.0
    %414 = vmatprep.subr.mxu0 0.0
    %415 = vmatpush1.xpose.msra.mxu0 0.0
    %416 = vmatprep.subr.mxu0 0.0
    %417 = vmatpush1.xpose.msra.mxu0 0.0
    %418 = vmatprep.subr.mxu0 0.0
    %419 = vmatpush1.xpose.msra.mxu0 0.0
    %420 = vmatprep.subr.mxu0 0.0
    %421 = vmatpush1.xpose.msra.mxu0 0.0
    %422 = vmatprep.subr.mxu0 0.0
    %423 = vmatpush1.xpose.msra.mxu0 0.0
    %424 = vmatprep.subr.mxu0 0.0
    %425 = vmatpush1.xpose.msra.mxu0 0.0
    %426 = vmatprep.subr.mxu0 0.0
    %427 = vmatpush1.xpose.msra.mxu0 0.0
    %428 = vmatprep.subr.mxu0 0.0
    %429 = vmatpush1.xpose.msra.mxu0 0.0
    %430 = vmatprep.subr.mxu0 0.0
    %431 = vmatpush1.xpose.msra.mxu0 0.0
    %432 = vmatprep.subr.mxu0 0.0
    %433 = vmatpush1.xpose.msra.mxu0 0.0
    %434 = vmatprep.subr.mxu0 0.0
    %435 = vmatpush1.xpose.msra.mxu0 0.0
    %436 = vmatprep.subr.mxu0 0.0
    %437 = vmatpush1.xpose.msra.mxu0 0.0
    %438 = vmatprep.subr.mxu0 0.0
    %439 = vmatpush1.xpose.msra.mxu0 0.0
    %440 = vmatprep.subr.mxu0 0.0
    %441 = vmatpush1.xpose.msra.mxu0 0.0
    %442 = vmatprep.subr.mxu0 0.0
    %443 = vmatpush1.xpose.msra.mxu0 0.0
    %444 = vmatprep.subr.mxu0 0.0
    %445 = vmatpush1.xpose.msra.mxu0 0.0
    %446 = vmatprep.subr.mxu0 0.0
    %447 = vmatpush1.xpose.msra.mxu0 0.0
    %448 = vmatprep.subr.mxu0 0.0
    %449 = vmatpush1.xpose.msra.mxu0 0.0
    %450 = vmatprep.mubr.f32.mxu0 0.0
    %451 = vmatmul.mubr.f32.gmra.mrb[0].mxu0 %v381
    %v452 = vpop.f32.mrb[0].mxu0
    %v453 = vadd.f32 0.0, %v452
    %v454 = vpop.f32.mrb[0].mxu0
    %455 = vdwg.mxu0
    %v456 = vmul.f32 %v377, 0.35355338
    %v457 = vmul.f32 %v453, 0.35355338
    %v458 = vlaneseq
    %v459 = vshrl.u32 %v458, 7
    %v460 = vsub.s32 0, %v459
    %v461 = vrot.slane %v46, %v460
    %v462 = vlaneseq
    %v463 = vshrl.u32 %v462, 7
    %v464 = vsub.s32 0, %v463
    %v465 = vrot.slane %v53, %v464
    %v468 = vadd.f32 %v456, %v461
    %v469 = vadd.f32 %v457, %v465
    %v470 = vsel %vm303, %v468, -inf
    %471 = vmax.xlane.f32.xlu0 %v470
    %v472 = vpop.xlane.xlu0 %471
    %v473 = vsel %vm303, %v469, -inf
    %474 = vmax.xlane.f32.xlu0 %v473
    %v475 = vpop.xlane.xlu0 %474
    %v476 = vsub.f32 %v468, %v472
    %v477 = vsub.f32 %v469, %v475
    %v478 = vmul.f32 %v476, 1.442695
    %v479 = vpow.pop %v478
    %v480 = vmul.f32 %v477, 1.442695
    %v481 = vpow.pop %v480
    %v482 = vsel %vm303, %v479, 0.0
    %483 = vadd.xlane.f32.xlu0 %v482
    %v484 = vpop.xlane.xlu0 %483
    %v485 = vsel %vm303, %v481, 0.0
    %486 = vadd.xlane.f32.xlu0 %v485
    %v487 = vpop.xlane.xlu0 %486
    %v488 = vrcp.pop %v484
    %v489 = vrcp.pop %v487
    %v490 = vmul.f32 %v479, %v488
    %v491 = vmul.f32 %v481, %v489
    %v493 = vsel %vm303, %v490, 0
    %495 = vmatprep.subr.mxu0 0.0
    %496 = vmatpush1.msra.mxu0 %v295
    %497 = vmatprep.subr.mxu0 0.0
    %498 = vmatpush1.msra.mxu0 0.0
    %499 = vmatprep.subr.mxu0 0.0
    %500 = vmatpush1.msra.mxu0 0.0
    %501 = vmatprep.subr.mxu0 0.0
    %502 = vmatpush1.msra.mxu0 0.0
    %503 = vmatprep.subr.mxu0 0.0
    %504 = vmatpush1.msra.mxu0 0.0
    %505 = vmatprep.subr.mxu0 0.0
    %506 = vmatpush1.msra.mxu0 0.0
    %507 = vmatprep.subr.mxu0 0.0
    %508 = vmatpush1.msra.mxu0 0.0
    %509 = vmatprep.subr.mxu0 0.0
    %510 = vmatpush1.msra.mxu0 0.0
    %511 = vmatprep.subr.mxu0 0.0
    %512 = vmatpush1.msra.mxu0 0.0
    %513 = vmatprep.subr.mxu0 0.0
    %514 = vmatpush1.msra.mxu0 0.0
    %515 = vmatprep.subr.mxu0 0.0
    %516 = vmatpush1.msra.mxu0 0.0
    %517 = vmatprep.subr.mxu0 0.0
    %518 = vmatpush1.msra.mxu0 0.0
    %519 = vmatprep.subr.mxu0 0.0
    %520 = vmatpush1.msra.mxu0 0.0
    %521 = vmatprep.subr.mxu0 0.0
    %522 = vmatpush1.msra.mxu0 0.0
    %523 = vmatprep.subr.mxu0 0.0
    %524 = vmatpush1.msra.mxu0 0.0
    %525 = vmatprep.subr.mxu0 0.0
    %526 = vmatpush1.msra.mxu0 0.0
    %527 = vmatprep.subr.mxu0 0.0
    %528 = vmatpush1.msra.mxu0 0.0
    %529 = vmatprep.subr.mxu0 0.0
    %530 = vmatpush1.msra.mxu0 0.0
    %531 = vmatprep.subr.mxu0 0.0
    %532 = vmatpush1.msra.mxu0 0.0
    %533 = vmatprep.subr.mxu0 0.0
    %534 = vmatpush1.msra.mxu0 0.0
    %535 = vmatprep.subr.mxu0 0.0
    %536 = vmatpush1.msra.mxu0 0.0
    %537 = vmatprep.subr.mxu0 0.0
    %538 = vmatpush1.msra.mxu0 0.0
    %539 = vmatprep.subr.mxu0 0.0
    %540 = vmatpush1.msra.mxu0 0.0
    %541 = vmatprep.subr.mxu0 0.0
    %542 = vmatpush1.msra.mxu0 0.0
    %543 = vmatprep.subr.mxu0 0.0
    %544 = vmatpush1.msra.mxu0 0.0
    %545 = vmatprep.subr.mxu0 0.0
    %546 = vmatpush1.msra.mxu0 0.0
    %547 = vmatprep.subr.mxu0 0.0
    %548 = vmatpush1.msra.mxu0 0.0
    %549 = vmatprep.subr.mxu0 0.0
    %550 = vmatpush1.msra.mxu0 0.0
    %551 = vmatprep.subr.mxu0 0.0
    %552 = vmatpush1.msra.mxu0 0.0
    %553 = vmatprep.subr.mxu0 0.0
    %554 = vmatpush1.msra.mxu0 0.0
    %555 = vmatprep.subr.mxu0 0.0
    %556 = vmatpush1.msra.mxu0 0.0
    %557 = vmatprep.subr.mxu0 0.0
    %558 = vmatpush1.msra.mxu0 0.0
    %559 = vmatprep.mubr.f32.mxu0 0.0
    %560 = vmatmul.mubr.f32.gmra.mrb[0].mxu0 %v493
    %v561 = vpop.f32.mrb[0].mxu0
    %v562 = vadd.f32 0.0, %v561
    %v563 = vpop.f32.mrb[0].mxu0
    %564 = vdwg.mxu0
    %v566 = vsel %vm303, %v491, 0
    %568 = vmatprep.subr.mxu0 0.0
    %569 = vmatpush1.msra.mxu0 %v300
    %570 = vmatprep.subr.mxu0 0.0
    %571 = vmatpush1.msra.mxu0 0.0
    %572 = vmatprep.subr.mxu0 0.0
    %573 = vmatpush1.msra.mxu0 0.0
    %574 = vmatprep.subr.mxu0 0.0
    %575 = vmatpush1.msra.mxu0 0.0
    %576 = vmatprep.subr.mxu0 0.0
    %577 = vmatpush1.msra.mxu0 0.0
    %578 = vmatprep.subr.mxu0 0.0
    %579 = vmatpush1.msra.mxu0 0.0
    %580 = vmatprep.subr.mxu0 0.0
    %581 = vmatpush1.msra.mxu0 0.0
    %582 = vmatprep.subr.mxu0 0.0
    %583 = vmatpush1.msra.mxu0 0.0
    %584 = vmatprep.subr.mxu0 0.0
    %585 = vmatpush1.msra.mxu0 0.0
    %586 = vmatprep.subr.mxu0 0.0
    %587 = vmatpush1.msra.mxu0 0.0
    %588 = vmatprep.subr.mxu0 0.0
    %589 = vmatpush1.msra.mxu0 0.0
    %590 = vmatprep.subr.mxu0 0.0
    %591 = vmatpush1.msra.mxu0 0.0
    %592 = vmatprep.subr.mxu0 0.0
    %593 = vmatpush1.msra.mxu0 0.0
    %594 = vmatprep.subr.mxu0 0.0
    %595 = vmatpush1.msra.mxu0 0.0
    %596 = vmatprep.subr.mxu0 0.0
    %597 = vmatpush1.msra.mxu0 0.0
    %598 = vmatprep.subr.mxu0 0.0
    %599 = vmatpush1.msra.mxu0 0.0
    %600 = vmatprep.subr.mxu0 0.0
    %601 = vmatpush1.msra.mxu0 0.0
    %602 = vmatprep.subr.mxu0 0.0
    %603 = vmatpush1.msra.mxu0 0.0
    %604 = vmatprep.subr.mxu0 0.0
    %605 = vmatpush1.msra.mxu0 0.0
    %606 = vmatprep.subr.mxu0 0.0
    %607 = vmatpush1.msra.mxu0 0.0
    %608 = vmatprep.subr.mxu0 0.0
    %609 = vmatpush1.msra.mxu0 0.0
    %610 = vmatprep.subr.mxu0 0.0
    %611 = vmatpush1.msra.mxu0 0.0
    %612 = vmatprep.subr.mxu0 0.0
    %613 = vmatpush1.msra.mxu0 0.0
    %614 = vmatprep.subr.mxu0 0.0
    %615 = vmatpush1.msra.mxu0 0.0
    %616 = vmatprep.subr.mxu0 0.0
    %617 = vmatpush1.msra.mxu0 0.0
    %618 = vmatprep.subr.mxu0 0.0
    %619 = vmatpush1.msra.mxu0 0.0
    %620 = vmatprep.subr.mxu0 0.0
    %621 = vmatpush1.msra.mxu0 0.0
    %622 = vmatprep.subr.mxu0 0.0
    %623 = vmatpush1.msra.mxu0 0.0
    %624 = vmatprep.subr.mxu0 0.0
    %625 = vmatpush1.msra.mxu0 0.0
    %626 = vmatprep.subr.mxu0 0.0
    %627 = vmatpush1.msra.mxu0 0.0
    %628 = vmatprep.subr.mxu0 0.0
    %629 = vmatpush1.msra.mxu0 0.0
    %630 = vmatprep.subr.mxu0 0.0
    %631 = vmatpush1.msra.mxu0 0.0
    %632 = vmatprep.mubr.f32.mxu0 0.0
    %633 = vmatmul.mubr.f32.gmra.mrb[0].mxu0 %v566
    %v634 = vpop.f32.mrb[0].mxu0
    %v635 = vadd.f32 0.0, %v634
    %v636 = vpop.f32.mrb[0].mxu0
    %637 = vdwg.mxu0
    %v639 = vsel %vm303, %v562, 0
    %v642 = vsel %vm303, %v635, 0
    %644 = vmatprep.subr.mxu0 0.0
    %645 = vmatpush1.msra.mxu0 %v61
    %646 = vmatprep.subr.mxu0 0.0
    %647 = vmatpush1.msra.mxu0 0.0
    %648 = vmatprep.subr.mxu0 0.0
    %649 = vmatpush1.msra.mxu0 0.0
    %650 = vmatprep.subr.mxu0 0.0
    %651 = vmatpush1.msra.mxu0 0.0
    %652 = vmatprep.subr.mxu0 0.0
    %653 = vmatpush1.msra.mxu0 0.0
    %654 = vmatprep.subr.mxu0 0.0
    %655 = vmatpush1.msra.mxu0 0.0
    %656 = vmatprep.subr.mxu0 0.0
    %657 = vmatpush1.msra.mxu0 0.0
    %658 = vmatprep.subr.mxu0 0.0
    %659 = vmatpush1.msra.mxu0 0.0
    %660 = vmatprep.subr.mxu0 0.0
    %661 = vmatpush1.msra.mxu0 0.0
    %662 = vmatprep.subr.mxu0 0.0
    %663 = vmatpush1.msra.mxu0 0.0
    %664 = vmatprep.subr.mxu0 0.0
    %665 = vmatpush1.msra.mxu0 0.0
    %666 = vmatprep.subr.mxu0 0.0
    %667 = vmatpush1.msra.mxu0 0.0
    %668 = vmatprep.subr.mxu0 0.0
    %669 = vmatpush1.msra.mxu0 0.0
    %670 = vmatprep.subr.mxu0 0.0
    %671 = vmatpush1.msra.mxu0 0.0
    %672 = vmatprep.subr.mxu0 0.0
    %673 = vmatpush1.msra.mxu0 0.0
    %674 = vmatprep.subr.mxu0 0.0
    %675 = vmatpush1.msra.mxu0 0.0
    %676 = vmatprep.subr.mxu0 0.0
    %677 = vmatpush1.msra.mxu0 0.0
    %678 = vmatprep.subr.mxu0 0.0
    %679 = vmatpush1.msra.mxu0 0.0
    %680 = vmatprep.subr.mxu0 0.0
    %681 = vmatpush1.msra.mxu0 0.0
    %682 = vmatprep.subr.mxu0 0.0
    %683 = vmatpush1.msra.mxu0 0.0
    %684 = vmatprep.subr.mxu0 0.0
    %685 = vmatpush1.msra.mxu0 0.0
    %686 = vmatprep.subr.mxu0 0.0
    %687 = vmatpush1.msra.mxu0 0.0
    %688 = vmatprep.subr.mxu0 0.0
    %689 = vmatpush1.msra.mxu0 0.0
    %690 = vmatprep.subr.mxu0 0.0
    %691 = vmatpush1.msra.mxu0 0.0
    %692 = vmatprep.subr.mxu0 0.0
    %693 = vmatpush1.msra.mxu0 0.0
    %694 = vmatprep.subr.mxu0 0.0
    %695 = vmatpush1.msra.mxu0 0.0
    %696 = vmatprep.subr.mxu0 0.0
    %697 = vmatpush1.msra.mxu0 0.0
    %698 = vmatprep.subr.mxu0 0.0
    %699 = vmatpush1.msra.mxu0 0.0
    %700 = vmatprep.subr.mxu0 0.0
    %701 = vmatpush1.msra.mxu0 0.0
    %702 = vmatprep.subr.mxu0 0.0
    %703 = vmatpush1.msra.mxu0 0.0
    %704 = vmatprep.subr.mxu0 0.0
    %705 = vmatpush1.msra.mxu0 0.0
    %706 = vmatprep.subr.mxu0 0.0
    %707 = vmatpush1.msra.mxu0 0.0
    %708 = vmatprep.mubr.f32.mxu0 0.0
    %709 = vmatmul.mubr.f32.gmra.mrb[0].mxu0 %v639
    %v710 = vpop.f32.mrb[0].mxu0
    %v711 = vadd.f32 0.0, %v710
    %v712 = vpop.f32.mrb[0].mxu0
    %713 = vmatprep.mubr.f32.mxu0 0.0
    %714 = vmatmul.mubr.f32.gmra.mrb[0].mxu0 %v642
    %v715 = vpop.f32.mrb[0].mxu0
    %v716 = vadd.f32 0.0, %v715
    %v717 = vpop.f32.mrb[0].mxu0
    %718 = vdwg.mxu0
    %v719 = vadd.f32 %v28, %v711
    %v720 = vadd.f32 %v29, %v716
    %v721 = vld [vmem:[#allocation2 + $0x20] sm:$0xff]
    %v722 = vld [vmem:[#allocation2 + $0x28] sm:$0xff]
    %v723 = vld [vmem:[#allocation2 + $0x30] sm:$0xff]
    %v724 = vld [vmem:[#allocation2 + $0x38] sm:$0xff]
    %v726 = vsel %vm62, %v721, 0
    %728 = vmatprep.subr.mxu0 0.0
    %729 = vmatpush1.xpose.msra.mxu0 %v726
    %730 = vmatprep.subr.mxu0 0.0
    %731 = vmatpush1.xpose.msra.mxu0 0.0
    %732 = vmatprep.subr.mxu0 0.0
    %733 = vmatpush1.xpose.msra.mxu0 0.0
    %734 = vmatprep.subr.mxu0 0.0
    %735 = vmatpush1.xpose.msra.mxu0 0.0
    %736 = vmatprep.subr.mxu0 0.0
    %737 = vmatpush1.xpose.msra.mxu0 0.0
    %738 = vmatprep.subr.mxu0 0.0
    %739 = vmatpush1.xpose.msra.mxu0 0.0
    %740 = vmatprep.subr.mxu0 0.0
    %741 = vmatpush1.xpose.msra.mxu0 0.0
    %742 = vmatprep.subr.mxu0 0.0
    %743 = vmatpush1.xpose.msra.mxu0 0.0
    %744 = vmatprep.subr.mxu0 0.0
    %745 = vmatpush1.xpose.msra.mxu0 0.0
    %746 = vmatprep.subr.mxu0 0.0
    %747 = vmatpush1.xpose.msra.mxu0 0.0
    %748 = vmatprep.subr.mxu0 0.0
    %749 = vmatpush1.xpose.msra.mxu0 0.0
    %750 = vmatprep.subr.mxu0 0.0
    %751 = vmatpush1.xpose.msra.mxu0 0.0
    %752 = vmatprep.subr.mxu0 0.0
    %753 = vmatpush1.xpose.msra.mxu0 0.0
    %754 = vmatprep.subr.mxu0 0.0
    %755 = vmatpush1.xpose.msra.mxu0 0.0
    %756 = vmatprep.subr.mxu0 0.0
    %757 = vmatpush1.xpose.msra.mxu0 0.0
    %758 = vmatprep.subr.mxu0 0.0
    %759 = vmatpush1.xpose.msra.mxu0 0.0
    %760 = vmatprep.subr.mxu0 0.0
    %761 = vmatpush1.xpose.msra.mxu0 0.0
    %762 = vmatprep.subr.mxu0 0.0
    %763 = vmatpush1.xpose.msra.mxu0 0.0
    %764 = vmatprep.subr.mxu0 0.0
    %765 = vmatpush1.xpose.msra.mxu0 0.0
    %766 = vmatprep.subr.mxu0 0.0
    %767 = vmatpush1.xpose.msra.mxu0 0.0
    %768 = vmatprep.subr.mxu0 0.0
    %769 = vmatpush1.xpose.msra.mxu0 0.0
    %770 = vmatprep.subr.mxu0 0.0
    %771 = vmatpush1.xpose.msra.mxu0 0.0
    %772 = vmatprep.subr.mxu0 0.0
    %773 = vmatpush1.xpose.msra.mxu0 0.0
    %774 = vmatprep.subr.mxu0 0.0
    %775 = vmatpush1.xpose.msra.mxu0 0.0
    %776 = vmatprep.subr.mxu0 0.0
    %777 = vmatpush1.xpose.msra.mxu0 0.0
    %778 = vmatprep.subr.mxu0 0.0
    %779 = vmatpush1.xpose.msra.mxu0 0.0
    %780 = vmatprep.subr.mxu0 0.0
    %781 = vmatpush1.xpose.msra.mxu0 0.0
    %782 = vmatprep.subr.mxu0 0.0
    %783 = vmatpush1.xpose.msra.mxu0 0.0
    %784 = vmatprep.subr.mxu0 0.0
    %785 = vmatpush1.xpose.msra.mxu0 0.0
    %786 = vmatprep.subr.mxu0 0.0
    %787 = vmatpush1.xpose.msra.mxu0 0.0
    %788 = vmatprep.subr.mxu0 0.0
    %789 = vmatpush1.xpose.msra.mxu0 0.0
    %790 = vmatprep.subr.mxu0 0.0
    %791 = vmatpush1.xpose.msra.mxu0 0.0
    %792 = vmatprep.mubr.f32.mxu0 0.0
    %793 = vmatmul.mubr.f32.gmra.mrb[0].mxu0 %v64
    %v794 = vpop.f32.mrb[0].mxu0
    %v795 = vadd.f32 0.0, %v794
    %v796 = vpop.f32.mrb[0].mxu0
    %797 = vmatprep.mubr.f32.mxu0 0.0
    %798 = vmatmul.mubr.f32.gmra.mrb[0].mxu0 %v67
    %v799 = vpop.f32.mrb[0].mxu0
    %v800 = vadd.f32 0.0, %v799
    %v801 = vpop.f32.mrb[0].mxu0
    %802 = vdwg.mxu0
    %v804 = vsel %vm62, %v722, 0
    %806 = vmatprep.subr.mxu0 0.0
    %807 = vmatpush1.xpose.msra.mxu0 %v804
    %808 = vmatprep.subr.mxu0 0.0
    %809 = vmatpush1.xpose.msra.mxu0 0.0
    %810 = vmatprep.subr.mxu0 0.0
    %811 = vmatpush1.xpose.msra.mxu0 0.0
    %812 = vmatprep.subr.mxu0 0.0
    %813 = vmatpush1.xpose.msra.mxu0 0.0
    %814 = vmatprep.subr.mxu0 0.0
    %815 = vmatpush1.xpose.msra.mxu0 0.0
    %816 = vmatprep.subr.mxu0 0.0
    %817 = vmatpush1.xpose.msra.mxu0 0.0
    %818 = vmatprep.subr.mxu0 0.0
    %819 = vmatpush1.xpose.msra.mxu0 0.0
    %820 = vmatprep.subr.mxu0 0.0
    %821 = vmatpush1.xpose.msra.mxu0 0.0
    %822 = vmatprep.subr.mxu0 0.0
    %823 = vmatpush1.xpose.msra.mxu0 0.0
    %824 = vmatprep.subr.mxu0 0.0
    %825 = vmatpush1.xpose.msra.mxu0 0.0
    %826 = vmatprep.subr.mxu0 0.0
    %827 = vmatpush1.xpose.msra.mxu0 0.0
    %828 = vmatprep.subr.mxu0 0.0
    %829 = vmatpush1.xpose.msra.mxu0 0.0
    %830 = vmatprep.subr.mxu0 0.0
    %831 = vmatpush1.xpose.msra.mxu0 0.0
    %832 = vmatprep.subr.mxu0 0.0
    %833 = vmatpush1.xpose.msra.mxu0 0.0
    %834 = vmatprep.subr.mxu0 0.0
    %835 = vmatpush1.xpose.msra.mxu0 0.0
    %836 = vmatprep.subr.mxu0 0.0
    %837 = vmatpush1.xpose.msra.mxu0 0.0
    %838 = vmatprep.subr.mxu0 0.0
    %839 = vmatpush1.xpose.msra.mxu0 0.0
    %840 = vmatprep.subr.mxu0 0.0
    %841 = vmatpush1.xpose.msra.mxu0 0.0
    %842 = vmatprep.subr.mxu0 0.0
    %843 = vmatpush1.xpose.msra.mxu0 0.0
    %844 = vmatprep.subr.mxu0 0.0
    %845 = vmatpush1.xpose.msra.mxu0 0.0
    %846 = vmatprep.subr.mxu0 0.0
    %847 = vmatpush1.xpose.msra.mxu0 0.0
    %848 = vmatprep.subr.mxu0 0.0
    %849 = vmatpush1.xpose.msra.mxu0 0.0
    %850 = vmatprep.subr.mxu0 0.0
    %851 = vmatpush1.xpose.msra.mxu0 0.0
    %852 = vmatprep.subr.mxu0 0.0
    %853 = vmatpush1.xpose.msra.mxu0 0.0
    %854 = vmatprep.subr.mxu0 0.0
    %855 = vmatpush1.xpose.msra.mxu0 0.0
    %856 = vmatprep.subr.mxu0 0.0
    %857 = vmatpush1.xpose.msra.mxu0 0.0
    %858 = vmatprep.subr.mxu0 0.0
    %859 = vmatpush1.xpose.msra.mxu0 0.0
    %860 = vmatprep.subr.mxu0 0.0
    %861 = vmatpush1.xpose.msra.mxu0 0.0
    %862 = vmatprep.subr.mxu0 0.0
    %863 = vmatpush1.xpose.msra.mxu0 0.0
    %864 = vmatprep.subr.mxu0 0.0
    %865 = vmatpush1.xpose.msra.mxu0 0.0
    %866 = vmatprep.subr.mxu0 0.0
    %867 = vmatpush1.xpose.msra.mxu0 0.0
    %868 = vmatprep.subr.mxu0 0.0
    %869 = vmatpush1.xpose.msra.mxu0 0.0
    %870 = vmatprep.mubr.f32.mxu0 0.0
    %871 = vmatmul.mubr.f32.gmra.mrb[0].mxu0 %v64
    %v872 = vpop.f32.mrb[0].mxu0
    %v873 = vadd.f32 0.0, %v872
    %v874 = vpop.f32.mrb[0].mxu0
    %875 = vmatprep.mubr.f32.mxu0 0.0
    %876 = vmatmul.mubr.f32.gmra.mrb[0].mxu0 %v67
    %v877 = vpop.f32.mrb[0].mxu0
    %v878 = vadd.f32 0.0, %v877
    %v879 = vpop.f32.mrb[0].mxu0
    %880 = vdwg.mxu0
    %v882 = vsel %vm62, %v723, 0
    %884 = vmatprep.subr.mxu0 0.0
    %885 = vmatpush1.xpose.msra.mxu0 %v882
    %886 = vmatprep.subr.mxu0 0.0
    %887 = vmatpush1.xpose.msra.mxu0 0.0
    %888 = vmatprep.subr.mxu0 0.0
    %889 = vmatpush1.xpose.msra.mxu0 0.0
    %890 = vmatprep.subr.mxu0 0.0
    %891 = vmatpush1.xpose.msra.mxu0 0.0
    %892 = vmatprep.subr.mxu0 0.0
    %893 = vmatpush1.xpose.msra.mxu0 0.0
    %894 = vmatprep.subr.mxu0 0.0
    %895 = vmatpush1.xpose.msra.mxu0 0.0
    %896 = vmatprep.subr.mxu0 0.0
    %897 = vmatpush1.xpose.msra.mxu0 0.0
    %898 = vmatprep.subr.mxu0 0.0
    %899 = vmatpush1.xpose.msra.mxu0 0.0
    %900 = vmatprep.subr.mxu0 0.0
    %901 = vmatpush1.xpose.msra.mxu0 0.0
    %902 = vmatprep.subr.mxu0 0.0
    %903 = vmatpush1.xpose.msra.mxu0 0.0
    %904 = vmatprep.subr.mxu0 0.0
    %905 = vmatpush1.xpose.msra.mxu0 0.0
    %906 = vmatprep.subr.mxu0 0.0
    %907 = vmatpush1.xpose.msra.mxu0 0.0
    %908 = vmatprep.subr.mxu0 0.0
    %909 = vmatpush1.xpose.msra.mxu0 0.0
    %910 = vmatprep.subr.mxu0 0.0
    %911 = vmatpush1.xpose.msra.mxu0 0.0
    %912 = vmatprep.subr.mxu0 0.0
    %913 = vmatpush1.xpose.msra.mxu0 0.0
    %914 = vmatprep.subr.mxu0 0.0
    %915 = vmatpush1.xpose.msra.mxu0 0.0
    %916 = vmatprep.subr.mxu0 0.0
    %917 = vmatpush1.xpose.msra.mxu0 0.0
    %918 = vmatprep.subr.mxu0 0.0
    %919 = vmatpush1.xpose.msra.mxu0 0.0
    %920 = vmatprep.subr.mxu0 0.0
    %921 = vmatpush1.xpose.msra.mxu0 0.0
    %922 = vmatprep.subr.mxu0 0.0
    %923 = vmatpush1.xpose.msra.mxu0 0.0
    %924 = vmatprep.subr.mxu0 0.0
    %925 = vmatpush1.xpose.msra.mxu0 0.0
    %926 = vmatprep.subr.mxu0 0.0
    %927 = vmatpush1.xpose.msra.mxu0 0.0
    %928 = vmatprep.subr.mxu0 0.0
    %929 = vmatpush1.xpose.msra.mxu0 0.0
    %930 = vmatprep.subr.mxu0 0.0
    %931 = vmatpush1.xpose.msra.mxu0 0.0
    %932 = vmatprep.subr.mxu0 0.0
    %933 = vmatpush1.xpose.msra.mxu0 0.0
    %934 = vmatprep.subr.mxu0 0.0
    %935 = vmatpush1.xpose.msra.mxu0 0.0
    %936 = vmatprep.subr.mxu0 0.0
    %937 = vmatpush1.xpose.msra.mxu0 0.0
    %938 = vmatprep.subr.mxu0 0.0
    %939 = vmatpush1.xpose.msra.mxu0 0.0
    %940 = vmatprep.subr.mxu0 0.0
    %941 = vmatpush1.xpose.msra.mxu0 0.0
    %942 = vmatprep.subr.mxu0 0.0
    %943 = vmatpush1.xpose.msra.mxu0 0.0
    %944 = vmatprep.subr.mxu0 0.0
    %945 = vmatpush1.xpose.msra.mxu0 0.0
    %946 = vmatprep.subr.mxu0 0.0
    %947 = vmatpush1.xpose.msra.mxu0 0.0
    %948 = vmatprep.mubr.f32.mxu0 0.0
    %949 = vmatmul.mubr.f32.gmra.mrb[0].mxu0 %v64
    %v950 = vpop.f32.mrb[0].mxu0
    %v951 = vadd.f32 0.0, %v950
    %v952 = vpop.f32.mrb[0].mxu0
    %953 = vmatprep.mubr.f32.mxu0 0.0
    %954 = vmatmul.mubr.f32.gmra.mrb[0].mxu0 %v67
    %v955 = vpop.f32.mrb[0].mxu0
    %v956 = vadd.f32 0.0, %v955
    %v957 = vpop.f32.mrb[0].mxu0
    %958 = vdwg.mxu0
    %v960 = vsel %vm303, %v795, 0
    %v963 = vsel %vm303, %v873, 0
    %965 = vmatprep.subr.mxu0 0.0
    %966 = vmatpush1.xpose.msra.mxu0 %v963
    %967 = vmatprep.subr.mxu0 0.0
    %968 = vmatpush1.xpose.msra.mxu0 0.0
    %969 = vmatprep.subr.mxu0 0.0
    %970 = vmatpush1.xpose.msra.mxu0 0.0
    %971 = vmatprep.subr.mxu0 0.0
    %972 = vmatpush1.xpose.msra.mxu0 0.0
    %973 = vmatprep.subr.mxu0 0.0
    %974 = vmatpush1.xpose.msra.mxu0 0.0
    %975 = vmatprep.subr.mxu0 0.0
    %976 = vmatpush1.xpose.msra.mxu0 0.0
    %977 = vmatprep.subr.mxu0 0.0
    %978 = vmatpush1.xpose.msra.mxu0 0.0
    %979 = vmatprep.subr.mxu0 0.0
    %980 = vmatpush1.xpose.msra.mxu0 0.0
    %981 = vmatprep.subr.mxu0 0.0
    %982 = vmatpush1.xpose.msra.mxu0 0.0
    %983 = vmatprep.subr.mxu0 0.0
    %984 = vmatpush1.xpose.msra.mxu0 0.0
    %985 = vmatprep.subr.mxu0 0.0
    %986 = vmatpush1.xpose.msra.mxu0 0.0
    %987 = vmatprep.subr.mxu0 0.0
    %988 = vmatpush1.xpose.msra.mxu0 0.0
    %989 = vmatprep.subr.mxu0 0.0
    %990 = vmatpush1.xpose.msra.mxu0 0.0
    %991 = vmatprep.subr.mxu0 0.0
    %992 = vmatpush1.xpose.msra.mxu0 0.0
    %993 = vmatprep.subr.mxu0 0.0
    %994 = vmatpush1.xpose.msra.mxu0 0.0
    %995 = vmatprep.subr.mxu0 0.0
    %996 = vmatpush1.xpose.msra.mxu0 0.0
    %997 = vmatprep.subr.mxu0 0.0
    %998 = vmatpush1.xpose.msra.mxu0 0.0
    %999 = vmatprep.subr.mxu0 0.0
    %1000 = vmatpush1.xpose.msra.mxu0 0.0
    %1001 = vmatprep.subr.mxu0 0.0
    %1002 = vmatpush1.xpose.msra.mxu0 0.0
    %1003 = vmatprep.subr.mxu0 0.0
    %1004 = vmatpush1.xpose.msra.mxu0 0.0
    %1005 = vmatprep.subr.mxu0 0.0
    %1006 = vmatpush1.xpose.msra.mxu0 0.0
    %1007 = vmatprep.subr.mxu0 0.0
    %1008 = vmatpush1.xpose.msra.mxu0 0.0
    %1009 = vmatprep.subr.mxu0 0.0
    %1010 = vmatpush1.xpose.msra.mxu0 0.0
    %1011 = vmatprep.subr.mxu0 0.0
    %1012 = vmatpush1.xpose.msra.mxu0 0.0
    %1013 = vmatprep.subr.mxu0 0.0
    %1014 = vmatpush1.xpose.msra.mxu0 0.0
    %1015 = vmatprep.subr.mxu0 0.0
    %1016 = vmatpush1.xpose.msra.mxu0 0.0
    %1017 = vmatprep.subr.mxu0 0.0
    %1018 = vmatpush1.xpose.msra.mxu0 0.0
    %1019 = vmatprep.subr.mxu0 0.0
    %1020 = vmatpush1.xpose.msra.mxu0 0.0
    %1021 = vmatprep.subr.mxu0 0.0
    %1022 = vmatpush1.xpose.msra.mxu0 0.0
    %1023 = vmatprep.subr.mxu0 0.0
    %1024 = vmatpush1.xpose.msra.mxu0 0.0
    %1025 = vmatprep.subr.mxu0 0.0
    %1026 = vmatpush1.xpose.msra.mxu0 0.0
    %1027 = vmatprep.subr.mxu0 0.0
    %1028 = vmatpush1.xpose.msra.mxu0 0.0
    %1029 = vmatprep.mubr.f32.mxu0 0.0
    %1030 = vmatmul.mubr.f32.gmra.mrb[0].mxu0 %v960
    %v1031 = vpop.f32.mrb[0].mxu0
    %v1032 = vadd.f32 0.0, %v1031
    %v1033 = vpop.f32.mrb[0].mxu0
    %1034 = vdwg.mxu0
    %v1036 = vsel %vm303, %v800, 0
    %v1039 = vsel %vm303, %v878, 0
    %1041 = vmatprep.subr.mxu0 0.0
    %1042 = vmatpush1.xpose.msra.mxu0 %v1039
    %1043 = vmatprep.subr.mxu0 0.0
    %1044 = vmatpush1.xpose.msra.mxu0 0.0
    %1045 = vmatprep.subr.mxu0 0.0
    %1046 = vmatpush1.xpose.msra.mxu0 0.0
    %1047 = vmatprep.subr.mxu0 0.0
    %1048 = vmatpush1.xpose.msra.mxu0 0.0
    %1049 = vmatprep.subr.mxu0 0.0
    %1050 = vmatpush1.xpose.msra.mxu0 0.0
    %1051 = vmatprep.subr.mxu0 0.0
    %1052 = vmatpush1.xpose.msra.mxu0 0.0
    %1053 = vmatprep.subr.mxu0 0.0
    %1054 = vmatpush1.xpose.msra.mxu0 0.0
    %1055 = vmatprep.subr.mxu0 0.0
    %1056 = vmatpush1.xpose.msra.mxu0 0.0
    %1057 = vmatprep.subr.mxu0 0.0
    %1058 = vmatpush1.xpose.msra.mxu0 0.0
    %1059 = vmatprep.subr.mxu0 0.0
    %1060 = vmatpush1.xpose.msra.mxu0 0.0
    %1061 = vmatprep.subr.mxu0 0.0
    %1062 = vmatpush1.xpose.msra.mxu0 0.0
    %1063 = vmatprep.subr.mxu0 0.0
    %1064 = vmatpush1.xpose.msra.mxu0 0.0
    %1065 = vmatprep.subr.mxu0 0.0
    %1066 = vmatpush1.xpose.msra.mxu0 0.0
    %1067 = vmatprep.subr.mxu0 0.0
    %1068 = vmatpush1.xpose.msra.mxu0 0.0
    %1069 = vmatprep.subr.mxu0 0.0
    %1070 = vmatpush1.xpose.msra.mxu0 0.0
    %1071 = vmatprep.subr.mxu0 0.0
    %1072 = vmatpush1.xpose.msra.mxu0 0.0
    %1073 = vmatprep.subr.mxu0 0.0
    %1074 = vmatpush1.xpose.msra.mxu0 0.0
    %1075 = vmatprep.subr.mxu0 0.0
    %1076 = vmatpush1.xpose.msra.mxu0 0.0
    %1077 = vmatprep.subr.mxu0 0.0
    %1078 = vmatpush1.xpose.msra.mxu0 0.0
    %1079 = vmatprep.subr.mxu0 0.0
    %1080 = vmatpush1.xpose.msra.mxu0 0.0
    %1081 = vmatprep.subr.mxu0 0.0
    %1082 = vmatpush1.xpose.msra.mxu0 0.0
    %1083 = vmatprep.subr.mxu0 0.0
    %1084 = vmatpush1.xpose.msra.mxu0 0.0
    %1085 = vmatprep.subr.mxu0 0.0
    %1086 = vmatpush1.xpose.msra.mxu0 0.0
    %1087 = vmatprep.subr.mxu0 0.0
    %1088 = vmatpush1.xpose.msra.mxu0 0.0
    %1089 = vmatprep.subr.mxu0 0.0
    %1090 = vmatpush1.xpose.msra.mxu0 0.0
    %1091 = vmatprep.subr.mxu0 0.0
    %1092 = vmatpush1.xpose.msra.mxu0 0.0
    %1093 = vmatprep.subr.mxu0 0.0
    %1094 = vmatpush1.xpose.msra.mxu0 0.0
    %1095 = vmatprep.subr.mxu0 0.0
    %1096 = vmatpush1.xpose.msra.mxu0 0.0
    %1097 = vmatprep.subr.mxu0 0.0
    %1098 = vmatpush1.xpose.msra.mxu0 0.0
    %1099 = vmatprep.subr.mxu0 0.0
    %1100 = vmatpush1.xpose.msra.mxu0 0.0
    %1101 = vmatprep.subr.mxu0 0.0
    %1102 = vmatpush1.xpose.msra.mxu0 0.0
    %1103 = vmatprep.subr.mxu0 0.0
    %1104 = vmatpush1.xpose.msra.mxu0 0.0
    %1105 = vmatprep.mubr.f32.mxu0 0.0
    %1106 = vmatmul.mubr.f32.gmra.mrb[0].mxu0 %v1036
    %v1107 = vpop.f32.mrb[0].mxu0
    %v1108 = vadd.f32 0.0, %v1107
    %v1109 = vpop.f32.mrb[0].mxu0
    %1110 = vdwg.mxu0
    %v1111 = vmul.f32 %v1032, 0.35355338
    %v1112 = vmul.f32 %v1108, 0.35355338
    %v1113 = vadd.f32 %v1111, %v461
    %v1114 = vadd.f32 %v1112, %v465
    %v1115 = vsel %vm303, %v1113, -inf
    %1116 = vmax.xlane.f32.xlu0 %v1115
    %v1117 = vpop.xlane.xlu0 %1116
    %v1118 = vsel %vm303, %v1114, -inf
    %1119 = vmax.xlane.f32.xlu0 %v1118
    %v1120 = vpop.xlane.xlu0 %1119
    %v1121 = vsub.f32 %v1113, %v1117
    %v1122 = vsub.f32 %v1114, %v1120
    %v1123 = vmul.f32 %v1121, 1.442695
    %v1124 = vpow.pop %v1123
    %v1125 = vmul.f32 %v1122, 1.442695
    %v1126 = vpow.pop %v1125
    %v1127 = vsel %vm303, %v1124, 0.0
    %1128 = vadd.xlane.f32.xlu0 %v1127
    %v1129 = vpop.xlane.xlu0 %1128
    %v1130 = vsel %vm303, %v1126, 0.0
    %1131 = vadd.xlane.f32.xlu0 %v1130
    %v1132 = vpop.xlane.xlu0 %1131
    %v1133 = vrcp.pop %v1129
    %v1134 = vrcp.pop %v1132
    %v1135 = vmul.f32 %v1124, %v1133
    %v1136 = vmul.f32 %v1126, %v1134
    %v1138 = vsel %vm303, %v1135, 0
    %1140 = vmatprep.subr.mxu0 0.0
    %1141 = vmatpush1.msra.mxu0 %v951
    %1142 = vmatprep.subr.mxu0 0.0
    %1143 = vmatpush1.msra.mxu0 0.0
    %1144 = vmatprep.subr.mxu0 0.0
    %1145 = vmatpush1.msra.mxu0 0.0
    %1146 = vmatprep.subr.mxu0 0.0
    %1147 = vmatpush1.msra.mxu0 0.0
    %1148 = vmatprep.subr.mxu0 0.0
    %1149 = vmatpush1.msra.mxu0 0.0
    %1150 = vmatprep.subr.mxu0 0.0
    %1151 = vmatpush1.msra.mxu0 0.0
    %1152 = vmatprep.subr.mxu0 0.0
    %1153 = vmatpush1.msra.mxu0 0.0
    %1154 = vmatprep.subr.mxu0 0.0
    %1155 = vmatpush1.msra.mxu0 0.0
    %1156 = vmatprep.subr.mxu0 0.0
    %1157 = vmatpush1.msra.mxu0 0.0
    %1158 = vmatprep.subr.mxu0 0.0
    %1159 = vmatpush1.msra.mxu0 0.0
    %1160 = vmatprep.subr.mxu0 0.0
    %1161 = vmatpush1.msra.mxu0 0.0
    %1162 = vmatprep.subr.mxu0 0.0
    %1163 = vmatpush1.msra.mxu0 0.0
    %1164 = vmatprep.subr.mxu0 0.0
    %1165 = vmatpush1.msra.mxu0 0.0
    %1166 = vmatprep.subr.mxu0 0.0
    %1167 = vmatpush1.msra.mxu0 0.0
    %1168 = vmatprep.subr.mxu0 0.0
    %1169 = vmatpush1.msra.mxu0 0.0
    %1170 = vmatprep.subr.mxu0 0.0
    %1171 = vmatpush1.msra.mxu0 0.0
    %1172 = vmatprep.subr.mxu0 0.0
    %1173 = vmatpush1.msra.mxu0 0.0
    %1174 = vmatprep.subr.mxu0 0.0
    %1175 = vmatpush1.msra.mxu0 0.0
    %1176 = vmatprep.subr.mxu0 0.0
    %1177 = vmatpush1.msra.mxu0 0.0
    %1178 = vmatprep.subr.mxu0 0.0
    %1179 = vmatpush1.msra.mxu0 0.0
    %1180 = vmatprep.subr.mxu0 0.0
    %1181 = vmatpush1.msra.mxu0 0.0
    %1182 = vmatprep.subr.mxu0 0.0
    %1183 = vmatpush1.msra.mxu0 0.0
    %1184 = vmatprep.subr.mxu0 0.0
    %1185 = vmatpush1.msra.mxu0 0.0
    %1186 = vmatprep.subr.mxu0 0.0
    %1187 = vmatpush1.msra.mxu0 0.0
    %1188 = vmatprep.subr.mxu0 0.0
    %1189 = vmatpush1.msra.mxu0 0.0
    %1190 = vmatprep.subr.mxu0 0.0
    %1191 = vmatpush1.msra.mxu0 0.0
    %1192 = vmatprep.subr.mxu0 0.0
    %1193 = vmatpush1.msra.mxu0 0.0
    %1194 = vmatprep.subr.mxu0 0.0
    %1195 = vmatpush1.msra.mxu0 0.0
    %1196 = vmatprep.subr.mxu0 0.0
    %1197 = vmatpush1.msra.mxu0 0.0
    %1198 = vmatprep.subr.mxu0 0.0
    %1199 = vmatpush1.msra.mxu0 0.0
    %1200 = vmatprep.subr.mxu0 0.0
    %1201 = vmatpush1.msra.mxu0 0.0
    %1202 = vmatprep.subr.mxu0 0.0
    %1203 = vmatpush1.msra.mxu0 0.0
    %1204 = vmatprep.mubr.f32.mxu0 0.0
    %1205 = vmatmul.mubr.f32.gmra.mrb[0].mxu0 %v1138
    %v1206 = vpop.f32.mrb[0].mxu0
    %v1207 = vadd.f32 0.0, %v1206
    %v1208 = vpop.f32.mrb[0].mxu0
    %1209 = vdwg.mxu0
    %v1211 = vsel %vm303, %v1136, 0
    %1213 = vmatprep.subr.mxu0 0.0
    %1214 = vmatpush1.msra.mxu0 %v956
    %1215 = vmatprep.subr.mxu0 0.0
    %1216 = vmatpush1.msra.mxu0 0.0
    %1217 = vmatprep.subr.mxu0 0.0
    %1218 = vmatpush1.msra.mxu0 0.0
    %1219 = vmatprep.subr.mxu0 0.0
    %1220 = vmatpush1.msra.mxu0 0.0
    %1221 = vmatprep.subr.mxu0 0.0
    %1222 = vmatpush1.msra.mxu0 0.0
    %1223 = vmatprep.subr.mxu0 0.0
    %1224 = vmatpush1.msra.mxu0 0.0
    %1225 = vmatprep.subr.mxu0 0.0
    %1226 = vmatpush1.msra.mxu0 0.0
    %1227 = vmatprep.subr.mxu0 0.0
    %1228 = vmatpush1.msra.mxu0 0.0
    %1229 = vmatprep.subr.mxu0 0.0
    %1230 = vmatpush1.msra.mxu0 0.0
    %1231 = vmatprep.subr.mxu0 0.0
    %1232 = vmatpush1.msra.mxu0 0.0
    %1233 = vmatprep.subr.mxu0 0.0
    %1234 = vmatpush1.msra.mxu0 0.0
    %1235 = vmatprep.subr.mxu0 0.0
    %1236 = vmatpush1.msra.mxu0 0.0
    %1237 = vmatprep.subr.mxu0 0.0
    %1238 = vmatpush1.msra.mxu0 0.0
    %1239 = vmatprep.subr.mxu0 0.0
    %1240 = vmatpush1.msra.mxu0 0.0
    %1241 = vmatprep.subr.mxu0 0.0
    %1242 = vmatpush1.msra.mxu0 0.0
    %1243 = vmatprep.subr.mxu0 0.0
    %1244 = vmatpush1.msra.mxu0 0.0
    %1245 = vmatprep.subr.mxu0 0.0
    %1246 = vmatpush1.msra.mxu0 0.0
    %1247 = vmatprep.subr.mxu0 0.0
    %1248 = vmatpush1.msra.mxu0 0.0
    %1249 = vmatprep.subr.mxu0 0.0
    %1250 = vmatpush1.msra.mxu0 0.0
    %1251 = vmatprep.subr.mxu0 0.0
    %1252 = vmatpush1.msra.mxu0 0.0
    %1253 = vmatprep.subr.mxu0 0.0
    %1254 = vmatpush1.msra.mxu0 0.0
    %1255 = vmatprep.subr.mxu0 0.0
    %1256 = vmatpush1.msra.mxu0 0.0
    %1257 = vmatprep.subr.mxu0 0.0
    %1258 = vmatpush1.msra.mxu0 0.0
    %1259 = vmatprep.subr.mxu0 0.0
    %1260 = vmatpush1.msra.mxu0 0.0
    %1261 = vmatprep.subr.mxu0 0.0
    %1262 = vmatpush1.msra.mxu0 0.0
    %1263 = vmatprep.subr.mxu0 0.0
    %1264 = vmatpush1.msra.mxu0 0.0
    %1265 = vmatprep.subr.mxu0 0.0
    %1266 = vmatpush1.msra.mxu0 0.0
    %1267 = vmatprep.subr.mxu0 0.0
    %1268 = vmatpush1.msra.mxu0 0.0
    %1269 = vmatprep.subr.mxu0 0.0
    %1270 = vmatpush1.msra.mxu0 0.0
    %1271 = vmatprep.subr.mxu0 0.0
    %1272 = vmatpush1.msra.mxu0 0.0
    %1273 = vmatprep.subr.mxu0 0.0
    %1274 = vmatpush1.msra.mxu0 0.0
    %1275 = vmatprep.subr.mxu0 0.0
    %1276 = vmatpush1.msra.mxu0 0.0
    %1277 = vmatprep.mubr.f32.mxu0 0.0
    %1278 = vmatmul.mubr.f32.gmra.mrb[0].mxu0 %v1211
    %v1279 = vpop.f32.mrb[0].mxu0
    %v1280 = vadd.f32 0.0, %v1279
    %v1281 = vpop.f32.mrb[0].mxu0
    %1282 = vdwg.mxu0
    %v1284 = vsel %vm303, %v1207, 0
    %v1287 = vsel %vm303, %v1280, 0
    %1289 = vmatprep.subr.mxu0 0.0
    %1290 = vmatpush1.msra.mxu0 %v724
    %1291 = vmatprep.subr.mxu0 0.0
    %1292 = vmatpush1.msra.mxu0 0.0
    %1293 = vmatprep.subr.mxu0 0.0
    %1294 = vmatpush1.msra.mxu0 0.0
    %1295 = vmatprep.subr.mxu0 0.0
    %1296 = vmatpush1.msra.mxu0 0.0
    %1297 = vmatprep.subr.mxu0 0.0
    %1298 = vmatpush1.msra.mxu0 0.0
    %1299 = vmatprep.subr.mxu0 0.0
    %1300 = vmatpush1.msra.mxu0 0.0
    %1301 = vmatprep.subr.mxu0 0.0
    %1302 = vmatpush1.msra.mxu0 0.0
    %1303 = vmatprep.subr.mxu0 0.0
    %1304 = vmatpush1.msra.mxu0 0.0
    %1305 = vmatprep.subr.mxu0 0.0
    %1306 = vmatpush1.msra.mxu0 0.0
    %1307 = vmatprep.subr.mxu0 0.0
    %1308 = vmatpush1.msra.mxu0 0.0
    %1309 = vmatprep.subr.mxu0 0.0
    %1310 = vmatpush1.msra.mxu0 0.0
    %1311 = vmatprep.subr.mxu0 0.0
    %1312 = vmatpush1.msra.mxu0 0.0
    %1313 = vmatprep.subr.mxu0 0.0
    %1314 = vmatpush1.msra.mxu0 0.0
    %1315 = vmatprep.subr.mxu0 0.0
    %1316 = vmatpush1.msra.mxu0 0.0
    %1317 = vmatprep.subr.mxu0 0.0
    %1318 = vmatpush1.msra.mxu0 0.0
    %1319 = vmatprep.subr.mxu0 0.0
    %1320 = vmatpush1.msra.mxu0 0.0
    %1321 = vmatprep.subr.mxu0 0.0
    %1322 = vmatpush1.msra.mxu0 0.0
    %1323 = vmatprep.subr.mxu0 0.0
    %1324 = vmatpush1.msra.mxu0 0.0
    %1325 = vmatprep.subr.mxu0 0.0
    %1326 = vmatpush1.msra.mxu0 0.0
    %1327 = vmatprep.subr.mxu0 0.0
    %1328 = vmatpush1.msra.mxu0 0.0
    %1329 = vmatprep.subr.mxu0 0.0
    %1330 = vmatpush1.msra.mxu0 0.0
    %1331 = vmatprep.subr.mxu0 0.0
    %1332 = vmatpush1.msra.mxu0 0.0
    %1333 = vmatprep.subr.mxu0 0.0
    %1334 = vmatpush1.msra.mxu0 0.0
    %1335 = vmatprep.subr.mxu0 0.0
    %1336 = vmatpush1.msra.mxu0 0.0
    %1337 = vmatprep.subr.mxu0 0.0
    %1338 = vmatpush1.msra.mxu0 0.0
    %1339 = vmatprep.subr.mxu0 0.0
    %1340 = vmatpush1.msra.mxu0 0.0
    %1341 = vmatprep.subr.mxu0 0.0
    %1342 = vmatpush1.msra.mxu0 0.0
    %1343 = vmatprep.subr.mxu0 0.0
    %1344 = vmatpush1.msra.mxu0 0.0
    %1345 = vmatprep.subr.mxu0 0.0
    %1346 = vmatpush1.msra.mxu0 0.0
    %1347 = vmatprep.subr.mxu0 0.0
    %1348 = vmatpush1.msra.mxu0 0.0
    %1349 = vmatprep.subr.mxu0 0.0
    %1350 = vmatpush1.msra.mxu0 0.0
    %1351 = vmatprep.subr.mxu0 0.0
    %1352 = vmatpush1.msra.mxu0 0.0
    %1353 = vmatprep.mubr.f32.mxu0 0.0
    %1354 = vmatmul.mubr.f32.gmra.mrb[0].mxu0 %v1284
    %v1355 = vpop.f32.mrb[0].mxu0
    %v1356 = vadd.f32 0.0, %v1355
    %v1357 = vpop.f32.mrb[0].mxu0
    %1358 = vmatprep.mubr.f32.mxu0 0.0
    %1359 = vmatmul.mubr.f32.gmra.mrb[0].mxu0 %v1287
    %v1360 = vpop.f32.mrb[0].mxu0
    %v1361 = vadd.f32 0.0, %v1360
    %v1362 = vpop.f32.mrb[0].mxu0
    %1363 = vdwg.mxu0
    %v1364 = vadd.f32 %v719, %v1356
    %v1365 = vadd.f32 %v720, %v1361
    %v1366 = vld [vmem:[#allocation2 + $0x40] sm:$0xff]
    %v1367 = vld [vmem:[#allocation2 + $0x48] sm:$0xff]
    %v1368 = vld [vmem:[#allocation2 + $0x50] sm:$0xff]
    %v1369 = vld [vmem:[#allocation2 + $0x58] sm:$0xff]
    %v1371 = vsel %vm62, %v1366, 0
    %1373 = vmatprep.subr.mxu0 0.0
    %1374 = vmatpush1.xpose.msra.mxu0 %v1371
    %1375 = vmatprep.subr.mxu0 0.0
    %1376 = vmatpush1.xpose.msra.mxu0 0.0
    %1377 = vmatprep.subr.mxu0 0.0
    %1378 = vmatpush1.xpose.msra.mxu0 0.0
    %1379 = vmatprep.subr.mxu0 0.0
    %1380 = vmatpush1.xpose.msra.mxu0 0.0
    %1381 = vmatprep.subr.mxu0 0.0
    %1382 = vmatpush1.xpose.msra.mxu0 0.0
    %1383 = vmatprep.subr.mxu0 0.0
    %1384 = vmatpush1.xpose.msra.mxu0 0.0
    %1385 = vmatprep.subr.mxu0 0.0
    %1386 = vmatpush1.xpose.msra.mxu0 0.0
    %1387 = vmatprep.subr.mxu0 0.0
    %1388 = vmatpush1.xpose.msra.mxu0 0.0
    %1389 = vmatprep.subr.mxu0 0.0
    %1390 = vmatpush1.xpose.msra.mxu0 0.0
    %1391 = vmatprep.subr.mxu0 0.0
    %1392 = vmatpush1.xpose.msra.mxu0 0.0
    %1393 = vmatprep.subr.mxu0 0.0
    %1394 = vmatpush1.xpose.msra.mxu0 0.0
    %1395 = vmatprep.subr.mxu0 0.0
    %1396 = vmatpush1.xpose.msra.mxu0 0.0
    %1397 = vmatprep.subr.mxu0 0.0
    %1398 = vmatpush1.xpose.msra.mxu0 0.0
    %1399 = vmatprep.subr.mxu0 0.0
    %1400 = vmatpush1.xpose.msra.mxu0 0.0
    %1401 = vmatprep.subr.mxu0 0.0
    %1402 = vmatpush1.xpose.msra.mxu0 0.0
    %1403 = vmatprep.subr.mxu0 0.0
    %1404 = vmatpush1.xpose.msra.mxu0 0.0
    %1405 = vmatprep.subr.mxu0 0.0
    %1406 = vmatpush1.xpose.msra.mxu0 0.0
    %1407 = vmatprep.subr.mxu0 0.0
    %1408 = vmatpush1.xpose.msra.mxu0 0.0
    %1409 = vmatprep.subr.mxu0 0.0
    %1410 = vmatpush1.xpose.msra.mxu0 0.0
    %1411 = vmatprep.subr.mxu0 0.0
    %1412 = vmatpush1.xpose.msra.mxu0 0.0
    %1413 = vmatprep.subr.mxu0 0.0
    %1414 = vmatpush1.xpose.msra.mxu0 0.0
    %1415 = vmatprep.subr.mxu0 0.0
    %1416 = vmatpush1.xpose.msra.mxu0 0.0
    %1417 = vmatprep.subr.mxu0 0.0
    %1418 = vmatpush1.xpose.msra.mxu0 0.0
    %1419 = vmatprep.subr.mxu0 0.0
    %1420 = vmatpush1.xpose.msra.mxu0 0.0
    %1421 = vmatprep.subr.mxu0 0.0
    %1422 = vmatpush1.xpose.msra.mxu0 0.0
    %1423 = vmatprep.subr.mxu0 0.0
    %1424 = vmatpush1.xpose.msra.mxu0 0.0
    %1425 = vmatprep.subr.mxu0 0.0
    %1426 = vmatpush1.xpose.msra.mxu0 0.0
    %1427 = vmatprep.subr.mxu0 0.0
    %1428 = vmatpush1.xpose.msra.mxu0 0.0
    %1429 = vmatprep.subr.mxu0 0.0
    %1430 = vmatpush1.xpose.msra.mxu0 0.0
    %1431 = vmatprep.subr.mxu0 0.0
    %1432 = vmatpush1.xpose.msra.mxu0 0.0
    %1433 = vmatprep.subr.mxu0 0.0
    %1434 = vmatpush1.xpose.msra.mxu0 0.0
    %1435 = vmatprep.subr.mxu0 0.0
    %1436 = vmatpush1.xpose.msra.mxu0 0.0
    %1437 = vmatprep.mubr.f32.mxu0 0.0
    %1438 = vmatmul.mubr.f32.gmra.mrb[0].mxu0 %v64
    %v1439 = vpop.f32.mrb[0].mxu0
    %v1440 = vadd.f32 0.0, %v1439
    %v1441 = vpop.f32.mrb[0].mxu0
    %1442 = vmatprep.mubr.f32.mxu0 0.0
    %1443 = vmatmul.mubr.f32.gmra.mrb[0].mxu0 %v67
    %v1444 = vpop.f32.mrb[0].mxu0
    %v1445 = vadd.f32 0.0, %v1444
    %v1446 = vpop.f32.mrb[0].mxu0
    %1447 = vdwg.mxu0
    %v1449 = vsel %vm62, %v1367, 0
    %1451 = vmatprep.subr.mxu0 0.0
    %1452 = vmatpush1.xpose.msra.mxu0 %v1449
    %1453 = vmatprep.subr.mxu0 0.0
    %1454 = vmatpush1.xpose.msra.mxu0 0.0
    %1455 = vmatprep.subr.mxu0 0.0
    %1456 = vmatpush1.xpose.msra.mxu0 0.0
    %1457 = vmatprep.subr.mxu0 0.0
    %1458 = vmatpush1.xpose.msra.mxu0 0.0
    %1459 = vmatprep.subr.mxu0 0.0
    %1460 = vmatpush1.xpose.msra.mxu0 0.0
    %1461 = vmatprep.subr.mxu0 0.0
    %1462 = vmatpush1.xpose.msra.mxu0 0.0
    %1463 = vmatprep.subr.mxu0 0.0
    %1464 = vmatpush1.xpose.msra.mxu0 0.0
    %1465 = vmatprep.subr.mxu0 0.0
    %1466 = vmatpush1.xpose.msra.mxu0 0.0
    %1467 = vmatprep.subr.mxu0 0.0
    %1468 = vmatpush1.xpose.msra.mxu0 0.0
    %1469 = vmatprep.subr.mxu0 0.0
    %1470 = vmatpush1.xpose.msra.mxu0 0.0
    %1471 = vmatprep.subr.mxu0 0.0
    %1472 = vmatpush1.xpose.msra.mxu0 0.0
    %1473 = vmatprep.subr.mxu0 0.0
    %1474 = vmatpush1.xpose.msra.mxu0 0.0
    %1475 = vmatprep.subr.mxu0 0.0
    %1476 = vmatpush1.xpose.msra.mxu0 0.0
    %1477 = vmatprep.subr.mxu0 0.0
    %1478 = vmatpush1.xpose.msra.mxu0 0.0
    %1479 = vmatprep.subr.mxu0 0.0
    %1480 = vmatpush1.xpose.msra.mxu0 0.0
    %1481 = vmatprep.subr.mxu0 0.0
    %1482 = vmatpush1.xpose.msra.mxu0 0.0
    %1483 = vmatprep.subr.mxu0 0.0
    %1484 = vmatpush1.xpose.msra.mxu0 0.0
    %1485 = vmatprep.subr.mxu0 0.0
    %1486 = vmatpush1.xpose.msra.mxu0 0.0
    %1487 = vmatprep.subr.mxu0 0.0
    %1488 = vmatpush1.xpose.msra.mxu0 0.0
    %1489 = vmatprep.subr.mxu0 0.0
    %1490 = vmatpush1.xpose.msra.mxu0 0.0
    %1491 = vmatprep.subr.mxu0 0.0
    %1492 = vmatpush1.xpose.msra.mxu0 0.0
    %1493 = vmatprep.subr.mxu0 0.0
    %1494 = vmatpush1.xpose.msra.mxu0 0.0
    %1495 = vmatprep.subr.mxu0 0.0
    %1496 = vmatpush1.xpose.msra.mxu0 0.0
    %1497 = vmatprep.subr.mxu0 0.0
    %1498 = vmatpush1.xpose.msra.mxu0 0.0
    %1499 = vmatprep.subr.mxu0 0.0
    %1500 = vmatpush1.xpose.msra.mxu0 0.0
    %1501 = vmatprep.subr.mxu0 0.0
    %1502 = vmatpush1.xpose.msra.mxu0 0.0
    %1503 = vmatprep.subr.mxu0 0.0
    %1504 = vmatpush1.xpose.msra.mxu0 0.0
    %1505 = vmatprep.subr.mxu0 0.0
    %1506 = vmatpush1.xpose.msra.mxu0 0.0
    %1507 = vmatprep.subr.mxu0 0.0
    %1508 = vmatpush1.xpose.msra.mxu0 0.0
    %1509 = vmatprep.subr.mxu0 0.0
    %1510 = vmatpush1.xpose.msra.mxu0 0.0
    %1511 = vmatprep.subr.mxu0 0.0
    %1512 = vmatpush1.xpose.msra.mxu0 0.0
    %1513 = vmatprep.subr.mxu0 0.0
    %1514 = vmatpush1.xpose.msra.mxu0 0.0
    %1515 = vmatprep.mubr.f32.mxu0 0.0
    %1516 = vmatmul.mubr.f32.gmra.mrb[0].mxu0 %v64
    %v1517 = vpop.f32.mrb[0].mxu0
    %v1518 = vadd.f32 0.0, %v1517
    %v1519 = vpop.f32.mrb[0].mxu0
    %1520 = vmatprep.mubr.f32.mxu0 0.0
    %1521 = vmatmul.mubr.f32.gmra.mrb[0].mxu0 %v67
    %v1522 = vpop.f32.mrb[0].mxu0
    %v1523 = vadd.f32 0.0, %v1522
    %v1524 = vpop.f32.mrb[0].mxu0
    %1525 = vdwg.mxu0
    %v1527 = vsel %vm62, %v1368, 0
    %1529 = vmatprep.subr.mxu0 0.0
    %1530 = vmatpush1.xpose.msra.mxu0 %v1527
    %1531 = vmatprep.subr.mxu0 0.0
    %1532 = vmatpush1.xpose.msra.mxu0 0.0
    %1533 = vmatprep.subr.mxu0 0.0
    %1534 = vmatpush1.xpose.msra.mxu0 0.0
    %1535 = vmatprep.subr.mxu0 0.0
    %1536 = vmatpush1.xpose.msra.mxu0 0.0
    %1537 = vmatprep.subr.mxu0 0.0
    %1538 = vmatpush1.xpose.msra.mxu0 0.0
    %1539 = vmatprep.subr.mxu0 0.0
    %1540 = vmatpush1.xpose.msra.mxu0 0.0
    %1541 = vmatprep.subr.mxu0 0.0
    %1542 = vmatpush1.xpose.msra.mxu0 0.0
    %1543 = vmatprep.subr.mxu0 0.0
    %1544 = vmatpush1.xpose.msra.mxu0 0.0
    %1545 = vmatprep.subr.mxu0 0.0
    %1546 = vmatpush1.xpose.msra.mxu0 0.0
    %1547 = vmatprep.subr.mxu0 0.0
    %1548 = vmatpush1.xpose.msra.mxu0 0.0
    %1549 = vmatprep.subr.mxu0 0.0
    %1550 = vmatpush1.xpose.msra.mxu0 0.0
    %1551 = vmatprep.subr.mxu0 0.0
    %1552 = vmatpush1.xpose.msra.mxu0 0.0
    %1553 = vmatprep.subr.mxu0 0.0
    %1554 = vmatpush1.xpose.msra.mxu0 0.0
    %1555 = vmatprep.subr.mxu0 0.0
    %1556 = vmatpush1.xpose.msra.mxu0 0.0
    %1557 = vmatprep.subr.mxu0 0.0
    %1558 = vmatpush1.xpose.msra.mxu0 0.0
    %1559 = vmatprep.subr.mxu0 0.0
    %1560 = vmatpush1.xpose.msra.mxu0 0.0
    %1561 = vmatprep.subr.mxu0 0.0
    %1562 = vmatpush1.xpose.msra.mxu0 0.0
    %1563 = vmatprep.subr.mxu0 0.0
    %1564 = vmatpush1.xpose.msra.mxu0 0.0
    %1565 = vmatprep.subr.mxu0 0.0
    %1566 = vmatpush1.xpose.msra.mxu0 0.0
    %1567 = vmatprep.subr.mxu0 0.0
    %1568 = vmatpush1.xpose.msra.mxu0 0.0
    %1569 = vmatprep.subr.mxu0 0.0
    %1570 = vmatpush1.xpose.msra.mxu0 0.0
    %1571 = vmatprep.subr.mxu0 0.0
    %1572 = vmatpush1.xpose.msra.mxu0 0.0
    %1573 = vmatprep.subr.mxu0 0.0
    %1574 = vmatpush1.xpose.msra.mxu0 0.0
    %1575 = vmatprep.subr.mxu0 0.0
    %1576 = vmatpush1.xpose.msra.mxu0 0.0
    %1577 = vmatprep.subr.mxu0 0.0
    %1578 = vmatpush1.xpose.msra.mxu0 0.0
    %1579 = vmatprep.subr.mxu0 0.0
    %1580 = vmatpush1.xpose.msra.mxu0 0.0
    %1581 = vmatprep.subr.mxu0 0.0
    %1582 = vmatpush1.xpose.msra.mxu0 0.0
    %1583 = vmatprep.subr.mxu0 0.0
    %1584 = vmatpush1.xpose.msra.mxu0 0.0
    %1585 = vmatprep.subr.mxu0 0.0
    %1586 = vmatpush1.xpose.msra.mxu0 0.0
    %1587 = vmatprep.subr.mxu0 0.0
    %1588 = vmatpush1.xpose.msra.mxu0 0.0
    %1589 = vmatprep.subr.mxu0 0.0
    %1590 = vmatpush1.xpose.msra.mxu0 0.0
    %1591 = vmatprep.subr.mxu0 0.0
    %1592 = vmatpush1.xpose.msra.mxu0 0.0
    %1593 = vmatprep.mubr.f32.mxu0 0.0
    %1594 = vmatmul.mubr.f32.gmra.mrb[0].mxu0 %v64
    %v1595 = vpop.f32.mrb[0].mxu0
    %v1596 = vadd.f32 0.0, %v1595
    %v1597 = vpop.f32.mrb[0].mxu0
    %1598 = vmatprep.mubr.f32.mxu0 0.0
    %1599 = vmatmul.mubr.f32.gmra.mrb[0].mxu0 %v67
    %v1600 = vpop.f32.mrb[0].mxu0
    %v1601 = vadd.f32 0.0, %v1600
    %v1602 = vpop.f32.mrb[0].mxu0
    %1603 = vdwg.mxu0
    %v1605 = vsel %vm303, %v1440, 0
    %v1608 = vsel %vm303, %v1518, 0
    %1610 = vmatprep.subr.mxu0 0.0
    %1611 = vmatpush1.xpose.msra.mxu0 %v1608
    %1612 = vmatprep.subr.mxu0 0.0
    %1613 = vmatpush1.xpose.msra.mxu0 0.0
    %1614 = vmatprep.subr.mxu0 0.0
    %1615 = vmatpush1.xpose.msra.mxu0 0.0
    %1616 = vmatprep.subr.mxu0 0.0
    %1617 = vmatpush1.xpose.msra.mxu0 0.0
    %1618 = vmatprep.subr.mxu0 0.0
    %1619 = vmatpush1.xpose.msra.mxu0 0.0
    %1620 = vmatprep.subr.mxu0 0.0
    %1621 = vmatpush1.xpose.msra.mxu0 0.0
    %1622 = vmatprep.subr.mxu0 0.0
    %1623 = vmatpush1.xpose.msra.mxu0 0.0
    %1624 = vmatprep.subr.mxu0 0.0
    %1625 = vmatpush1.xpose.msra.mxu0 0.0
    %1626 = vmatprep.subr.mxu0 0.0
    %1627 = vmatpush1.xpose.msra.mxu0 0.0
    %1628 = vmatprep.subr.mxu0 0.0
    %1629 = vmatpush1.xpose.msra.mxu0 0.0
    %1630 = vmatprep.subr.mxu0 0.0
    %1631 = vmatpush1.xpose.msra.mxu0 0.0
    %1632 = vmatprep.subr.mxu0 0.0
    %1633 = vmatpush1.xpose.msra.mxu0 0.0
    %1634 = vmatprep.subr.mxu0 0.0
    %1635 = vmatpush1.xpose.msra.mxu0 0.0
    %1636 = vmatprep.subr.mxu0 0.0
    %1637 = vmatpush1.xpose.msra.mxu0 0.0
    %1638 = vmatprep.subr.mxu0 0.0
    %1639 = vmatpush1.xpose.msra.mxu0 0.0
    %1640 = vmatprep.subr.mxu0 0.0
    %1641 = vmatpush1.xpose.msra.mxu0 0.0
    %1642 = vmatprep.subr.mxu0 0.0
    %1643 = vmatpush1.xpose.msra.mxu0 0.0
    %1644 = vmatprep.subr.mxu0 0.0
    %1645 = vmatpush1.xpose.msra.mxu0 0.0
    %1646 = vmatprep.subr.mxu0 0.0
    %1647 = vmatpush1.xpose.msra.mxu0 0.0
    %1648 = vmatprep.subr.mxu0 0.0
    %1649 = vmatpush1.xpose.msra.mxu0 0.0
    %1650 = vmatprep.subr.mxu0 0.0
    %1651 = vmatpush1.xpose.msra.mxu0 0.0
    %1652 = vmatprep.subr.mxu0 0.0
    %1653 = vmatpush1.xpose.msra.mxu0 0.0
    %1654 = vmatprep.subr.mxu0 0.0
    %1655 = vmatpush1.xpose.msra.mxu0 0.0
    %1656 = vmatprep.subr.mxu0 0.0
    %1657 = vmatpush1.xpose.msra.mxu0 0.0
    %1658 = vmatprep.subr.mxu0 0.0
    %1659 = vmatpush1.xpose.msra.mxu0 0.0
    %1660 = vmatprep.subr.mxu0 0.0
    %1661 = vmatpush1.xpose.msra.mxu0 0.0
    %1662 = vmatprep.subr.mxu0 0.0
    %1663 = vmatpush1.xpose.msra.mxu0 0.0
    %1664 = vmatprep.subr.mxu0 0.0
    %1665 = vmatpush1.xpose.msra.mxu0 0.0
    %1666 = vmatprep.subr.mxu0 0.0
    %1667 = vmatpush1.xpose.msra.mxu0 0.0
    %1668 = vmatprep.subr.mxu0 0.0
    %1669 = vmatpush1.xpose.msra.mxu0 0.0
    %1670 = vmatprep.subr.mxu0 0.0
    %1671 = vmatpush1.xpose.msra.mxu0 0.0
    %1672 = vmatprep.subr.mxu0 0.0
    %1673 = vmatpush1.xpose.msra.mxu0 0.0
    %1674 = vmatprep.mubr.f32.mxu0 0.0
    %1675 = vmatmul.mubr.f32.gmra.mrb[0].mxu0 %v1605
    %v1676 = vpop.f32.mrb[0].mxu0
    %v1677 = vadd.f32 0.0, %v1676
    %v1678 = vpop.f32.mrb[0].mxu0
    %1679 = vdwg.mxu0
    %v1681 = vsel %vm303, %v1445, 0
    %v1684 = vsel %vm303, %v1523, 0
    %1686 = vmatprep.subr.mxu0 0.0
    %1687 = vmatpush1.xpose.msra.mxu0 %v1684
    %1688 = vmatprep.subr.mxu0 0.0
    %1689 = vmatpush1.xpose.msra.mxu0 0.0
    %1690 = vmatprep.subr.mxu0 0.0
    %1691 = vmatpush1.xpose.msra.mxu0 0.0
    %1692 = vmatprep.subr.mxu0 0.0
    %1693 = vmatpush1.xpose.msra.mxu0 0.0
    %1694 = vmatprep.subr.mxu0 0.0
    %1695 = vmatpush1.xpose.msra.mxu0 0.0
    %1696 = vmatprep.subr.mxu0 0.0
    %1697 = vmatpush1.xpose.msra.mxu0 0.0
    %1698 = vmatprep.subr.mxu0 0.0
    %1699 = vmatpush1.xpose.msra.mxu0 0.0
    %1700 = vmatprep.subr.mxu0 0.0
    %1701 = vmatpush1.xpose.msra.mxu0 0.0
    %1702 = vmatprep.subr.mxu0 0.0
    %1703 = vmatpush1.xpose.msra.mxu0 0.0
    %1704 = vmatprep.subr.mxu0 0.0
    %1705 = vmatpush1.xpose.msra.mxu0 0.0
    %1706 = vmatprep.subr.mxu0 0.0
    %1707 = vmatpush1.xpose.msra.mxu0 0.0
    %1708 = vmatprep.subr.mxu0 0.0
    %1709 = vmatpush1.xpose.msra.mxu0 0.0
    %1710 = vmatprep.subr.mxu0 0.0
    %1711 = vmatpush1.xpose.msra.mxu0 0.0
    %1712 = vmatprep.subr.mxu0 0.0
    %1713 = vmatpush1.xpose.msra.mxu0 0.0
    %1714 = vmatprep.subr.mxu0 0.0
    %1715 = vmatpush1.xpose.msra.mxu0 0.0
    %1716 = vmatprep.subr.mxu0 0.0
    %1717 = vmatpush1.xpose.msra.mxu0 0.0
    %1718 = vmatprep.subr.mxu0 0.0
    %1719 = vmatpush1.xpose.msra.mxu0 0.0
    %1720 = vmatprep.subr.mxu0 0.0
    %1721 = vmatpush1.xpose.msra.mxu0 0.0
    %1722 = vmatprep.subr.mxu0 0.0
    %1723 = vmatpush1.xpose.msra.mxu0 0.0
    %1724 = vmatprep.subr.mxu0 0.0
    %1725 = vmatpush1.xpose.msra.mxu0 0.0
    %1726 = vmatprep.subr.mxu0 0.0
    %1727 = vmatpush1.xpose.msra.mxu0 0.0
    %1728 = vmatprep.subr.mxu0 0.0
    %1729 = vmatpush1.xpose.msra.mxu0 0.0
    %1730 = vmatprep.subr.mxu0 0.0
    %1731 = vmatpush1.xpose.msra.mxu0 0.0
    %1732 = vmatprep.subr.mxu0 0.0
    %1733 = vmatpush1.xpose.msra.mxu0 0.0
    %1734 = vmatprep.subr.mxu0 0.0
    %1735 = vmatpush1.xpose.msra.mxu0 0.0
    %1736 = vmatprep.subr.mxu0 0.0
    %1737 = vmatpush1.xpose.msra.mxu0 0.0
    %1738 = vmatprep.subr.mxu0 0.0
    %1739 = vmatpush1.xpose.msra.mxu0 0.0
    %1740 = vmatprep.subr.mxu0 0.0
    %1741 = vmatpush1.xpose.msra.mxu0 0.0
    %1742 = vmatprep.subr.mxu0 0.0
    %1743 = vmatpush1.xpose.msra.mxu0 0.0
    %1744 = vmatprep.subr.mxu0 0.0
    %1745 = vmatpush1.xpose.msra.mxu0 0.0
    %1746 = vmatprep.subr.mxu0 0.0
    %1747 = vmatpush1.xpose.msra.mxu0 0.0
    %1748 = vmatprep.subr.mxu0 0.0
    %1749 = vmatpush1.xpose.msra.mxu0 0.0
    %1750 = vmatprep.mubr.f32.mxu0 0.0
    %1751 = vmatmul.mubr.f32.gmra.mrb[0].mxu0 %v1681
    %v1752 = vpop.f32.mrb[0].mxu0
    %v1753 = vadd.f32 0.0, %v1752
    %v1754 = vpop.f32.mrb[0].mxu0
    %1755 = vdwg.mxu0
    %v1756 = vmul.f32 %v1677, 0.35355338
    %v1757 = vmul.f32 %v1753, 0.35355338
    %v1758 = vadd.f32 %v1756, %v461
    %v1759 = vadd.f32 %v1757, %v465
    %v1760 = vsel %vm303, %v1758, -inf
    %1761 = vmax.xlane.f32.xlu0 %v1760
    %v1762 = vpop.xlane.xlu0 %1761
    %v1763 = vsel %vm303, %v1759, -inf
    %1764 = vmax.xlane.f32.xlu0 %v1763
    %v1765 = vpop.xlane.xlu0 %1764
    %v1766 = vsub.f32 %v1758, %v1762
    %v1767 = vsub.f32 %v1759, %v1765
    %v1768 = vmul.f32 %v1766, 1.442695
    %v1769 = vpow.pop %v1768
    %v1770 = vmul.f32 %v1767, 1.442695
    %v1771 = vpow.pop %v1770
    %v1772 = vsel %vm303, %v1769, 0.0
    %1773 = vadd.xlane.f32.xlu0 %v1772
    %v1774 = vpop.xlane.xlu0 %1773
    %v1775 = vsel %vm303, %v1771, 0.0
    %1776 = vadd.xlane.f32.xlu0 %v1775
    %v1777 = vpop.xlane.xlu0 %1776
    %v1778 = vrcp.pop %v1774
    %v1779 = vrcp.pop %v1777
    %v1780 = vmul.f32 %v1769, %v1778
    %v1781 = vmul.f32 %v1771, %v1779
    %v1783 = vsel %vm303, %v1780, 0
    %1785 = vmatprep.subr.mxu0 0.0
    %1786 = vmatpush1.msra.mxu0 %v1596
    %1787 = vmatprep.subr.mxu0 0.0
    %1788 = vmatpush1.msra.mxu0 0.0
    %1789 = vmatprep.subr.mxu0 0.0
    %1790 = vmatpush1.msra.mxu0 0.0
    %1791 = vmatprep.subr.mxu0 0.0
    %1792 = vmatpush1.msra.mxu0 0.0
    %1793 = vmatprep.subr.mxu0 0.0
    %1794 = vmatpush1.msra.mxu0 0.0
    %1795 = vmatprep.subr.mxu0 0.0
    %1796 = vmatpush1.msra.mxu0 0.0
    %1797 = vmatprep.subr.mxu0 0.0
    %1798 = vmatpush1.msra.mxu0 0.0
    %1799 = vmatprep.subr.mxu0 0.0
    %1800 = vmatpush1.msra.mxu0 0.0
    %1801 = vmatprep.subr.mxu0 0.0
    %1802 = vmatpush1.msra.mxu0 0.0
    %1803 = vmatprep.subr.mxu0 0.0
    %1804 = vmatpush1.msra.mxu0 0.0
    %1805 = vmatprep.subr.mxu0 0.0
    %1806 = vmatpush1.msra.mxu0 0.0
    %1807 = vmatprep.subr.mxu0 0.0
    %1808 = vmatpush1.msra.mxu0 0.0
    %1809 = vmatprep.subr.mxu0 0.0
    %1810 = vmatpush1.msra.mxu0 0.0
    %1811 = vmatprep.subr.mxu0 0.0
    %1812 = vmatpush1.msra.mxu0 0.0
    %1813 = vmatprep.subr.mxu0 0.0
    %1814 = vmatpush1.msra.mxu0 0.0
    %1815 = vmatprep.subr.mxu0 0.0
    %1816 = vmatpush1.msra.mxu0 0.0
    %1817 = vmatprep.subr.mxu0 0.0
    %1818 = vmatpush1.msra.mxu0 0.0
    %1819 = vmatprep.subr.mxu0 0.0
    %1820 = vmatpush1.msra.mxu0 0.0
    %1821 = vmatprep.subr.mxu0 0.0
    %1822 = vmatpush1.msra.mxu0 0.0
    %1823 = vmatprep.subr.mxu0 0.0
    %1824 = vmatpush1.msra.mxu0 0.0
    %1825 = vmatprep.subr.mxu0 0.0
    %1826 = vmatpush1.msra.mxu0 0.0
    %1827 = vmatprep.subr.mxu0 0.0
    %1828 = vmatpush1.msra.mxu0 0.0
    %1829 = vmatprep.subr.mxu0 0.0
    %1830 = vmatpush1.msra.mxu0 0.0
    %1831 = vmatprep.subr.mxu0 0.0
    %1832 = vmatpush1.msra.mxu0 0.0
    %1833 = vmatprep.subr.mxu0 0.0
    %1834 = vmatpush1.msra.mxu0 0.0
    %1835 = vmatprep.subr.mxu0 0.0
    %1836 = vmatpush1.msra.mxu0 0.0
    %1837 = vmatprep.subr.mxu0 0.0
    %1838 = vmatpush1.msra.mxu0 0.0
    %1839 = vmatprep.subr.mxu0 0.0
    %1840 = vmatpush1.msra.mxu0 0.0
    %1841 = vmatprep.subr.mxu0 0.0
    %1842 = vmatpush1.msra.mxu0 0.0
    %1843 = vmatprep.subr.mxu0 0.0
    %1844 = vmatpush1.msra.mxu0 0.0
    %1845 = vmatprep.subr.mxu0 0.0
    %1846 = vmatpush1.msra.mxu0 0.0
    %1847 = vmatprep.subr.mxu0 0.0
    %1848 = vmatpush1.msra.mxu0 0.0
    %1849 = vmatprep.mubr.f32.mxu0 0.0
    %1850 = vmatmul.mubr.f32.gmra.mrb[0].mxu0 %v1783
    %v1851 = vpop.f32.mrb[0].mxu0
    %v1852 = vadd.f32 0.0, %v1851
    %v1853 = vpop.f32.mrb[0].mxu0
    %1854 = vdwg.mxu0
    %v1856 = vsel %vm303, %v1781, 0
    %1858 = vmatprep.subr.mxu0 0.0
    %1859 = vmatpush1.msra.mxu0 %v1601
    %1860 = vmatprep.subr.mxu0 0.0
    %1861 = vmatpush1.msra.mxu0 0.0
    %1862 = vmatprep.subr.mxu0 0.0
    %1863 = vmatpush1.msra.mxu0 0.0
    %1864 = vmatprep.subr.mxu0 0.0
    %1865 = vmatpush1.msra.mxu0 0.0
    %1866 = vmatprep.subr.mxu0 0.0
    %1867 = vmatpush1.msra.mxu0 0.0
    %1868 = vmatprep.subr.mxu0 0.0
    %1869 = vmatpush1.msra.mxu0 0.0
    %1870 = vmatprep.subr.mxu0 0.0
    %1871 = vmatpush1.msra.mxu0 0.0
    %1872 = vmatprep.subr.mxu0 0.0
    %1873 = vmatpush1.msra.mxu0 0.0
    %1874 = vmatprep.subr.mxu0 0.0
    %1875 = vmatpush1.msra.mxu0 0.0
    %1876 = vmatprep.subr.mxu0 0.0
    %1877 = vmatpush1.msra.mxu0 0.0
    %1878 = vmatprep.subr.mxu0 0.0
    %1879 = vmatpush1.msra.mxu0 0.0
    %1880 = vmatprep.subr.mxu0 0.0
    %1881 = vmatpush1.msra.mxu0 0.0
    %1882 = vmatprep.subr.mxu0 0.0
    %1883 = vmatpush1.msra.mxu0 0.0
    %1884 = vmatprep.subr.mxu0 0.0
    %1885 = vmatpush1.msra.mxu0 0.0
    %1886 = vmatprep.subr.mxu0 0.0
    %1887 = vmatpush1.msra.mxu0 0.0
    %1888 = vmatprep.subr.mxu0 0.0
    %1889 = vmatpush1.msra.mxu0 0.0
    %1890 = vmatprep.subr.mxu0 0.0
    %1891 = vmatpush1.msra.mxu0 0.0
    %1892 = vmatprep.subr.mxu0 0.0
    %1893 = vmatpush1.msra.mxu0 0.0
    %1894 = vmatprep.subr.mxu0 0.0
    %1895 = vmatpush1.msra.mxu0 0.0
    %1896 = vmatprep.subr.mxu0 0.0
    %1897 = vmatpush1.msra.mxu0 0.0
    %1898 = vmatprep.subr.mxu0 0.0
    %1899 = vmatpush1.msra.mxu0 0.0
    %1900 = vmatprep.subr.mxu0 0.0
    %1901 = vmatpush1.msra.mxu0 0.0
    %1902 = vmatprep.subr.mxu0 0.0
    %1903 = vmatpush1.msra.mxu0 0.0
    %1904 = vmatprep.subr.mxu0 0.0
    %1905 = vmatpush1.msra.mxu0 0.0
    %1906 = vmatprep.subr.mxu0 0.0
    %1907 = vmatpush1.msra.mxu0 0.0
    %1908 = vmatprep.subr.mxu0 0.0
    %1909 = vmatpush1.msra.mxu0 0.0
    %1910 = vmatprep.subr.mxu0 0.0
    %1911 = vmatpush1.msra.mxu0 0.0
    %1912 = vmatprep.subr.mxu0 0.0
    %1913 = vmatpush1.msra.mxu0 0.0
    %1914 = vmatprep.subr.mxu0 0.0
    %1915 = vmatpush1.msra.mxu0 0.0
    %1916 = vmatprep.subr.mxu0 0.0
    %1917 = vmatpush1.msra.mxu0 0.0
    %1918 = vmatprep.subr.mxu0 0.0
    %1919 = vmatpush1.msra.mxu0 0.0
    %1920 = vmatprep.subr.mxu0 0.0
    %1921 = vmatpush1.msra.mxu0 0.0
    %1922 = vmatprep.mubr.f32.mxu0 0.0
    %1923 = vmatmul.mubr.f32.gmra.mrb[0].mxu0 %v1856
    %v1924 = vpop.f32.mrb[0].mxu0
    %v1925 = vadd.f32 0.0, %v1924
    %v1926 = vpop.f32.mrb[0].mxu0
    %1927 = vdwg.mxu0
    %v1929 = vsel %vm303, %v1852, 0
    %v1932 = vsel %vm303, %v1925, 0
    %1934 = vmatprep.subr.mxu0 0.0
    %1935 = vmatpush1.msra.mxu0 %v1369
    %1936 = vmatprep.subr.mxu0 0.0
    %1937 = vmatpush1.msra.mxu0 0.0
    %1938 = vmatprep.subr.mxu0 0.0
    %1939 = vmatpush1.msra.mxu0 0.0
    %1940 = vmatprep.subr.mxu0 0.0
    %1941 = vmatpush1.msra.mxu0 0.0
    %1942 = vmatprep.subr.mxu0 0.0
    %1943 = vmatpush1.msra.mxu0 0.0
    %1944 = vmatprep.subr.mxu0 0.0
    %1945 = vmatpush1.msra.mxu0 0.0
    %1946 = vmatprep.subr.mxu0 0.0
    %1947 = vmatpush1.msra.mxu0 0.0
    %1948 = vmatprep.subr.mxu0 0.0
    %1949 = vmatpush1.msra.mxu0 0.0
    %1950 = vmatprep.subr.mxu0 0.0
    %1951 = vmatpush1.msra.mxu0 0.0
    %1952 = vmatprep.subr.mxu0 0.0
    %1953 = vmatpush1.msra.mxu0 0.0
    %1954 = vmatprep.subr.mxu0 0.0
    %1955 = vmatpush1.msra.mxu0 0.0
    %1956 = vmatprep.subr.mxu0 0.0
    %1957 = vmatpush1.msra.mxu0 0.0
    %1958 = vmatprep.subr.mxu0 0.0
    %1959 = vmatpush1.msra.mxu0 0.0
    %1960 = vmatprep.subr.mxu0 0.0
    %1961 = vmatpush1.msra.mxu0 0.0
    %1962 = vmatprep.subr.mxu0 0.0
    %1963 = vmatpush1.msra.mxu0 0.0
    %1964 = vmatprep.subr.mxu0 0.0
    %1965 = vmatpush1.msra.mxu0 0.0
    %1966 = vmatprep.subr.mxu0 0.0
    %1967 = vmatpush1.msra.mxu0 0.0
    %1968 = vmatprep.subr.mxu0 0.0
    %1969 = vmatpush1.msra.mxu0 0.0
    %1970 = vmatprep.subr.mxu0 0.0
    %1971 = vmatpush1.msra.mxu0 0.0
    %1972 = vmatprep.subr.mxu0 0.0
    %1973 = vmatpush1.msra.mxu0 0.0
    %1974 = vmatprep.subr.mxu0 0.0
    %1975 = vmatpush1.msra.mxu0 0.0
    %1976 = vmatprep.subr.mxu0 0.0
    %1977 = vmatpush1.msra.mxu0 0.0
    %1978 = vmatprep.subr.mxu0 0.0
    %1979 = vmatpush1.msra.mxu0 0.0
    %1980 = vmatprep.subr.mxu0 0.0
    %1981 = vmatpush1.msra.mxu0 0.0
    %1982 = vmatprep.subr.mxu0 0.0
    %1983 = vmatpush1.msra.mxu0 0.0
    %1984 = vmatprep.subr.mxu0 0.0
    %1985 = vmatpush1.msra.mxu0 0.0
    %1986 = vmatprep.subr.mxu0 0.0
    %1987 = vmatpush1.msra.mxu0 0.0
    %1988 = vmatprep.subr.mxu0 0.0
    %1989 = vmatpush1.msra.mxu0 0.0
    %1990 = vmatprep.subr.mxu0 0.0
    %1991 = vmatpush1.msra.mxu0 0.0
    %1992 = vmatprep.subr.mxu0 0.0
    %1993 = vmatpush1.msra.mxu0 0.0
    %1994 = vmatprep.subr.mxu0 0.0
    %1995 = vmatpush1.msra.mxu0 0.0
    %1996 = vmatprep.subr.mxu0 0.0
    %1997 = vmatpush1.msra.mxu0 0.0
    %1998 = vmatprep.mubr.f32.mxu0 0.0
    %1999 = vmatmul.mubr.f32.gmra.mrb[0].mxu0 %v1929
    %v2000 = vpop.f32.mrb[0].mxu0
    %v2001 = vadd.f32 0.0, %v2000
    %v2002 = vpop.f32.mrb[0].mxu0
    %2003 = vmatprep.mubr.f32.mxu0 0.0
    %2004 = vmatmul.mubr.f32.gmra.mrb[0].mxu0 %v1932
    %v2005 = vpop.f32.mrb[0].mxu0
    %v2006 = vadd.f32 0.0, %v2005
    %v2007 = vpop.f32.mrb[0].mxu0
    %2008 = vdwg.mxu0
    %v2009 = vadd.f32 %v1364, %v2001
    %v2010 = vadd.f32 %v1365, %v2006
    %v2011 = vld [vmem:[#allocation2 + $0x60] sm:$0xff]
    %v2012 = vld [vmem:[#allocation2 + $0x68] sm:$0xff]
    %v2013 = vld [vmem:[#allocation2 + $0x70] sm:$0xff]
    %v2014 = vld [vmem:[#allocation2 + $0x78] sm:$0xff]
    %v2016 = vsel %vm62, %v2011, 0
    %2018 = vmatprep.subr.mxu0 0.0
    %2019 = vmatpush1.xpose.msra.mxu0 %v2016
    %2020 = vmatprep.subr.mxu0 0.0
    %2021 = vmatpush1.xpose.msra.mxu0 0.0
    %2022 = vmatprep.subr.mxu0 0.0
    %2023 = vmatpush1.xpose.msra.mxu0 0.0
    %2024 = vmatprep.subr.mxu0 0.0
    %2025 = vmatpush1.xpose.msra.mxu0 0.0
    %2026 = vmatprep.subr.mxu0 0.0
    %2027 = vmatpush1.xpose.msra.mxu0 0.0
    %2028 = vmatprep.subr.mxu0 0.0
    %2029 = vmatpush1.xpose.msra.mxu0 0.0
    %2030 = vmatprep.subr.mxu0 0.0
    %2031 = vmatpush1.xpose.msra.mxu0 0.0
    %2032 = vmatprep.subr.mxu0 0.0
    %2033 = vmatpush1.xpose.msra.mxu0 0.0
    %2034 = vmatprep.subr.mxu0 0.0
    %2035 = vmatpush1.xpose.msra.mxu0 0.0
    %2036 = vmatprep.subr.mxu0 0.0
    %2037 = vmatpush1.xpose.msra.mxu0 0.0
    %2038 = vmatprep.subr.mxu0 0.0
    %2039 = vmatpush1.xpose.msra.mxu0 0.0
    %2040 = vmatprep.subr.mxu0 0.0
    %2041 = vmatpush1.xpose.msra.mxu0 0.0
    %2042 = vmatprep.subr.mxu0 0.0
    %2043 = vmatpush1.xpose.msra.mxu0 0.0
    %2044 = vmatprep.subr.mxu0 0.0
    %2045 = vmatpush1.xpose.msra.mxu0 0.0
    %2046 = vmatprep.subr.mxu0 0.0
    %2047 = vmatpush1.xpose.msra.mxu0 0.0
    %2048 = vmatprep.subr.mxu0 0.0
    %2049 = vmatpush1.xpose.msra.mxu0 0.0
    %2050 = vmatprep.subr.mxu0 0.0
    %2051 = vmatpush1.xpose.msra.mxu0 0.0
    %2052 = vmatprep.subr.mxu0 0.0
    %2053 = vmatpush1.xpose.msra.mxu0 0.0
    %2054 = vmatprep.subr.mxu0 0.0
    %2055 = vmatpush1.xpose.msra.mxu0 0.0
    %2056 = vmatprep.subr.mxu0 0.0
    %2057 = vmatpush1.xpose.msra.mxu0 0.0
    %2058 = vmatprep.subr.mxu0 0.0
    %2059 = vmatpush1.xpose.msra.mxu0 0.0
    %2060 = vmatprep.subr.mxu0 0.0
    %2061 = vmatpush1.xpose.msra.mxu0 0.0
    %2062 = vmatprep.subr.mxu0 0.0
    %2063 = vmatpush1.xpose.msra.mxu0 0.0
    %2064 = vmatprep.subr.mxu0 0.0
    %2065 = vmatpush1.xpose.msra.mxu0 0.0
    %2066 = vmatprep.subr.mxu0 0.0
    %2067 = vmatpush1.xpose.msra.mxu0 0.0
    %2068 = vmatprep.subr.mxu0 0.0
    %2069 = vmatpush1.xpose.msra.mxu0 0.0
    %2070 = vmatprep.subr.mxu0 0.0
    %2071 = vmatpush1.xpose.msra.mxu0 0.0
    %2072 = vmatprep.subr.mxu0 0.0
    %2073 = vmatpush1.xpose.msra.mxu0 0.0
    %2074 = vmatprep.subr.mxu0 0.0
    %2075 = vmatpush1.xpose.msra.mxu0 0.0
    %2076 = vmatprep.subr.mxu0 0.0
    %2077 = vmatpush1.xpose.msra.mxu0 0.0
    %2078 = vmatprep.subr.mxu0 0.0
    %2079 = vmatpush1.xpose.msra.mxu0 0.0
    %2080 = vmatprep.subr.mxu0 0.0
    %2081 = vmatpush1.xpose.msra.mxu0 0.0
    %2082 = vmatprep.mubr.f32.mxu0 0.0
    %2083 = vmatmul.mubr.f32.gmra.mrb[0].mxu0 %v64
    %v2084 = vpop.f32.mrb[0].mxu0
    %v2085 = vadd.f32 0.0, %v2084
    %v2086 = vpop.f32.mrb[0].mxu0
    %2087 = vmatprep.mubr.f32.mxu0 0.0
    %2088 = vmatmul.mubr.f32.gmra.mrb[0].mxu0 %v67
    %v2089 = vpop.f32.mrb[0].mxu0
    %v2090 = vadd.f32 0.0, %v2089
    %v2091 = vpop.f32.mrb[0].mxu0
    %2092 = vdwg.mxu0
    %v2094 = vsel %vm62, %v2012, 0
    %2096 = vmatprep.subr.mxu0 0.0
    %2097 = vmatpush1.xpose.msra.mxu0 %v2094
    %2098 = vmatprep.subr.mxu0 0.0
    %2099 = vmatpush1.xpose.msra.mxu0 0.0
    %2100 = vmatprep.subr.mxu0 0.0
    %2101 = vmatpush1.xpose.msra.mxu0 0.0
    %2102 = vmatprep.subr.mxu0 0.0
    %2103 = vmatpush1.xpose.msra.mxu0 0.0
    %2104 = vmatprep.subr.mxu0 0.0
    %2105 = vmatpush1.xpose.msra.mxu0 0.0
    %2106 = vmatprep.subr.mxu0 0.0
    %2107 = vmatpush1.xpose.msra.mxu0 0.0
    %2108 = vmatprep.subr.mxu0 0.0
    %2109 = vmatpush1.xpose.msra.mxu0 0.0
    %2110 = vmatprep.subr.mxu0 0.0
    %2111 = vmatpush1.xpose.msra.mxu0 0.0
    %2112 = vmatprep.subr.mxu0 0.0
    %2113 = vmatpush1.xpose.msra.mxu0 0.0
    %2114 = vmatprep.subr.mxu0 0.0
    %2115 = vmatpush1.xpose.msra.mxu0 0.0
    %2116 = vmatprep.subr.mxu0 0.0
    %2117 = vmatpush1.xpose.msra.mxu0 0.0
    %2118 = vmatprep.subr.mxu0 0.0
    %2119 = vmatpush1.xpose.msra.mxu0 0.0
    %2120 = vmatprep.subr.mxu0 0.0
    %2121 = vmatpush1.xpose.msra.mxu0 0.0
    %2122 = vmatprep.subr.mxu0 0.0
    %2123 = vmatpush1.xpose.msra.mxu0 0.0
    %2124 = vmatprep.subr.mxu0 0.0
    %2125 = vmatpush1.xpose.msra.mxu0 0.0
    %2126 = vmatprep.subr.mxu0 0.0
    %2127 = vmatpush1.xpose.msra.mxu0 0.0
    %2128 = vmatprep.subr.mxu0 0.0
    %2129 = vmatpush1.xpose.msra.mxu0 0.0
    %2130 = vmatprep.subr.mxu0 0.0
    %2131 = vmatpush1.xpose.msra.mxu0 0.0
    %2132 = vmatprep.subr.mxu0 0.0
    %2133 = vmatpush1.xpose.msra.mxu0 0.0
    %2134 = vmatprep.subr.mxu0 0.0
    %2135 = vmatpush1.xpose.msra.mxu0 0.0
    %2136 = vmatprep.subr.mxu0 0.0
    %2137 = vmatpush1.xpose.msra.mxu0 0.0
    %2138 = vmatprep.subr.mxu0 0.0
    %2139 = vmatpush1.xpose.msra.mxu0 0.0
    %2140 = vmatprep.subr.mxu0 0.0
    %2141 = vmatpush1.xpose.msra.mxu0 0.0
    %2142 = vmatprep.subr.mxu0 0.0
    %2143 = vmatpush1.xpose.msra.mxu0 0.0
    %2144 = vmatprep.subr.mxu0 0.0
    %2145 = vmatpush1.xpose.msra.mxu0 0.0
    %2146 = vmatprep.subr.mxu0 0.0
    %2147 = vmatpush1.xpose.msra.mxu0 0.0
    %2148 = vmatprep.subr.mxu0 0.0
    %2149 = vmatpush1.xpose.msra.mxu0 0.0
    %2150 = vmatprep.subr.mxu0 0.0
    %2151 = vmatpush1.xpose.msra.mxu0 0.0
    %2152 = vmatprep.subr.mxu0 0.0
    %2153 = vmatpush1.xpose.msra.mxu0 0.0
    %2154 = vmatprep.subr.mxu0 0.0
    %2155 = vmatpush1.xpose.msra.mxu0 0.0
    %2156 = vmatprep.subr.mxu0 0.0
    %2157 = vmatpush1.xpose.msra.mxu0 0.0
    %2158 = vmatprep.subr.mxu0 0.0
    %2159 = vmatpush1.xpose.msra.mxu0 0.0
    %2160 = vmatprep.mubr.f32.mxu0 0.0
    %2161 = vmatmul.mubr.f32.gmra.mrb[0].mxu0 %v64
    %v2162 = vpop.f32.mrb[0].mxu0
    %v2163 = vadd.f32 0.0, %v2162
    %v2164 = vpop.f32.mrb[0].mxu0
    %2165 = vmatprep.mubr.f32.mxu0 0.0
    %2166 = vmatmul.mubr.f32.gmra.mrb[0].mxu0 %v67
    %v2167 = vpop.f32.mrb[0].mxu0
    %v2168 = vadd.f32 0.0, %v2167
    %v2169 = vpop.f32.mrb[0].mxu0
    %2170 = vdwg.mxu0
    %v2172 = vsel %vm62, %v2013, 0
    %2174 = vmatprep.subr.mxu0 0.0
    %2175 = vmatpush1.xpose.msra.mxu0 %v2172
    %2176 = vmatprep.subr.mxu0 0.0
    %2177 = vmatpush1.xpose.msra.mxu0 0.0
    %2178 = vmatprep.subr.mxu0 0.0
    %2179 = vmatpush1.xpose.msra.mxu0 0.0
    %2180 = vmatprep.subr.mxu0 0.0
    %2181 = vmatpush1.xpose.msra.mxu0 0.0
    %2182 = vmatprep.subr.mxu0 0.0
    %2183 = vmatpush1.xpose.msra.mxu0 0.0
    %2184 = vmatprep.subr.mxu0 0.0
    %2185 = vmatpush1.xpose.msra.mxu0 0.0
    %2186 = vmatprep.subr.mxu0 0.0
    %2187 = vmatpush1.xpose.msra.mxu0 0.0
    %2188 = vmatprep.subr.mxu0 0.0
    %2189 = vmatpush1.xpose.msra.mxu0 0.0
    %2190 = vmatprep.subr.mxu0 0.0
    %2191 = vmatpush1.xpose.msra.mxu0 0.0
    %2192 = vmatprep.subr.mxu0 0.0
    %2193 = vmatpush1.xpose.msra.mxu0 0.0
    %2194 = vmatprep.subr.mxu0 0.0
    %2195 = vmatpush1.xpose.msra.mxu0 0.0
    %2196 = vmatprep.subr.mxu0 0.0
    %2197 = vmatpush1.xpose.msra.mxu0 0.0
    %2198 = vmatprep.subr.mxu0 0.0
    %2199 = vmatpush1.xpose.msra.mxu0 0.0
    %2200 = vmatprep.subr.mxu0 0.0
    %2201 = vmatpush1.xpose.msra.mxu0 0.0
    %2202 = vmatprep.subr.mxu0 0.0
    %2203 = vmatpush1.xpose.msra.mxu0 0.0
    %2204 = vmatprep.subr.mxu0 0.0
    %2205 = vmatpush1.xpose.msra.mxu0 0.0
    %2206 = vmatprep.subr.mxu0 0.0
    %2207 = vmatpush1.xpose.msra.mxu0 0.0
    %2208 = vmatprep.subr.mxu0 0.0
    %2209 = vmatpush1.xpose.msra.mxu0 0.0
    %2210 = vmatprep.subr.mxu0 0.0
    %2211 = vmatpush1.xpose.msra.mxu0 0.0
    %2212 = vmatprep.subr.mxu0 0.0
    %2213 = vmatpush1.xpose.msra.mxu0 0.0
    %2214 = vmatprep.subr.mxu0 0.0
    %2215 = vmatpush1.xpose.msra.mxu0 0.0
    %2216 = vmatprep.subr.mxu0 0.0
    %2217 = vmatpush1.xpose.msra.mxu0 0.0
    %2218 = vmatprep.subr.mxu0 0.0
    %2219 = vmatpush1.xpose.msra.mxu0 0.0
    %2220 = vmatprep.subr.mxu0 0.0
    %2221 = vmatpush1.xpose.msra.mxu0 0.0
    %2222 = vmatprep.subr.mxu0 0.0
    %2223 = vmatpush1.xpose.msra.mxu0 0.0
    %2224 = vmatprep.subr.mxu0 0.0
    %2225 = vmatpush1.xpose.msra.mxu0 0.0
    %2226 = vmatprep.subr.mxu0 0.0
    %2227 = vmatpush1.xpose.msra.mxu0 0.0
    %2228 = vmatprep.subr.mxu0 0.0
    %2229 = vmatpush1.xpose.msra.mxu0 0.0
    %2230 = vmatprep.subr.mxu0 0.0
    %2231 = vmatpush1.xpose.msra.mxu0 0.0
    %2232 = vmatprep.subr.mxu0 0.0
    %2233 = vmatpush1.xpose.msra.mxu0 0.0
    %2234 = vmatprep.subr.mxu0 0.0
    %2235 = vmatpush1.xpose.msra.mxu0 0.0
    %2236 = vmatprep.subr.mxu0 0.0
    %2237 = vmatpush1.xpose.msra.mxu0 0.0
    %2238 = vmatprep.mubr.f32.mxu0 0.0
    %2239 = vmatmul.mubr.f32.gmra.mrb[0].mxu0 %v64
    %v2240 = vpop.f32.mrb[0].mxu0
    %v2241 = vadd.f32 0.0, %v2240
    %v2242 = vpop.f32.mrb[0].mxu0
    %2243 = vmatprep.mubr.f32.mxu0 0.0
    %2244 = vmatmul.mubr.f32.gmra.mrb[0].mxu0 %v67
    %v2245 = vpop.f32.mrb[0].mxu0
    %v2246 = vadd.f32 0.0, %v2245
    %v2247 = vpop.f32.mrb[0].mxu0
    %2248 = vdwg.mxu0
    %v2250 = vsel %vm303, %v2085, 0
    %v2253 = vsel %vm303, %v2163, 0
    %2255 = vmatprep.subr.mxu0 0.0
    %2256 = vmatpush1.xpose.msra.mxu0 %v2253
    %2257 = vmatprep.subr.mxu0 0.0
    %2258 = vmatpush1.xpose.msra.mxu0 0.0
    %2259 = vmatprep.subr.mxu0 0.0
    %2260 = vmatpush1.xpose.msra.mxu0 0.0
    %2261 = vmatprep.subr.mxu0 0.0
    %2262 = vmatpush1.xpose.msra.mxu0 0.0
    %2263 = vmatprep.subr.mxu0 0.0
    %2264 = vmatpush1.xpose.msra.mxu0 0.0
    %2265 = vmatprep.subr.mxu0 0.0
    %2266 = vmatpush1.xpose.msra.mxu0 0.0
    %2267 = vmatprep.subr.mxu0 0.0
    %2268 = vmatpush1.xpose.msra.mxu0 0.0
    %2269 = vmatprep.subr.mxu0 0.0
    %2270 = vmatpush1.xpose.msra.mxu0 0.0
    %2271 = vmatprep.subr.mxu0 0.0
    %2272 = vmatpush1.xpose.msra.mxu0 0.0
    %2273 = vmatprep.subr.mxu0 0.0
    %2274 = vmatpush1.xpose.msra.mxu0 0.0
    %2275 = vmatprep.subr.mxu0 0.0
    %2276 = vmatpush1.xpose.msra.mxu0 0.0
    %2277 = vmatprep.subr.mxu0 0.0
    %2278 = vmatpush1.xpose.msra.mxu0 0.0
    %2279 = vmatprep.subr.mxu0 0.0
    %2280 = vmatpush1.xpose.msra.mxu0 0.0
    %2281 = vmatprep.subr.mxu0 0.0
    %2282 = vmatpush1.xpose.msra.mxu0 0.0
    %2283 = vmatprep.subr.mxu0 0.0
    %2284 = vmatpush1.xpose.msra.mxu0 0.0
    %2285 = vmatprep.subr.mxu0 0.0
    %2286 = vmatpush1.xpose.msra.mxu0 0.0
    %2287 = vmatprep.subr.mxu0 0.0
    %2288 = vmatpush1.xpose.msra.mxu0 0.0
    %2289 = vmatprep.subr.mxu0 0.0
    %2290 = vmatpush1.xpose.msra.mxu0 0.0
    %2291 = vmatprep.subr.mxu0 0.0
    %2292 = vmatpush1.xpose.msra.mxu0 0.0
    %2293 = vmatprep.subr.mxu0 0.0
    %2294 = vmatpush1.xpose.msra.mxu0 0.0
    %2295 = vmatprep.subr.mxu0 0.0
    %2296 = vmatpush1.xpose.msra.mxu0 0.0
    %2297 = vmatprep.subr.mxu0 0.0
    %2298 = vmatpush1.xpose.msra.mxu0 0.0
    %2299 = vmatprep.subr.mxu0 0.0
    %2300 = vmatpush1.xpose.msra.mxu0 0.0
    %2301 = vmatprep.subr.mxu0 0.0
    %2302 = vmatpush1.xpose.msra.mxu0 0.0
    %2303 = vmatprep.subr.mxu0 0.0
    %2304 = vmatpush1.xpose.msra.mxu0 0.0
    %2305 = vmatprep.subr.mxu0 0.0
    %2306 = vmatpush1.xpose.msra.mxu0 0.0
    %2307 = vmatprep.subr.mxu0 0.0
    %2308 = vmatpush1.xpose.msra.mxu0 0.0
    %2309 = vmatprep.subr.mxu0 0.0
    %2310 = vmatpush1.xpose.msra.mxu0 0.0
    %2311 = vmatprep.subr.mxu0 0.0
    %2312 = vmatpush1.xpose.msra.mxu0 0.0
    %2313 = vmatprep.subr.mxu0 0.0
    %2314 = vmatpush1.xpose.msra.mxu0 0.0
    %2315 = vmatprep.subr.mxu0 0.0
    %2316 = vmatpush1.xpose.msra.mxu0 0.0
    %2317 = vmatprep.subr.mxu0 0.0
    %2318 = vmatpush1.xpose.msra.mxu0 0.0
    %2319 = vmatprep.mubr.f32.mxu0 0.0
    %2320 = vmatmul.mubr.f32.gmra.mrb[0].mxu0 %v2250
    %v2321 = vpop.f32.mrb[0].mxu0
    %v2322 = vadd.f32 0.0, %v2321
    %v2323 = vpop.f32.mrb[0].mxu0
    %2324 = vdwg.mxu0
    %v2326 = vsel %vm303, %v2090, 0
    %v2329 = vsel %vm303, %v2168, 0
    %2331 = vmatprep.subr.mxu0 0.0
    %2332 = vmatpush1.xpose.msra.mxu0 %v2329
    %2333 = vmatprep.subr.mxu0 0.0
    %2334 = vmatpush1.xpose.msra.mxu0 0.0
    %2335 = vmatprep.subr.mxu0 0.0
    %2336 = vmatpush1.xpose.msra.mxu0 0.0
    %2337 = vmatprep.subr.mxu0 0.0
    %2338 = vmatpush1.xpose.msra.mxu0 0.0
    %2339 = vmatprep.subr.mxu0 0.0
    %2340 = vmatpush1.xpose.msra.mxu0 0.0
    %2341 = vmatprep.subr.mxu0 0.0
    %2342 = vmatpush1.xpose.msra.mxu0 0.0
    %2343 = vmatprep.subr.mxu0 0.0
    %2344 = vmatpush1.xpose.msra.mxu0 0.0
    %2345 = vmatprep.subr.mxu0 0.0
    %2346 = vmatpush1.xpose.msra.mxu0 0.0
    %2347 = vmatprep.subr.mxu0 0.0
    %2348 = vmatpush1.xpose.msra.mxu0 0.0
    %2349 = vmatprep.subr.mxu0 0.0
    %2350 = vmatpush1.xpose.msra.mxu0 0.0
    %2351 = vmatprep.subr.mxu0 0.0
    %2352 = vmatpush1.xpose.msra.mxu0 0.0
    %2353 = vmatprep.subr.mxu0 0.0
    %2354 = vmatpush1.xpose.msra.mxu0 0.0
    %2355 = vmatprep.subr.mxu0 0.0
    %2356 = vmatpush1.xpose.msra.mxu0 0.0
    %2357 = vmatprep.subr.mxu0 0.0
    %2358 = vmatpush1.xpose.msra.mxu0 0.0
    %2359 = vmatprep.subr.mxu0 0.0
    %2360 = vmatpush1.xpose.msra.mxu0 0.0
    %2361 = vmatprep.subr.mxu0 0.0
    %2362 = vmatpush1.xpose.msra.mxu0 0.0
    %2363 = vmatprep.subr.mxu0 0.0
    %2364 = vmatpush1.xpose.msra.mxu0 0.0
    %2365 = vmatprep.subr.mxu0 0.0
    %2366 = vmatpush1.xpose.msra.mxu0 0.0
    %2367 = vmatprep.subr.mxu0 0.0
    %2368 = vmatpush1.xpose.msra.mxu0 0.0
    %2369 = vmatprep.subr.mxu0 0.0
    %2370 = vmatpush1.xpose.msra.mxu0 0.0
    %2371 = vmatprep.subr.mxu0 0.0
    %2372 = vmatpush1.xpose.msra.mxu0 0.0
    %2373 = vmatprep.subr.mxu0 0.0
    %2374 = vmatpush1.xpose.msra.mxu0 0.0
    %2375 = vmatprep.subr.mxu0 0.0
    %2376 = vmatpush1.xpose.msra.mxu0 0.0
    %2377 = vmatprep.subr.mxu0 0.0
    %2378 = vmatpush1.xpose.msra.mxu0 0.0
    %2379 = vmatprep.subr.mxu0 0.0
    %2380 = vmatpush1.xpose.msra.mxu0 0.0
    %2381 = vmatprep.subr.mxu0 0.0
    %2382 = vmatpush1.xpose.msra.mxu0 0.0
    %2383 = vmatprep.subr.mxu0 0.0
    %2384 = vmatpush1.xpose.msra.mxu0 0.0
    %2385 = vmatprep.subr.mxu0 0.0
    %2386 = vmatpush1.xpose.msra.mxu0 0.0
    %2387 = vmatprep.subr.mxu0 0.0
    %2388 = vmatpush1.xpose.msra.mxu0 0.0
    %2389 = vmatprep.subr.mxu0 0.0
    %2390 = vmatpush1.xpose.msra.mxu0 0.0
    %2391 = vmatprep.subr.mxu0 0.0
    %2392 = vmatpush1.xpose.msra.mxu0 0.0
    %2393 = vmatprep.subr.mxu0 0.0
    %2394 = vmatpush1.xpose.msra.mxu0 0.0
    %2395 = vmatprep.mubr.f32.mxu0 0.0
    %2396 = vmatmul.mubr.f32.gmra.mrb[0].mxu0 %v2326
    %v2397 = vpop.f32.mrb[0].mxu0
    %v2398 = vadd.f32 0.0, %v2397
    %v2399 = vpop.f32.mrb[0].mxu0
    %2400 = vdwg.mxu0
    %v2401 = vmul.f32 %v2322, 0.35355338
    %v2402 = vmul.f32 %v2398, 0.35355338
    %v2403 = vadd.f32 %v2401, %v461
    %v2404 = vadd.f32 %v2402, %v465
    %v2405 = vsel %vm303, %v2403, -inf
    %2406 = vmax.xlane.f32.xlu0 %v2405
    %v2407 = vpop.xlane.xlu0 %2406
    %v2408 = vsel %vm303, %v2404, -inf
    %2409 = vmax.xlane.f32.xlu0 %v2408
    %v2410 = vpop.xlane.xlu0 %2409
    %v2411 = vsub.f32 %v2403, %v2407
    %v2412 = vsub.f32 %v2404, %v2410
    %v2413 = vmul.f32 %v2411, 1.442695
    %v2414 = vpow.pop %v2413
    %v2415 = vmul.f32 %v2412, 1.442695
    %v2416 = vpow.pop %v2415
    %v2417 = vsel %vm303, %v2414, 0.0
    %2418 = vadd.xlane.f32.xlu0 %v2417
    %v2419 = vpop.xlane.xlu0 %2418
    %v2420 = vsel %vm303, %v2416, 0.0
    %2421 = vadd.xlane.f32.xlu0 %v2420
    %v2422 = vpop.xlane.xlu0 %2421
    %v2423 = vrcp.pop %v2419
    %v2424 = vrcp.pop %v2422
    %v2425 = vmul.f32 %v2414, %v2423
    %v2426 = vmul.f32 %v2416, %v2424
    %v2428 = vsel %vm303, %v2425, 0
    %2430 = vmatprep.subr.mxu0 0.0
    %2431 = vmatpush1.msra.mxu0 %v2241
    %2432 = vmatprep.subr.mxu0 0.0
    %2433 = vmatpush1.msra.mxu0 0.0
    %2434 = vmatprep.subr.mxu0 0.0
    %2435 = vmatpush1.msra.mxu0 0.0
    %2436 = vmatprep.subr.mxu0 0.0
    %2437 = vmatpush1.msra.mxu0 0.0
    %2438 = vmatprep.subr.mxu0 0.0
    %2439 = vmatpush1.msra.mxu0 0.0
    %2440 = vmatprep.subr.mxu0 0.0
    %2441 = vmatpush1.msra.mxu0 0.0
    %2442 = vmatprep.subr.mxu0 0.0
    %2443 = vmatpush1.msra.mxu0 0.0
    %2444 = vmatprep.subr.mxu0 0.0
    %2445 = vmatpush1.msra.mxu0 0.0
    %2446 = vmatprep.subr.mxu0 0.0
    %2447 = vmatpush1.msra.mxu0 0.0
    %2448 = vmatprep.subr.mxu0 0.0
    %2449 = vmatpush1.msra.mxu0 0.0
    %2450 = vmatprep.subr.mxu0 0.0
    %2451 = vmatpush1.msra.mxu0 0.0
    %2452 = vmatprep.subr.mxu0 0.0
    %2453 = vmatpush1.msra.mxu0 0.0
    %2454 = vmatprep.subr.mxu0 0.0
    %2455 = vmatpush1.msra.mxu0 0.0
    %2456 = vmatprep.subr.mxu0 0.0
    %2457 = vmatpush1.msra.mxu0 0.0
    %2458 = vmatprep.subr.mxu0 0.0
    %2459 = vmatpush1.msra.mxu0 0.0
    %2460 = vmatprep.subr.mxu0 0.0
    %2461 = vmatpush1.msra.mxu0 0.0
    %2462 = vmatprep.subr.mxu0 0.0
    %2463 = vmatpush1.msra.mxu0 0.0
    %2464 = vmatprep.subr.mxu0 0.0
    %2465 = vmatpush1.msra.mxu0 0.0
    %2466 = vmatprep.subr.mxu0 0.0
    %2467 = vmatpush1.msra.mxu0 0.0
    %2468 = vmatprep.subr.mxu0 0.0
    %2469 = vmatpush1.msra.mxu0 0.0
    %2470 = vmatprep.subr.mxu0 0.0
    %2471 = vmatpush1.msra.mxu0 0.0
    %2472 = vmatprep.subr.mxu0 0.0
    %2473 = vmatpush1.msra.mxu0 0.0
    %2474 = vmatprep.subr.mxu0 0.0
    %2475 = vmatpush1.msra.mxu0 0.0
    %2476 = vmatprep.subr.mxu0 0.0
    %2477 = vmatpush1.msra.mxu0 0.0
    %2478 = vmatprep.subr.mxu0 0.0
    %2479 = vmatpush1.msra.mxu0 0.0
    %2480 = vmatprep.subr.mxu0 0.0
    %2481 = vmatpush1.msra.mxu0 0.0
    %2482 = vmatprep.subr.mxu0 0.0
    %2483 = vmatpush1.msra.mxu0 0.0
    %2484 = vmatprep.subr.mxu0 0.0
    %2485 = vmatpush1.msra.mxu0 0.0
    %2486 = vmatprep.subr.mxu0 0.0
    %2487 = vmatpush1.msra.mxu0 0.0
    %2488 = vmatprep.subr.mxu0 0.0
    %2489 = vmatpush1.msra.mxu0 0.0
    %2490 = vmatprep.subr.mxu0 0.0
    %2491 = vmatpush1.msra.mxu0 0.0
    %2492 = vmatprep.subr.mxu0 0.0
    %2493 = vmatpush1.msra.mxu0 0.0
    %2494 = vmatprep.mubr.f32.mxu0 0.0
    %2495 = vmatmul.mubr.f32.gmra.mrb[0].mxu0 %v2428
    %v2496 = vpop.f32.mrb[0].mxu0
    %v2497 = vadd.f32 0.0, %v2496
    %v2498 = vpop.f32.mrb[0].mxu0
    %2499 = vdwg.mxu0
    %v2501 = vsel %vm303, %v2426, 0
    %2503 = vmatprep.subr.mxu0 0.0
    %2504 = vmatpush1.msra.mxu0 %v2246
    %2505 = vmatprep.subr.mxu0 0.0
    %2506 = vmatpush1.msra.mxu0 0.0
    %2507 = vmatprep.subr.mxu0 0.0
    %2508 = vmatpush1.msra.mxu0 0.0
    %2509 = vmatprep.subr.mxu0 0.0
    %2510 = vmatpush1.msra.mxu0 0.0
    %2511 = vmatprep.subr.mxu0 0.0
    %2512 = vmatpush1.msra.mxu0 0.0
    %2513 = vmatprep.subr.mxu0 0.0
    %2514 = vmatpush1.msra.mxu0 0.0
    %2515 = vmatprep.subr.mxu0 0.0
    %2516 = vmatpush1.msra.mxu0 0.0
    %2517 = vmatprep.subr.mxu0 0.0
    %2518 = vmatpush1.msra.mxu0 0.0
    %2519 = vmatprep.subr.mxu0 0.0
    %2520 = vmatpush1.msra.mxu0 0.0
    %2521 = vmatprep.subr.mxu0 0.0
    %2522 = vmatpush1.msra.mxu0 0.0
    %2523 = vmatprep.subr.mxu0 0.0
    %2524 = vmatpush1.msra.mxu0 0.0
    %2525 = vmatprep.subr.mxu0 0.0
    %2526 = vmatpush1.msra.mxu0 0.0
    %2527 = vmatprep.subr.mxu0 0.0
    %2528 = vmatpush1.msra.mxu0 0.0
    %2529 = vmatprep.subr.mxu0 0.0
    %2530 = vmatpush1.msra.mxu0 0.0
    %2531 = vmatprep.subr.mxu0 0.0
    %2532 = vmatpush1.msra.mxu0 0.0
    %2533 = vmatprep.subr.mxu0 0.0
    %2534 = vmatpush1.msra.mxu0 0.0
    %2535 = vmatprep.subr.mxu0 0.0
    %2536 = vmatpush1.msra.mxu0 0.0
    %2537 = vmatprep.subr.mxu0 0.0
    %2538 = vmatpush1.msra.mxu0 0.0
    %2539 = vmatprep.subr.mxu0 0.0
    %2540 = vmatpush1.msra.mxu0 0.0
    %2541 = vmatprep.subr.mxu0 0.0
    %2542 = vmatpush1.msra.mxu0 0.0
    %2543 = vmatprep.subr.mxu0 0.0
    %2544 = vmatpush1.msra.mxu0 0.0
    %2545 = vmatprep.subr.mxu0 0.0
    %2546 = vmatpush1.msra.mxu0 0.0
    %2547 = vmatprep.subr.mxu0 0.0
    %2548 = vmatpush1.msra.mxu0 0.0
    %2549 = vmatprep.subr.mxu0 0.0
    %2550 = vmatpush1.msra.mxu0 0.0
    %2551 = vmatprep.subr.mxu0 0.0
    %2552 = vmatpush1.msra.mxu0 0.0
    %2553 = vmatprep.subr.mxu0 0.0
    %2554 = vmatpush1.msra.mxu0 0.0
    %2555 = vmatprep.subr.mxu0 0.0
    %2556 = vmatpush1.msra.mxu0 0.0
    %2557 = vmatprep.subr.mxu0 0.0
    %2558 = vmatpush1.msra.mxu0 0.0
    %2559 = vmatprep.subr.mxu0 0.0
    %2560 = vmatpush1.msra.mxu0 0.0
    %2561 = vmatprep.subr.mxu0 0.0
    %2562 = vmatpush1.msra.mxu0 0.0
    %2563 = vmatprep.subr.mxu0 0.0
    %2564 = vmatpush1.msra.mxu0 0.0
    %2565 = vmatprep.subr.mxu0 0.0
    %2566 = vmatpush1.msra.mxu0 0.0
    %2567 = vmatprep.mubr.f32.mxu0 0.0
    %2568 = vmatmul.mubr.f32.gmra.mrb[0].mxu0 %v2501
    %v2569 = vpop.f32.mrb[0].mxu0
    %v2570 = vadd.f32 0.0, %v2569
    %v2571 = vpop.f32.mrb[0].mxu0
    %2572 = vdwg.mxu0
    %v2574 = vsel %vm303, %v2497, 0
    %v2577 = vsel %vm303, %v2570, 0
    %2579 = vmatprep.subr.mxu0 0.0
    %2580 = vmatpush1.msra.mxu0 %v2014
    %2581 = vmatprep.subr.mxu0 0.0
    %2582 = vmatpush1.msra.mxu0 0.0
    %2583 = vmatprep.subr.mxu0 0.0
    %2584 = vmatpush1.msra.mxu0 0.0
    %2585 = vmatprep.subr.mxu0 0.0
    %2586 = vmatpush1.msra.mxu0 0.0
    %2587 = vmatprep.subr.mxu0 0.0
    %2588 = vmatpush1.msra.mxu0 0.0
    %2589 = vmatprep.subr.mxu0 0.0
    %2590 = vmatpush1.msra.mxu0 0.0
    %2591 = vmatprep.subr.mxu0 0.0
    %2592 = vmatpush1.msra.mxu0 0.0
    %2593 = vmatprep.subr.mxu0 0.0
    %2594 = vmatpush1.msra.mxu0 0.0
    %2595 = vmatprep.subr.mxu0 0.0
    %2596 = vmatpush1.msra.mxu0 0.0
    %2597 = vmatprep.subr.mxu0 0.0
    %2598 = vmatpush1.msra.mxu0 0.0
    %2599 = vmatprep.subr.mxu0 0.0
    %2600 = vmatpush1.msra.mxu0 0.0
    %2601 = vmatprep.subr.mxu0 0.0
    %2602 = vmatpush1.msra.mxu0 0.0
    %2603 = vmatprep.subr.mxu0 0.0
    %2604 = vmatpush1.msra.mxu0 0.0
    %2605 = vmatprep.subr.mxu0 0.0
    %2606 = vmatpush1.msra.mxu0 0.0
    %2607 = vmatprep.subr.mxu0 0.0
    %2608 = vmatpush1.msra.mxu0 0.0
    %2609 = vmatprep.subr.mxu0 0.0
    %2610 = vmatpush1.msra.mxu0 0.0
    %2611 = vmatprep.subr.mxu0 0.0
    %2612 = vmatpush1.msra.mxu0 0.0
    %2613 = vmatprep.subr.mxu0 0.0
    %2614 = vmatpush1.msra.mxu0 0.0
    %2615 = vmatprep.subr.mxu0 0.0
    %2616 = vmatpush1.msra.mxu0 0.0
    %2617 = vmatprep.subr.mxu0 0.0
    %2618 = vmatpush1.msra.mxu0 0.0
    %2619 = vmatprep.subr.mxu0 0.0
    %2620 = vmatpush1.msra.mxu0 0.0
    %2621 = vmatprep.subr.mxu0 0.0
    %2622 = vmatpush1.msra.mxu0 0.0
    %2623 = vmatprep.subr.mxu0 0.0
    %2624 = vmatpush1.msra.mxu0 0.0
    %2625 = vmatprep.subr.mxu0 0.0
    %2626 = vmatpush1.msra.mxu0 0.0
    %2627 = vmatprep.subr.mxu0 0.0
    %2628 = vmatpush1.msra.mxu0 0.0
    %2629 = vmatprep.subr.mxu0 0.0
    %2630 = vmatpush1.msra.mxu0 0.0
    %2631 = vmatprep.subr.mxu0 0.0
    %2632 = vmatpush1.msra.mxu0 0.0
    %2633 = vmatprep.subr.mxu0 0.0
    %2634 = vmatpush1.msra.mxu0 0.0
    %2635 = vmatprep.subr.mxu0 0.0
    %2636 = vmatpush1.msra.mxu0 0.0
    %2637 = vmatprep.subr.mxu0 0.0
    %2638 = vmatpush1.msra.mxu0 0.0
    %2639 = vmatprep.subr.mxu0 0.0
    %2640 = vmatpush1.msra.mxu0 0.0
    %2641 = vmatprep.subr.mxu0 0.0
    %2642 = vmatpush1.msra.mxu0 0.0
    %2643 = vmatprep.mubr.f32.mxu0 0.0
    %2644 = vmatmul.mubr.f32.gmra.mrb[0].mxu0 %v2574
    %v2645 = vpop.f32.mrb[0].mxu0
    %v2646 = vadd.f32 0.0, %v2645
    %v2647 = vpop.f32.mrb[0].mxu0
    %2648 = vmatprep.mubr.f32.mxu0 0.0
    %2649 = vmatmul.mubr.f32.gmra.mrb[0].mxu0 %v2577
    %v2650 = vpop.f32.mrb[0].mxu0
    %v2651 = vadd.f32 0.0, %v2650
    %v2652 = vpop.f32.mrb[0].mxu0
    %2653 = vdwg.mxu0
    %v2654 = vadd.f32 %v2009, %v2646
    %v2655 = vadd.f32 %v2010, %v2651
    %2656 = vst.msk [vmem:[%s3] sm:$0xff] %vm303, %v490
    %2657 = vst.msk [vmem:[%s3 + $0x8] sm:$0xff] %vm303, %v491
    %2658 = vst.msk [vmem:[%s3 + $0x10] sm:$0xff] %vm303, %v1135
    %2659 = vst.msk [vmem:[%s3 + $0x18] sm:$0xff] %vm303, %v1136
    %2660 = vst.msk [vmem:[%s3 + $0x20] sm:$0xff] %vm303, %v1780
    %2661 = vst.msk [vmem:[%s3 + $0x28] sm:$0xff] %vm303, %v1781
    %2662 = vst.msk [vmem:[%s3 + $0x30] sm:$0xff] %vm303, %v2425
    %2663 = vst.msk [vmem:[%s3 + $0x38] sm:$0xff] %vm303, %v2426
    %v2664 = vsel %vm62, %v2654, 0.0
    %2665 = vadd.xlane.f32.xlu0 %v2664
    %v2666 = vpop.xlane.xlu0 %2665
    %v2667 = vsel %vm62, %v2655, 0.0
    %2668 = vadd.xlane.f32.xlu0 %v2667
    %v2669 = vpop.xlane.xlu0 %2668
    %v2670 = vrcp.pop 32.0
    %v2671 = vmul.f32 %v2666, %v2670
    %v2672 = vmul.f32 %v2669, %v2670
    %v2673 = vsub.f32 %v2654, %v2671
    %v2674 = vsub.f32 %v2655, %v2672
    %v2675 = vmul.f32 %v2673, %v2673
    %v2676 = vmul.f32 %v2674, %v2674
    %v2677 = vsel %vm62, %v2675, 0.0
    %2678 = vadd.xlane.f32.xlu0 %v2677
    %v2679 = vpop.xlane.xlu0 %2678
    %v2680 = vsel %vm62, %v2676, 0.0
    %2681 = vadd.xlane.f32.xlu0 %v2680
    %v2682 = vpop.xlane.xlu0 %2681
    %v2683 = vmul.f32 %v2679, %v2670
    %v2684 = vmul.f32 %v2682, %v2670
    %v2685 = vadd.f32 %v2683, 1e-05
    %v2686 = vadd.f32 %v2684, 1e-05
    %v2687 = vrsqrt.pop %v2685
    %v2688 = vrsqrt.pop %v2686
    %v2689 = vmul.f32 %v2673, %v2687
    %v2690 = vmul.f32 %v2674, %v2688
    %v2691 = vlaneseq
    %v2692 = vshrl.u32 %v2691, 7
    %v2693 = vsub.s32 0, %v2692
    %v2694 = vrot.slane %v54, %v2693
    %v2695 = vmul.f32 %v2689, %v2694
    %v2696 = vmul.f32 %v2690, %v2694
    %v2697 = vlaneseq
    %v2698 = vshrl.u32 %v2697, 7
    %v2699 = vsub.s32 0, %v2698
    %v2700 = vrot.slane %v55, %v2699
    %v2701 = vadd.f32 %v2695, %v2700
    %v2702 = vadd.f32 %v2696, %v2700
    %v2703 = vld [vmem:[#allocation2 + $0x80] sm:$0xff]
    %v2704 = vld [vmem:[#allocation2 + $0x88] sm:$0xff]
    %v2705 = vld [vmem:[#allocation2 + $0x90] sm:$0xff]
    %v2706 = vld [vmem:[#allocation2 + $0x98] sm:$0xff]
    %v2707 = vld [vmem:[#allocation2 + $0xa0] sm:$0xff]
    %v2708 = vld [vmem:[#allocation2 + $0xa8] sm:$0xff]
    %v2709 = vld [vmem:[#allocation2 + $0xb0] sm:$0xff]
    %v2710 = vld [vmem:[#allocation2 + $0xb8] sm:$0xff]
    %v2711 = vld [vmem:[#allocation2 + $0xc0] sm:$0xff]
    %v2712 = vld [vmem:[#allocation2 + $0xc8] sm:$0xff]
    %v2713 = vld [vmem:[#allocation2 + $0xd0] sm:$0xff]
    %v2714 = vld [vmem:[#allocation2 + $0xd8] sm:$0xff]
    %v2715 = vlaneseq
    %v2716 = vshrl.u32 %v2715, 7
    %v2717 = vsub.s32 0, %v2716
    %v2718 = vrot.slane %v56, %v2717
    %v2720 = vsel %vm62, %v2701, 0
    %v2723 = vsel %vm62, %v2702, 0
    %2725 = vmatprep.subr.mxu0 0.0
    %2726 = vmatpush1.msra.mxu0 %v2703
    %2727 = vmatprep.subr.mxu0 0.0
    %2728 = vmatpush1.msra.mxu0 %v2704
    %2729 = vmatprep.subr.mxu0 0.0
    %2730 = vmatpush1.msra.mxu0 %v2705
    %2731 = vmatprep.subr.mxu0 0.0
    %2732 = vmatpush1.msra.mxu0 %v2706
    %2733 = vmatprep.subr.mxu0 0.0
    %2734 = vmatpush1.msra.mxu0 0.0
    %2735 = vmatprep.subr.mxu0 0.0
    %2736 = vmatpush1.msra.mxu0 0.0
    %2737 = vmatprep.subr.mxu0 0.0
    %2738 = vmatpush1.msra.mxu0 0.0
    %2739 = vmatprep.subr.mxu0 0.0
    %2740 = vmatpush1.msra.mxu0 0.0
    %2741 = vmatprep.subr.mxu0 0.0
    %2742 = vmatpush1.msra.mxu0 0.0
    %2743 = vmatprep.subr.mxu0 0.0
    %2744 = vmatpush1.msra.mxu0 0.0
    %2745 = vmatprep.subr.mxu0 0.0
    %2746 = vmatpush1.msra.mxu0 0.0
    %2747 = vmatprep.subr.mxu0 0.0
    %2748 = vmatpush1.msra.mxu0 0.0
    %2749 = vmatprep.subr.mxu0 0.0
    %2750 = vmatpush1.msra.mxu0 0.0
    %2751 = vmatprep.subr.mxu0 0.0
    %2752 = vmatpush1.msra.mxu0 0.0
    %2753 = vmatprep.subr.mxu0 0.0
    %2754 = vmatpush1.msra.mxu0 0.0
    %2755 = vmatprep.subr.mxu0 0.0
    %2756 = vmatpush1.msra.mxu0 0.0
    %2757 = vmatprep.subr.mxu0 0.0
    %2758 = vmatpush1.msra.mxu0 0.0
    %2759 = vmatprep.subr.mxu0 0.0
    %2760 = vmatpush1.msra.mxu0 0.0
    %2761 = vmatprep.subr.mxu0 0.0
    %2762 = vmatpush1.msra.mxu0 0.0
    %2763 = vmatprep.subr.mxu0 0.0
    %2764 = vmatpush1.msra.mxu0 0.0
    %2765 = vmatprep.subr.mxu0 0.0
    %2766 = vmatpush1.msra.mxu0 0.0
    %2767 = vmatprep.subr.mxu0 0.0
    %2768 = vmatpush1.msra.mxu0 0.0
    %2769 = vmatprep.subr.mxu0 0.0
    %2770 = vmatpush1.msra.mxu0 0.0
    %2771 = vmatprep.subr.mxu0 0.0
    %2772 = vmatpush1.msra.mxu0 0.0
    %2773 = vmatprep.subr.mxu0 0.0
    %2774 = vmatpush1.msra.mxu0 0.0
    %2775 = vmatprep.subr.mxu0 0.0
    %2776 = vmatpush1.msra.mxu0 0.0
    %2777 = vmatprep.subr.mxu0 0.0
    %2778 = vmatpush1.msra.mxu0 0.0
    %2779 = vmatprep.subr.mxu0 0.0
    %2780 = vmatpush1.msra.mxu0 0.0
    %2781 = vmatprep.subr.mxu0 0.0
    %2782 = vmatpush1.msra.mxu0 0.0
    %2783 = vmatprep.subr.mxu0 0.0
    %2784 = vmatpush1.msra.mxu0 0.0
    %2785 = vmatprep.subr.mxu0 0.0
    %2786 = vmatpush1.msra.mxu0 0.0
    %2787 = vmatprep.subr.mxu0 0.0
    %2788 = vmatpush1.msra.mxu0 0.0
    %2789 = vmatprep.mubr.f32.mxu0 0.0
    %2790 = vmatmul.mubr.f32.gmra.mrb[0].mxu0 %v2720
    %v2791 = vpop.f32.mrb[0].mxu0
    %v2792 = vadd.f32 %v2718, %v2791
    %v2793 = vpop.f32.mrb[0].mxu0
    %2794 = vmatprep.mubr.f32.mxu0 0.0
    %2795 = vmatmul.mubr.f32.gmra.mrb[0].mxu0 %v2723
    %v2796 = vpop.f32.mrb[0].mxu0
    %v2797 = vadd.f32 %v2718, %v2796
    %v2798 = vpop.f32.mrb[0].mxu0
    %2799 = vdwg.mxu0
    %v2800 = vmax.f32 %v2792, 0.0
    %v2801 = vmax.f32 %v2797, 0.0
    %v2802 = vlaneseq
    %v2803 = vshrl.u32 %v2802, 7
    %v2804 = vsub.s32 0, %v2803
    %v2805 = vrot.slane %v57, %v2804
    %vm2806 = vcmask 523264
    %v2808 = vsel %vm2806, %v2800, 0
    %v2811 = vsel %vm2806, %v2801, 0
    %2813 = vmatprep.subr.mxu0 0.0
    %2814 = vmatpush1.msra.mxu0 %v2707
    %2815 = vmatprep.subr.mxu0 0.0
    %2816 = vmatpush1.msra.mxu0 %v2708
    %2817 = vmatprep.subr.mxu0 0.0
    %2818 = vmatpush1.msra.mxu0 %v2709
    %2819 = vmatprep.subr.mxu0 0.0
    %2820 = vmatpush1.msra.mxu0 %v2710
    %2821 = vmatprep.subr.mxu0 0.0
    %2822 = vmatpush1.msra.mxu0 %v2711
    %2823 = vmatprep.subr.mxu0 0.0
    %2824 = vmatpush1.msra.mxu0 %v2712
    %2825 = vmatprep.subr.mxu0 0.0
    %2826 = vmatpush1.msra.mxu0 %v2713
    %2827 = vmatprep.subr.mxu0 0.0
    %2828 = vmatpush1.msra.mxu0 %v2714
    %2829 = vmatprep.subr.mxu0 0.0
    %2830 = vmatpush1.msra.mxu0 0.0
    %2831 = vmatprep.subr.mxu0 0.0
    %2832 = vmatpush1.msra.mxu0 0.0
    %2833 = vmatprep.subr.mxu0 0.0
    %2834 = vmatpush1.msra.mxu0 0.0
    %2835 = vmatprep.subr.mxu0 0.0
    %2836 = vmatpush1.msra.mxu0 0.0
    %2837 = vmatprep.subr.mxu0 0.0
    %2838 = vmatpush1.msra.mxu0 0.0
    %2839 = vmatprep.subr.mxu0 0.0
    %2840 = vmatpush1.msra.mxu0 0.0
    %2841 = vmatprep.subr.mxu0 0.0
    %2842 = vmatpush1.msra.mxu0 0.0
    %2843 = vmatprep.subr.mxu0 0.0
    %2844 = vmatpush1.msra.mxu0 0.0
    %2845 = vmatprep.subr.mxu0 0.0
    %2846 = vmatpush1.msra.mxu0 0.0
    %2847 = vmatprep.subr.mxu0 0.0
    %2848 = vmatpush1.msra.mxu0 0.0
    %2849 = vmatprep.subr.mxu0 0.0
    %2850 = vmatpush1.msra.mxu0 0.0
    %2851 = vmatprep.subr.mxu0 0.0
    %2852 = vmatpush1.msra.mxu0 0.0
    %2853 = vmatprep.subr.mxu0 0.0
    %2854 = vmatpush1.msra.mxu0 0.0
    %2855 = vmatprep.subr.mxu0 0.0
    %2856 = vmatpush1.msra.mxu0 0.0
    %2857 = vmatprep.subr.mxu0 0.0
    %2858 = vmatpush1.msra.mxu0 0.0
    %2859 = vmatprep.subr.mxu0 0.0
    %2860 = vmatpush1.msra.mxu0 0.0
    %2861 = vmatprep.subr.mxu0 0.0
    %2862 = vmatpush1.msra.mxu0 0.0
    %2863 = vmatprep.subr.mxu0 0.0
    %2864 = vmatpush1.msra.mxu0 0.0
    %2865 = vmatprep.subr.mxu0 0.0
    %2866 = vmatpush1.msra.mxu0 0.0
    %2867 = vmatprep.subr.mxu0 0.0
    %2868 = vmatpush1.msra.mxu0 0.0
    %2869 = vmatprep.subr.mxu0 0.0
    %2870 = vmatpush1.msra.mxu0 0.0
    %2871 = vmatprep.subr.mxu0 0.0
    %2872 = vmatpush1.msra.mxu0 0.0
    %2873 = vmatprep.subr.mxu0 0.0
    %2874 = vmatpush1.msra.mxu0 0.0
    %2875 = vmatprep.subr.mxu0 0.0
    %2876 = vmatpush1.msra.mxu0 0.0
    %2877 = vmatprep.mubr.f32.mxu0 0.0
    %2878 = vmatmul.mubr.f32.gmra.mrb[0].mxu0 %v2808
    %v2879 = vpop.f32.mrb[0].mxu0
    %v2880 = vadd.f32 %v2805, %v2879
    %v2881 = vpop.f32.mrb[0].mxu0
    %2882 = vmatprep.mubr.f32.mxu0 0.0
    %2883 = vmatmul.mubr.f32.gmra.mrb[0].mxu0 %v2811
    %v2884 = vpop.f32.mrb[0].mxu0
    %v2885 = vadd.f32 %v2805, %v2884
    %v2886 = vpop.f32.mrb[0].mxu0
    %2887 = vdwg.mxu0
    %v2888 = vadd.f32 %v2880, %v2701
    %v2889 = vadd.f32 %v2885, %v2702
    %v2890 = vsel %vm62, %v2888, 0.0
    %2891 = vadd.xlane.f32.xlu0 %v2890
    %v2892 = vpop.xlane.xlu0 %2891
    %v2893 = vsel %vm62, %v2889, 0.0
    %2894 = vadd.xlane.f32.xlu0 %v2893
    %v2895 = vpop.xlane.xlu0 %2894
    %v2896 = vmul.f32 %v2892, %v2670
    %v2897 = vmul.f32 %v2895, %v2670
    %v2898 = vsub.f32 %v2888, %v2896
    %v2899 = vsub.f32 %v2889, %v2897
    %v2900 = vmul.f32 %v2898, %v2898
    %v2901 = vmul.f32 %v2899, %v2899
    %v2902 = vsel %vm62, %v2900, 0.0
    %2903 = vadd.xlane.f32.xlu0 %v2902
    %v2904 = vpop.xlane.xlu0 %2903
    %v2905 = vsel %vm62, %v2901, 0.0
    %2906 = vadd.xlane.f32.xlu0 %v2905
    %v2907 = vpop.xlane.xlu0 %2906
    %v2908 = vmul.f32 %v2904, %v2670
    %v2909 = vmul.f32 %v2907, %v2670
    %v2910 = vadd.f32 %v2908, 1e-05
    %v2911 = vadd.f32 %v2909, 1e-05
    %v2912 = vrsqrt.pop %v2910
    %v2913 = vrsqrt.pop %v2911
    %v2914 = vmul.f32 %v2898, %v2912
    %v2915 = vmul.f32 %v2899, %v2913
    %v2916 = vmul.f32 %v2914, %v2694
    %v2917 = vmul.f32 %v2915, %v2694
    %v2918 = vadd.f32 %v2916, %v2700
    %v2919 = vadd.f32 %v2917, %v2700
    %v2920 = vand.u32 2147483647, %v2918
    %v2921 = vand.u32 2147483647, %v2919
    %vm2922 = vcmp.lt.f32.partialorder %v2920, inf
    %vm2923 = vcmp.lt.f32.partialorder %v2921, inf
    %v2924 = vsel %vm2922, 0.0, 1.0
    %v2925 = vsel %vm2923, 0.0, 1.0
    %v2926 = vsel %vm62, %v2924, -inf
    %2927 = vmax.xlane.f32.xlu0 %v2926
    %v2928 = vpop.xlane.xlu0 %2927
    %v2929 = vsel %vm62, %v2925, -inf
    %2930 = vmax.xlane.f32.xlu0 %v2929
    %v2931 = vpop.xlane.xlu0 %2930
    %v2932 = vmax.f32 %v2928, %v2931
    %v2933 = vrot.slane %v2932, 4
    %v2934 = vmax.f32 %v2932, %v2933
    %v2935 = vrot.slane %v2934, 2
    %v2936 = vmax.f32 %v2934, %v2935
    %v2937 = vrot.slane %v2936, 1
    %v2938 = vmax.f32 %v2936, %v2937
    %vm2939 = vcmp.gt.f32.partialorder %v2938, 0.0
    %v2940 = vmax.f32 %v2918, -3.4028235e+38
    %v2941 = vmax.f32 %v2919, -3.4028235e+38
    %v2942 = vmin.f32 %v2940, 3.4028235e+38
    %v2943 = vmin.f32 %v2941, 3.4028235e+38
    %v2944 = vsel %vm2939, 1, 0
    %vm2945 = vcmp.eq.s32.totalorder %v2944, 1
    %v2946 = vsel %vm2945, %v2942, %v2918
    %v2947 = vsel %vm2945, %v2943, %v2919
    %s2948 = scalar_lea.vmem [#allocation2], 256
    %v2949 = vld [vmem:[%s2948 + $0xe0] sm:$0x1]
    %v2950 = vld [vmem:[%s2948 + $0xe8] sm:$0x1]
    %v2951 = vld [vmem:[%s2948 + $0xf0] sm:$0x1]
    %v2952 = vld [vmem:[%s2948 + $0xf8] sm:$0x1]
    %v2953 = vld [vmem:[%s2948] sm:$0xff]
    %v2954 = vld [vmem:[%s2948 + $0x8] sm:$0xff]
    %v2955 = vld [vmem:[%s2948 + $0x10] sm:$0xff]
    %v2956 = vld [vmem:[%s2948 + $0x18] sm:$0xff]
    %v2958 = vsel %vm62, %v2946, 0
    %v2961 = vsel %vm62, %v2947, 0
    %v2964 = vsel %vm62, %v2953, 0
    %2966 = vmatprep.subr.mxu0 0.0
    %2967 = vmatpush1.xpose.msra.mxu0 %v2964
    %2968 = vmatprep.subr.mxu0 0.0
    %2969 = vmatpush1.xpose.msra.mxu0 0.0
    %2970 = vmatprep.subr.mxu0 0.0
    %2971 = vmatpush1.xpose.msra.mxu0 0.0
    %2972 = vmatprep.subr.mxu0 0.0
    %2973 = vmatpush1.xpose.msra.mxu0 0.0
    %2974 = vmatprep.subr.mxu0 0.0
    %2975 = vmatpush1.xpose.msra.mxu0 0.0
    %2976 = vmatprep.subr.mxu0 0.0
    %2977 = vmatpush1.xpose.msra.mxu0 0.0
    %2978 = vmatprep.subr.mxu0 0.0
    %2979 = vmatpush1.xpose.msra.mxu0 0.0
    %2980 = vmatprep.subr.mxu0 0.0
    %2981 = vmatpush1.xpose.msra.mxu0 0.0
    %2982 = vmatprep.subr.mxu0 0.0
    %2983 = vmatpush1.xpose.msra.mxu0 0.0
    %2984 = vmatprep.subr.mxu0 0.0
    %2985 = vmatpush1.xpose.msra.mxu0 0.0
    %2986 = vmatprep.subr.mxu0 0.0
    %2987 = vmatpush1.xpose.msra.mxu0 0.0
    %2988 = vmatprep.subr.mxu0 0.0
    %2989 = vmatpush1.xpose.msra.mxu0 0.0
    %2990 = vmatprep.subr.mxu0 0.0
    %2991 = vmatpush1.xpose.msra.mxu0 0.0
    %2992 = vmatprep.subr.mxu0 0.0
    %2993 = vmatpush1.xpose.msra.mxu0 0.0
    %2994 = vmatprep.subr.mxu0 0.0
    %2995 = vmatpush1.xpose.msra.mxu0 0.0
    %2996 = vmatprep.subr.mxu0 0.0
    %2997 = vmatpush1.xpose.msra.mxu0 0.0
    %2998 = vmatprep.subr.mxu0 0.0
    %2999 = vmatpush1.xpose.msra.mxu0 0.0
    %3000 = vmatprep.subr.mxu0 0.0
    %3001 = vmatpush1.xpose.msra.mxu0 0.0
    %3002 = vmatprep.subr.mxu0 0.0
    %3003 = vmatpush1.xpose.msra.mxu0 0.0
    %3004 = vmatprep.subr.mxu0 0.0
    %3005 = vmatpush1.xpose.msra.mxu0 0.0
    %3006 = vmatprep.subr.mxu0 0.0
    %3007 = vmatpush1.xpose.msra.mxu0 0.0
    %3008 = vmatprep.subr.mxu0 0.0
    %3009 = vmatpush1.xpose.msra.mxu0 0.0
    %3010 = vmatprep.subr.mxu0 0.0
    %3011 = vmatpush1.xpose.msra.mxu0 0.0
    %3012 = vmatprep.subr.mxu0 0.0
    %3013 = vmatpush1.xpose.msra.mxu0 0.0
    %3014 = vmatprep.subr.mxu0 0.0
    %3015 = vmatpush1.xpose.msra.mxu0 0.0
    %3016 = vmatprep.subr.mxu0 0.0
    %3017 = vmatpush1.xpose.msra.mxu0 0.0
    %3018 = vmatprep.subr.mxu0 0.0
    %3019 = vmatpush1.xpose.msra.mxu0 0.0
    %3020 = vmatprep.subr.mxu0 0.0
    %3021 = vmatpush1.xpose.msra.mxu0 0.0
    %3022 = vmatprep.subr.mxu0 0.0
    %3023 = vmatpush1.xpose.msra.mxu0 0.0
    %3024 = vmatprep.subr.mxu0 0.0
    %3025 = vmatpush1.xpose.msra.mxu0 0.0
    %3026 = vmatprep.subr.mxu0 0.0
    %3027 = vmatpush1.xpose.msra.mxu0 0.0
    %3028 = vmatprep.subr.mxu0 0.0
    %3029 = vmatpush1.xpose.msra.mxu0 0.0
    %3030 = vmatprep.mubr.f32.mxu0 0.0
    %3031 = vmatmul.mubr.f32.gmra.mrb[0].mxu0 %v2958
    %v3032 = vpop.f32.mrb[0].mxu0
    %v3033 = vadd.f32 0.0, %v3032
    %v3034 = vpop.f32.mrb[0].mxu0
    %3035 = vmatprep.mubr.f32.mxu0 0.0
    %3036 = vmatmul.mubr.f32.gmra.mrb[0].mxu0 %v2961
    %v3037 = vpop.f32.mrb[0].mxu0
    %v3038 = vadd.f32 0.0, %v3037
    %v3039 = vpop.f32.mrb[0].mxu0
    %3040 = vdwg.mxu0
    %v3042 = vsel %vm62, %v2954, 0
    %3044 = vmatprep.subr.mxu0 0.0
    %3045 = vmatpush1.xpose.msra.mxu0 %v3042
    %3046 = vmatprep.subr.mxu0 0.0
    %3047 = vmatpush1.xpose.msra.mxu0 0.0
    %3048 = vmatprep.subr.mxu0 0.0
    %3049 = vmatpush1.xpose.msra.mxu0 0.0
    %3050 = vmatprep.subr.mxu0 0.0
    %3051 = vmatpush1.xpose.msra.mxu0 0.0
    %3052 = vmatprep.subr.mxu0 0.0
    %3053 = vmatpush1.xpose.msra.mxu0 0.0
    %3054 = vmatprep.subr.mxu0 0.0
    %3055 = vmatpush1.xpose.msra.mxu0 0.0
    %3056 = vmatprep.subr.mxu0 0.0
    %3057 = vmatpush1.xpose.msra.mxu0 0.0
    %3058 = vmatprep.subr.mxu0 0.0
    %3059 = vmatpush1.xpose.msra.mxu0 0.0
    %3060 = vmatprep.subr.mxu0 0.0
    %3061 = vmatpush1.xpose.msra.mxu0 0.0
    %3062 = vmatprep.subr.mxu0 0.0
    %3063 = vmatpush1.xpose.msra.mxu0 0.0
    %3064 = vmatprep.subr.mxu0 0.0
    %3065 = vmatpush1.xpose.msra.mxu0 0.0
    %3066 = vmatprep.subr.mxu0 0.0
    %3067 = vmatpush1.xpose.msra.mxu0 0.0
    %3068 = vmatprep.subr.mxu0 0.0
    %3069 = vmatpush1.xpose.msra.mxu0 0.0
    %3070 = vmatprep.subr.mxu0 0.0
    %3071 = vmatpush1.xpose.msra.mxu0 0.0
    %3072 = vmatprep.subr.mxu0 0.0
    %3073 = vmatpush1.xpose.msra.mxu0 0.0
    %3074 = vmatprep.subr.mxu0 0.0
    %3075 = vmatpush1.xpose.msra.mxu0 0.0
    %3076 = vmatprep.subr.mxu0 0.0
    %3077 = vmatpush1.xpose.msra.mxu0 0.0
    %3078 = vmatprep.subr.mxu0 0.0
    %3079 = vmatpush1.xpose.msra.mxu0 0.0
    %3080 = vmatprep.subr.mxu0 0.0
    %3081 = vmatpush1.xpose.msra.mxu0 0.0
    %3082 = vmatprep.subr.mxu0 0.0
    %3083 = vmatpush1.xpose.msra.mxu0 0.0
    %3084 = vmatprep.subr.mxu0 0.0
    %3085 = vmatpush1.xpose.msra.mxu0 0.0
    %3086 = vmatprep.subr.mxu0 0.0
    %3087 = vmatpush1.xpose.msra.mxu0 0.0
    %3088 = vmatprep.subr.mxu0 0.0
    %3089 = vmatpush1.xpose.msra.mxu0 0.0
    %3090 = vmatprep.subr.mxu0 0.0
    %3091 = vmatpush1.xpose.msra.mxu0 0.0
    %3092 = vmatprep.subr.mxu0 0.0
    %3093 = vmatpush1.xpose.msra.mxu0 0.0
    %3094 = vmatprep.subr.mxu0 0.0
    %3095 = vmatpush1.xpose.msra.mxu0 0.0
    %3096 = vmatprep.subr.mxu0 0.0
    %3097 = vmatpush1.xpose.msra.mxu0 0.0
    %3098 = vmatprep.subr.mxu0 0.0
    %3099 = vmatpush1.xpose.msra.mxu0 0.0
    %3100 = vmatprep.subr.mxu0 0.0
    %3101 = vmatpush1.xpose.msra.mxu0 0.0
    %3102 = vmatprep.subr.mxu0 0.0
    %3103 = vmatpush1.xpose.msra.mxu0 0.0
    %3104 = vmatprep.subr.mxu0 0.0
    %3105 = vmatpush1.xpose.msra.mxu0 0.0
    %3106 = vmatprep.subr.mxu0 0.0
    %3107 = vmatpush1.xpose.msra.mxu0 0.0
    %3108 = vmatprep.mubr.f32.mxu0 0.0
    %3109 = vmatmul.mubr.f32.gmra.mrb[0].mxu0 %v2958
    %v3110 = vpop.f32.mrb[0].mxu0
    %v3111 = vadd.f32 0.0, %v3110
    %v3112 = vpop.f32.mrb[0].mxu0
    %3113 = vmatprep.mubr.f32.mxu0 0.0
    %3114 = vmatmul.mubr.f32.gmra.mrb[0].mxu0 %v2961
    %v3115 = vpop.f32.mrb[0].mxu0
    %v3116 = vadd.f32 0.0, %v3115
    %v3117 = vpop.f32.mrb[0].mxu0
    %3118 = vdwg.mxu0
    %v3120 = vsel %vm62, %v2955, 0
    %3122 = vmatprep.subr.mxu0 0.0
    %3123 = vmatpush1.xpose.msra.mxu0 %v3120
    %3124 = vmatprep.subr.mxu0 0.0
    %3125 = vmatpush1.xpose.msra.mxu0 0.0
    %3126 = vmatprep.subr.mxu0 0.0
    %3127 = vmatpush1.xpose.msra.mxu0 0.0
    %3128 = vmatprep.subr.mxu0 0.0
    %3129 = vmatpush1.xpose.msra.mxu0 0.0
    %3130 = vmatprep.subr.mxu0 0.0
    %3131 = vmatpush1.xpose.msra.mxu0 0.0
    %3132 = vmatprep.subr.mxu0 0.0
    %3133 = vmatpush1.xpose.msra.mxu0 0.0
    %3134 = vmatprep.subr.mxu0 0.0
    %3135 = vmatpush1.xpose.msra.mxu0 0.0
    %3136 = vmatprep.subr.mxu0 0.0
    %3137 = vmatpush1.xpose.msra.mxu0 0.0
    %3138 = vmatprep.subr.mxu0 0.0
    %3139 = vmatpush1.xpose.msra.mxu0 0.0
    %3140 = vmatprep.subr.mxu0 0.0
    %3141 = vmatpush1.xpose.msra.mxu0 0.0
    %3142 = vmatprep.subr.mxu0 0.0
    %3143 = vmatpush1.xpose.msra.mxu0 0.0
    %3144 = vmatprep.subr.mxu0 0.0
    %3145 = vmatpush1.xpose.msra.mxu0 0.0
    %3146 = vmatprep.subr.mxu0 0.0
    %3147 = vmatpush1.xpose.msra.mxu0 0.0
    %3148 = vmatprep.subr.mxu0 0.0
    %3149 = vmatpush1.xpose.msra.mxu0 0.0
    %3150 = vmatprep.subr.mxu0 0.0
    %3151 = vmatpush1.xpose.msra.mxu0 0.0
    %3152 = vmatprep.subr.mxu0 0.0
    %3153 = vmatpush1.xpose.msra.mxu0 0.0
    %3154 = vmatprep.subr.mxu0 0.0
    %3155 = vmatpush1.xpose.msra.mxu0 0.0
    %3156 = vmatprep.subr.mxu0 0.0
    %3157 = vmatpush1.xpose.msra.mxu0 0.0
    %3158 = vmatprep.subr.mxu0 0.0
    %3159 = vmatpush1.xpose.msra.mxu0 0.0
    %3160 = vmatprep.subr.mxu0 0.0
    %3161 = vmatpush1.xpose.msra.mxu0 0.0
    %3162 = vmatprep.subr.mxu0 0.0
    %3163 = vmatpush1.xpose.msra.mxu0 0.0
    %3164 = vmatprep.subr.mxu0 0.0
    %3165 = vmatpush1.xpose.msra.mxu0 0.0
    %3166 = vmatprep.subr.mxu0 0.0
    %3167 = vmatpush1.xpose.msra.mxu0 0.0
    %3168 = vmatprep.subr.mxu0 0.0
    %3169 = vmatpush1.xpose.msra.mxu0 0.0
    %3170 = vmatprep.subr.mxu0 0.0
    %3171 = vmatpush1.xpose.msra.mxu0 0.0
    %3172 = vmatprep.subr.mxu0 0.0
    %3173 = vmatpush1.xpose.msra.mxu0 0.0
    %3174 = vmatprep.subr.mxu0 0.0
    %3175 = vmatpush1.xpose.msra.mxu0 0.0
    %3176 = vmatprep.subr.mxu0 0.0
    %3177 = vmatpush1.xpose.msra.mxu0 0.0
    %3178 = vmatprep.subr.mxu0 0.0
    %3179 = vmatpush1.xpose.msra.mxu0 0.0
    %3180 = vmatprep.subr.mxu0 0.0
    %3181 = vmatpush1.xpose.msra.mxu0 0.0
    %3182 = vmatprep.subr.mxu0 0.0
    %3183 = vmatpush1.xpose.msra.mxu0 0.0
    %3184 = vmatprep.subr.mxu0 0.0
    %3185 = vmatpush1.xpose.msra.mxu0 0.0
    %3186 = vmatprep.mubr.f32.mxu0 0.0
    %3187 = vmatmul.mubr.f32.gmra.mrb[0].mxu0 %v2958
    %v3188 = vpop.f32.mrb[0].mxu0
    %v3189 = vadd.f32 0.0, %v3188
    %v3190 = vpop.f32.mrb[0].mxu0
    %3191 = vmatprep.mubr.f32.mxu0 0.0
    %3192 = vmatmul.mubr.f32.gmra.mrb[0].mxu0 %v2961
    %v3193 = vpop.f32.mrb[0].mxu0
    %v3194 = vadd.f32 0.0, %v3193
    %v3195 = vpop.f32.mrb[0].mxu0
    %3196 = vdwg.mxu0
    %v3198 = vsel %vm303, %v3033, 0
    %v3201 = vsel %vm303, %v3111, 0
    %3203 = vmatprep.subr.mxu0 0.0
    %3204 = vmatpush1.xpose.msra.mxu0 %v3201
    %3205 = vmatprep.subr.mxu0 0.0
    %3206 = vmatpush1.xpose.msra.mxu0 0.0
    %3207 = vmatprep.subr.mxu0 0.0
    %3208 = vmatpush1.xpose.msra.mxu0 0.0
    %3209 = vmatprep.subr.mxu0 0.0
    %3210 = vmatpush1.xpose.msra.mxu0 0.0
    %3211 = vmatprep.subr.mxu0 0.0
    %3212 = vmatpush1.xpose.msra.mxu0 0.0
    %3213 = vmatprep.subr.mxu0 0.0
    %3214 = vmatpush1.xpose.msra.mxu0 0.0
    %3215 = vmatprep.subr.mxu0 0.0
    %3216 = vmatpush1.xpose.msra.mxu0 0.0
    %3217 = vmatprep.subr.mxu0 0.0
    %3218 = vmatpush1.xpose.msra.mxu0 0.0
    %3219 = vmatprep.subr.mxu0 0.0
    %3220 = vmatpush1.xpose.msra.mxu0 0.0
    %3221 = vmatprep.subr.mxu0 0.0
    %3222 = vmatpush1.xpose.msra.mxu0 0.0
    %3223 = vmatprep.subr.mxu0 0.0
    %3224 = vmatpush1.xpose.msra.mxu0 0.0
    %3225 = vmatprep.subr.mxu0 0.0
    %3226 = vmatpush1.xpose.msra.mxu0 0.0
    %3227 = vmatprep.subr.mxu0 0.0
    %3228 = vmatpush1.xpose.msra.mxu0 0.0
    %3229 = vmatprep.subr.mxu0 0.0
    %3230 = vmatpush1.xpose.msra.mxu0 0.0
    %3231 = vmatprep.subr.mxu0 0.0
    %3232 = vmatpush1.xpose.msra.mxu0 0.0
    %3233 = vmatprep.subr.mxu0 0.0
    %3234 = vmatpush1.xpose.msra.mxu0 0.0
    %3235 = vmatprep.subr.mxu0 0.0
    %3236 = vmatpush1.xpose.msra.mxu0 0.0
    %3237 = vmatprep.subr.mxu0 0.0
    %3238 = vmatpush1.xpose.msra.mxu0 0.0
    %3239 = vmatprep.subr.mxu0 0.0
    %3240 = vmatpush1.xpose.msra.mxu0 0.0
    %3241 = vmatprep.subr.mxu0 0.0
    %3242 = vmatpush1.xpose.msra.mxu0 0.0
    %3243 = vmatprep.subr.mxu0 0.0
    %3244 = vmatpush1.xpose.msra.mxu0 0.0
    %3245 = vmatprep.subr.mxu0 0.0
    %3246 = vmatpush1.xpose.msra.mxu0 0.0
    %3247 = vmatprep.subr.mxu0 0.0
    %3248 = vmatpush1.xpose.msra.mxu0 0.0
    %3249 = vmatprep.subr.mxu0 0.0
    %3250 = vmatpush1.xpose.msra.mxu0 0.0
    %3251 = vmatprep.subr.mxu0 0.0
    %3252 = vmatpush1.xpose.msra.mxu0 0.0
    %3253 = vmatprep.subr.mxu0 0.0
    %3254 = vmatpush1.xpose.msra.mxu0 0.0
    %3255 = vmatprep.subr.mxu0 0.0
    %3256 = vmatpush1.xpose.msra.mxu0 0.0
    %3257 = vmatprep.subr.mxu0 0.0
    %3258 = vmatpush1.xpose.msra.mxu0 0.0
    %3259 = vmatprep.subr.mxu0 0.0
    %3260 = vmatpush1.xpose.msra.mxu0 0.0
    %3261 = vmatprep.subr.mxu0 0.0
    %3262 = vmatpush1.xpose.msra.mxu0 0.0
    %3263 = vmatprep.subr.mxu0 0.0
    %3264 = vmatpush1.xpose.msra.mxu0 0.0
    %3265 = vmatprep.subr.mxu0 0.0
    %3266 = vmatpush1.xpose.msra.mxu0 0.0
    %3267 = vmatprep.mubr.f32.mxu0 0.0
    %3268 = vmatmul.mubr.f32.gmra.mrb[0].mxu0 %v3198
    %v3269 = vpop.f32.mrb[0].mxu0
    %v3270 = vadd.f32 0.0, %v3269
    %v3271 = vpop.f32.mrb[0].mxu0
    %3272 = vdwg.mxu0
    %v3274 = vsel %vm303, %v3038, 0
    %v3277 = vsel %vm303, %v3116, 0
    %3279 = vmatprep.subr.mxu0 0.0
    %3280 = vmatpush1.xpose.msra.mxu0 %v3277
    %3281 = vmatprep.subr.mxu0 0.0
    %3282 = vmatpush1.xpose.msra.mxu0 0.0
    %3283 = vmatprep.subr.mxu0 0.0
    %3284 = vmatpush1.xpose.msra.mxu0 0.0
    %3285 = vmatprep.subr.mxu0 0.0
    %3286 = vmatpush1.xpose.msra.mxu0 0.0
    %3287 = vmatprep.subr.mxu0 0.0
    %3288 = vmatpush1.xpose.msra.mxu0 0.0
    %3289 = vmatprep.subr.mxu0 0.0
    %3290 = vmatpush1.xpose.msra.mxu0 0.0
    %3291 = vmatprep.subr.mxu0 0.0
    %3292 = vmatpush1.xpose.msra.mxu0 0.0
    %3293 = vmatprep.subr.mxu0 0.0
    %3294 = vmatpush1.xpose.msra.mxu0 0.0
    %3295 = vmatprep.subr.mxu0 0.0
    %3296 = vmatpush1.xpose.msra.mxu0 0.0
    %3297 = vmatprep.subr.mxu0 0.0
    %3298 = vmatpush1.xpose.msra.mxu0 0.0
    %3299 = vmatprep.subr.mxu0 0.0
    %3300 = vmatpush1.xpose.msra.mxu0 0.0
    %3301 = vmatprep.subr.mxu0 0.0
    %3302 = vmatpush1.xpose.msra.mxu0 0.0
    %3303 = vmatprep.subr.mxu0 0.0
    %3304 = vmatpush1.xpose.msra.mxu0 0.0
    %3305 = vmatprep.subr.mxu0 0.0
    %3306 = vmatpush1.xpose.msra.mxu0 0.0
    %3307 = vmatprep.subr.mxu0 0.0
    %3308 = vmatpush1.xpose.msra.mxu0 0.0
    %3309 = vmatprep.subr.mxu0 0.0
    %3310 = vmatpush1.xpose.msra.mxu0 0.0
    %3311 = vmatprep.subr.mxu0 0.0
    %3312 = vmatpush1.xpose.msra.mxu0 0.0
    %3313 = vmatprep.subr.mxu0 0.0
    %3314 = vmatpush1.xpose.msra.mxu0 0.0
    %3315 = vmatprep.subr.mxu0 0.0
    %3316 = vmatpush1.xpose.msra.mxu0 0.0
    %3317 = vmatprep.subr.mxu0 0.0
    %3318 = vmatpush1.xpose.msra.mxu0 0.0
    %3319 = vmatprep.subr.mxu0 0.0
    %3320 = vmatpush1.xpose.msra.mxu0 0.0
    %3321 = vmatprep.subr.mxu0 0.0
    %3322 = vmatpush1.xpose.msra.mxu0 0.0
    %3323 = vmatprep.subr.mxu0 0.0
    %3324 = vmatpush1.xpose.msra.mxu0 0.0
    %3325 = vmatprep.subr.mxu0 0.0
    %3326 = vmatpush1.xpose.msra.mxu0 0.0
    %3327 = vmatprep.subr.mxu0 0.0
    %3328 = vmatpush1.xpose.msra.mxu0 0.0
    %3329 = vmatprep.subr.mxu0 0.0
    %3330 = vmatpush1.xpose.msra.mxu0 0.0
    %3331 = vmatprep.subr.mxu0 0.0
    %3332 = vmatpush1.xpose.msra.mxu0 0.0
    %3333 = vmatprep.subr.mxu0 0.0
    %3334 = vmatpush1.xpose.msra.mxu0 0.0
    %3335 = vmatprep.subr.mxu0 0.0
    %3336 = vmatpush1.xpose.msra.mxu0 0.0
    %3337 = vmatprep.subr.mxu0 0.0
    %3338 = vmatpush1.xpose.msra.mxu0 0.0
    %3339 = vmatprep.subr.mxu0 0.0
    %3340 = vmatpush1.xpose.msra.mxu0 0.0
    %3341 = vmatprep.subr.mxu0 0.0
    %3342 = vmatpush1.xpose.msra.mxu0 0.0
    %3343 = vmatprep.mubr.f32.mxu0 0.0
    %3344 = vmatmul.mubr.f32.gmra.mrb[0].mxu0 %v3274
    %v3345 = vpop.f32.mrb[0].mxu0
    %v3346 = vadd.f32 0.0, %v3345
    %v3347 = vpop.f32.mrb[0].mxu0
    %3348 = vdwg.mxu0
    %v3349 = vmul.f32 %v3270, 0.35355338
    %v3350 = vmul.f32 %v3346, 0.35355338
    %v3351 = vadd.f32 %v3349, %v461
    %v3352 = vadd.f32 %v3350, %v465
    %v3353 = vsel %vm303, %v3351, -inf
    %3354 = vmax.xlane.f32.xlu0 %v3353
    %v3355 = vpop.xlane.xlu0 %3354
    %v3356 = vsel %vm303, %v3352, -inf
    %3357 = vmax.xlane.f32.xlu0 %v3356
    %v3358 = vpop.xlane.xlu0 %3357
    %v3359 = vsub.f32 %v3351, %v3355
    %v3360 = vsub.f32 %v3352, %v3358
    %v3361 = vmul.f32 %v3359, 1.442695
    %v3362 = vpow.pop %v3361
    %v3363 = vmul.f32 %v3360, 1.442695
    %v3364 = vpow.pop %v3363
    %v3365 = vsel %vm303, %v3362, 0.0
    %3366 = vadd.xlane.f32.xlu0 %v3365
    %v3367 = vpop.xlane.xlu0 %3366
    %v3368 = vsel %vm303, %v3364, 0.0
    %3369 = vadd.xlane.f32.xlu0 %v3368
    %v3370 = vpop.xlane.xlu0 %3369
    %v3371 = vrcp.pop %v3367
    %v3372 = vrcp.pop %v3370
    %v3373 = vmul.f32 %v3362, %v3371
    %v3374 = vmul.f32 %v3364, %v3372
    %v3376 = vsel %vm303, %v3373, 0
    %3378 = vmatprep.subr.mxu0 0.0
    %3379 = vmatpush1.msra.mxu0 %v3189
    %3380 = vmatprep.subr.mxu0 0.0
    %3381 = vmatpush1.msra.mxu0 0.0
    %3382 = vmatprep.subr.mxu0 0.0
    %3383 = vmatpush1.msra.mxu0 0.0
    %3384 = vmatprep.subr.mxu0 0.0
    %3385 = vmatpush1.msra.mxu0 0.0
    %3386 = vmatprep.subr.mxu0 0.0
    %3387 = vmatpush1.msra.mxu0 0.0
    %3388 = vmatprep.subr.mxu0 0.0
    %3389 = vmatpush1.msra.mxu0 0.0
    %3390 = vmatprep.subr.mxu0 0.0
    %3391 = vmatpush1.msra.mxu0 0.0
    %3392 = vmatprep.subr.mxu0 0.0
    %3393 = vmatpush1.msra.mxu0 0.0
    %3394 = vmatprep.subr.mxu0 0.0
    %3395 = vmatpush1.msra.mxu0 0.0
    %3396 = vmatprep.subr.mxu0 0.0
    %3397 = vmatpush1.msra.mxu0 0.0
    %3398 = vmatprep.subr.mxu0 0.0
    %3399 = vmatpush1.msra.mxu0 0.0
    %3400 = vmatprep.subr.mxu0 0.0
    %3401 = vmatpush1.msra.mxu0 0.0
    %3402 = vmatprep.subr.mxu0 0.0
    %3403 = vmatpush1.msra.mxu0 0.0
    %3404 = vmatprep.subr.mxu0 0.0
    %3405 = vmatpush1.msra.mxu0 0.0
    %3406 = vmatprep.subr.mxu0 0.0
    %3407 = vmatpush1.msra.mxu0 0.0
    %3408 = vmatprep.subr.mxu0 0.0
    %3409 = vmatpush1.msra.mxu0 0.0
    %3410 = vmatprep.subr.mxu0 0.0
    %3411 = vmatpush1.msra.mxu0 0.0
    %3412 = vmatprep.subr.mxu0 0.0
    %3413 = vmatpush1.msra.mxu0 0.0
    %3414 = vmatprep.subr.mxu0 0.0
    %3415 = vmatpush1.msra.mxu0 0.0
    %3416 = vmatprep.subr.mxu0 0.0
    %3417 = vmatpush1.msra.mxu0 0.0
    %3418 = vmatprep.subr.mxu0 0.0
    %3419 = vmatpush1.msra.mxu0 0.0
    %3420 = vmatprep.subr.mxu0 0.0
    %3421 = vmatpush1.msra.mxu0 0.0
    %3422 = vmatprep.subr.mxu0 0.0
    %3423 = vmatpush1.msra.mxu0 0.0
    %3424 = vmatprep.subr.mxu0 0.0
    %3425 = vmatpush1.msra.mxu0 0.0
    %3426 = vmatprep.subr.mxu0 0.0
    %3427 = vmatpush1.msra.mxu0 0.0
    %3428 = vmatprep.subr.mxu0 0.0
    %3429 = vmatpush1.msra.mxu0 0.0
    %3430 = vmatprep.subr.mxu0 0.0
    %3431 = vmatpush1.msra.mxu0 0.0
    %3432 = vmatprep.subr.mxu0 0.0
    %3433 = vmatpush1.msra.mxu0 0.0
    %3434 = vmatprep.subr.mxu0 0.0
    %3435 = vmatpush1.msra.mxu0 0.0
    %3436 = vmatprep.subr.mxu0 0.0
    %3437 = vmatpush1.msra.mxu0 0.0
    %3438 = vmatprep.subr.mxu0 0.0
    %3439 = vmatpush1.msra.mxu0 0.0
    %3440 = vmatprep.subr.mxu0 0.0
    %3441 = vmatpush1.msra.mxu0 0.0
    %3442 = vmatprep.mubr.f32.mxu0 0.0
    %3443 = vmatmul.mubr.f32.gmra.mrb[0].mxu0 %v3376
    %v3444 = vpop.f32.mrb[0].mxu0
    %v3445 = vadd.f32 0.0, %v3444
    %v3446 = vpop.f32.mrb[0].mxu0
    %3447 = vdwg.mxu0
    %v3449 = vsel %vm303, %v3374, 0
    %3451 = vmatprep.subr.mxu0 0.0
    %3452 = vmatpush1.msra.mxu0 %v3194
    %3453 = vmatprep.subr.mxu0 0.0
    %3454 = vmatpush1.msra.mxu0 0.0
    %3455 = vmatprep.subr.mxu0 0.0
    %3456 = vmatpush1.msra.mxu0 0.0
    %3457 = vmatprep.subr.mxu0 0.0
    %3458 = vmatpush1.msra.mxu0 0.0
    %3459 = vmatprep.subr.mxu0 0.0
    %3460 = vmatpush1.msra.mxu0 0.0
    %3461 = vmatprep.subr.mxu0 0.0
    %3462 = vmatpush1.msra.mxu0 0.0
    %3463 = vmatprep.subr.mxu0 0.0
    %3464 = vmatpush1.msra.mxu0 0.0
    %3465 = vmatprep.subr.mxu0 0.0
    %3466 = vmatpush1.msra.mxu0 0.0
    %3467 = vmatprep.subr.mxu0 0.0
    %3468 = vmatpush1.msra.mxu0 0.0
    %3469 = vmatprep.subr.mxu0 0.0
    %3470 = vmatpush1.msra.mxu0 0.0
    %3471 = vmatprep.subr.mxu0 0.0
    %3472 = vmatpush1.msra.mxu0 0.0
    %3473 = vmatprep.subr.mxu0 0.0
    %3474 = vmatpush1.msra.mxu0 0.0
    %3475 = vmatprep.subr.mxu0 0.0
    %3476 = vmatpush1.msra.mxu0 0.0
    %3477 = vmatprep.subr.mxu0 0.0
    %3478 = vmatpush1.msra.mxu0 0.0
    %3479 = vmatprep.subr.mxu0 0.0
    %3480 = vmatpush1.msra.mxu0 0.0
    %3481 = vmatprep.subr.mxu0 0.0
    %3482 = vmatpush1.msra.mxu0 0.0
    %3483 = vmatprep.subr.mxu0 0.0
    %3484 = vmatpush1.msra.mxu0 0.0
    %3485 = vmatprep.subr.mxu0 0.0
    %3486 = vmatpush1.msra.mxu0 0.0
    %3487 = vmatprep.subr.mxu0 0.0
    %3488 = vmatpush1.msra.mxu0 0.0
    %3489 = vmatprep.subr.mxu0 0.0
    %3490 = vmatpush1.msra.mxu0 0.0
    %3491 = vmatprep.subr.mxu0 0.0
    %3492 = vmatpush1.msra.mxu0 0.0
    %3493 = vmatprep.subr.mxu0 0.0
    %3494 = vmatpush1.msra.mxu0 0.0
    %3495 = vmatprep.subr.mxu0 0.0
    %3496 = vmatpush1.msra.mxu0 0.0
    %3497 = vmatprep.subr.mxu0 0.0
    %3498 = vmatpush1.msra.mxu0 0.0
    %3499 = vmatprep.subr.mxu0 0.0
    %3500 = vmatpush1.msra.mxu0 0.0
    %3501 = vmatprep.subr.mxu0 0.0
    %3502 = vmatpush1.msra.mxu0 0.0
    %3503 = vmatprep.subr.mxu0 0.0
    %3504 = vmatpush1.msra.mxu0 0.0
    %3505 = vmatprep.subr.mxu0 0.0
    %3506 = vmatpush1.msra.mxu0 0.0
    %3507 = vmatprep.subr.mxu0 0.0
    %3508 = vmatpush1.msra.mxu0 0.0
    %3509 = vmatprep.subr.mxu0 0.0
    %3510 = vmatpush1.msra.mxu0 0.0
    %3511 = vmatprep.subr.mxu0 0.0
    %3512 = vmatpush1.msra.mxu0 0.0
    %3513 = vmatprep.subr.mxu0 0.0
    %3514 = vmatpush1.msra.mxu0 0.0
    %3515 = vmatprep.mubr.f32.mxu0 0.0
    %3516 = vmatmul.mubr.f32.gmra.mrb[0].mxu0 %v3449
    %v3517 = vpop.f32.mrb[0].mxu0
    %v3518 = vadd.f32 0.0, %v3517
    %v3519 = vpop.f32.mrb[0].mxu0
    %3520 = vdwg.mxu0
    %v3522 = vsel %vm303, %v3445, 0
    %v3525 = vsel %vm303, %v3518, 0
    %3527 = vmatprep.subr.mxu0 0.0
    %3528 = vmatpush1.msra.mxu0 %v2956
    %3529 = vmatprep.subr.mxu0 0.0
    %3530 = vmatpush1.msra.mxu0 0.0
    %3531 = vmatprep.subr.mxu0 0.0
    %3532 = vmatpush1.msra.mxu0 0.0
    %3533 = vmatprep.subr.mxu0 0.0
    %3534 = vmatpush1.msra.mxu0 0.0
    %3535 = vmatprep.subr.mxu0 0.0
    %3536 = vmatpush1.msra.mxu0 0.0
    %3537 = vmatprep.subr.mxu0 0.0
    %3538 = vmatpush1.msra.mxu0 0.0
    %3539 = vmatprep.subr.mxu0 0.0
    %3540 = vmatpush1.msra.mxu0 0.0
    %3541 = vmatprep.subr.mxu0 0.0
    %3542 = vmatpush1.msra.mxu0 0.0
    %3543 = vmatprep.subr.mxu0 0.0
    %3544 = vmatpush1.msra.mxu0 0.0
    %3545 = vmatprep.subr.mxu0 0.0
    %3546 = vmatpush1.msra.mxu0 0.0
    %3547 = vmatprep.subr.mxu0 0.0
    %3548 = vmatpush1.msra.mxu0 0.0
    %3549 = vmatprep.subr.mxu0 0.0
    %3550 = vmatpush1.msra.mxu0 0.0
    %3551 = vmatprep.subr.mxu0 0.0
    %3552 = vmatpush1.msra.mxu0 0.0
    %3553 = vmatprep.subr.mxu0 0.0
    %3554 = vmatpush1.msra.mxu0 0.0
    %3555 = vmatprep.subr.mxu0 0.0
    %3556 = vmatpush1.msra.mxu0 0.0
    %3557 = vmatprep.subr.mxu0 0.0
    %3558 = vmatpush1.msra.mxu0 0.0
    %3559 = vmatprep.subr.mxu0 0.0
    %3560 = vmatpush1.msra.mxu0 0.0
    %3561 = vmatprep.subr.mxu0 0.0
    %3562 = vmatpush1.msra.mxu0 0.0
    %3563 = vmatprep.subr.mxu0 0.0
    %3564 = vmatpush1.msra.mxu0 0.0
    %3565 = vmatprep.subr.mxu0 0.0
    %3566 = vmatpush1.msra.mxu0 0.0
    %3567 = vmatprep.subr.mxu0 0.0
    %3568 = vmatpush1.msra.mxu0 0.0
    %3569 = vmatprep.subr.mxu0 0.0
    %3570 = vmatpush1.msra.mxu0 0.0
    %3571 = vmatprep.subr.mxu0 0.0
    %3572 = vmatpush1.msra.mxu0 0.0
    %3573 = vmatprep.subr.mxu0 0.0
    %3574 = vmatpush1.msra.mxu0 0.0
    %3575 = vmatprep.subr.mxu0 0.0
    %3576 = vmatpush1.msra.mxu0 0.0
    %3577 = vmatprep.subr.mxu0 0.0
    %3578 = vmatpush1.msra.mxu0 0.0
    %3579 = vmatprep.subr.mxu0 0.0
    %3580 = vmatpush1.msra.mxu0 0.0
    %3581 = vmatprep.subr.mxu0 0.0
    %3582 = vmatpush1.msra.mxu0 0.0
    %3583 = vmatprep.subr.mxu0 0.0
    %3584 = vmatpush1.msra.mxu0 0.0
    %3585 = vmatprep.subr.mxu0 0.0
    %3586 = vmatpush1.msra.mxu0 0.0
    %3587 = vmatprep.subr.mxu0 0.0
    %3588 = vmatpush1.msra.mxu0 0.0
    %3589 = vmatprep.subr.mxu0 0.0
    %3590 = vmatpush1.msra.mxu0 0.0
    %3591 = vmatprep.mubr.f32.mxu0 0.0
    %3592 = vmatmul.mubr.f32.gmra.mrb[0].mxu0 %v3522
    %v3593 = vpop.f32.mrb[0].mxu0
    %v3594 = vadd.f32 0.0, %v3593
    %v3595 = vpop.f32.mrb[0].mxu0
    %3596 = vmatprep.mubr.f32.mxu0 0.0
    %3597 = vmatmul.mubr.f32.gmra.mrb[0].mxu0 %v3525
    %v3598 = vpop.f32.mrb[0].mxu0
    %v3599 = vadd.f32 0.0, %v3598
    %v3600 = vpop.f32.mrb[0].mxu0
    %3601 = vdwg.mxu0
    %v3602 = vadd.f32 %v2946, %v3594
    %v3603 = vadd.f32 %v2947, %v3599
    %v3604 = vld [vmem:[%s2948 + $0x20] sm:$0xff]
    %v3605 = vld [vmem:[%s2948 + $0x28] sm:$0xff]
    %v3606 = vld [vmem:[%s2948 + $0x30] sm:$0xff]
    %v3607 = vld [vmem:[%s2948 + $0x38] sm:$0xff]
    %v3609 = vsel %vm62, %v3604, 0
    %3611 = vmatprep.subr.mxu0 0.0
    %3612 = vmatpush1.xpose.msra.mxu0 %v3609
    %3613 = vmatprep.subr.mxu0 0.0
    %3614 = vmatpush1.xpose.msra.mxu0 0.0
    %3615 = vmatprep.subr.mxu0 0.0
    %3616 = vmatpush1.xpose.msra.mxu0 0.0
    %3617 = vmatprep.subr.mxu0 0.0
    %3618 = vmatpush1.xpose.msra.mxu0 0.0
    %3619 = vmatprep.subr.mxu0 0.0
    %3620 = vmatpush1.xpose.msra.mxu0 0.0
    %3621 = vmatprep.subr.mxu0 0.0
    %3622 = vmatpush1.xpose.msra.mxu0 0.0
    %3623 = vmatprep.subr.mxu0 0.0
    %3624 = vmatpush1.xpose.msra.mxu0 0.0
    %3625 = vmatprep.subr.mxu0 0.0
    %3626 = vmatpush1.xpose.msra.mxu0 0.0
    %3627 = vmatprep.subr.mxu0 0.0
    %3628 = vmatpush1.xpose.msra.mxu0 0.0
    %3629 = vmatprep.subr.mxu0 0.0
    %3630 = vmatpush1.xpose.msra.mxu0 0.0
    %3631 = vmatprep.subr.mxu0 0.0
    %3632 = vmatpush1.xpose.msra.mxu0 0.0
    %3633 = vmatprep.subr.mxu0 0.0
    %3634 = vmatpush1.xpose.msra.mxu0 0.0
    %3635 = vmatprep.subr.mxu0 0.0
    %3636 = vmatpush1.xpose.msra.mxu0 0.0
    %3637 = vmatprep.subr.mxu0 0.0
    %3638 = vmatpush1.xpose.msra.mxu0 0.0
    %3639 = vmatprep.subr.mxu0 0.0
    %3640 = vmatpush1.xpose.msra.mxu0 0.0
    %3641 = vmatprep.subr.mxu0 0.0
    %3642 = vmatpush1.xpose.msra.mxu0 0.0
    %3643 = vmatprep.subr.mxu0 0.0
    %3644 = vmatpush1.xpose.msra.mxu0 0.0
    %3645 = vmatprep.subr.mxu0 0.0
    %3646 = vmatpush1.xpose.msra.mxu0 0.0
    %3647 = vmatprep.subr.mxu0 0.0
    %3648 = vmatpush1.xpose.msra.mxu0 0.0
    %3649 = vmatprep.subr.mxu0 0.0
    %3650 = vmatpush1.xpose.msra.mxu0 0.0
    %3651 = vmatprep.subr.mxu0 0.0
    %3652 = vmatpush1.xpose.msra.mxu0 0.0
    %3653 = vmatprep.subr.mxu0 0.0
    %3654 = vmatpush1.xpose.msra.mxu0 0.0
    %3655 = vmatprep.subr.mxu0 0.0
    %3656 = vmatpush1.xpose.msra.mxu0 0.0
    %3657 = vmatprep.subr.mxu0 0.0
    %3658 = vmatpush1.xpose.msra.mxu0 0.0
    %3659 = vmatprep.subr.mxu0 0.0
    %3660 = vmatpush1.xpose.msra.mxu0 0.0
    %3661 = vmatprep.subr.mxu0 0.0
    %3662 = vmatpush1.xpose.msra.mxu0 0.0
    %3663 = vmatprep.subr.mxu0 0.0
    %3664 = vmatpush1.xpose.msra.mxu0 0.0
    %3665 = vmatprep.subr.mxu0 0.0
    %3666 = vmatpush1.xpose.msra.mxu0 0.0
    %3667 = vmatprep.subr.mxu0 0.0
    %3668 = vmatpush1.xpose.msra.mxu0 0.0
    %3669 = vmatprep.subr.mxu0 0.0
    %3670 = vmatpush1.xpose.msra.mxu0 0.0
    %3671 = vmatprep.subr.mxu0 0.0
    %3672 = vmatpush1.xpose.msra.mxu0 0.0
    %3673 = vmatprep.subr.mxu0 0.0
    %3674 = vmatpush1.xpose.msra.mxu0 0.0
    %3675 = vmatprep.mubr.f32.mxu0 0.0
    %3676 = vmatmul.mubr.f32.gmra.mrb[0].mxu0 %v2958
    %v3677 = vpop.f32.mrb[0].mxu0
    %v3678 = vadd.f32 0.0, %v3677
    %v3679 = vpop.f32.mrb[0].mxu0
    %3680 = vmatprep.mubr.f32.mxu0 0.0
    %3681 = vmatmul.mubr.f32.gmra.mrb[0].mxu0 %v2961
    %v3682 = vpop.f32.mrb[0].mxu0
    %v3683 = vadd.f32 0.0, %v3682
    %v3684 = vpop.f32.mrb[0].mxu0
    %3685 = vdwg.mxu0
    %v3687 = vsel %vm62, %v3605, 0
    %3689 = vmatprep.subr.mxu0 0.0
    %3690 = vmatpush1.xpose.msra.mxu0 %v3687
    %3691 = vmatprep.subr.mxu0 0.0
    %3692 = vmatpush1.xpose.msra.mxu0 0.0
    %3693 = vmatprep.subr.mxu0 0.0
    %3694 = vmatpush1.xpose.msra.mxu0 0.0
    %3695 = vmatprep.subr.mxu0 0.0
    %3696 = vmatpush1.xpose.msra.mxu0 0.0
    %3697 = vmatprep.subr.mxu0 0.0
    %3698 = vmatpush1.xpose.msra.mxu0 0.0
    %3699 = vmatprep.subr.mxu0 0.0
    %3700 = vmatpush1.xpose.msra.mxu0 0.0
    %3701 = vmatprep.subr.mxu0 0.0
    %3702 = vmatpush1.xpose.msra.mxu0 0.0
    %3703 = vmatprep.subr.mxu0 0.0
    %3704 = vmatpush1.xpose.msra.mxu0 0.0
    %3705 = vmatprep.subr.mxu0 0.0
    %3706 = vmatpush1.xpose.msra.mxu0 0.0
    %3707 = vmatprep.subr.mxu0 0.0
    %3708 = vmatpush1.xpose.msra.mxu0 0.0
    %3709 = vmatprep.subr.mxu0 0.0
    %3710 = vmatpush1.xpose.msra.mxu0 0.0
    %3711 = vmatprep.subr.mxu0 0.0
    %3712 = vmatpush1.xpose.msra.mxu0 0.0
    %3713 = vmatprep.subr.mxu0 0.0
    %3714 = vmatpush1.xpose.msra.mxu0 0.0
    %3715 = vmatprep.subr.mxu0 0.0
    %3716 = vmatpush1.xpose.msra.mxu0 0.0
    %3717 = vmatprep.subr.mxu0 0.0
    %3718 = vmatpush1.xpose.msra.mxu0 0.0
    %3719 = vmatprep.subr.mxu0 0.0
    %3720 = vmatpush1.xpose.msra.mxu0 0.0
    %3721 = vmatprep.subr.mxu0 0.0
    %3722 = vmatpush1.xpose.msra.mxu0 0.0
    %3723 = vmatprep.subr.mxu0 0.0
    %3724 = vmatpush1.xpose.msra.mxu0 0.0
    %3725 = vmatprep.subr.mxu0 0.0
    %3726 = vmatpush1.xpose.msra.mxu0 0.0
    %3727 = vmatprep.subr.mxu0 0.0
    %3728 = vmatpush1.xpose.msra.mxu0 0.0
    %3729 = vmatprep.subr.mxu0 0.0
    %3730 = vmatpush1.xpose.msra.mxu0 0.0
    %3731 = vmatprep.subr.mxu0 0.0
    %3732 = vmatpush1.xpose.msra.mxu0 0.0
    %3733 = vmatprep.subr.mxu0 0.0
    %3734 = vmatpush1.xpose.msra.mxu0 0.0
    %3735 = vmatprep.subr.mxu0 0.0
    %3736 = vmatpush1.xpose.msra.mxu0 0.0
    %3737 = vmatprep.subr.mxu0 0.0
    %3738 = vmatpush1.xpose.msra.mxu0 0.0
    %3739 = vmatprep.subr.mxu0 0.0
    %3740 = vmatpush1.xpose.msra.mxu0 0.0
    %3741 = vmatprep.subr.mxu0 0.0
    %3742 = vmatpush1.xpose.msra.mxu0 0.0
    %3743 = vmatprep.subr.mxu0 0.0
    %3744 = vmatpush1.xpose.msra.mxu0 0.0
    %3745 = vmatprep.subr.mxu0 0.0
    %3746 = vmatpush1.xpose.msra.mxu0 0.0
    %3747 = vmatprep.subr.mxu0 0.0
    %3748 = vmatpush1.xpose.msra.mxu0 0.0
    %3749 = vmatprep.subr.mxu0 0.0
    %3750 = vmatpush1.xpose.msra.mxu0 0.0
    %3751 = vmatprep.subr.mxu0 0.0
    %3752 = vmatpush1.xpose.msra.mxu0 0.0
    %3753 = vmatprep.mubr.f32.mxu0 0.0
    %3754 = vmatmul.mubr.f32.gmra.mrb[0].mxu0 %v2958
    %v3755 = vpop.f32.mrb[0].mxu0
    %v3756 = vadd.f32 0.0, %v3755
    %v3757 = vpop.f32.mrb[0].mxu0
    %3758 = vmatprep.mubr.f32.mxu0 0.0
    %3759 = vmatmul.mubr.f32.gmra.mrb[0].mxu0 %v2961
    %v3760 = vpop.f32.mrb[0].mxu0
    %v3761 = vadd.f32 0.0, %v3760
    %v3762 = vpop.f32.mrb[0].mxu0
    %3763 = vdwg.mxu0
    %v3765 = vsel %vm62, %v3606, 0
    %3767 = vmatprep.subr.mxu0 0.0
    %3768 = vmatpush1.xpose.msra.mxu0 %v3765
    %3769 = vmatprep.subr.mxu0 0.0
    %3770 = vmatpush1.xpose.msra.mxu0 0.0
    %3771 = vmatprep.subr.mxu0 0.0
    %3772 = vmatpush1.xpose.msra.mxu0 0.0
    %3773 = vmatprep.subr.mxu0 0.0
    %3774 = vmatpush1.xpose.msra.mxu0 0.0
    %3775 = vmatprep.subr.mxu0 0.0
    %3776 = vmatpush1.xpose.msra.mxu0 0.0
    %3777 = vmatprep.subr.mxu0 0.0
    %3778 = vmatpush1.xpose.msra.mxu0 0.0
    %3779 = vmatprep.subr.mxu0 0.0
    %3780 = vmatpush1.xpose.msra.mxu0 0.0
    %3781 = vmatprep.subr.mxu0 0.0
    %3782 = vmatpush1.xpose.msra.mxu0 0.0
    %3783 = vmatprep.subr.mxu0 0.0
    %3784 = vmatpush1.xpose.msra.mxu0 0.0
    %3785 = vmatprep.subr.mxu0 0.0
    %3786 = vmatpush1.xpose.msra.mxu0 0.0
    %3787 = vmatprep.subr.mxu0 0.0
    %3788 = vmatpush1.xpose.msra.mxu0 0.0
    %3789 = vmatprep.subr.mxu0 0.0
    %3790 = vmatpush1.xpose.msra.mxu0 0.0
    %3791 = vmatprep.subr.mxu0 0.0
    %3792 = vmatpush1.xpose.msra.mxu0 0.0
    %3793 = vmatprep.subr.mxu0 0.0
    %3794 = vmatpush1.xpose.msra.mxu0 0.0
    %3795 = vmatprep.subr.mxu0 0.0
    %3796 = vmatpush1.xpose.msra.mxu0 0.0
    %3797 = vmatprep.subr.mxu0 0.0
    %3798 = vmatpush1.xpose.msra.mxu0 0.0
    %3799 = vmatprep.subr.mxu0 0.0
    %3800 = vmatpush1.xpose.msra.mxu0 0.0
    %3801 = vmatprep.subr.mxu0 0.0
    %3802 = vmatpush1.xpose.msra.mxu0 0.0
    %3803 = vmatprep.subr.mxu0 0.0
    %3804 = vmatpush1.xpose.msra.mxu0 0.0
    %3805 = vmatprep.subr.mxu0 0.0
    %3806 = vmatpush1.xpose.msra.mxu0 0.0
    %3807 = vmatprep.subr.mxu0 0.0
    %3808 = vmatpush1.xpose.msra.mxu0 0.0
    %3809 = vmatprep.subr.mxu0 0.0
    %3810 = vmatpush1.xpose.msra.mxu0 0.0
    %3811 = vmatprep.subr.mxu0 0.0
    %3812 = vmatpush1.xpose.msra.mxu0 0.0
    %3813 = vmatprep.subr.mxu0 0.0
    %3814 = vmatpush1.xpose.msra.mxu0 0.0
    %3815 = vmatprep.subr.mxu0 0.0
    %3816 = vmatpush1.xpose.msra.mxu0 0.0
    %3817 = vmatprep.subr.mxu0 0.0
    %3818 = vmatpush1.xpose.msra.mxu0 0.0
    %3819 = vmatprep.subr.mxu0 0.0
    %3820 = vmatpush1.xpose.msra.mxu0 0.0
    %3821 = vmatprep.subr.mxu0 0.0
    %3822 = vmatpush1.xpose.msra.mxu0 0.0
    %3823 = vmatprep.subr.mxu0 0.0
    %3824 = vmatpush1.xpose.msra.mxu0 0.0
    %3825 = vmatprep.subr.mxu0 0.0
    %3826 = vmatpush1.xpose.msra.mxu0 0.0
    %3827 = vmatprep.subr.mxu0 0.0
    %3828 = vmatpush1.xpose.msra.mxu0 0.0
    %3829 = vmatprep.subr.mxu0 0.0
    %3830 = vmatpush1.xpose.msra.mxu0 0.0
    %3831 = vmatprep.mubr.f32.mxu0 0.0
    %3832 = vmatmul.mubr.f32.gmra.mrb[0].mxu0 %v2958
    %v3833 = vpop.f32.mrb[0].mxu0
    %v3834 = vadd.f32 0.0, %v3833
    %v3835 = vpop.f32.mrb[0].mxu0
    %3836 = vmatprep.mubr.f32.mxu0 0.0
    %3837 = vmatmul.mubr.f32.gmra.mrb[0].mxu0 %v2961
    %v3838 = vpop.f32.mrb[0].mxu0
    %v3839 = vadd.f32 0.0, %v3838
    %v3840 = vpop.f32.mrb[0].mxu0
    %3841 = vdwg.mxu0
    %v3843 = vsel %vm303, %v3678, 0
    %v3846 = vsel %vm303, %v3756, 0
    %3848 = vmatprep.subr.mxu0 0.0
    %3849 = vmatpush1.xpose.msra.mxu0 %v3846
    %3850 = vmatprep.subr.mxu0 0.0
    %3851 = vmatpush1.xpose.msra.mxu0 0.0
    %3852 = vmatprep.subr.mxu0 0.0
    %3853 = vmatpush1.xpose.msra.mxu0 0.0
    %3854 = vmatprep.subr.mxu0 0.0
    %3855 = vmatpush1.xpose.msra.mxu0 0.0
    %3856 = vmatprep.subr.mxu0 0.0
    %3857 = vmatpush1.xpose.msra.mxu0 0.0
    %3858 = vmatprep.subr.mxu0 0.0
    %3859 = vmatpush1.xpose.msra.mxu0 0.0
    %3860 = vmatprep.subr.mxu0 0.0
    %3861 = vmatpush1.xpose.msra.mxu0 0.0
    %3862 = vmatprep.subr.mxu0 0.0
    %3863 = vmatpush1.xpose.msra.mxu0 0.0
    %3864 = vmatprep.subr.mxu0 0.0
    %3865 = vmatpush1.xpose.msra.mxu0 0.0
    %3866 = vmatprep.subr.mxu0 0.0
    %3867 = vmatpush1.xpose.msra.mxu0 0.0
    %3868 = vmatprep.subr.mxu0 0.0
    %3869 = vmatpush1.xpose.msra.mxu0 0.0
    %3870 = vmatprep.subr.mxu0 0.0
    %3871 = vmatpush1.xpose.msra.mxu0 0.0
    %3872 = vmatprep.subr.mxu0 0.0
    %3873 = vmatpush1.xpose.msra.mxu0 0.0
    %3874 = vmatprep.subr.mxu0 0.0
    %3875 = vmatpush1.xpose.msra.mxu0 0.0
    %3876 = vmatprep.subr.mxu0 0.0
    %3877 = vmatpush1.xpose.msra.mxu0 0.0
    %3878 = vmatprep.subr.mxu0 0.0
    %3879 = vmatpush1.xpose.msra.mxu0 0.0
    %3880 = vmatprep.subr.mxu0 0.0
    %3881 = vmatpush1.xpose.msra.mxu0 0.0
    %3882 = vmatprep.subr.mxu0 0.0
    %3883 = vmatpush1.xpose.msra.mxu0 0.0
    %3884 = vmatprep.subr.mxu0 0.0
    %3885 = vmatpush1.xpose.msra.mxu0 0.0
    %3886 = vmatprep.subr.mxu0 0.0
    %3887 = vmatpush1.xpose.msra.mxu0 0.0
    %3888 = vmatprep.subr.mxu0 0.0
    %3889 = vmatpush1.xpose.msra.mxu0 0.0
    %3890 = vmatprep.subr.mxu0 0.0
    %3891 = vmatpush1.xpose.msra.mxu0 0.0
    %3892 = vmatprep.subr.mxu0 0.0
    %3893 = vmatpush1.xpose.msra.mxu0 0.0
    %3894 = vmatprep.subr.mxu0 0.0
    %3895 = vmatpush1.xpose.msra.mxu0 0.0
    %3896 = vmatprep.subr.mxu0 0.0
    %3897 = vmatpush1.xpose.msra.mxu0 0.0
    %3898 = vmatprep.subr.mxu0 0.0
    %3899 = vmatpush1.xpose.msra.mxu0 0.0
    %3900 = vmatprep.subr.mxu0 0.0
    %3901 = vmatpush1.xpose.msra.mxu0 0.0
    %3902 = vmatprep.subr.mxu0 0.0
    %3903 = vmatpush1.xpose.msra.mxu0 0.0
    %3904 = vmatprep.subr.mxu0 0.0
    %3905 = vmatpush1.xpose.msra.mxu0 0.0
    %3906 = vmatprep.subr.mxu0 0.0
    %3907 = vmatpush1.xpose.msra.mxu0 0.0
    %3908 = vmatprep.subr.mxu0 0.0
    %3909 = vmatpush1.xpose.msra.mxu0 0.0
    %3910 = vmatprep.subr.mxu0 0.0
    %3911 = vmatpush1.xpose.msra.mxu0 0.0
    %3912 = vmatprep.mubr.f32.mxu0 0.0
    %3913 = vmatmul.mubr.f32.gmra.mrb[0].mxu0 %v3843
    %v3914 = vpop.f32.mrb[0].mxu0
    %v3915 = vadd.f32 0.0, %v3914
    %v3916 = vpop.f32.mrb[0].mxu0
    %3917 = vdwg.mxu0
    %v3919 = vsel %vm303, %v3683, 0
    %v3922 = vsel %vm303, %v3761, 0
    %3924 = vmatprep.subr.mxu0 0.0
    %3925 = vmatpush1.xpose.msra.mxu0 %v3922
    %3926 = vmatprep.subr.mxu0 0.0
    %3927 = vmatpush1.xpose.msra.mxu0 0.0
    %3928 = vmatprep.subr.mxu0 0.0
    %3929 = vmatpush1.xpose.msra.mxu0 0.0
    %3930 = vmatprep.subr.mxu0 0.0
    %3931 = vmatpush1.xpose.msra.mxu0 0.0
    %3932 = vmatprep.subr.mxu0 0.0
    %3933 = vmatpush1.xpose.msra.mxu0 0.0
    %3934 = vmatprep.subr.mxu0 0.0
    %3935 = vmatpush1.xpose.msra.mxu0 0.0
    %3936 = vmatprep.subr.mxu0 0.0
    %3937 = vmatpush1.xpose.msra.mxu0 0.0
    %3938 = vmatprep.subr.mxu0 0.0
    %3939 = vmatpush1.xpose.msra.mxu0 0.0
    %3940 = vmatprep.subr.mxu0 0.0
    %3941 = vmatpush1.xpose.msra.mxu0 0.0
    %3942 = vmatprep.subr.mxu0 0.0
    %3943 = vmatpush1.xpose.msra.mxu0 0.0
    %3944 = vmatprep.subr.mxu0 0.0
    %3945 = vmatpush1.xpose.msra.mxu0 0.0
    %3946 = vmatprep.subr.mxu0 0.0
    %3947 = vmatpush1.xpose.msra.mxu0 0.0
    %3948 = vmatprep.subr.mxu0 0.0
    %3949 = vmatpush1.xpose.msra.mxu0 0.0
    %3950 = vmatprep.subr.mxu0 0.0
    %3951 = vmatpush1.xpose.msra.mxu0 0.0
    %3952 = vmatprep.subr.mxu0 0.0
    %3953 = vmatpush1.xpose.msra.mxu0 0.0
    %3954 = vmatprep.subr.mxu0 0.0
    %3955 = vmatpush1.xpose.msra.mxu0 0.0
    %3956 = vmatprep.subr.mxu0 0.0
    %3957 = vmatpush1.xpose.msra.mxu0 0.0
    %3958 = vmatprep.subr.mxu0 0.0
    %3959 = vmatpush1.xpose.msra.mxu0 0.0
    %3960 = vmatprep.subr.mxu0 0.0
    %3961 = vmatpush1.xpose.msra.mxu0 0.0
    %3962 = vmatprep.subr.mxu0 0.0
    %3963 = vmatpush1.xpose.msra.mxu0 0.0
    %3964 = vmatprep.subr.mxu0 0.0
    %3965 = vmatpush1.xpose.msra.mxu0 0.0
    %3966 = vmatprep.subr.mxu0 0.0
    %3967 = vmatpush1.xpose.msra.mxu0 0.0
    %3968 = vmatprep.subr.mxu0 0.0
    %3969 = vmatpush1.xpose.msra.mxu0 0.0
    %3970 = vmatprep.subr.mxu0 0.0
    %3971 = vmatpush1.xpose.msra.mxu0 0.0
    %3972 = vmatprep.subr.mxu0 0.0
    %3973 = vmatpush1.xpose.msra.mxu0 0.0
    %3974 = vmatprep.subr.mxu0 0.0
    %3975 = vmatpush1.xpose.msra.mxu0 0.0
    %3976 = vmatprep.subr.mxu0 0.0
    %3977 = vmatpush1.xpose.msra.mxu0 0.0
    %3978 = vmatprep.subr.mxu0 0.0
    %3979 = vmatpush1.xpose.msra.mxu0 0.0
    %3980 = vmatprep.subr.mxu0 0.0
    %3981 = vmatpush1.xpose.msra.mxu0 0.0
    %3982 = vmatprep.subr.mxu0 0.0
    %3983 = vmatpush1.xpose.msra.mxu0 0.0
    %3984 = vmatprep.subr.mxu0 0.0
    %3985 = vmatpush1.xpose.msra.mxu0 0.0
    %3986 = vmatprep.subr.mxu0 0.0
    %3987 = vmatpush1.xpose.msra.mxu0 0.0
    %3988 = vmatprep.mubr.f32.mxu0 0.0
    %3989 = vmatmul.mubr.f32.gmra.mrb[0].mxu0 %v3919
    %v3990 = vpop.f32.mrb[0].mxu0
    %v3991 = vadd.f32 0.0, %v3990
    %v3992 = vpop.f32.mrb[0].mxu0
    %3993 = vdwg.mxu0
    %v3994 = vmul.f32 %v3915, 0.35355338
    %v3995 = vmul.f32 %v3991, 0.35355338
    %v3996 = vadd.f32 %v3994, %v461
    %v3997 = vadd.f32 %v3995, %v465
    %v3998 = vsel %vm303, %v3996, -inf
    %3999 = vmax.xlane.f32.xlu0 %v3998
    %v4000 = vpop.xlane.xlu0 %3999
    %v4001 = vsel %vm303, %v3997, -inf
    %4002 = vmax.xlane.f32.xlu0 %v4001
    %v4003 = vpop.xlane.xlu0 %4002
    %v4004 = vsub.f32 %v3996, %v4000
    %v4005 = vsub.f32 %v3997, %v4003
    %v4006 = vmul.f32 %v4004, 1.442695
    %v4007 = vpow.pop %v4006
    %v4008 = vmul.f32 %v4005, 1.442695
    %v4009 = vpow.pop %v4008
    %v4010 = vsel %vm303, %v4007, 0.0
    %4011 = vadd.xlane.f32.xlu0 %v4010
    %v4012 = vpop.xlane.xlu0 %4011
    %v4013 = vsel %vm303, %v4009, 0.0
    %4014 = vadd.xlane.f32.xlu0 %v4013
    %v4015 = vpop.xlane.xlu0 %4014
    %v4016 = vrcp.pop %v4012
    %v4017 = vrcp.pop %v4015
    %v4018 = vmul.f32 %v4007, %v4016
    %v4019 = vmul.f32 %v4009, %v4017
    %v4021 = vsel %vm303, %v4018, 0
    %4023 = vmatprep.subr.mxu0 0.0
    %4024 = vmatpush1.msra.mxu0 %v3834
    %4025 = vmatprep.subr.mxu0 0.0
    %4026 = vmatpush1.msra.mxu0 0.0
    %4027 = vmatprep.subr.mxu0 0.0
    %4028 = vmatpush1.msra.mxu0 0.0
    %4029 = vmatprep.subr.mxu0 0.0
    %4030 = vmatpush1.msra.mxu0 0.0
    %4031 = vmatprep.subr.mxu0 0.0
    %4032 = vmatpush1.msra.mxu0 0.0
    %4033 = vmatprep.subr.mxu0 0.0
    %4034 = vmatpush1.msra.mxu0 0.0
    %4035 = vmatprep.subr.mxu0 0.0
    %4036 = vmatpush1.msra.mxu0 0.0
    %4037 = vmatprep.subr.mxu0 0.0
    %4038 = vmatpush1.msra.mxu0 0.0
    %4039 = vmatprep.subr.mxu0 0.0
    %4040 = vmatpush1.msra.mxu0 0.0
    %4041 = vmatprep.subr.mxu0 0.0
    %4042 = vmatpush1.msra.mxu0 0.0
    %4043 = vmatprep.subr.mxu0 0.0
    %4044 = vmatpush1.msra.mxu0 0.0
    %4045 = vmatprep.subr.mxu0 0.0
    %4046 = vmatpush1.msra.mxu0 0.0
    %4047 = vmatprep.subr.mxu0 0.0
    %4048 = vmatpush1.msra.mxu0 0.0
    %4049 = vmatprep.subr.mxu0 0.0
    %4050 = vmatpush1.msra.mxu0 0.0
    %4051 = vmatprep.subr.mxu0 0.0
    %4052 = vmatpush1.msra.mxu0 0.0
    %4053 = vmatprep.subr.mxu0 0.0
    %4054 = vmatpush1.msra.mxu0 0.0
    %4055 = vmatprep.subr.mxu0 0.0
    %4056 = vmatpush1.msra.mxu0 0.0
    %4057 = vmatprep.subr.mxu0 0.0
    %4058 = vmatpush1.msra.mxu0 0.0
    %4059 = vmatprep.subr.mxu0 0.0
    %4060 = vmatpush1.msra.mxu0 0.0
    %4061 = vmatprep.subr.mxu0 0.0
    %4062 = vmatpush1.msra.mxu0 0.0
    %4063 = vmatprep.subr.mxu0 0.0
    %4064 = vmatpush1.msra.mxu0 0.0
    %4065 = vmatprep.subr.mxu0 0.0
    %4066 = vmatpush1.msra.mxu0 0.0
    %4067 = vmatprep.subr.mxu0 0.0
    %4068 = vmatpush1.msra.mxu0 0.0
    %4069 = vmatprep.subr.mxu0 0.0
    %4070 = vmatpush1.msra.mxu0 0.0
    %4071 = vmatprep.subr.mxu0 0.0
    %4072 = vmatpush1.msra.mxu0 0.0
    %4073 = vmatprep.subr.mxu0 0.0
    %4074 = vmatpush1.msra.mxu0 0.0
    %4075 = vmatprep.subr.mxu0 0.0
    %4076 = vmatpush1.msra.mxu0 0.0
    %4077 = vmatprep.subr.mxu0 0.0
    %4078 = vmatpush1.msra.mxu0 0.0
    %4079 = vmatprep.subr.mxu0 0.0
    %4080 = vmatpush1.msra.mxu0 0.0
    %4081 = vmatprep.subr.mxu0 0.0
    %4082 = vmatpush1.msra.mxu0 0.0
    %4083 = vmatprep.subr.mxu0 0.0
    %4084 = vmatpush1.msra.mxu0 0.0
    %4085 = vmatprep.subr.mxu0 0.0
    %4086 = vmatpush1.msra.mxu0 0.0
    %4087 = vmatprep.mubr.f32.mxu0 0.0
    %4088 = vmatmul.mubr.f32.gmra.mrb[0].mxu0 %v4021
    %v4089 = vpop.f32.mrb[0].mxu0
    %v4090 = vadd.f32 0.0, %v4089
    %v4091 = vpop.f32.mrb[0].mxu0
    %4092 = vdwg.mxu0
    %v4094 = vsel %vm303, %v4019, 0
    %4096 = vmatprep.subr.mxu0 0.0
    %4097 = vmatpush1.msra.mxu0 %v3839
    %4098 = vmatprep.subr.mxu0 0.0
    %4099 = vmatpush1.msra.mxu0 0.0
    %4100 = vmatprep.subr.mxu0 0.0
    %4101 = vmatpush1.msra.mxu0 0.0
    %4102 = vmatprep.subr.mxu0 0.0
    %4103 = vmatpush1.msra.mxu0 0.0
    %4104 = vmatprep.subr.mxu0 0.0
    %4105 = vmatpush1.msra.mxu0 0.0
    %4106 = vmatprep.subr.mxu0 0.0
    %4107 = vmatpush1.msra.mxu0 0.0
    %4108 = vmatprep.subr.mxu0 0.0
    %4109 = vmatpush1.msra.mxu0 0.0
    %4110 = vmatprep.subr.mxu0 0.0
    %4111 = vmatpush1.msra.mxu0 0.0
    %4112 = vmatprep.subr.mxu0 0.0
    %4113 = vmatpush1.msra.mxu0 0.0
    %4114 = vmatprep.subr.mxu0 0.0
    %4115 = vmatpush1.msra.mxu0 0.0
    %4116 = vmatprep.subr.mxu0 0.0
    %4117 = vmatpush1.msra.mxu0 0.0
    %4118 = vmatprep.subr.mxu0 0.0
    %4119 = vmatpush1.msra.mxu0 0.0
    %4120 = vmatprep.subr.mxu0 0.0
    %4121 = vmatpush1.msra.mxu0 0.0
    %4122 = vmatprep.subr.mxu0 0.0
    %4123 = vmatpush1.msra.mxu0 0.0
    %4124 = vmatprep.subr.mxu0 0.0
    %4125 = vmatpush1.msra.mxu0 0.0
    %4126 = vmatprep.subr.mxu0 0.0
    %4127 = vmatpush1.msra.mxu0 0.0
    %4128 = vmatprep.subr.mxu0 0.0
    %4129 = vmatpush1.msra.mxu0 0.0
    %4130 = vmatprep.subr.mxu0 0.0
    %4131 = vmatpush1.msra.mxu0 0.0
    %4132 = vmatprep.subr.mxu0 0.0
    %4133 = vmatpush1.msra.mxu0 0.0
    %4134 = vmatprep.subr.mxu0 0.0
    %4135 = vmatpush1.msra.mxu0 0.0
    %4136 = vmatprep.subr.mxu0 0.0
    %4137 = vmatpush1.msra.mxu0 0.0
    %4138 = vmatprep.subr.mxu0 0.0
    %4139 = vmatpush1.msra.mxu0 0.0
    %4140 = vmatprep.subr.mxu0 0.0
    %4141 = vmatpush1.msra.mxu0 0.0
    %4142 = vmatprep.subr.mxu0 0.0
    %4143 = vmatpush1.msra.mxu0 0.0
    %4144 = vmatprep.subr.mxu0 0.0
    %4145 = vmatpush1.msra.mxu0 0.0
    %4146 = vmatprep.subr.mxu0 0.0
    %4147 = vmatpush1.msra.mxu0 0.0
    %4148 = vmatprep.subr.mxu0 0.0
    %4149 = vmatpush1.msra.mxu0 0.0
    %4150 = vmatprep.subr.mxu0 0.0
    %4151 = vmatpush1.msra.mxu0 0.0
    %4152 = vmatprep.subr.mxu0 0.0
    %4153 = vmatpush1.msra.mxu0 0.0
    %4154 = vmatprep.subr.mxu0 0.0
    %4155 = vmatpush1.msra.mxu0 0.0
    %4156 = vmatprep.subr.mxu0 0.0
    %4157 = vmatpush1.msra.mxu0 0.0
    %4158 = vmatprep.subr.mxu0 0.0
    %4159 = vmatpush1.msra.mxu0 0.0
    %4160 = vmatprep.mubr.f32.mxu0 0.0
    %4161 = vmatmul.mubr.f32.gmra.mrb[0].mxu0 %v4094
    %v4162 = vpop.f32.mrb[0].mxu0
    %v4163 = vadd.f32 0.0, %v4162
    %v4164 = vpop.f32.mrb[0].mxu0
    %4165 = vdwg.mxu0
    %v4167 = vsel %vm303, %v4090, 0
    %v4170 = vsel %vm303, %v4163, 0
    %4172 = vmatprep.subr.mxu0 0.0
    %4173 = vmatpush1.msra.mxu0 %v3607
    %4174 = vmatprep.subr.mxu0 0.0
    %4175 = vmatpush1.msra.mxu0 0.0
    %4176 = vmatprep.subr.mxu0 0.0
    %4177 = vmatpush1.msra.mxu0 0.0
    %4178 = vmatprep.subr.mxu0 0.0
    %4179 = vmatpush1.msra.mxu0 0.0
    %4180 = vmatprep.subr.mxu0 0.0
    %4181 = vmatpush1.msra.mxu0 0.0
    %4182 = vmatprep.subr.mxu0 0.0
    %4183 = vmatpush1.msra.mxu0 0.0
    %4184 = vmatprep.subr.mxu0 0.0
    %4185 = vmatpush1.msra.mxu0 0.0
    %4186 = vmatprep.subr.mxu0 0.0
    %4187 = vmatpush1.msra.mxu0 0.0
    %4188 = vmatprep.subr.mxu0 0.0
    %4189 = vmatpush1.msra.mxu0 0.0
    %4190 = vmatprep.subr.mxu0 0.0
    %4191 = vmatpush1.msra.mxu0 0.0
    %4192 = vmatprep.subr.mxu0 0.0
    %4193 = vmatpush1.msra.mxu0 0.0
    %4194 = vmatprep.subr.mxu0 0.0
    %4195 = vmatpush1.msra.mxu0 0.0
    %4196 = vmatprep.subr.mxu0 0.0
    %4197 = vmatpush1.msra.mxu0 0.0
    %4198 = vmatprep.subr.mxu0 0.0
    %4199 = vmatpush1.msra.mxu0 0.0
    %4200 = vmatprep.subr.mxu0 0.0
    %4201 = vmatpush1.msra.mxu0 0.0
    %4202 = vmatprep.subr.mxu0 0.0
    %4203 = vmatpush1.msra.mxu0 0.0
    %4204 = vmatprep.subr.mxu0 0.0
    %4205 = vmatpush1.msra.mxu0 0.0
    %4206 = vmatprep.subr.mxu0 0.0
    %4207 = vmatpush1.msra.mxu0 0.0
    %4208 = vmatprep.subr.mxu0 0.0
    %4209 = vmatpush1.msra.mxu0 0.0
    %4210 = vmatprep.subr.mxu0 0.0
    %4211 = vmatpush1.msra.mxu0 0.0
    %4212 = vmatprep.subr.mxu0 0.0
    %4213 = vmatpush1.msra.mxu0 0.0
    %4214 = vmatprep.subr.mxu0 0.0
    %4215 = vmatpush1.msra.mxu0 0.0
    %4216 = vmatprep.subr.mxu0 0.0
    %4217 = vmatpush1.msra.mxu0 0.0
    %4218 = vmatprep.subr.mxu0 0.0
    %4219 = vmatpush1.msra.mxu0 0.0
    %4220 = vmatprep.subr.mxu0 0.0
    %4221 = vmatpush1.msra.mxu0 0.0
    %4222 = vmatprep.subr.mxu0 0.0
    %4223 = vmatpush1.msra.mxu0 0.0
    %4224 = vmatprep.subr.mxu0 0.0
    %4225 = vmatpush1.msra.mxu0 0.0
    %4226 = vmatprep.subr.mxu0 0.0
    %4227 = vmatpush1.msra.mxu0 0.0
    %4228 = vmatprep.subr.mxu0 0.0
    %4229 = vmatpush1.msra.mxu0 0.0
    %4230 = vmatprep.subr.mxu0 0.0
    %4231 = vmatpush1.msra.mxu0 0.0
    %4232 = vmatprep.subr.mxu0 0.0
    %4233 = vmatpush1.msra.mxu0 0.0
    %4234 = vmatprep.subr.mxu0 0.0
    %4235 = vmatpush1.msra.mxu0 0.0
    %4236 = vmatprep.mubr.f32.mxu0 0.0
    %4237 = vmatmul.mubr.f32.gmra.mrb[0].mxu0 %v4167
    %v4238 = vpop.f32.mrb[0].mxu0
    %v4239 = vadd.f32 0.0, %v4238
    %v4240 = vpop.f32.mrb[0].mxu0
    %4241 = vmatprep.mubr.f32.mxu0 0.0
    %4242 = vmatmul.mubr.f32.gmra.mrb[0].mxu0 %v4170
    %v4243 = vpop.f32.mrb[0].mxu0
    %v4244 = vadd.f32 0.0, %v4243
    %v4245 = vpop.f32.mrb[0].mxu0
    %4246 = vdwg.mxu0
    %v4247 = vadd.f32 %v3602, %v4239
    %v4248 = vadd.f32 %v3603, %v4244
    %v4249 = vld [vmem:[%s2948 + $0x40] sm:$0xff]
    %v4250 = vld [vmem:[%s2948 + $0x48] sm:$0xff]
    %v4251 = vld [vmem:[%s2948 + $0x50] sm:$0xff]
    %v4252 = vld [vmem:[%s2948 + $0x58] sm:$0xff]
    %v4254 = vsel %vm62, %v4249, 0
    %4256 = vmatprep.subr.mxu0 0.0
    %4257 = vmatpush1.xpose.msra.mxu0 %v4254
    %4258 = vmatprep.subr.mxu0 0.0
    %4259 = vmatpush1.xpose.msra.mxu0 0.0
    %4260 = vmatprep.subr.mxu0 0.0
    %4261 = vmatpush1.xpose.msra.mxu0 0.0
    %4262 = vmatprep.subr.mxu0 0.0
    %4263 = vmatpush1.xpose.msra.mxu0 0.0
    %4264 = vmatprep.subr.mxu0 0.0
    %4265 = vmatpush1.xpose.msra.mxu0 0.0
    %4266 = vmatprep.subr.mxu0 0.0
    %4267 = vmatpush1.xpose.msra.mxu0 0.0
    %4268 = vmatprep.subr.mxu0 0.0
    %4269 = vmatpush1.xpose.msra.mxu0 0.0
    %4270 = vmatprep.subr.mxu0 0.0
    %4271 = vmatpush1.xpose.msra.mxu0 0.0
    %4272 = vmatprep.subr.mxu0 0.0
    %4273 = vmatpush1.xpose.msra.mxu0 0.0
    %4274 = vmatprep.subr.mxu0 0.0
    %4275 = vmatpush1.xpose.msra.mxu0 0.0
    %4276 = vmatprep.subr.mxu0 0.0
    %4277 = vmatpush1.xpose.msra.mxu0 0.0
    %4278 = vmatprep.subr.mxu0 0.0
    %4279 = vmatpush1.xpose.msra.mxu0 0.0
    %4280 = vmatprep.subr.mxu0 0.0
    %4281 = vmatpush1.xpose.msra.mxu0 0.0
    %4282 = vmatprep.subr.mxu0 0.0
    %4283 = vmatpush1.xpose.msra.mxu0 0.0
    %4284 = vmatprep.subr.mxu0 0.0
    %4285 = vmatpush1.xpose.msra.mxu0 0.0
    %4286 = vmatprep.subr.mxu0 0.0
    %4287 = vmatpush1.xpose.msra.mxu0 0.0
    %4288 = vmatprep.subr.mxu0 0.0
    %4289 = vmatpush1.xpose.msra.mxu0 0.0
    %4290 = vmatprep.subr.mxu0 0.0
    %4291 = vmatpush1.xpose.msra.mxu0 0.0
    %4292 = vmatprep.subr.mxu0 0.0
    %4293 = vmatpush1.xpose.msra.mxu0 0.0
    %4294 = vmatprep.subr.mxu0 0.0
    %4295 = vmatpush1.xpose.msra.mxu0 0.0
    %4296 = vmatprep.subr.mxu0 0.0
    %4297 = vmatpush1.xpose.msra.mxu0 0.0
    %4298 = vmatprep.subr.mxu0 0.0
    %4299 = vmatpush1.xpose.msra.mxu0 0.0
    %4300 = vmatprep.subr.mxu0 0.0
    %4301 = vmatpush1.xpose.msra.mxu0 0.0
    %4302 = vmatprep.subr.mxu0 0.0
    %4303 = vmatpush1.xpose.msra.mxu0 0.0
    %4304 = vmatprep.subr.mxu0 0.0
    %4305 = vmatpush1.xpose.msra.mxu0 0.0
    %4306 = vmatprep.subr.mxu0 0.0
    %4307 = vmatpush1.xpose.msra.mxu0 0.0
    %4308 = vmatprep.subr.mxu0 0.0
    %4309 = vmatpush1.xpose.msra.mxu0 0.0
    %4310 = vmatprep.subr.mxu0 0.0
    %4311 = vmatpush1.xpose.msra.mxu0 0.0
    %4312 = vmatprep.subr.mxu0 0.0
    %4313 = vmatpush1.xpose.msra.mxu0 0.0
    %4314 = vmatprep.subr.mxu0 0.0
    %4315 = vmatpush1.xpose.msra.mxu0 0.0
    %4316 = vmatprep.subr.mxu0 0.0
    %4317 = vmatpush1.xpose.msra.mxu0 0.0
    %4318 = vmatprep.subr.mxu0 0.0
    %4319 = vmatpush1.xpose.msra.mxu0 0.0
    %4320 = vmatprep.mubr.f32.mxu0 0.0
    %4321 = vmatmul.mubr.f32.gmra.mrb[0].mxu0 %v2958
    %v4322 = vpop.f32.mrb[0].mxu0
    %v4323 = vadd.f32 0.0, %v4322
    %v4324 = vpop.f32.mrb[0].mxu0
    %4325 = vmatprep.mubr.f32.mxu0 0.0
    %4326 = vmatmul.mubr.f32.gmra.mrb[0].mxu0 %v2961
    %v4327 = vpop.f32.mrb[0].mxu0
    %v4328 = vadd.f32 0.0, %v4327
    %v4329 = vpop.f32.mrb[0].mxu0
    %4330 = vdwg.mxu0
    %v4332 = vsel %vm62, %v4250, 0
    %4334 = vmatprep.subr.mxu0 0.0
    %4335 = vmatpush1.xpose.msra.mxu0 %v4332
    %4336 = vmatprep.subr.mxu0 0.0
    %4337 = vmatpush1.xpose.msra.mxu0 0.0
    %4338 = vmatprep.subr.mxu0 0.0
    %4339 = vmatpush1.xpose.msra.mxu0 0.0
    %4340 = vmatprep.subr.mxu0 0.0
    %4341 = vmatpush1.xpose.msra.mxu0 0.0
    %4342 = vmatprep.subr.mxu0 0.0
    %4343 = vmatpush1.xpose.msra.mxu0 0.0
    %4344 = vmatprep.subr.mxu0 0.0
    %4345 = vmatpush1.xpose.msra.mxu0 0.0
    %4346 = vmatprep.subr.mxu0 0.0
    %4347 = vmatpush1.xpose.msra.mxu0 0.0
    %4348 = vmatprep.subr.mxu0 0.0
    %4349 = vmatpush1.xpose.msra.mxu0 0.0
    %4350 = vmatprep.subr.mxu0 0.0
    %4351 = vmatpush1.xpose.msra.mxu0 0.0
    %4352 = vmatprep.subr.mxu0 0.0
    %4353 = vmatpush1.xpose.msra.mxu0 0.0
    %4354 = vmatprep.subr.mxu0 0.0
    %4355 = vmatpush1.xpose.msra.mxu0 0.0
    %4356 = vmatprep.subr.mxu0 0.0
    %4357 = vmatpush1.xpose.msra.mxu0 0.0
    %4358 = vmatprep.subr.mxu0 0.0
    %4359 = vmatpush1.xpose.msra.mxu0 0.0
    %4360 = vmatprep.subr.mxu0 0.0
    %4361 = vmatpush1.xpose.msra.mxu0 0.0
    %4362 = vmatprep.subr.mxu0 0.0
    %4363 = vmatpush1.xpose.msra.mxu0 0.0
    %4364 = vmatprep.subr.mxu0 0.0
    %4365 = vmatpush1.xpose.msra.mxu0 0.0
    %4366 = vmatprep.subr.mxu0 0.0
    %4367 = vmatpush1.xpose.msra.mxu0 0.0
    %4368 = vmatprep.subr.mxu0 0.0
    %4369 = vmatpush1.xpose.msra.mxu0 0.0
    %4370 = vmatprep.subr.mxu0 0.0
    %4371 = vmatpush1.xpose.msra.mxu0 0.0
    %4372 = vmatprep.subr.mxu0 0.0
    %4373 = vmatpush1.xpose.msra.mxu0 0.0
    %4374 = vmatprep.subr.mxu0 0.0
    %4375 = vmatpush1.xpose.msra.mxu0 0.0
    %4376 = vmatprep.subr.mxu0 0.0
    %4377 = vmatpush1.xpose.msra.mxu0 0.0
    %4378 = vmatprep.subr.mxu0 0.0
    %4379 = vmatpush1.xpose.msra.mxu0 0.0
    %4380 = vmatprep.subr.mxu0 0.0
    %4381 = vmatpush1.xpose.msra.mxu0 0.0
    %4382 = vmatprep.subr.mxu0 0.0
    %4383 = vmatpush1.xpose.msra.mxu0 0.0
    %4384 = vmatprep.subr.mxu0 0.0
    %4385 = vmatpush1.xpose.msra.mxu0 0.0
    %4386 = vmatprep.subr.mxu0 0.0
    %4387 = vmatpush1.xpose.msra.mxu0 0.0
    %4388 = vmatprep.subr.mxu0 0.0
    %4389 = vmatpush1.xpose.msra.mxu0 0.0
    %4390 = vmatprep.subr.mxu0 0.0
    %4391 = vmatpush1.xpose.msra.mxu0 0.0
    %4392 = vmatprep.subr.mxu0 0.0
    %4393 = vmatpush1.xpose.msra.mxu0 0.0
    %4394 = vmatprep.subr.mxu0 0.0
    %4395 = vmatpush1.xpose.msra.mxu0 0.0
    %4396 = vmatprep.subr.mxu0 0.0
    %4397 = vmatpush1.xpose.msra.mxu0 0.0
    %4398 = vmatprep.mubr.f32.mxu0 0.0
    %4399 = vmatmul.mubr.f32.gmra.mrb[0].mxu0 %v2958
    %v4400 = vpop.f32.mrb[0].mxu0
    %v4401 = vadd.f32 0.0, %v4400
    %v4402 = vpop.f32.mrb[0].mxu0
    %4403 = vmatprep.mubr.f32.mxu0 0.0
    %4404 = vmatmul.mubr.f32.gmra.mrb[0].mxu0 %v2961
    %v4405 = vpop.f32.mrb[0].mxu0
    %v4406 = vadd.f32 0.0, %v4405
    %v4407 = vpop.f32.mrb[0].mxu0
    %4408 = vdwg.mxu0
    %v4410 = vsel %vm62, %v4251, 0
    %4412 = vmatprep.subr.mxu0 0.0
    %4413 = vmatpush1.xpose.msra.mxu0 %v4410
    %4414 = vmatprep.subr.mxu0 0.0
    %4415 = vmatpush1.xpose.msra.mxu0 0.0
    %4416 = vmatprep.subr.mxu0 0.0
    %4417 = vmatpush1.xpose.msra.mxu0 0.0
    %4418 = vmatprep.subr.mxu0 0.0
    %4419 = vmatpush1.xpose.msra.mxu0 0.0
    %4420 = vmatprep.subr.mxu0 0.0
    %4421 = vmatpush1.xpose.msra.mxu0 0.0
    %4422 = vmatprep.subr.mxu0 0.0
    %4423 = vmatpush1.xpose.msra.mxu0 0.0
    %4424 = vmatprep.subr.mxu0 0.0
    %4425 = vmatpush1.xpose.msra.mxu0 0.0
    %4426 = vmatprep.subr.mxu0 0.0
    %4427 = vmatpush1.xpose.msra.mxu0 0.0
    %4428 = vmatprep.subr.mxu0 0.0
    %4429 = vmatpush1.xpose.msra.mxu0 0.0
    %4430 = vmatprep.subr.mxu0 0.0
    %4431 = vmatpush1.xpose.msra.mxu0 0.0
    %4432 = vmatprep.subr.mxu0 0.0
    %4433 = vmatpush1.xpose.msra.mxu0 0.0
    %4434 = vmatprep.subr.mxu0 0.0
    %4435 = vmatpush1.xpose.msra.mxu0 0.0
    %4436 = vmatprep.subr.mxu0 0.0
    %4437 = vmatpush1.xpose.msra.mxu0 0.0
    %4438 = vmatprep.subr.mxu0 0.0
    %4439 = vmatpush1.xpose.msra.mxu0 0.0
    %4440 = vmatprep.subr.mxu0 0.0
    %4441 = vmatpush1.xpose.msra.mxu0 0.0
    %4442 = vmatprep.subr.mxu0 0.0
    %4443 = vmatpush1.xpose.msra.mxu0 0.0
    %4444 = vmatprep.subr.mxu0 0.0
    %4445 = vmatpush1.xpose.msra.mxu0 0.0
    %4446 = vmatprep.subr.mxu0 0.0
    %4447 = vmatpush1.xpose.msra.mxu0 0.0
    %4448 = vmatprep.subr.mxu0 0.0
    %4449 = vmatpush1.xpose.msra.mxu0 0.0
    %4450 = vmatprep.subr.mxu0 0.0
    %4451 = vmatpush1.xpose.msra.mxu0 0.0
    %4452 = vmatprep.subr.mxu0 0.0
    %4453 = vmatpush1.xpose.msra.mxu0 0.0
    %4454 = vmatprep.subr.mxu0 0.0
    %4455 = vmatpush1.xpose.msra.mxu0 0.0
    %4456 = vmatprep.subr.mxu0 0.0
    %4457 = vmatpush1.xpose.msra.mxu0 0.0
    %4458 = vmatprep.subr.mxu0 0.0
    %4459 = vmatpush1.xpose.msra.mxu0 0.0
    %4460 = vmatprep.subr.mxu0 0.0
    %4461 = vmatpush1.xpose.msra.mxu0 0.0
    %4462 = vmatprep.subr.mxu0 0.0
    %4463 = vmatpush1.xpose.msra.mxu0 0.0
    %4464 = vmatprep.subr.mxu0 0.0
    %4465 = vmatpush1.xpose.msra.mxu0 0.0
    %4466 = vmatprep.subr.mxu0 0.0
    %4467 = vmatpush1.xpose.msra.mxu0 0.0
    %4468 = vmatprep.subr.mxu0 0.0
    %4469 = vmatpush1.xpose.msra.mxu0 0.0
    %4470 = vmatprep.subr.mxu0 0.0
    %4471 = vmatpush1.xpose.msra.mxu0 0.0
    %4472 = vmatprep.subr.mxu0 0.0
    %4473 = vmatpush1.xpose.msra.mxu0 0.0
    %4474 = vmatprep.subr.mxu0 0.0
    %4475 = vmatpush1.xpose.msra.mxu0 0.0
    %4476 = vmatprep.mubr.f32.mxu0 0.0
    %4477 = vmatmul.mubr.f32.gmra.mrb[0].mxu0 %v2958
    %v4478 = vpop.f32.mrb[0].mxu0
    %v4479 = vadd.f32 0.0, %v4478
    %v4480 = vpop.f32.mrb[0].mxu0
    %4481 = vmatprep.mubr.f32.mxu0 0.0
    %4482 = vmatmul.mubr.f32.gmra.mrb[0].mxu0 %v2961
    %v4483 = vpop.f32.mrb[0].mxu0
    %v4484 = vadd.f32 0.0, %v4483
    %v4485 = vpop.f32.mrb[0].mxu0
    %4486 = vdwg.mxu0
    %v4488 = vsel %vm303, %v4323, 0
    %v4491 = vsel %vm303, %v4401, 0
    %4493 = vmatprep.subr.mxu0 0.0
    %4494 = vmatpush1.xpose.msra.mxu0 %v4491
    %4495 = vmatprep.subr.mxu0 0.0
    %4496 = vmatpush1.xpose.msra.mxu0 0.0
    %4497 = vmatprep.subr.mxu0 0.0
    %4498 = vmatpush1.xpose.msra.mxu0 0.0
    %4499 = vmatprep.subr.mxu0 0.0
    %4500 = vmatpush1.xpose.msra.mxu0 0.0
    %4501 = vmatprep.subr.mxu0 0.0
    %4502 = vmatpush1.xpose.msra.mxu0 0.0
    %4503 = vmatprep.subr.mxu0 0.0
    %4504 = vmatpush1.xpose.msra.mxu0 0.0
    %4505 = vmatprep.subr.mxu0 0.0
    %4506 = vmatpush1.xpose.msra.mxu0 0.0
    %4507 = vmatprep.subr.mxu0 0.0
    %4508 = vmatpush1.xpose.msra.mxu0 0.0
    %4509 = vmatprep.subr.mxu0 0.0
    %4510 = vmatpush1.xpose.msra.mxu0 0.0
    %4511 = vmatprep.subr.mxu0 0.0
    %4512 = vmatpush1.xpose.msra.mxu0 0.0
    %4513 = vmatprep.subr.mxu0 0.0
    %4514 = vmatpush1.xpose.msra.mxu0 0.0
    %4515 = vmatprep.subr.mxu0 0.0
    %4516 = vmatpush1.xpose.msra.mxu0 0.0
    %4517 = vmatprep.subr.mxu0 0.0
    %4518 = vmatpush1.xpose.msra.mxu0 0.0
    %4519 = vmatprep.subr.mxu0 0.0
    %4520 = vmatpush1.xpose.msra.mxu0 0.0
    %4521 = vmatprep.subr.mxu0 0.0
    %4522 = vmatpush1.xpose.msra.mxu0 0.0
    %4523 = vmatprep.subr.mxu0 0.0
    %4524 = vmatpush1.xpose.msra.mxu0 0.0
    %4525 = vmatprep.subr.mxu0 0.0
    %4526 = vmatpush1.xpose.msra.mxu0 0.0
    %4527 = vmatprep.subr.mxu0 0.0
    %4528 = vmatpush1.xpose.msra.mxu0 0.0
    %4529 = vmatprep.subr.mxu0 0.0
    %4530 = vmatpush1.xpose.msra.mxu0 0.0
    %4531 = vmatprep.subr.mxu0 0.0
    %4532 = vmatpush1.xpose.msra.mxu0 0.0
    %4533 = vmatprep.subr.mxu0 0.0
    %4534 = vmatpush1.xpose.msra.mxu0 0.0
    %4535 = vmatprep.subr.mxu0 0.0
    %4536 = vmatpush1.xpose.msra.mxu0 0.0
    %4537 = vmatprep.subr.mxu0 0.0
    %4538 = vmatpush1.xpose.msra.mxu0 0.0
    %4539 = vmatprep.subr.mxu0 0.0
    %4540 = vmatpush1.xpose.msra.mxu0 0.0
    %4541 = vmatprep.subr.mxu0 0.0
    %4542 = vmatpush1.xpose.msra.mxu0 0.0
    %4543 = vmatprep.subr.mxu0 0.0
    %4544 = vmatpush1.xpose.msra.mxu0 0.0
    %4545 = vmatprep.subr.mxu0 0.0
    %4546 = vmatpush1.xpose.msra.mxu0 0.0
    %4547 = vmatprep.subr.mxu0 0.0
    %4548 = vmatpush1.xpose.msra.mxu0 0.0
    %4549 = vmatprep.subr.mxu0 0.0
    %4550 = vmatpush1.xpose.msra.mxu0 0.0
    %4551 = vmatprep.subr.mxu0 0.0
    %4552 = vmatpush1.xpose.msra.mxu0 0.0
    %4553 = vmatprep.subr.mxu0 0.0
    %4554 = vmatpush1.xpose.msra.mxu0 0.0
    %4555 = vmatprep.subr.mxu0 0.0
    %4556 = vmatpush1.xpose.msra.mxu0 0.0
    %4557 = vmatprep.mubr.f32.mxu0 0.0
    %4558 = vmatmul.mubr.f32.gmra.mrb[0].mxu0 %v4488
    %v4559 = vpop.f32.mrb[0].mxu0
    %v4560 = vadd.f32 0.0, %v4559
    %v4561 = vpop.f32.mrb[0].mxu0
    %4562 = vdwg.mxu0
    %v4564 = vsel %vm303, %v4328, 0
    %v4567 = vsel %vm303, %v4406, 0
    %4569 = vmatprep.subr.mxu0 0.0
    %4570 = vmatpush1.xpose.msra.mxu0 %v4567
    %4571 = vmatprep.subr.mxu0 0.0
    %4572 = vmatpush1.xpose.msra.mxu0 0.0
    %4573 = vmatprep.subr.mxu0 0.0
    %4574 = vmatpush1.xpose.msra.mxu0 0.0
    %4575 = vmatprep.subr.mxu0 0.0
    %4576 = vmatpush1.xpose.msra.mxu0 0.0
    %4577 = vmatprep.subr.mxu0 0.0
    %4578 = vmatpush1.xpose.msra.mxu0 0.0
    %4579 = vmatprep.subr.mxu0 0.0
    %4580 = vmatpush1.xpose.msra.mxu0 0.0
    %4581 = vmatprep.subr.mxu0 0.0
    %4582 = vmatpush1.xpose.msra.mxu0 0.0
    %4583 = vmatprep.subr.mxu0 0.0
    %4584 = vmatpush1.xpose.msra.mxu0 0.0
    %4585 = vmatprep.subr.mxu0 0.0
    %4586 = vmatpush1.xpose.msra.mxu0 0.0
    %4587 = vmatprep.subr.mxu0 0.0
    %4588 = vmatpush1.xpose.msra.mxu0 0.0
    %4589 = vmatprep.subr.mxu0 0.0
    %4590 = vmatpush1.xpose.msra.mxu0 0.0
    %4591 = vmatprep.subr.mxu0 0.0
    %4592 = vmatpush1.xpose.msra.mxu0 0.0
    %4593 = vmatprep.subr.mxu0 0.0
    %4594 = vmatpush1.xpose.msra.mxu0 0.0
    %4595 = vmatprep.subr.mxu0 0.0
    %4596 = vmatpush1.xpose.msra.mxu0 0.0
    %4597 = vmatprep.subr.mxu0 0.0
    %4598 = vmatpush1.xpose.msra.mxu0 0.0
    %4599 = vmatprep.subr.mxu0 0.0
    %4600 = vmatpush1.xpose.msra.mxu0 0.0
    %4601 = vmatprep.subr.mxu0 0.0
    %4602 = vmatpush1.xpose.msra.mxu0 0.0
    %4603 = vmatprep.subr.mxu0 0.0
    %4604 = vmatpush1.xpose.msra.mxu0 0.0
    %4605 = vmatprep.subr.mxu0 0.0
    %4606 = vmatpush1.xpose.msra.mxu0 0.0
    %4607 = vmatprep.subr.mxu0 0.0
    %4608 = vmatpush1.xpose.msra.mxu0 0.0
    %4609 = vmatprep.subr.mxu0 0.0
    %4610 = vmatpush1.xpose.msra.mxu0 0.0
    %4611 = vmatprep.subr.mxu0 0.0
    %4612 = vmatpush1.xpose.msra.mxu0 0.0
    %4613 = vmatprep.subr.mxu0 0.0
    %4614 = vmatpush1.xpose.msra.mxu0 0.0
    %4615 = vmatprep.subr.mxu0 0.0
    %4616 = vmatpush1.xpose.msra.mxu0 0.0
    %4617 = vmatprep.subr.mxu0 0.0
    %4618 = vmatpush1.xpose.msra.mxu0 0.0
    %4619 = vmatprep.subr.mxu0 0.0
    %4620 = vmatpush1.xpose.msra.mxu0 0.0
    %4621 = vmatprep.subr.mxu0 0.0
    %4622 = vmatpush1.xpose.msra.mxu0 0.0
    %4623 = vmatprep.subr.mxu0 0.0
    %4624 = vmatpush1.xpose.msra.mxu0 0.0
    %4625 = vmatprep.subr.mxu0 0.0
    %4626 = vmatpush1.xpose.msra.mxu0 0.0
    %4627 = vmatprep.subr.mxu0 0.0
    %4628 = vmatpush1.xpose.msra.mxu0 0.0
    %4629 = vmatprep.subr.mxu0 0.0
    %4630 = vmatpush1.xpose.msra.mxu0 0.0
    %4631 = vmatprep.subr.mxu0 0.0
    %4632 = vmatpush1.xpose.msra.mxu0 0.0
    %4633 = vmatprep.mubr.f32.mxu0 0.0
    %4634 = vmatmul.mubr.f32.gmra.mrb[0].mxu0 %v4564
    %v4635 = vpop.f32.mrb[0].mxu0
    %v4636 = vadd.f32 0.0, %v4635
    %v4637 = vpop.f32.mrb[0].mxu0
    %4638 = vdwg.mxu0
    %v4639 = vmul.f32 %v4560, 0.35355338
    %v4640 = vmul.f32 %v4636, 0.35355338
    %v4641 = vadd.f32 %v4639, %v461
    %v4642 = vadd.f32 %v4640, %v465
    %v4643 = vsel %vm303, %v4641, -inf
    %4644 = vmax.xlane.f32.xlu0 %v4643
    %v4645 = vpop.xlane.xlu0 %4644
    %v4646 = vsel %vm303, %v4642, -inf
    %4647 = vmax.xlane.f32.xlu0 %v4646
    %v4648 = vpop.xlane.xlu0 %4647
    %v4649 = vsub.f32 %v4641, %v4645
    %v4650 = vsub.f32 %v4642, %v4648
    %v4651 = vmul.f32 %v4649, 1.442695
    %v4652 = vpow.pop %v4651
    %v4653 = vmul.f32 %v4650, 1.442695
    %v4654 = vpow.pop %v4653
    %v4655 = vsel %vm303, %v4652, 0.0
    %4656 = vadd.xlane.f32.xlu0 %v4655
    %v4657 = vpop.xlane.xlu0 %4656
    %v4658 = vsel %vm303, %v4654, 0.0
    %4659 = vadd.xlane.f32.xlu0 %v4658
    %v4660 = vpop.xlane.xlu0 %4659
    %v4661 = vrcp.pop %v4657
    %v4662 = vrcp.pop %v4660
    %v4663 = vmul.f32 %v4652, %v4661
    %v4664 = vmul.f32 %v4654, %v4662
    %v4666 = vsel %vm303, %v4663, 0
    %4668 = vmatprep.subr.mxu0 0.0
    %4669 = vmatpush1.msra.mxu0 %v4479
    %4670 = vmatprep.subr.mxu0 0.0
    %4671 = vmatpush1.msra.mxu0 0.0
    %4672 = vmatprep.subr.mxu0 0.0
    %4673 = vmatpush1.msra.mxu0 0.0
    %4674 = vmatprep.subr.mxu0 0.0
    %4675 = vmatpush1.msra.mxu0 0.0
    %4676 = vmatprep.subr.mxu0 0.0
    %4677 = vmatpush1.msra.mxu0 0.0
    %4678 = vmatprep.subr.mxu0 0.0
    %4679 = vmatpush1.msra.mxu0 0.0
    %4680 = vmatprep.subr.mxu0 0.0
    %4681 = vmatpush1.msra.mxu0 0.0
    %4682 = vmatprep.subr.mxu0 0.0
    %4683 = vmatpush1.msra.mxu0 0.0
    %4684 = vmatprep.subr.mxu0 0.0
    %4685 = vmatpush1.msra.mxu0 0.0
    %4686 = vmatprep.subr.mxu0 0.0
    %4687 = vmatpush1.msra.mxu0 0.0
    %4688 = vmatprep.subr.mxu0 0.0
    %4689 = vmatpush1.msra.mxu0 0.0
    %4690 = vmatprep.subr.mxu0 0.0
    %4691 = vmatpush1.msra.mxu0 0.0
    %4692 = vmatprep.subr.mxu0 0.0
    %4693 = vmatpush1.msra.mxu0 0.0
    %4694 = vmatprep.subr.mxu0 0.0
    %4695 = vmatpush1.msra.mxu0 0.0
    %4696 = vmatprep.subr.mxu0 0.0
    %4697 = vmatpush1.msra.mxu0 0.0
    %4698 = vmatprep.subr.mxu0 0.0
    %4699 = vmatpush1.msra.mxu0 0.0
    %4700 = vmatprep.subr.mxu0 0.0
    %4701 = vmatpush1.msra.mxu0 0.0
    %4702 = vmatprep.subr.mxu0 0.0
    %4703 = vmatpush1.msra.mxu0 0.0
    %4704 = vmatprep.subr.mxu0 0.0
    %4705 = vmatpush1.msra.mxu0 0.0
    %4706 = vmatprep.subr.mxu0 0.0
    %4707 = vmatpush1.msra.mxu0 0.0
    %4708 = vmatprep.subr.mxu0 0.0
    %4709 = vmatpush1.msra.mxu0 0.0
    %4710 = vmatprep.subr.mxu0 0.0
    %4711 = vmatpush1.msra.mxu0 0.0
    %4712 = vmatprep.subr.mxu0 0.0
    %4713 = vmatpush1.msra.mxu0 0.0
    %4714 = vmatprep.subr.mxu0 0.0
    %4715 = vmatpush1.msra.mxu0 0.0
    %4716 = vmatprep.subr.mxu0 0.0
    %4717 = vmatpush1.msra.mxu0 0.0
    %4718 = vmatprep.subr.mxu0 0.0
    %4719 = vmatpush1.msra.mxu0 0.0
    %4720 = vmatprep.subr.mxu0 0.0
    %4721 = vmatpush1.msra.mxu0 0.0
    %4722 = vmatprep.subr.mxu0 0.0
    %4723 = vmatpush1.msra.mxu0 0.0
    %4724 = vmatprep.subr.mxu0 0.0
    %4725 = vmatpush1.msra.mxu0 0.0
    %4726 = vmatprep.subr.mxu0 0.0
    %4727 = vmatpush1.msra.mxu0 0.0
    %4728 = vmatprep.subr.mxu0 0.0
    %4729 = vmatpush1.msra.mxu0 0.0
    %4730 = vmatprep.subr.mxu0 0.0
    %4731 = vmatpush1.msra.mxu0 0.0
    %4732 = vmatprep.mubr.f32.mxu0 0.0
    %4733 = vmatmul.mubr.f32.gmra.mrb[0].mxu0 %v4666
    %v4734 = vpop.f32.mrb[0].mxu0
    %v4735 = vadd.f32 0.0, %v4734
    %v4736 = vpop.f32.mrb[0].mxu0
    %4737 = vdwg.mxu0
    %v4739 = vsel %vm303, %v4664, 0
    %4741 = vmatprep.subr.mxu0 0.0
    %4742 = vmatpush1.msra.mxu0 %v4484
    %4743 = vmatprep.subr.mxu0 0.0
    %4744 = vmatpush1.msra.mxu0 0.0
    %4745 = vmatprep.subr.mxu0 0.0
    %4746 = vmatpush1.msra.mxu0 0.0
    %4747 = vmatprep.subr.mxu0 0.0
    %4748 = vmatpush1.msra.mxu0 0.0
    %4749 = vmatprep.subr.mxu0 0.0
    %4750 = vmatpush1.msra.mxu0 0.0
    %4751 = vmatprep.subr.mxu0 0.0
    %4752 = vmatpush1.msra.mxu0 0.0
    %4753 = vmatprep.subr.mxu0 0.0
    %4754 = vmatpush1.msra.mxu0 0.0
    %4755 = vmatprep.subr.mxu0 0.0
    %4756 = vmatpush1.msra.mxu0 0.0
    %4757 = vmatprep.subr.mxu0 0.0
    %4758 = vmatpush1.msra.mxu0 0.0
    %4759 = vmatprep.subr.mxu0 0.0
    %4760 = vmatpush1.msra.mxu0 0.0
    %4761 = vmatprep.subr.mxu0 0.0
    %4762 = vmatpush1.msra.mxu0 0.0
    %4763 = vmatprep.subr.mxu0 0.0
    %4764 = vmatpush1.msra.mxu0 0.0
    %4765 = vmatprep.subr.mxu0 0.0
    %4766 = vmatpush1.msra.mxu0 0.0
    %4767 = vmatprep.subr.mxu0 0.0
    %4768 = vmatpush1.msra.mxu0 0.0
    %4769 = vmatprep.subr.mxu0 0.0
    %4770 = vmatpush1.msra.mxu0 0.0
    %4771 = vmatprep.subr.mxu0 0.0
    %4772 = vmatpush1.msra.mxu0 0.0
    %4773 = vmatprep.subr.mxu0 0.0
    %4774 = vmatpush1.msra.mxu0 0.0
    %4775 = vmatprep.subr.mxu0 0.0
    %4776 = vmatpush1.msra.mxu0 0.0
    %4777 = vmatprep.subr.mxu0 0.0
    %4778 = vmatpush1.msra.mxu0 0.0
    %4779 = vmatprep.subr.mxu0 0.0
    %4780 = vmatpush1.msra.mxu0 0.0
    %4781 = vmatprep.subr.mxu0 0.0
    %4782 = vmatpush1.msra.mxu0 0.0
    %4783 = vmatprep.subr.mxu0 0.0
    %4784 = vmatpush1.msra.mxu0 0.0
    %4785 = vmatprep.subr.mxu0 0.0
    %4786 = vmatpush1.msra.mxu0 0.0
    %4787 = vmatprep.subr.mxu0 0.0
    %4788 = vmatpush1.msra.mxu0 0.0
    %4789 = vmatprep.subr.mxu0 0.0
    %4790 = vmatpush1.msra.mxu0 0.0
    %4791 = vmatprep.subr.mxu0 0.0
    %4792 = vmatpush1.msra.mxu0 0.0
    %4793 = vmatprep.subr.mxu0 0.0
    %4794 = vmatpush1.msra.mxu0 0.0
    %4795 = vmatprep.subr.mxu0 0.0
    %4796 = vmatpush1.msra.mxu0 0.0
    %4797 = vmatprep.subr.mxu0 0.0
    %4798 = vmatpush1.msra.mxu0 0.0
    %4799 = vmatprep.subr.mxu0 0.0
    %4800 = vmatpush1.msra.mxu0 0.0
    %4801 = vmatprep.subr.mxu0 0.0
    %4802 = vmatpush1.msra.mxu0 0.0
    %4803 = vmatprep.subr.mxu0 0.0
    %4804 = vmatpush1.msra.mxu0 0.0
    %4805 = vmatprep.mubr.f32.mxu0 0.0
    %4806 = vmatmul.mubr.f32.gmra.mrb[0].mxu0 %v4739
    %v4807 = vpop.f32.mrb[0].mxu0
    %v4808 = vadd.f32 0.0, %v4807
    %v4809 = vpop.f32.mrb[0].mxu0
    %4810 = vdwg.mxu0
    %v4812 = vsel %vm303, %v4735, 0
    %v4815 = vsel %vm303, %v4808, 0
    %4817 = vmatprep.subr.mxu0 0.0
    %4818 = vmatpush1.msra.mxu0 %v4252
    %4819 = vmatprep.subr.mxu0 0.0
    %4820 = vmatpush1.msra.mxu0 0.0
    %4821 = vmatprep.subr.mxu0 0.0
    %4822 = vmatpush1.msra.mxu0 0.0
    %4823 = vmatprep.subr.mxu0 0.0
    %4824 = vmatpush1.msra.mxu0 0.0
    %4825 = vmatprep.subr.mxu0 0.0
    %4826 = vmatpush1.msra.mxu0 0.0
    %4827 = vmatprep.subr.mxu0 0.0
    %4828 = vmatpush1.msra.mxu0 0.0
    %4829 = vmatprep.subr.mxu0 0.0
    %4830 = vmatpush1.msra.mxu0 0.0
    %4831 = vmatprep.subr.mxu0 0.0
    %4832 = vmatpush1.msra.mxu0 0.0
    %4833 = vmatprep.subr.mxu0 0.0
    %4834 = vmatpush1.msra.mxu0 0.0
    %4835 = vmatprep.subr.mxu0 0.0
    %4836 = vmatpush1.msra.mxu0 0.0
    %4837 = vmatprep.subr.mxu0 0.0
    %4838 = vmatpush1.msra.mxu0 0.0
    %4839 = vmatprep.subr.mxu0 0.0
    %4840 = vmatpush1.msra.mxu0 0.0
    %4841 = vmatprep.subr.mxu0 0.0
    %4842 = vmatpush1.msra.mxu0 0.0
    %4843 = vmatprep.subr.mxu0 0.0
    %4844 = vmatpush1.msra.mxu0 0.0
    %4845 = vmatprep.subr.mxu0 0.0
    %4846 = vmatpush1.msra.mxu0 0.0
    %4847 = vmatprep.subr.mxu0 0.0
    %4848 = vmatpush1.msra.mxu0 0.0
    %4849 = vmatprep.subr.mxu0 0.0
    %4850 = vmatpush1.msra.mxu0 0.0
    %4851 = vmatprep.subr.mxu0 0.0
    %4852 = vmatpush1.msra.mxu0 0.0
    %4853 = vmatprep.subr.mxu0 0.0
    %4854 = vmatpush1.msra.mxu0 0.0
    %4855 = vmatprep.subr.mxu0 0.0
    %4856 = vmatpush1.msra.mxu0 0.0
    %4857 = vmatprep.subr.mxu0 0.0
    %4858 = vmatpush1.msra.mxu0 0.0
    %4859 = vmatprep.subr.mxu0 0.0
    %4860 = vmatpush1.msra.mxu0 0.0
    %4861 = vmatprep.subr.mxu0 0.0
    %4862 = vmatpush1.msra.mxu0 0.0
    %4863 = vmatprep.subr.mxu0 0.0
    %4864 = vmatpush1.msra.mxu0 0.0
    %4865 = vmatprep.subr.mxu0 0.0
    %4866 = vmatpush1.msra.mxu0 0.0
    %4867 = vmatprep.subr.mxu0 0.0
    %4868 = vmatpush1.msra.mxu0 0.0
    %4869 = vmatprep.subr.mxu0 0.0
    %4870 = vmatpush1.msra.mxu0 0.0
    %4871 = vmatprep.subr.mxu0 0.0
    %4872 = vmatpush1.msra.mxu0 0.0
    %4873 = vmatprep.subr.mxu0 0.0
    %4874 = vmatpush1.msra.mxu0 0.0
    %4875 = vmatprep.subr.mxu0 0.0
    %4876 = vmatpush1.msra.mxu0 0.0
    %4877 = vmatprep.subr.mxu0 0.0
    %4878 = vmatpush1.msra.mxu0 0.0
    %4879 = vmatprep.subr.mxu0 0.0
    %4880 = vmatpush1.msra.mxu0 0.0
    %4881 = vmatprep.mubr.f32.mxu0 0.0
    %4882 = vmatmul.mubr.f32.gmra.mrb[0].mxu0 %v4812
    %v4883 = vpop.f32.mrb[0].mxu0
    %v4884 = vadd.f32 0.0, %v4883
    %v4885 = vpop.f32.mrb[0].mxu0
    %4886 = vmatprep.mubr.f32.mxu0 0.0
    %4887 = vmatmul.mubr.f32.gmra.mrb[0].mxu0 %v4815
    %v4888 = vpop.f32.mrb[0].mxu0
    %v4889 = vadd.f32 0.0, %v4888
    %v4890 = vpop.f32.mrb[0].mxu0
    %4891 = vdwg.mxu0
    %v4892 = vadd.f32 %v4247, %v4884
    %v4893 = vadd.f32 %v4248, %v4889
    %v4894 = vld [vmem:[%s2948 + $0x60] sm:$0xff]
    %v4895 = vld [vmem:[%s2948 + $0x68] sm:$0xff]
    %v4896 = vld [vmem:[%s2948 + $0x70] sm:$0xff]
    %v4897 = vld [vmem:[%s2948 + $0x78] sm:$0xff]
    %v4899 = vsel %vm62, %v4894, 0
    %4901 = vmatprep.subr.mxu0 0.0
    %4902 = vmatpush1.xpose.msra.mxu0 %v4899
    %4903 = vmatprep.subr.mxu0 0.0
    %4904 = vmatpush1.xpose.msra.mxu0 0.0
    %4905 = vmatprep.subr.mxu0 0.0
    %4906 = vmatpush1.xpose.msra.mxu0 0.0
    %4907 = vmatprep.subr.mxu0 0.0
    %4908 = vmatpush1.xpose.msra.mxu0 0.0
    %4909 = vmatprep.subr.mxu0 0.0
    %4910 = vmatpush1.xpose.msra.mxu0 0.0
    %4911 = vmatprep.subr.mxu0 0.0
    %4912 = vmatpush1.xpose.msra.mxu0 0.0
    %4913 = vmatprep.subr.mxu0 0.0
    %4914 = vmatpush1.xpose.msra.mxu0 0.0
    %4915 = vmatprep.subr.mxu0 0.0
    %4916 = vmatpush1.xpose.msra.mxu0 0.0
    %4917 = vmatprep.subr.mxu0 0.0
    %4918 = vmatpush1.xpose.msra.mxu0 0.0
    %4919 = vmatprep.subr.mxu0 0.0
    %4920 = vmatpush1.xpose.msra.mxu0 0.0
    %4921 = vmatprep.subr.mxu0 0.0
    %4922 = vmatpush1.xpose.msra.mxu0 0.0
    %4923 = vmatprep.subr.mxu0 0.0
    %4924 = vmatpush1.xpose.msra.mxu0 0.0
    %4925 = vmatprep.subr.mxu0 0.0
    %4926 = vmatpush1.xpose.msra.mxu0 0.0
    %4927 = vmatprep.subr.mxu0 0.0
    %4928 = vmatpush1.xpose.msra.mxu0 0.0
    %4929 = vmatprep.subr.mxu0 0.0
    %4930 = vmatpush1.xpose.msra.mxu0 0.0
    %4931 = vmatprep.subr.mxu0 0.0
    %4932 = vmatpush1.xpose.msra.mxu0 0.0
    %4933 = vmatprep.subr.mxu0 0.0
    %4934 = vmatpush1.xpose.msra.mxu0 0.0
    %4935 = vmatprep.subr.mxu0 0.0
    %4936 = vmatpush1.xpose.msra.mxu0 0.0
    %4937 = vmatprep.subr.mxu0 0.0
    %4938 = vmatpush1.xpose.msra.mxu0 0.0
    %4939 = vmatprep.subr.mxu0 0.0
    %4940 = vmatpush1.xpose.msra.mxu0 0.0
    %4941 = vmatprep.subr.mxu0 0.0
    %4942 = vmatpush1.xpose.msra.mxu0 0.0
    %4943 = vmatprep.subr.mxu0 0.0
    %4944 = vmatpush1.xpose.msra.mxu0 0.0
    %4945 = vmatprep.subr.mxu0 0.0
    %4946 = vmatpush1.xpose.msra.mxu0 0.0
    %4947 = vmatprep.subr.mxu0 0.0
    %4948 = vmatpush1.xpose.msra.mxu0 0.0
    %4949 = vmatprep.subr.mxu0 0.0
    %4950 = vmatpush1.xpose.msra.mxu0 0.0
    %4951 = vmatprep.subr.mxu0 0.0
    %4952 = vmatpush1.xpose.msra.mxu0 0.0
    %4953 = vmatprep.subr.mxu0 0.0
    %4954 = vmatpush1.xpose.msra.mxu0 0.0
    %4955 = vmatprep.subr.mxu0 0.0
    %4956 = vmatpush1.xpose.msra.mxu0 0.0
    %4957 = vmatprep.subr.mxu0 0.0
    %4958 = vmatpush1.xpose.msra.mxu0 0.0
    %4959 = vmatprep.subr.mxu0 0.0
    %4960 = vmatpush1.xpose.msra.mxu0 0.0
    %4961 = vmatprep.subr.mxu0 0.0
    %4962 = vmatpush1.xpose.msra.mxu0 0.0
    %4963 = vmatprep.subr.mxu0 0.0
    %4964 = vmatpush1.xpose.msra.mxu0 0.0
    %4965 = vmatprep.mubr.f32.mxu0 0.0
    %4966 = vmatmul.mubr.f32.gmra.mrb[0].mxu0 %v2958
    %v4967 = vpop.f32.mrb[0].mxu0
    %v4968 = vadd.f32 0.0, %v4967
    %v4969 = vpop.f32.mrb[0].mxu0
    %4970 = vmatprep.mubr.f32.mxu0 0.0
    %4971 = vmatmul.mubr.f32.gmra.mrb[0].mxu0 %v2961
    %v4972 = vpop.f32.mrb[0].mxu0
    %v4973 = vadd.f32 0.0, %v4972
    %v4974 = vpop.f32.mrb[0].mxu0
    %4975 = vdwg.mxu0
    %v4977 = vsel %vm62, %v4895, 0
    %4979 = vmatprep.subr.mxu0 0.0
    %4980 = vmatpush1.xpose.msra.mxu0 %v4977
    %4981 = vmatprep.subr.mxu0 0.0
    %4982 = vmatpush1.xpose.msra.mxu0 0.0
    %4983 = vmatprep.subr.mxu0 0.0
    %4984 = vmatpush1.xpose.msra.mxu0 0.0
    %4985 = vmatprep.subr.mxu0 0.0
    %4986 = vmatpush1.xpose.msra.mxu0 0.0
    %4987 = vmatprep.subr.mxu0 0.0
    %4988 = vmatpush1.xpose.msra.mxu0 0.0
    %4989 = vmatprep.subr.mxu0 0.0
    %4990 = vmatpush1.xpose.msra.mxu0 0.0
    %4991 = vmatprep.subr.mxu0 0.0
    %4992 = vmatpush1.xpose.msra.mxu0 0.0
    %4993 = vmatprep.subr.mxu0 0.0
    %4994 = vmatpush1.xpose.msra.mxu0 0.0
    %4995 = vmatprep.subr.mxu0 0.0
    %4996 = vmatpush1.xpose.msra.mxu0 0.0
    %4997 = vmatprep.subr.mxu0 0.0
    %4998 = vmatpush1.xpose.msra.mxu0 0.0
    %4999 = vmatprep.subr.mxu0 0.0
    %5000 = vmatpush1.xpose.msra.mxu0 0.0
    %5001 = vmatprep.subr.mxu0 0.0
    %5002 = vmatpush1.xpose.msra.mxu0 0.0
    %5003 = vmatprep.subr.mxu0 0.0
    %5004 = vmatpush1.xpose.msra.mxu0 0.0
    %5005 = vmatprep.subr.mxu0 0.0
    %5006 = vmatpush1.xpose.msra.mxu0 0.0
    %5007 = vmatprep.subr.mxu0 0.0
    %5008 = vmatpush1.xpose.msra.mxu0 0.0
    %5009 = vmatprep.subr.mxu0 0.0
    %5010 = vmatpush1.xpose.msra.mxu0 0.0
    %5011 = vmatprep.subr.mxu0 0.0
    %5012 = vmatpush1.xpose.msra.mxu0 0.0
    %5013 = vmatprep.subr.mxu0 0.0
    %5014 = vmatpush1.xpose.msra.mxu0 0.0
    %5015 = vmatprep.subr.mxu0 0.0
    %5016 = vmatpush1.xpose.msra.mxu0 0.0
    %5017 = vmatprep.subr.mxu0 0.0
    %5018 = vmatpush1.xpose.msra.mxu0 0.0
    %5019 = vmatprep.subr.mxu0 0.0
    %5020 = vmatpush1.xpose.msra.mxu0 0.0
    %5021 = vmatprep.subr.mxu0 0.0
    %5022 = vmatpush1.xpose.msra.mxu0 0.0
    %5023 = vmatprep.subr.mxu0 0.0
    %5024 = vmatpush1.xpose.msra.mxu0 0.0
    %5025 = vmatprep.subr.mxu0 0.0
    %5026 = vmatpush1.xpose.msra.mxu0 0.0
    %5027 = vmatprep.subr.mxu0 0.0
    %5028 = vmatpush1.xpose.msra.mxu0 0.0
    %5029 = vmatprep.subr.mxu0 0.0
    %5030 = vmatpush1.xpose.msra.mxu0 0.0
    %5031 = vmatprep.subr.mxu0 0.0
    %5032 = vmatpush1.xpose.msra.mxu0 0.0
    %5033 = vmatprep.subr.mxu0 0.0
    %5034 = vmatpush1.xpose.msra.mxu0 0.0
    %5035 = vmatprep.subr.mxu0 0.0
    %5036 = vmatpush1.xpose.msra.mxu0 0.0
    %5037 = vmatprep.subr.mxu0 0.0
    %5038 = vmatpush1.xpose.msra.mxu0 0.0
    %5039 = vmatprep.subr.mxu0 0.0
    %5040 = vmatpush1.xpose.msra.mxu0 0.0
    %5041 = vmatprep.subr.mxu0 0.0
    %5042 = vmatpush1.xpose.msra.mxu0 0.0
    %5043 = vmatprep.mubr.f32.mxu0 0.0
    %5044 = vmatmul.mubr.f32.gmra.mrb[0].mxu0 %v2958
    %v5045 = vpop.f32.mrb[0].mxu0
    %v5046 = vadd.f32 0.0, %v5045
    %v5047 = vpop.f32.mrb[0].mxu0
    %5048 = vmatprep.mubr.f32.mxu0 0.0
    %5049 = vmatmul.mubr.f32.gmra.mrb[0].mxu0 %v2961
    %v5050 = vpop.f32.mrb[0].mxu0
    %v5051 = vadd.f32 0.0, %v5050
    %v5052 = vpop.f32.mrb[0].mxu0
    %5053 = vdwg.mxu0
    %v5055 = vsel %vm62, %v4896, 0
    %5057 = vmatprep.subr.mxu0 0.0
    %5058 = vmatpush1.xpose.msra.mxu0 %v5055
    %5059 = vmatprep.subr.mxu0 0.0
    %5060 = vmatpush1.xpose.msra.mxu0 0.0
    %5061 = vmatprep.subr.mxu0 0.0
    %5062 = vmatpush1.xpose.msra.mxu0 0.0
    %5063 = vmatprep.subr.mxu0 0.0
    %5064 = vmatpush1.xpose.msra.mxu0 0.0
    %5065 = vmatprep.subr.mxu0 0.0
    %5066 = vmatpush1.xpose.msra.mxu0 0.0
    %5067 = vmatprep.subr.mxu0 0.0
    %5068 = vmatpush1.xpose.msra.mxu0 0.0
    %5069 = vmatprep.subr.mxu0 0.0
    %5070 = vmatpush1.xpose.msra.mxu0 0.0
    %5071 = vmatprep.subr.mxu0 0.0
    %5072 = vmatpush1.xpose.msra.mxu0 0.0
    %5073 = vmatprep.subr.mxu0 0.0
    %5074 = vmatpush1.xpose.msra.mxu0 0.0
    %5075 = vmatprep.subr.mxu0 0.0
    %5076 = vmatpush1.xpose.msra.mxu0 0.0
    %5077 = vmatprep.subr.mxu0 0.0
    %5078 = vmatpush1.xpose.msra.mxu0 0.0
    %5079 = vmatprep.subr.mxu0 0.0
    %5080 = vmatpush1.xpose.msra.mxu0 0.0
    %5081 = vmatprep.subr.mxu0 0.0
    %5082 = vmatpush1.xpose.msra.mxu0 0.0
    %5083 = vmatprep.subr.mxu0 0.0
    %5084 = vmatpush1.xpose.msra.mxu0 0.0
    %5085 = vmatprep.subr.mxu0 0.0
    %5086 = vmatpush1.xpose.msra.mxu0 0.0
    %5087 = vmatprep.subr.mxu0 0.0
    %5088 = vmatpush1.xpose.msra.mxu0 0.0
    %5089 = vmatprep.subr.mxu0 0.0
    %5090 = vmatpush1.xpose.msra.mxu0 0.0
    %5091 = vmatprep.subr.mxu0 0.0
    %5092 = vmatpush1.xpose.msra.mxu0 0.0
    %5093 = vmatprep.subr.mxu0 0.0
    %5094 = vmatpush1.xpose.msra.mxu0 0.0
    %5095 = vmatprep.subr.mxu0 0.0
    %5096 = vmatpush1.xpose.msra.mxu0 0.0
    %5097 = vmatprep.subr.mxu0 0.0
    %5098 = vmatpush1.xpose.msra.mxu0 0.0
    %5099 = vmatprep.subr.mxu0 0.0
    %5100 = vmatpush1.xpose.msra.mxu0 0.0
    %5101 = vmatprep.subr.mxu0 0.0
    %5102 = vmatpush1.xpose.msra.mxu0 0.0
    %5103 = vmatprep.subr.mxu0 0.0
    %5104 = vmatpush1.xpose.msra.mxu0 0.0
    %5105 = vmatprep.subr.mxu0 0.0
    %5106 = vmatpush1.xpose.msra.mxu0 0.0
    %5107 = vmatprep.subr.mxu0 0.0
    %5108 = vmatpush1.xpose.msra.mxu0 0.0
    %5109 = vmatprep.subr.mxu0 0.0
    %5110 = vmatpush1.xpose.msra.mxu0 0.0
    %5111 = vmatprep.subr.mxu0 0.0
    %5112 = vmatpush1.xpose.msra.mxu0 0.0
    %5113 = vmatprep.subr.mxu0 0.0
    %5114 = vmatpush1.xpose.msra.mxu0 0.0
    %5115 = vmatprep.subr.mxu0 0.0
    %5116 = vmatpush1.xpose.msra.mxu0 0.0
    %5117 = vmatprep.subr.mxu0 0.0
    %5118 = vmatpush1.xpose.msra.mxu0 0.0
    %5119 = vmatprep.subr.mxu0 0.0
    %5120 = vmatpush1.xpose.msra.mxu0 0.0
    %5121 = vmatprep.mubr.f32.mxu0 0.0
    %5122 = vmatmul.mubr.f32.gmra.mrb[0].mxu0 %v2958
    %v5123 = vpop.f32.mrb[0].mxu0
    %v5124 = vadd.f32 0.0, %v5123
    %v5125 = vpop.f32.mrb[0].mxu0
    %5126 = vmatprep.mubr.f32.mxu0 0.0
    %5127 = vmatmul.mubr.f32.gmra.mrb[0].mxu0 %v2961
    %v5128 = vpop.f32.mrb[0].mxu0
    %v5129 = vadd.f32 0.0, %v5128
    %v5130 = vpop.f32.mrb[0].mxu0
    %5131 = vdwg.mxu0
    %v5133 = vsel %vm303, %v4968, 0
    %v5136 = vsel %vm303, %v5046, 0
    %5138 = vmatprep.subr.mxu0 0.0
    %5139 = vmatpush1.xpose.msra.mxu0 %v5136
    %5140 = vmatprep.subr.mxu0 0.0
    %5141 = vmatpush1.xpose.msra.mxu0 0.0
    %5142 = vmatprep.subr.mxu0 0.0
    %5143 = vmatpush1.xpose.msra.mxu0 0.0
    %5144 = vmatprep.subr.mxu0 0.0
    %5145 = vmatpush1.xpose.msra.mxu0 0.0
    %5146 = vmatprep.subr.mxu0 0.0
    %5147 = vmatpush1.xpose.msra.mxu0 0.0
    %5148 = vmatprep.subr.mxu0 0.0
    %5149 = vmatpush1.xpose.msra.mxu0 0.0
    %5150 = vmatprep.subr.mxu0 0.0
    %5151 = vmatpush1.xpose.msra.mxu0 0.0
    %5152 = vmatprep.subr.mxu0 0.0
    %5153 = vmatpush1.xpose.msra.mxu0 0.0
    %5154 = vmatprep.subr.mxu0 0.0
    %5155 = vmatpush1.xpose.msra.mxu0 0.0
    %5156 = vmatprep.subr.mxu0 0.0
    %5157 = vmatpush1.xpose.msra.mxu0 0.0
    %5158 = vmatprep.subr.mxu0 0.0
    %5159 = vmatpush1.xpose.msra.mxu0 0.0
    %5160 = vmatprep.subr.mxu0 0.0
    %5161 = vmatpush1.xpose.msra.mxu0 0.0
    %5162 = vmatprep.subr.mxu0 0.0
    %5163 = vmatpush1.xpose.msra.mxu0 0.0
    %5164 = vmatprep.subr.mxu0 0.0
    %5165 = vmatpush1.xpose.msra.mxu0 0.0
    %5166 = vmatprep.subr.mxu0 0.0
    %5167 = vmatpush1.xpose.msra.mxu0 0.0
    %5168 = vmatprep.subr.mxu0 0.0
    %5169 = vmatpush1.xpose.msra.mxu0 0.0
    %5170 = vmatprep.subr.mxu0 0.0
    %5171 = vmatpush1.xpose.msra.mxu0 0.0
    %5172 = vmatprep.subr.mxu0 0.0
    %5173 = vmatpush1.xpose.msra.mxu0 0.0
    %5174 = vmatprep.subr.mxu0 0.0
    %5175 = vmatpush1.xpose.msra.mxu0 0.0
    %5176 = vmatprep.subr.mxu0 0.0
    %5177 = vmatpush1.xpose.msra.mxu0 0.0
    %5178 = vmatprep.subr.mxu0 0.0
    %5179 = vmatpush1.xpose.msra.mxu0 0.0
    %5180 = vmatprep.subr.mxu0 0.0
    %5181 = vmatpush1.xpose.msra.mxu0 0.0
    %5182 = vmatprep.subr.mxu0 0.0
    %5183 = vmatpush1.xpose.msra.mxu0 0.0
    %5184 = vmatprep.subr.mxu0 0.0
    %5185 = vmatpush1.xpose.msra.mxu0 0.0
    %5186 = vmatprep.subr.mxu0 0.0
    %5187 = vmatpush1.xpose.msra.mxu0 0.0
    %5188 = vmatprep.subr.mxu0 0.0
    %5189 = vmatpush1.xpose.msra.mxu0 0.0
    %5190 = vmatprep.subr.mxu0 0.0
    %5191 = vmatpush1.xpose.msra.mxu0 0.0
    %5192 = vmatprep.subr.mxu0 0.0
    %5193 = vmatpush1.xpose.msra.mxu0 0.0
    %5194 = vmatprep.subr.mxu0 0.0
    %5195 = vmatpush1.xpose.msra.mxu0 0.0
    %5196 = vmatprep.subr.mxu0 0.0
    %5197 = vmatpush1.xpose.msra.mxu0 0.0
    %5198 = vmatprep.subr.mxu0 0.0
    %5199 = vmatpush1.xpose.msra.mxu0 0.0
    %5200 = vmatprep.subr.mxu0 0.0
    %5201 = vmatpush1.xpose.msra.mxu0 0.0
    %5202 = vmatprep.mubr.f32.mxu0 0.0
    %5203 = vmatmul.mubr.f32.gmra.mrb[0].mxu0 %v5133
    %v5204 = vpop.f32.mrb[0].mxu0
    %v5205 = vadd.f32 0.0, %v5204
    %v5206 = vpop.f32.mrb[0].mxu0
    %5207 = vdwg.mxu0
    %v5209 = vsel %vm303, %v4973, 0
    %v5212 = vsel %vm303, %v5051, 0
    %5214 = vmatprep.subr.mxu0 0.0
    %5215 = vmatpush1.xpose.msra.mxu0 %v5212
    %5216 = vmatprep.subr.mxu0 0.0
    %5217 = vmatpush1.xpose.msra.mxu0 0.0
    %5218 = vmatprep.subr.mxu0 0.0
    %5219 = vmatpush1.xpose.msra.mxu0 0.0
    %5220 = vmatprep.subr.mxu0 0.0
    %5221 = vmatpush1.xpose.msra.mxu0 0.0
    %5222 = vmatprep.subr.mxu0 0.0
    %5223 = vmatpush1.xpose.msra.mxu0 0.0
    %5224 = vmatprep.subr.mxu0 0.0
    %5225 = vmatpush1.xpose.msra.mxu0 0.0
    %5226 = vmatprep.subr.mxu0 0.0
    %5227 = vmatpush1.xpose.msra.mxu0 0.0
    %5228 = vmatprep.subr.mxu0 0.0
    %5229 = vmatpush1.xpose.msra.mxu0 0.0
    %5230 = vmatprep.subr.mxu0 0.0
    %5231 = vmatpush1.xpose.msra.mxu0 0.0
    %5232 = vmatprep.subr.mxu0 0.0
    %5233 = vmatpush1.xpose.msra.mxu0 0.0
    %5234 = vmatprep.subr.mxu0 0.0
    %5235 = vmatpush1.xpose.msra.mxu0 0.0
    %5236 = vmatprep.subr.mxu0 0.0
    %5237 = vmatpush1.xpose.msra.mxu0 0.0
    %5238 = vmatprep.subr.mxu0 0.0
    %5239 = vmatpush1.xpose.msra.mxu0 0.0
    %5240 = vmatprep.subr.mxu0 0.0
    %5241 = vmatpush1.xpose.msra.mxu0 0.0
    %5242 = vmatprep.subr.mxu0 0.0
    %5243 = vmatpush1.xpose.msra.mxu0 0.0
    %5244 = vmatprep.subr.mxu0 0.0
    %5245 = vmatpush1.xpose.msra.mxu0 0.0
    %5246 = vmatprep.subr.mxu0 0.0
    %5247 = vmatpush1.xpose.msra.mxu0 0.0
    %5248 = vmatprep.subr.mxu0 0.0
    %5249 = vmatpush1.xpose.msra.mxu0 0.0
    %5250 = vmatprep.subr.mxu0 0.0
    %5251 = vmatpush1.xpose.msra.mxu0 0.0
    %5252 = vmatprep.subr.mxu0 0.0
    %5253 = vmatpush1.xpose.msra.mxu0 0.0
    %5254 = vmatprep.subr.mxu0 0.0
    %5255 = vmatpush1.xpose.msra.mxu0 0.0
    %5256 = vmatprep.subr.mxu0 0.0
    %5257 = vmatpush1.xpose.msra.mxu0 0.0
    %5258 = vmatprep.subr.mxu0 0.0
    %5259 = vmatpush1.xpose.msra.mxu0 0.0
    %5260 = vmatprep.subr.mxu0 0.0
    %5261 = vmatpush1.xpose.msra.mxu0 0.0
    %5262 = vmatprep.subr.mxu0 0.0
    %5263 = vmatpush1.xpose.msra.mxu0 0.0
    %5264 = vmatprep.subr.mxu0 0.0
    %5265 = vmatpush1.xpose.msra.mxu0 0.0
    %5266 = vmatprep.subr.mxu0 0.0
    %5267 = vmatpush1.xpose.msra.mxu0 0.0
    %5268 = vmatprep.subr.mxu0 0.0
    %5269 = vmatpush1.xpose.msra.mxu0 0.0
    %5270 = vmatprep.subr.mxu0 0.0
    %5271 = vmatpush1.xpose.msra.mxu0 0.0
    %5272 = vmatprep.subr.mxu0 0.0
    %5273 = vmatpush1.xpose.msra.mxu0 0.0
    %5274 = vmatprep.subr.mxu0 0.0
    %5275 = vmatpush1.xpose.msra.mxu0 0.0
    %5276 = vmatprep.subr.mxu0 0.0
    %5277 = vmatpush1.xpose.msra.mxu0 0.0
    %5278 = vmatprep.mubr.f32.mxu0 0.0
    %5279 = vmatmul.mubr.f32.gmra.mrb[0].mxu0 %v5209
    %v5280 = vpop.f32.mrb[0].mxu0
    %v5281 = vadd.f32 0.0, %v5280
    %v5282 = vpop.f32.mrb[0].mxu0
    %5283 = vdwg.mxu0
    %v5284 = vmul.f32 %v5205, 0.35355338
    %v5285 = vmul.f32 %v5281, 0.35355338
    %v5286 = vadd.f32 %v5284, %v461
    %v5287 = vadd.f32 %v5285, %v465
    %v5288 = vsel %vm303, %v5286, -inf
    %5289 = vmax.xlane.f32.xlu0 %v5288
    %v5290 = vpop.xlane.xlu0 %5289
    %v5291 = vsel %vm303, %v5287, -inf
    %5292 = vmax.xlane.f32.xlu0 %v5291
    %v5293 = vpop.xlane.xlu0 %5292
    %v5294 = vsub.f32 %v5286, %v5290
    %v5295 = vsub.f32 %v5287, %v5293
    %v5296 = vmul.f32 %v5294, 1.442695
    %v5297 = vpow.pop %v5296
    %v5298 = vmul.f32 %v5295, 1.442695
    %v5299 = vpow.pop %v5298
    %v5300 = vsel %vm303, %v5297, 0.0
    %5301 = vadd.xlane.f32.xlu0 %v5300
    %v5302 = vpop.xlane.xlu0 %5301
    %v5303 = vsel %vm303, %v5299, 0.0
    %5304 = vadd.xlane.f32.xlu0 %v5303
    %v5305 = vpop.xlane.xlu0 %5304
    %v5306 = vrcp.pop %v5302
    %v5307 = vrcp.pop %v5305
    %v5308 = vmul.f32 %v5297, %v5306
    %v5309 = vmul.f32 %v5299, %v5307
    %v5311 = vsel %vm303, %v5308, 0
    %5313 = vmatprep.subr.mxu0 0.0
    %5314 = vmatpush1.msra.mxu0 %v5124
    %5315 = vmatprep.subr.mxu0 0.0
    %5316 = vmatpush1.msra.mxu0 0.0
    %5317 = vmatprep.subr.mxu0 0.0
    %5318 = vmatpush1.msra.mxu0 0.0
    %5319 = vmatprep.subr.mxu0 0.0
    %5320 = vmatpush1.msra.mxu0 0.0
    %5321 = vmatprep.subr.mxu0 0.0
    %5322 = vmatpush1.msra.mxu0 0.0
    %5323 = vmatprep.subr.mxu0 0.0
    %5324 = vmatpush1.msra.mxu0 0.0
    %5325 = vmatprep.subr.mxu0 0.0
    %5326 = vmatpush1.msra.mxu0 0.0
    %5327 = vmatprep.subr.mxu0 0.0
    %5328 = vmatpush1.msra.mxu0 0.0
    %5329 = vmatprep.subr.mxu0 0.0
    %5330 = vmatpush1.msra.mxu0 0.0
    %5331 = vmatprep.subr.mxu0 0.0
    %5332 = vmatpush1.msra.mxu0 0.0
    %5333 = vmatprep.subr.mxu0 0.0
    %5334 = vmatpush1.msra.mxu0 0.0
    %5335 = vmatprep.subr.mxu0 0.0
    %5336 = vmatpush1.msra.mxu0 0.0
    %5337 = vmatprep.subr.mxu0 0.0
    %5338 = vmatpush1.msra.mxu0 0.0
    %5339 = vmatprep.subr.mxu0 0.0
    %5340 = vmatpush1.msra.mxu0 0.0
    %5341 = vmatprep.subr.mxu0 0.0
    %5342 = vmatpush1.msra.mxu0 0.0
    %5343 = vmatprep.subr.mxu0 0.0
    %5344 = vmatpush1.msra.mxu0 0.0
    %5345 = vmatprep.subr.mxu0 0.0
    %5346 = vmatpush1.msra.mxu0 0.0
    %5347 = vmatprep.subr.mxu0 0.0
    %5348 = vmatpush1.msra.mxu0 0.0
    %5349 = vmatprep.subr.mxu0 0.0
    %5350 = vmatpush1.msra.mxu0 0.0
    %5351 = vmatprep.subr.mxu0 0.0
    %5352 = vmatpush1.msra.mxu0 0.0
    %5353 = vmatprep.subr.mxu0 0.0
    %5354 = vmatpush1.msra.mxu0 0.0
    %5355 = vmatprep.subr.mxu0 0.0
    %5356 = vmatpush1.msra.mxu0 0.0
    %5357 = vmatprep.subr.mxu0 0.0
    %5358 = vmatpush1.msra.mxu0 0.0
    %5359 = vmatprep.subr.mxu0 0.0
    %5360 = vmatpush1.msra.mxu0 0.0
    %5361 = vmatprep.subr.mxu0 0.0
    %5362 = vmatpush1.msra.mxu0 0.0
    %5363 = vmatprep.subr.mxu0 0.0
    %5364 = vmatpush1.msra.mxu0 0.0
    %5365 = vmatprep.subr.mxu0 0.0
    %5366 = vmatpush1.msra.mxu0 0.0
    %5367 = vmatprep.subr.mxu0 0.0
    %5368 = vmatpush1.msra.mxu0 0.0
    %5369 = vmatprep.subr.mxu0 0.0
    %5370 = vmatpush1.msra.mxu0 0.0
    %5371 = vmatprep.subr.mxu0 0.0
    %5372 = vmatpush1.msra.mxu0 0.0
    %5373 = vmatprep.subr.mxu0 0.0
    %5374 = vmatpush1.msra.mxu0 0.0
    %5375 = vmatprep.subr.mxu0 0.0
    %5376 = vmatpush1.msra.mxu0 0.0
    %5377 = vmatprep.mubr.f32.mxu0 0.0
    %5378 = vmatmul.mubr.f32.gmra.mrb[0].mxu0 %v5311
    %v5379 = vpop.f32.mrb[0].mxu0
    %v5380 = vadd.f32 0.0, %v5379
    %v5381 = vpop.f32.mrb[0].mxu0
    %5382 = vdwg.mxu0
    %v5384 = vsel %vm303, %v5309, 0
    %5386 = vmatprep.subr.mxu0 0.0
    %5387 = vmatpush1.msra.mxu0 %v5129
    %5388 = vmatprep.subr.mxu0 0.0
    %5389 = vmatpush1.msra.mxu0 0.0
    %5390 = vmatprep.subr.mxu0 0.0
    %5391 = vmatpush1.msra.mxu0 0.0
    %5392 = vmatprep.subr.mxu0 0.0
    %5393 = vmatpush1.msra.mxu0 0.0
    %5394 = vmatprep.subr.mxu0 0.0
    %5395 = vmatpush1.msra.mxu0 0.0
    %5396 = vmatprep.subr.mxu0 0.0
    %5397 = vmatpush1.msra.mxu0 0.0
    %5398 = vmatprep.subr.mxu0 0.0
    %5399 = vmatpush1.msra.mxu0 0.0
    %5400 = vmatprep.subr.mxu0 0.0
    %5401 = vmatpush1.msra.mxu0 0.0
    %5402 = vmatprep.subr.mxu0 0.0
    %5403 = vmatpush1.msra.mxu0 0.0
    %5404 = vmatprep.subr.mxu0 0.0
    %5405 = vmatpush1.msra.mxu0 0.0
    %5406 = vmatprep.subr.mxu0 0.0
    %5407 = vmatpush1.msra.mxu0 0.0
    %5408 = vmatprep.subr.mxu0 0.0
    %5409 = vmatpush1.msra.mxu0 0.0
    %5410 = vmatprep.subr.mxu0 0.0
    %5411 = vmatpush1.msra.mxu0 0.0
    %5412 = vmatprep.subr.mxu0 0.0
    %5413 = vmatpush1.msra.mxu0 0.0
    %5414 = vmatprep.subr.mxu0 0.0
    %5415 = vmatpush1.msra.mxu0 0.0
    %5416 = vmatprep.subr.mxu0 0.0
    %5417 = vmatpush1.msra.mxu0 0.0
    %5418 = vmatprep.subr.mxu0 0.0
    %5419 = vmatpush1.msra.mxu0 0.0
    %5420 = vmatprep.subr.mxu0 0.0
    %5421 = vmatpush1.msra.mxu0 0.0
    %5422 = vmatprep.subr.mxu0 0.0
    %5423 = vmatpush1.msra.mxu0 0.0
    %5424 = vmatprep.subr.mxu0 0.0
    %5425 = vmatpush1.msra.mxu0 0.0
    %5426 = vmatprep.subr.mxu0 0.0
    %5427 = vmatpush1.msra.mxu0 0.0
    %5428 = vmatprep.subr.mxu0 0.0
    %5429 = vmatpush1.msra.mxu0 0.0
    %5430 = vmatprep.subr.mxu0 0.0
    %5431 = vmatpush1.msra.mxu0 0.0
    %5432 = vmatprep.subr.mxu0 0.0
    %5433 = vmatpush1.msra.mxu0 0.0
    %5434 = vmatprep.subr.mxu0 0.0
    %5435 = vmatpush1.msra.mxu0 0.0
    %5436 = vmatprep.subr.mxu0 0.0
    %5437 = vmatpush1.msra.mxu0 0.0
    %5438 = vmatprep.subr.mxu0 0.0
    %5439 = vmatpush1.msra.mxu0 0.0
    %5440 = vmatprep.subr.mxu0 0.0
    %5441 = vmatpush1.msra.mxu0 0.0
    %5442 = vmatprep.subr.mxu0 0.0
    %5443 = vmatpush1.msra.mxu0 0.0
    %5444 = vmatprep.subr.mxu0 0.0
    %5445 = vmatpush1.msra.mxu0 0.0
    %5446 = vmatprep.subr.mxu0 0.0
    %5447 = vmatpush1.msra.mxu0 0.0
    %5448 = vmatprep.subr.mxu0 0.0
    %5449 = vmatpush1.msra.mxu0 0.0
    %5450 = vmatprep.mubr.f32.mxu0 0.0
    %5451 = vmatmul.mubr.f32.gmra.mrb[0].mxu0 %v5384
    %v5452 = vpop.f32.mrb[0].mxu0
    %v5453 = vadd.f32 0.0, %v5452
    %v5454 = vpop.f32.mrb[0].mxu0
    %5455 = vdwg.mxu0
    %v5457 = vsel %vm303, %v5380, 0
    %v5460 = vsel %vm303, %v5453, 0
    %5462 = vmatprep.subr.mxu0 0.0
    %5463 = vmatpush1.msra.mxu0 %v4897
    %5464 = vmatprep.subr.mxu0 0.0
    %5465 = vmatpush1.msra.mxu0 0.0
    %5466 = vmatprep.subr.mxu0 0.0
    %5467 = vmatpush1.msra.mxu0 0.0
    %5468 = vmatprep.subr.mxu0 0.0
    %5469 = vmatpush1.msra.mxu0 0.0
    %5470 = vmatprep.subr.mxu0 0.0
    %5471 = vmatpush1.msra.mxu0 0.0
    %5472 = vmatprep.subr.mxu0 0.0
    %5473 = vmatpush1.msra.mxu0 0.0
    %5474 = vmatprep.subr.mxu0 0.0
    %5475 = vmatpush1.msra.mxu0 0.0
    %5476 = vmatprep.subr.mxu0 0.0
    %5477 = vmatpush1.msra.mxu0 0.0
    %5478 = vmatprep.subr.mxu0 0.0
    %5479 = vmatpush1.msra.mxu0 0.0
    %5480 = vmatprep.subr.mxu0 0.0
    %5481 = vmatpush1.msra.mxu0 0.0
    %5482 = vmatprep.subr.mxu0 0.0
    %5483 = vmatpush1.msra.mxu0 0.0
    %5484 = vmatprep.subr.mxu0 0.0
    %5485 = vmatpush1.msra.mxu0 0.0
    %5486 = vmatprep.subr.mxu0 0.0
    %5487 = vmatpush1.msra.mxu0 0.0
    %5488 = vmatprep.subr.mxu0 0.0
    %5489 = vmatpush1.msra.mxu0 0.0
    %5490 = vmatprep.subr.mxu0 0.0
    %5491 = vmatpush1.msra.mxu0 0.0
    %5492 = vmatprep.subr.mxu0 0.0
    %5493 = vmatpush1.msra.mxu0 0.0
    %5494 = vmatprep.subr.mxu0 0.0
    %5495 = vmatpush1.msra.mxu0 0.0
    %5496 = vmatprep.subr.mxu0 0.0
    %5497 = vmatpush1.msra.mxu0 0.0
    %5498 = vmatprep.subr.mxu0 0.0
    %5499 = vmatpush1.msra.mxu0 0.0
    %5500 = vmatprep.subr.mxu0 0.0
    %5501 = vmatpush1.msra.mxu0 0.0
    %5502 = vmatprep.subr.mxu0 0.0
    %5503 = vmatpush1.msra.mxu0 0.0
    %5504 = vmatprep.subr.mxu0 0.0
    %5505 = vmatpush1.msra.mxu0 0.0
    %5506 = vmatprep.subr.mxu0 0.0
    %5507 = vmatpush1.msra.mxu0 0.0
    %5508 = vmatprep.subr.mxu0 0.0
    %5509 = vmatpush1.msra.mxu0 0.0
    %5510 = vmatprep.subr.mxu0 0.0
    %5511 = vmatpush1.msra.mxu0 0.0
    %5512 = vmatprep.subr.mxu0 0.0
    %5513 = vmatpush1.msra.mxu0 0.0
    %5514 = vmatprep.subr.mxu0 0.0
    %5515 = vmatpush1.msra.mxu0 0.0
    %5516 = vmatprep.subr.mxu0 0.0
    %5517 = vmatpush1.msra.mxu0 0.0
    %5518 = vmatprep.subr.mxu0 0.0
    %5519 = vmatpush1.msra.mxu0 0.0
    %5520 = vmatprep.subr.mxu0 0.0
    %5521 = vmatpush1.msra.mxu0 0.0
    %5522 = vmatprep.subr.mxu0 0.0
    %5523 = vmatpush1.msra.mxu0 0.0
    %5524 = vmatprep.subr.mxu0 0.0
    %5525 = vmatpush1.msra.mxu0 0.0
    %5526 = vmatprep.mubr.f32.mxu0 0.0
    %5527 = vmatmul.mubr.f32.gmra.mrb[0].mxu0 %v5457
    %v5528 = vpop.f32.mrb[0].mxu0
    %v5529 = vadd.f32 0.0, %v5528
    %v5530 = vpop.f32.mrb[0].mxu0
    %5531 = vmatprep.mubr.f32.mxu0 0.0
    %5532 = vmatmul.mubr.f32.gmra.mrb[0].mxu0 %v5460
    %v5533 = vpop.f32.mrb[0].mxu0
    %v5534 = vadd.f32 0.0, %v5533
    %v5535 = vpop.f32.mrb[0].mxu0
    %5536 = vdwg.mxu0
    %v5537 = vadd.f32 %v4892, %v5529
    %v5538 = vadd.f32 %v4893, %v5534
    %s5539 = scalar_lea.vmem %s3, 64
    %5540 = vst.msk [vmem:[%s5539] sm:$0xff] %vm303, %v3373
    %5541 = vst.msk [vmem:[%s5539 + $0x8] sm:$0xff] %vm303, %v3374
    %5542 = vst.msk [vmem:[%s5539 + $0x10] sm:$0xff] %vm303, %v4018
    %5543 = vst.msk [vmem:[%s5539 + $0x18] sm:$0xff] %vm303, %v4019
    %5544 = vst.msk [vmem:[%s5539 + $0x20] sm:$0xff] %vm303, %v4663
    %5545 = vst.msk [vmem:[%s5539 + $0x28] sm:$0xff] %vm303, %v4664
    %5546 = vst.msk [vmem:[%s5539 + $0x30] sm:$0xff] %vm303, %v5308
    %5547 = vst.msk [vmem:[%s5539 + $0x38] sm:$0xff] %vm303, %v5309
    %v5548 = vsel %vm62, %v5537, 0.0
    %5549 = vadd.xlane.f32.xlu0 %v5548
    %v5550 = vpop.xlane.xlu0 %5549
    %v5551 = vsel %vm62, %v5538, 0.0
    %5552 = vadd.xlane.f32.xlu0 %v5551
    %v5553 = vpop.xlane.xlu0 %5552
    %v5554 = vmul.f32 %v5550, %v2670
    %v5555 = vmul.f32 %v5553, %v2670
    %v5556 = vsub.f32 %v5537, %v5554
    %v5557 = vsub.f32 %v5538, %v5555
    %v5558 = vmul.f32 %v5556, %v5556
    %v5559 = vmul.f32 %v5557, %v5557
    %v5560 = vsel %vm62, %v5558, 0.0
    %5561 = vadd.xlane.f32.xlu0 %v5560
    %v5562 = vpop.xlane.xlu0 %5561
    %v5563 = vsel %vm62, %v5559, 0.0
    %5564 = vadd.xlane.f32.xlu0 %v5563
    %v5565 = vpop.xlane.xlu0 %5564
    %v5566 = vmul.f32 %v5562, %v2670
    %v5567 = vmul.f32 %v5565, %v2670
    %v5568 = vadd.f32 %v5566, 1e-05
    %v5569 = vadd.f32 %v5567, 1e-05
    %v5570 = vrsqrt.pop %v5568
    %v5571 = vrsqrt.pop %v5569
    %v5572 = vmul.f32 %v5556, %v5570
    %v5573 = vmul.f32 %v5557, %v5571
    %v5574 = vlaneseq
    %v5575 = vshrl.u32 %v5574, 7
    %v5576 = vsub.s32 0, %v5575
    %v5577 = vrot.slane %v2949, %v5576
    %v5578 = vmul.f32 %v5572, %v5577
    %v5579 = vmul.f32 %v5573, %v5577
    %v5580 = vlaneseq
    %v5581 = vshrl.u32 %v5580, 7
    %v5582 = vsub.s32 0, %v5581
    %v5583 = vrot.slane %v2950, %v5582
    %v5584 = vadd.f32 %v5578, %v5583
    %v5585 = vadd.f32 %v5579, %v5583
    %v5586 = vld [vmem:[%s2948 + $0x80] sm:$0xff]
    %v5587 = vld [vmem:[%s2948 + $0x88] sm:$0xff]
    %v5588 = vld [vmem:[%s2948 + $0x90] sm:$0xff]
    %v5589 = vld [vmem:[%s2948 + $0x98] sm:$0xff]
    %v5590 = vld [vmem:[%s2948 + $0xa0] sm:$0xff]
    %v5591 = vld [vmem:[%s2948 + $0xa8] sm:$0xff]
    %v5592 = vld [vmem:[%s2948 + $0xb0] sm:$0xff]
    %v5593 = vld [vmem:[%s2948 + $0xb8] sm:$0xff]
    %v5594 = vld [vmem:[%s2948 + $0xc0] sm:$0xff]
    %v5595 = vld [vmem:[%s2948 + $0xc8] sm:$0xff]
    %v5596 = vld [vmem:[%s2948 + $0xd0] sm:$0xff]
    %v5597 = vld [vmem:[%s2948 + $0xd8] sm:$0xff]
    %v5598 = vlaneseq
    %v5599 = vshrl.u32 %v5598, 7
    %v5600 = vsub.s32 0, %v5599
    %v5601 = vrot.slane %v2951, %v5600
    %v5603 = vsel %vm62, %v5584, 0
    %v5606 = vsel %vm62, %v5585, 0
    %5608 = vmatprep.subr.mxu0 0.0
    %5609 = vmatpush1.msra.mxu0 %v5586
    %5610 = vmatprep.subr.mxu0 0.0
    %5611 = vmatpush1.msra.mxu0 %v5587
    %5612 = vmatprep.subr.mxu0 0.0
    %5613 = vmatpush1.msra.mxu0 %v5588
    %5614 = vmatprep.subr.mxu0 0.0
    %5615 = vmatpush1.msra.mxu0 %v5589
    %5616 = vmatprep.subr.mxu0 0.0
    %5617 = vmatpush1.msra.mxu0 0.0
    %5618 = vmatprep.subr.mxu0 0.0
    %5619 = vmatpush1.msra.mxu0 0.0
    %5620 = vmatprep.subr.mxu0 0.0
    %5621 = vmatpush1.msra.mxu0 0.0
    %5622 = vmatprep.subr.mxu0 0.0
    %5623 = vmatpush1.msra.mxu0 0.0
    %5624 = vmatprep.subr.mxu0 0.0
    %5625 = vmatpush1.msra.mxu0 0.0
    %5626 = vmatprep.subr.mxu0 0.0
    %5627 = vmatpush1.msra.mxu0 0.0
    %5628 = vmatprep.subr.mxu0 0.0
    %5629 = vmatpush1.msra.mxu0 0.0
    %5630 = vmatprep.subr.mxu0 0.0
    %5631 = vmatpush1.msra.mxu0 0.0
    %5632 = vmatprep.subr.mxu0 0.0
    %5633 = vmatpush1.msra.mxu0 0.0
    %5634 = vmatprep.subr.mxu0 0.0
    %5635 = vmatpush1.msra.mxu0 0.0
    %5636 = vmatprep.subr.mxu0 0.0
    %5637 = vmatpush1.msra.mxu0 0.0
    %5638 = vmatprep.subr.mxu0 0.0
    %5639 = vmatpush1.msra.mxu0 0.0
    %5640 = vmatprep.subr.mxu0 0.0
    %5641 = vmatpush1.msra.mxu0 0.0
    %5642 = vmatprep.subr.mxu0 0.0
    %5643 = vmatpush1.msra.mxu0 0.0
    %5644 = vmatprep.subr.mxu0 0.0
    %5645 = vmatpush1.msra.mxu0 0.0
    %5646 = vmatprep.subr.mxu0 0.0
    %5647 = vmatpush1.msra.mxu0 0.0
    %5648 = vmatprep.subr.mxu0 0.0
    %5649 = vmatpush1.msra.mxu0 0.0
    %5650 = vmatprep.subr.mxu0 0.0
    %5651 = vmatpush1.msra.mxu0 0.0
    %5652 = vmatprep.subr.mxu0 0.0
    %5653 = vmatpush1.msra.mxu0 0.0
    %5654 = vmatprep.subr.mxu0 0.0
    %5655 = vmatpush1.msra.mxu0 0.0
    %5656 = vmatprep.subr.mxu0 0.0
    %5657 = vmatpush1.msra.mxu0 0.0
    %5658 = vmatprep.subr.mxu0 0.0
    %5659 = vmatpush1.msra.mxu0 0.0
    %5660 = vmatprep.subr.mxu0 0.0
    %5661 = vmatpush1.msra.mxu0 0.0
    %5662 = vmatprep.subr.mxu0 0.0
    %5663 = vmatpush1.msra.mxu0 0.0
    %5664 = vmatprep.subr.mxu0 0.0
    %5665 = vmatpush1.msra.mxu0 0.0
    %5666 = vmatprep.subr.mxu0 0.0
    %5667 = vmatpush1.msra.mxu0 0.0
    %5668 = vmatprep.subr.mxu0 0.0
    %5669 = vmatpush1.msra.mxu0 0.0
    %5670 = vmatprep.subr.mxu0 0.0
    %5671 = vmatpush1.msra.mxu0 0.0
    %5672 = vmatprep.mubr.f32.mxu0 0.0
    %5673 = vmatmul.mubr.f32.gmra.mrb[0].mxu0 %v5603
    %v5674 = vpop.f32.mrb[0].mxu0
    %v5675 = vadd.f32 %v5601, %v5674
    %v5676 = vpop.f32.mrb[0].mxu0
    %5677 = vmatprep.mubr.f32.mxu0 0.0
    %5678 = vmatmul.mubr.f32.gmra.mrb[0].mxu0 %v5606
    %v5679 = vpop.f32.mrb[0].mxu0
    %v5680 = vadd.f32 %v5601, %v5679
    %v5681 = vpop.f32.mrb[0].mxu0
    %5682 = vdwg.mxu0
    %v5683 = vmax.f32 %v5675, 0.0
    %v5684 = vmax.f32 %v5680, 0.0
    %v5685 = vlaneseq
    %v5686 = vshrl.u32 %v5685, 7
    %v5687 = vsub.s32 0, %v5686
    %v5688 = vrot.slane %v2952, %v5687
    %v5690 = vsel %vm2806, %v5683, 0
    %v5693 = vsel %vm2806, %v5684, 0
    %5695 = vmatprep.subr.mxu0 0.0
    %5696 = vmatpush1.msra.mxu0 %v5590
    %5697 = vmatprep.subr.mxu0 0.0
    %5698 = vmatpush1.msra.mxu0 %v5591
    %5699 = vmatprep.subr.mxu0 0.0
    %5700 = vmatpush1.msra.mxu0 %v5592
    %5701 = vmatprep.subr.mxu0 0.0
    %5702 = vmatpush1.msra.mxu0 %v5593
    %5703 = vmatprep.subr.mxu0 0.0
    %5704 = vmatpush1.msra.mxu0 %v5594
    %5705 = vmatprep.subr.mxu0 0.0
    %5706 = vmatpush1.msra.mxu0 %v5595
    %5707 = vmatprep.subr.mxu0 0.0
    %5708 = vmatpush1.msra.mxu0 %v5596
    %5709 = vmatprep.subr.mxu0 0.0
    %5710 = vmatpush1.msra.mxu0 %v5597
    %5711 = vmatprep.subr.mxu0 0.0
    %5712 = vmatpush1.msra.mxu0 0.0
    %5713 = vmatprep.subr.mxu0 0.0
    %5714 = vmatpush1.msra.mxu0 0.0
    %5715 = vmatprep.subr.mxu0 0.0
    %5716 = vmatpush1.msra.mxu0 0.0
    %5717 = vmatprep.subr.mxu0 0.0
    %5718 = vmatpush1.msra.mxu0 0.0
    %5719 = vmatprep.subr.mxu0 0.0
    %5720 = vmatpush1.msra.mxu0 0.0
    %5721 = vmatprep.subr.mxu0 0.0
    %5722 = vmatpush1.msra.mxu0 0.0
    %5723 = vmatprep.subr.mxu0 0.0
    %5724 = vmatpush1.msra.mxu0 0.0
    %5725 = vmatprep.subr.mxu0 0.0
    %5726 = vmatpush1.msra.mxu0 0.0
    %5727 = vmatprep.subr.mxu0 0.0
    %5728 = vmatpush1.msra.mxu0 0.0
    %5729 = vmatprep.subr.mxu0 0.0
    %5730 = vmatpush1.msra.mxu0 0.0
    %5731 = vmatprep.subr.mxu0 0.0
    %5732 = vmatpush1.msra.mxu0 0.0
    %5733 = vmatprep.subr.mxu0 0.0
    %5734 = vmatpush1.msra.mxu0 0.0
    %5735 = vmatprep.subr.mxu0 0.0
    %5736 = vmatpush1.msra.mxu0 0.0
    %5737 = vmatprep.subr.mxu0 0.0
    %5738 = vmatpush1.msra.mxu0 0.0
    %5739 = vmatprep.subr.mxu0 0.0
    %5740 = vmatpush1.msra.mxu0 0.0
    %5741 = vmatprep.subr.mxu0 0.0
    %5742 = vmatpush1.msra.mxu0 0.0
    %5743 = vmatprep.subr.mxu0 0.0
    %5744 = vmatpush1.msra.mxu0 0.0
    %5745 = vmatprep.subr.mxu0 0.0
    %5746 = vmatpush1.msra.mxu0 0.0
    %5747 = vmatprep.subr.mxu0 0.0
    %5748 = vmatpush1.msra.mxu0 0.0
    %5749 = vmatprep.subr.mxu0 0.0
    %5750 = vmatpush1.msra.mxu0 0.0
    %5751 = vmatprep.subr.mxu0 0.0
    %5752 = vmatpush1.msra.mxu0 0.0
    %5753 = vmatprep.subr.mxu0 0.0
    %5754 = vmatpush1.msra.mxu0 0.0
    %5755 = vmatprep.subr.mxu0 0.0
    %5756 = vmatpush1.msra.mxu0 0.0
    %5757 = vmatprep.subr.mxu0 0.0
    %5758 = vmatpush1.msra.mxu0 0.0
    %5759 = vmatprep.mubr.f32.mxu0 0.0
    %5760 = vmatmul.mubr.f32.gmra.mrb[0].mxu0 %v5690
    %v5761 = vpop.f32.mrb[0].mxu0
    %v5762 = vadd.f32 %v5688, %v5761
    %v5763 = vpop.f32.mrb[0].mxu0
    %5764 = vmatprep.mubr.f32.mxu0 0.0
    %5765 = vmatmul.mubr.f32.gmra.mrb[0].mxu0 %v5693
    %v5766 = vpop.f32.mrb[0].mxu0
    %v5767 = vadd.f32 %v5688, %v5766
    %v5768 = vpop.f32.mrb[0].mxu0
    %5769 = vdwg.mxu0
    %v5770 = vadd.f32 %v5762, %v5584
    %v5771 = vadd.f32 %v5767, %v5585
    %v5772 = vsel %vm62, %v5770, 0.0
    %5773 = vadd.xlane.f32.xlu0 %v5772
    %v5774 = vpop.xlane.xlu0 %5773
    %v5775 = vsel %vm62, %v5771, 0.0
    %5776 = vadd.xlane.f32.xlu0 %v5775
    %v5777 = vpop.xlane.xlu0 %5776
    %v5778 = vmul.f32 %v5774, %v2670
    %v5779 = vmul.f32 %v5777, %v2670
    %v5780 = vsub.f32 %v5770, %v5778
    %v5781 = vsub.f32 %v5771, %v5779
    %v5782 = vmul.f32 %v5780, %v5780
    %v5783 = vmul.f32 %v5781, %v5781
    %v5784 = vsel %vm62, %v5782, 0.0
    %5785 = vadd.xlane.f32.xlu0 %v5784
    %v5786 = vpop.xlane.xlu0 %5785
    %v5787 = vsel %vm62, %v5783, 0.0
    %5788 = vadd.xlane.f32.xlu0 %v5787
    %v5789 = vpop.xlane.xlu0 %5788
    %v5790 = vmul.f32 %v5786, %v2670
    %v5791 = vmul.f32 %v5789, %v2670
    %v5792 = vadd.f32 %v5790, 1e-05
    %v5793 = vadd.f32 %v5791, 1e-05
    %v5794 = vrsqrt.pop %v5792
    %v5795 = vrsqrt.pop %v5793
    %v5796 = vmul.f32 %v5780, %v5794
    %v5797 = vmul.f32 %v5781, %v5795
    %v5798 = vmul.f32 %v5796, %v5577
    %v5799 = vmul.f32 %v5797, %v5577
    %v5800 = vadd.f32 %v5798, %v5583
    %v5801 = vadd.f32 %v5799, %v5583
    %v5802 = vand.u32 2147483647, %v5800
    %v5803 = vand.u32 2147483647, %v5801
    %vm5804 = vcmp.lt.f32.partialorder %v5802, inf
    %vm5805 = vcmp.lt.f32.partialorder %v5803, inf
    %v5806 = vsel %vm5804, 0.0, 1.0
    %v5807 = vsel %vm5805, 0.0, 1.0
    %v5808 = vsel %vm62, %v5806, -inf
    %5809 = vmax.xlane.f32.xlu0 %v5808
    %v5810 = vpop.xlane.xlu0 %5809
    %v5811 = vsel %vm62, %v5807, -inf
    %5812 = vmax.xlane.f32.xlu0 %v5811
    %v5813 = vpop.xlane.xlu0 %5812
    %v5814 = vmax.f32 %v5810, %v5813
    %v5815 = vrot.slane %v5814, 4
    %v5816 = vmax.f32 %v5814, %v5815
    %v5817 = vrot.slane %v5816, 2
    %v5818 = vmax.f32 %v5816, %v5817
    %v5819 = vrot.slane %v5818, 1
    %v5820 = vmax.f32 %v5818, %v5819
    %vm5821 = vcmp.gt.f32.partialorder %v5820, 0.0
    %v5822 = vmax.f32 %v5800, -3.4028235e+38
    %v5823 = vmax.f32 %v5801, -3.4028235e+38
    %v5824 = vmin.f32 %v5822, 3.4028235e+38
    %v5825 = vmin.f32 %v5823, 3.4028235e+38
    %v5826 = vsel %vm5821, 1, 0
    %vm5827 = vcmp.eq.s32.totalorder %v5826, 1
    %v5828 = vsel %vm5827, %v5824, %v5800
    %v5829 = vsel %vm5827, %v5825, %v5801
    %5830 = vst.msk [vmem:[#allocation5] sm:$0xff] %vm62, %v5828
    %5831 = vst.msk [vmem:[#allocation5 + $0x8] sm:$0xff] %vm62, %v5829
    // Predicated region
    $region14: #{encoder_forward.1} parent=1 // pred_check
      _
    $region15: #{encoder_forward.1} parent=1 // pred_check_branch
      %5833 = sbr.rel (0) target = $region17
    $region16: #{encoder_forward.1} parent=1 // pred_region
      %s5835 = ssub.s32 256, 256
      %5836 = vsyncadd [#allocation4], %s5835
      %s5837 = sshll.u32 [#allocation5], 4
      %s5838 = int_to_ptr.vmem [resolvable:$true] %s5837
      %5843 = dma.vmem_to_hbm [thread:$0]  %s5838, 256, %s2, [#allocation4], 128, 128, 8
    $region17: #{encoder_forward.1} parent=1 // pred_fallthru
      _
    // Predicated region
    $region18: #{encoder_forward.1} parent=1 // pred_check
      _
    $region19: #{encoder_forward.1} parent=1 // pred_check_branch
      %5845 = sbr.rel (0) target = $region21
    $region20: #{encoder_forward.1} parent=1 // pred_region
      _
    $region21: #{encoder_forward.1} parent=1 // pred_fallthru
      _
    // Predicated region
    $region22: #{encoder_forward.1} parent=1 // pred_check
      _
    $region23: #{encoder_forward.1} parent=1 // pred_check_branch
      %5847 = sbr.rel (0) target = $region25
    $region24: #{encoder_forward.1} parent=1 // pred_region
      %5848 = dma.done [#allocation4], 256
    $region25: #{encoder_forward.1} parent=1 // pred_fallthru
      _
    // Predicated region
    $region26: #{encoder_forward.1} parent=1 // pred_check
      _
    $region27: #{encoder_forward.1} parent=1 // pred_check_branch
      %5850 = sbr.rel (0) target = $region29
    $region28: #{encoder_forward.1} parent=1 // pred_region
      _
    $region29: #{encoder_forward.1} parent=1 // pred_fallthru
      _
    %5851 = vsyncpa [#allocation3], 1
    %5852 = vsyncpa [#allocation4], 1

</llo_original>
